<compile_context>
chip_gen: v7x
topology: tpu7x:2x2x1
jax: 0.10.0
libtpu: 0.0.40
codegen_flags: <defaults>
</compile_context>

<pallas_src>
import jax
import jax.numpy as jnp
from jax import lax
from jax.experimental import pallas as pl
from jax.experimental.pallas import tpu as pltpu


_VMEM_LIMIT = 40 * 1024 * 1024    # raised scoped-VMEM cap (v5e default is only 16 MiB)
_VMEM_BUDGET = 20 * 1024 * 1024   # per-call working-set target (fits v7x 64 MiB VMEM)


# ----------------------------------------------------------------------------
# Small helpers
# ----------------------------------------------------------------------------
def _round_up(x, m):
    return ((x + m - 1) // m) * m


def _pad_rows(a, m_pad):
    if a.shape[0] == m_pad:
        return a
    return jnp.pad(a, ((0, m_pad - a.shape[0]), (0, 0)))


def _pick_tm(K, N, y_bytes):
    """Largest row tile whose double-buffered working set fits the VMEM budget."""
    for tm in (1024, 512, 256, 128):
        est = 2 * tm * K * 2 + 2 * K * N * 2 + 2 * tm * N * y_bytes + 16 * N * 4
        if est <= _VMEM_BUDGET:
            return tm
    return 128


def _tiling(M, K, N, y_bytes):
    tm = _pick_tm(K, N, y_bytes)
    m8 = _round_up(M, 8)
    if m8 <= tm:
        return m8, m8                       # single tile, rows padded to 8
    return _round_up(M, tm), tm             # padded/cdiv grid


def _ew_tile(m_pad):
    for tm in (1024, 512, 256, 128):
        if m_pad % tm == 0:
            return tm
    return m_pad


# ----------------------------------------------------------------------------
# Pallas kernels
# ----------------------------------------------------------------------------
def _matmul_stats_kernel(a_ref, w_ref, y_ref, s_ref, ss_ref):
    """y = a @ w (bf16 in, f32 MXU accumulate); per-tile column sum / sum-of-squares."""
    y = jnp.dot(a_ref[...], w_ref[...], preferred_element_type=jnp.float32)
    y_ref[...] = y.astype(y_ref.dtype)
    s = jnp.sum(y, axis=0, keepdims=True)
    ss = jnp.sum(y * y, axis=0, keepdims=True)
    s_ref[...] = s.reshape(1, 1, s.shape[1])
    ss_ref[...] = ss.reshape(1, 1, ss.shape[1])


def _make_matmul_bias_act_kernel(act_fn):
    def kernel(a_ref, w_ref, b_ref, y_ref):
        y = jnp.dot(a_ref[...], w_ref[...], preferred_element_type=jnp.float32)
        y = y + b_ref[...]
        y_ref[...] = act_fn(y).astype(y_ref.dtype)
    return kernel


def _lrelu(v):
    return jnp.maximum(v, 0.2 * v)          # LeakyReLU(0.2)


def _affine_lrelu_kernel(y_ref, sc_ref, sh_ref, o_ref):
    v = y_ref[...].astype(jnp.float32) * sc_ref[...] + sh_ref[...]
    o_ref[...] = _lrelu(v).astype(o_ref.dtype)


def _nan_clean_kernel(x_ref, o_ref):
    v = x_ref[...]
    o_ref[...] = jnp.where(jnp.isnan(v), jnp.zeros_like(v), v).astype(o_ref.dtype)


def _reparam_kernel(mu_ref, lv_ref, eps_ref, z_ref):
    z_ref[...] = mu_ref[...] + eps_ref[...] * jnp.exp(0.5 * lv_ref[...])


# ----------------------------------------------------------------------------
# Pallas wrappers
# ----------------------------------------------------------------------------
def matmul_stats(a, w, out_dtype=jnp.bfloat16):
    """a:(M,K) @ w:(K,N) (no bias) plus per-column sum / sum^2 of the REAL rows.

    Rows are zero-padded to a tile multiple; since there is no bias the padded
    rows contribute exactly zero to the statistics.  Returns (y_padded, s, ss).
    """
    M, K = a.shape
    N = w.shape[1]
    m_pad, tm = _tiling(M, K, N, jnp.dtype(out_dtype).itemsize)
    nt = m_pad // tm
    a_p = _pad_rows(a, m_pad).astype(jnp.bfloat16)
    w = w.astype(jnp.bfloat16)
    y, s, ss = pl.pallas_call(
        _matmul_stats_kernel,
        out_shape=(
            jax.ShapeDtypeStruct((m_pad, N), out_dtype),
            jax.ShapeDtypeStruct((nt, 1, N), jnp.float32),
            jax.ShapeDtypeStruct((nt, 1, N), jnp.float32),
        ),
        grid_spec=pltpu.PrefetchScalarGridSpec(
            num_scalar_prefetch=0,
            grid=(nt,),
            in_specs=[
                pl.BlockSpec((tm, K), lambda i: (i, 0)),
                pl.BlockSpec((K, N), lambda i: (0, 0)),
            ],
            out_specs=[
                pl.BlockSpec((tm, N), lambda i: (i, 0)),
                pl.BlockSpec((1, 1, N), lambda i: (i, 0, 0)),
                pl.BlockSpec((1, 1, N), lambda i: (i, 0, 0)),
            ],
        ),
        compiler_params=pltpu.CompilerParams(
            dimension_semantics=("parallel",), vmem_limit_bytes=_VMEM_LIMIT),
    )(a_p, w)
    return y, jnp.sum(s[:, 0, :], axis=0), jnp.sum(ss[:, 0, :], axis=0)


def matmul_bias_act(a, w, b, act_fn, out_dtype):
    """act(a @ w + b).  Output lanes are zero-padded up to a multiple of 128 so
    stores stay lane-dense, then sliced back; rows padded/sliced likewise."""
    M, K = a.shape
    N = w.shape[1]
    Np = _round_up(max(N, 128), 128)
    if Np != N:
        w = jnp.pad(w, ((0, 0), (0, Np - N)))
        b = jnp.pad(b, (0, Np - N))
    m_pad, tm = _tiling(M, K, Np, jnp.dtype(out_dtype).itemsize)
    nt = m_pad // tm
    a_p = _pad_rows(a, m_pad).astype(jnp.bfloat16)
    w = w.astype(jnp.bfloat16)
    b2 = b.reshape(1, Np).astype(jnp.float32)
    y = pl.pallas_call(
        _make_matmul_bias_act_kernel(act_fn),
        out_shape=jax.ShapeDtypeStruct((m_pad, Np), out_dtype),
        grid_spec=pltpu.PrefetchScalarGridSpec(
            num_scalar_prefetch=0,
            grid=(nt,),
            in_specs=[
                pl.BlockSpec((tm, K), lambda i: (i, 0)),
                pl.BlockSpec((K, Np), lambda i: (0, 0)),
                pl.BlockSpec((1, Np), lambda i: (0, 0)),
            ],
            out_specs=pl.BlockSpec((tm, Np), lambda i: (i, 0)),
        ),
        compiler_params=pltpu.CompilerParams(
            dimension_semantics=("parallel",), vmem_limit_bytes=_VMEM_LIMIT),
    )(a_p, w, b2)
    return y[:M, :N]


def apply_affine_lrelu(y, scale, shift, out_dtype=jnp.bfloat16):
    """LeakyReLU(0.2)(y * scale + shift), per-column scale/shift (BatchNorm affine)."""
    M, N = y.shape
    tm = _ew_tile(M)
    return pl.pallas_call(
        _affine_lrelu_kernel,
        out_shape=jax.ShapeDtypeStruct((M, N), out_dtype),
        grid_spec=pltpu.PrefetchScalarGridSpec(
            num_scalar_prefetch=0,
            grid=(M // tm,),
            in_specs=[
                pl.BlockSpec((tm, N), lambda i: (i, 0)),
                pl.BlockSpec((1, N), lambda i: (0, 0)),
                pl.BlockSpec((1, N), lambda i: (0, 0)),
            ],
            out_specs=pl.BlockSpec((tm, N), lambda i: (i, 0)),
        ),
        compiler_params=pltpu.CompilerParams(
            dimension_semantics=("parallel",), vmem_limit_bytes=_VMEM_LIMIT),
    )(y, scale.reshape(1, N).astype(jnp.float32),
      shift.reshape(1, N).astype(jnp.float32))


def nan_clean(x, out_dtype=jnp.bfloat16):
    """apply_mask(x, None): NaN -> 0, on a lane-dense (rows,128) view of the data."""
    shape = x.shape
    flat = x.reshape(-1)
    n = flat.shape[0]
    rows = pl.cdiv(n, 128)
    tm = min(512, _round_up(rows, 8))
    npad = _round_up(n, tm * 128)
    x2 = jnp.pad(flat, (0, npad - n)).reshape(-1, 128)
    y2 = pl.pallas_call(
        _nan_clean_kernel,
        out_shape=jax.ShapeDtypeStruct(x2.shape, out_dtype),
        grid_spec=pltpu.PrefetchScalarGridSpec(
            num_scalar_prefetch=0,
            grid=(x2.shape[0] // tm,),
            in_specs=[pl.BlockSpec((tm, 128), lambda i: (i, 0))],
            out_specs=pl.BlockSpec((tm, 128), lambda i: (i, 0)),
        ),
        compiler_params=pltpu.CompilerParams(
            dimension_semantics=("parallel",), vmem_limit_bytes=_VMEM_LIMIT),
    )(x2)
    return y2.reshape(-1)[:n].reshape(shape)


def reparam_pallas(mu2, lv2, eps2):
    M, L = mu2.shape
    m8 = _round_up(M, 8)
    tm = _ew_tile(m8)
    args = [_pad_rows(v.astype(jnp.float32), m8) for v in (mu2, lv2, eps2)]
    z = pl.pallas_call(
        _reparam_kernel,
        out_shape=jax.ShapeDtypeStruct((m8, L), jnp.float32),
        grid_spec=pltpu.PrefetchScalarGridSpec(
            num_scalar_prefetch=0,
            grid=(m8 // tm,),
            in_specs=[pl.BlockSpec((tm, L), lambda i: (i, 0))] * 3,
            out_specs=pl.BlockSpec((tm, L), lambda i: (i, 0)),
        ),
        compiler_params=pltpu.CompilerParams(
            dimension_semantics=("parallel",), vmem_limit_bytes=_VMEM_LIMIT),
    )(*args)
    return z[:M]


# ----------------------------------------------------------------------------
# Conv blocks (im2col / weight-repack glue in JAX, matmul+BN+act in Pallas)
# ----------------------------------------------------------------------------
def _im2col_nhwc(x, kh, kw, stride, padding):
    # TODO(synk): stream the kh*kw taps inside the matmul kernel (manual DMA over
    # shifted NHWC windows) instead of materializing the im2col matrix in HBM.
    B, H, W, C = x.shape
    Ho = (H + 2 * padding - kh) // stride + 1
    Wo = (W + 2 * padding - kw) // stride + 1
    xp = jnp.pad(x, ((0, 0), (padding, padding), (padding, padding), (0, 0)))
    cols = []
    for i in range(kh):
        for j in range(kw):
            cols.append(xp[:, i:i + stride * Ho:stride, j:j + stride * Wo:stride, :])
    pat = jnp.concatenate(cols, axis=-1)                 # (B, Ho, Wo, kh*kw*C)
    return pat.reshape(B * Ho * Wo, kh * kw * C), Ho, Wo


def _bn_affine(s, ss, count, gamma, beta):
    """Training-mode BatchNorm: batch stats (biased variance), eps=1e-5."""
    mean = s / count
    var = jnp.maximum(ss / count - mean * mean, 0.0)     # guard f32 cancellation
    scale = gamma / jnp.sqrt(var + 1e-5)
    shift = beta - mean * scale
    return scale, shift


def conv_bn_lrelu(x_nhwc, w, gamma, beta, *, stride, padding):
    """Conv2d + training-mode BatchNorm + LeakyReLU(0.2).  The conv bias is
    mathematically cancelled by BN and therefore omitted.  NHWC in/out (bf16)."""
    Cout, Cin, kh, kw = w.shape
    B = x_nhwc.shape[0]
    pat, Ho, Wo = _im2col_nhwc(x_nhwc, kh, kw, stride, padding)
    wmat = w.transpose(2, 3, 1, 0).reshape(kh * kw * Cin, Cout)
    M = B * Ho * Wo
    y, s, ss = matmul_stats(pat, wmat, out_dtype=jnp.bfloat16)
    scale, shift = _bn_affine(s, ss, M, gamma, beta)
    o = apply_affine_lrelu(y, scale, shift, out_dtype=jnp.bfloat16)
    return o[:M].reshape(B, Ho, Wo, Cout)


def conv1x1_bn_lrelu(x2d, w, gamma, beta):
    """1x1 conv + BN + lrelu on a flat (rows, Cin) pixel matrix (no im2col)."""
    Cout = w.shape[0]
    wmat = w.reshape(Cout, -1).T                         # (Cin, Cout)
    M = x2d.shape[0]
    y, s, ss = matmul_stats(x2d, wmat, out_dtype=jnp.bfloat16)
    scale, shift = _bn_affine(s, ss, M, gamma, beta)
    return apply_affine_lrelu(y, scale, shift, out_dtype=jnp.bfloat16)[:M]


def _convtranspose_wmat(w):
    """ConvTranspose2d(k=4,s=2,p=1) weight (Cin,Cout,4,4) -> equivalent stride-1
    3x3 conv weight matrix (9*Cin, 4*Cout).  Columns are phase-major (py,px,co)
    so a depth-to-space reshape reconstructs the transposed-conv output."""
    Cin, Cout = w.shape[0], w.shape[1]
    kidx = {(0, -1): 3, (0, 0): 1, (1, 0): 2, (1, 1): 0}   # (phase, offset) -> tap
    zero = jnp.zeros((Cin, Cout), w.dtype)
    rows = []
    for dy in (-1, 0, 1):
        for dx in (-1, 0, 1):
            cols = []
            for py in (0, 1):
                for px in (0, 1):
                    kh = kidx.get((py, dy))
                    kw = kidx.get((px, dx))
                    cols.append(zero if kh is None or kw is None else w[:, :, kh, kw])
            rows.append(jnp.concatenate(cols, axis=1))
    return jnp.concatenate(rows, axis=0)                   # (9*Cin, 4*Cout)


def _depth_to_space(y, B, H, W, Cout):
    y = y.reshape(B, H, W, 2, 2, Cout)
    return y.transpose(0, 1, 3, 2, 4, 5).reshape(B, 2 * H, 2 * W, Cout)


def convtranspose_bn_lrelu(x_nhwc, w, gamma, beta):
    """ConvTranspose2d(k=4,s=2,p=1) + BN + lrelu, lowered sub-pixel style to one
    stride-1 3x3 matmul producing all 4 output phases (no zero-dilation)."""
    B, H, W, _ = x_nhwc.shape
    Cout = w.shape[1]
    pat, _, _ = _im2col_nhwc(x_nhwc, 3, 3, 1, 1)
    wmat = _convtranspose_wmat(w)                          # (9*Cin, 4*Cout)
    M = B * H * W
    y, s, ss = matmul_stats(pat, wmat, out_dtype=jnp.bfloat16)
    s_c = s.reshape(4, Cout).sum(axis=0)                   # fold the 4 phases
    ss_c = ss.reshape(4, Cout).sum(axis=0)
    scale, shift = _bn_affine(s_c, ss_c, 4 * M, gamma, beta)
    o = apply_affine_lrelu(y, jnp.tile(scale, 4), jnp.tile(shift, 4),
                           out_dtype=jnp.bfloat16)
    return _depth_to_space(o[:M], B, H, W, Cout)


def convtranspose_bias_tanh(x_nhwc, w, b):
    """Final ConvTranspose2d + bias + tanh (no BN); tanh fused into the matmul."""
    B, H, W, _ = x_nhwc.shape
    Cout = w.shape[1]
    pat, _, _ = _im2col_nhwc(x_nhwc, 3, 3, 1, 1)
    wmat = _convtranspose_wmat(w)
    y = matmul_bias_act(pat, wmat, jnp.tile(b, 4), jnp.tanh, jnp.float32)
    return _depth_to_space(y, B, H, W, Cout)


def mu_logvar_fused(h2d, mu_w, mu_b, lv_w, lv_b):
    """Both 1x1 latent heads fused into one matmul; logvar columns clamped to
    [-10, 10] inside the kernel via a lane mask."""
    L = mu_w.shape[0]
    wmat = jnp.concatenate([mu_w.reshape(L, -1).T, lv_w.reshape(L, -1).T], axis=1)
    bias = jnp.concatenate([mu_b, lv_b])

    def act(v):
        lane = lax.broadcasted_iota(jnp.int32, v.shape, 1)
        return jnp.where(lane >= L, jnp.clip(v, -10.0, 10.0), v)

    y = matmul_bias_act(h2d, wmat, bias, act, jnp.float32)   # (M, 2L)
    return y[:, :L], y[:, L:]


# ----------------------------------------------------------------------------
# Parameters (deterministic, matching nn.Module shapes / init style)
# ----------------------------------------------------------------------------
def init_params(key, in_ch, latent_dim):
    ks = jax.random.split(key, 9)

    def kaiming(k, shape, fan_out):
        return ((2.0 / fan_out) ** 0.5) * jax.random.normal(k, shape, jnp.float32)

    p = {}
    p["enc1_w"] = kaiming(ks[0], (64, in_ch, 4, 4), 64 * 16);  p["enc1_b"] = jnp.zeros((64,))
    p["bn1_g"] = jnp.ones((64,));   p["bn1_b"] = jnp.zeros((64,))
    p["enc2_w"] = kaiming(ks[1], (128, 64, 4, 4), 128 * 16);   p["enc2_b"] = jnp.zeros((128,))
    p["bn2_g"] = jnp.ones((128,));  p["bn2_b"] = jnp.zeros((128,))
    p["enc3_w"] = kaiming(ks[2], (256, 128, 4, 4), 256 * 16);  p["enc3_b"] = jnp.zeros((256,))
    p["bn3_g"] = jnp.ones((256,));  p["bn3_b"] = jnp.zeros((256,))
    p["mu_w"] = kaiming(ks[3], (latent_dim, 256, 1, 1), latent_dim)
    p["mu_b"] = jnp.zeros((latent_dim,))
    p["lv_w"] = kaiming(ks[4], (latent_dim, 256, 1, 1), latent_dim)
    p["lv_b"] = jnp.zeros((latent_dim,))
    p["fl_w"] = kaiming(ks[5], (256, latent_dim, 1, 1), 256);  p["fl_b"] = jnp.zeros((256,))
    p["bn0_g"] = jnp.ones((256,));  p["bn0_b"] = jnp.zeros((256,))
    # ConvTranspose2d weights: (Cin, Cout, kh, kw)
    p["dec1_w"] = kaiming(ks[6], (256, 128, 4, 4), 256 * 16);  p["dec1_b"] = jnp.zeros((128,))
    p["dbn1_g"] = jnp.ones((128,)); p["dbn1_b"] = jnp.zeros((128,))
    p["dec2_w"] = kaiming(ks[7], (128, 64, 4, 4), 128 * 16);   p["dec2_b"] = jnp.zeros((64,))
    p["dbn2_g"] = jnp.ones((64,));  p["dbn2_b"] = jnp.zeros((64,))
    p["dec3_w"] = kaiming(ks[8], (64, in_ch, 4, 4), 64 * 16);  p["dec3_b"] = jnp.zeros((in_ch,))
    return p


# ----------------------------------------------------------------------------
# Forward pass
# ----------------------------------------------------------------------------
def ocean_vae_forward(params, x, eps):
    p = params
    B, C, H, W = x.shape
    L = eps.shape[1]

    # apply_mask(x, mask=None): NaN -> 0 (Pallas, lane-dense flat view).
    # Stay channels-last (NHWC) for the whole network; NCHW only at the boundary.
    x_nhwc = nan_clean(x.transpose(0, 2, 3, 1), out_dtype=jnp.bfloat16)

    # ---- encoder ----
    h = conv_bn_lrelu(x_nhwc, p["enc1_w"], p["bn1_g"], p["bn1_b"], stride=2, padding=1)
    h = conv_bn_lrelu(h, p["enc2_w"], p["bn2_g"], p["bn2_b"], stride=2, padding=1)
    h = conv_bn_lrelu(h, p["enc3_w"], p["bn3_g"], p["bn3_b"], stride=2, padding=1)

    Bh, lh, lw, Ch = h.shape
    h2 = h.reshape(Bh * lh * lw, Ch)
    mu2, lv2 = mu_logvar_fused(h2, p["mu_w"], p["mu_b"], p["lv_w"], p["lv_b"])

    # ---- reparameterize (training mode): z = mu + eps * exp(0.5*logvar) ----
    eps2 = eps.transpose(0, 2, 3, 1).reshape(-1, L)
    z2 = reparam_pallas(mu2, lv2, eps2)

    # ---- decoder ----
    d2 = conv1x1_bn_lrelu(z2.astype(jnp.bfloat16), p["fl_w"], p["bn0_g"], p["bn0_b"])
    d = d2.reshape(B, lh, lw, -1)
    d = convtranspose_bn_lrelu(d, p["dec1_w"], p["dbn1_g"], p["dbn1_b"])
    d = convtranspose_bn_lrelu(d, p["dec2_w"], p["dbn2_g"], p["dbn2_b"])
    recon_nhwc = convtranspose_bias_tanh(d, p["dec3_w"], p["dec3_b"])

    recon = recon_nhwc.transpose(0, 3, 1, 2)
    mu = mu2.reshape(B, lh, lw, L).transpose(0, 3, 1, 2)
    logvar = lv2.reshape(B, lh, lw, L).transpose(0, 3, 1, 2)
    return recon, mu, logvar


# ----------------------------------------------------------------------------
if __name__ == "__main__":
    key = jax.random.PRNGKey(0)
    k_x, k_eps, k_p = jax.random.split(key, 3)

    B, C, H, W = 2, 4, 16, 16           # small shapes (module's real size is 336x720)
    latent_dim = 8
    lh, lw = H // 8, W // 8             # three stride-2 convs

    x = jax.random.normal(k_x, (B, C, H, W), jnp.float32)
    x = x.at[0, 0, 0, 0].set(jnp.nan)   # exercise the NaN-cleanup path of apply_mask
    eps = jax.random.normal(k_eps, (B, latent_dim, lh, lw), jnp.float32)

    params = init_params(k_p, C, latent_dim)

    fwd = jax.jit(ocean_vae_forward)
    recon, mu, logvar = fwd(params, x, eps)
    jax.block_until_ready((recon, mu, logvar))

    assert recon.shape == (B, C, H, W)
    assert mu.shape == (B, latent_dim, lh, lw)
    assert logvar.shape == (B, latent_dim, lh, lw)
    assert bool(jnp.all(jnp.isfinite(recon)))
    assert bool(jnp.all(jnp.abs(recon) <= 1.0))              # tanh output
    assert bool(jnp.all((logvar >= -10.0) & (logvar <= 10.0)))

    print("KERNEL_OK")
</pallas_src>

<mosaic_0001>
module attributes {stable_mosaic.version = 11 : i64} {
  func.func @_nan_clean_kernel(%arg0: i32, %arg1: memref<16x128xf32, #tpu.memory_space<vmem>>, %arg2: memref<16x128xbf16, #tpu.memory_space<vmem>>) attributes {dimension_semantics = [#tpu.dimension_semantics<parallel>], iteration_bounds = array<i64: 1>, scalar_prefetch = 0 : i64, scratch_operands = 0 : i64, tpu.core_type = #tpu.core_type<tc>, window_params = [{transform_indices = @transform_0, window_bounds = array<i64: 16, 128>}, {transform_indices = @transform_1, window_bounds = array<i64: 16, 128>}]} {
    %c0 = arith.constant 0 : index
    %c0_0 = arith.constant 0 : index
    %0 = vector.load %arg1[%c0, %c0_0] : memref<16x128xf32, #tpu.memory_space<vmem>>, vector<16x128xf32>
    %1 = arith.cmpf one, %0, %0 : vector<16x128xf32>
    %cst = arith.constant 0.000000e+00 : f32
    %2 = vector.broadcast %cst : f32 to vector<16x128xf32>
    %3 = arith.select %1, %2, %0 : vector<16x128xi1>, vector<16x128xf32>
    %4 = arith.truncf %3 : vector<16x128xf32> to vector<16x128xbf16>
    %c0_1 = arith.constant 0 : index
    %c0_2 = arith.constant 0 : index
    %5 = vector.load %arg2[%c0_1, %c0_2] : memref<16x128xbf16, #tpu.memory_space<vmem>>, vector<16x128xbf16>
    tpu.vector_store %arg2[%c0_1, %c0_2], %4 {strides = array<i32>} : memref<16x128xbf16, #tpu.memory_space<vmem>>, vector<16x128xbf16>,
    return
  }
  func.func @transform_0(%arg0: i32) -> (i32, i32) {
    %c0_i32 = arith.constant 0 : i32
    %c0_i32_0 = arith.constant 0 : i32
    return %arg0, %c0_i32 : i32, i32
  }
  func.func @transform_1(%arg0: i32) -> (i32, i32) {
    %c0_i32 = arith.constant 0 : i32
    %c0_i32_0 = arith.constant 0 : i32
    return %arg0, %c0_i32 : i32, i32
  }
}

module attributes {stable_mosaic.version = 11 : i64} {
  func.func @_affine_lrelu_kernel(%arg0: i32, %arg1: memref<128x64xbf16, #tpu.memory_space<vmem>>, %arg2: memref<1x64xf32, #tpu.memory_space<vmem>>, %arg3: memref<1x64xf32, #tpu.memory_space<vmem>>, %arg4: memref<128x64xbf16, #tpu.memory_space<vmem>>) attributes {dimension_semantics = [#tpu.dimension_semantics<parallel>], iteration_bounds = array<i64: 1>, scalar_prefetch = 0 : i64, scratch_operands = 0 : i64, tpu.core_type = #tpu.core_type<tc>, window_params = [{transform_indices = @transform_0, window_bounds = array<i64: 128, 64>}, {pipeline_mode = #tpu.pipeline_mode<synchronous>, transform_indices = @transform_1, window_bounds = array<i64: 1, 64>}, {pipeline_mode = #tpu.pipeline_mode<synchronous>, transform_indices = @transform_2, window_bounds = array<i64: 1, 64>}, {transform_indices = @transform_3, window_bounds = array<i64: 128, 64>}]} {
    %c0 = arith.constant 0 : index
    %c0_0 = arith.constant 0 : index
    %0 = vector.load %arg1[%c0, %c0_0] : memref<128x64xbf16, #tpu.memory_space<vmem>>, vector<128x64xbf16>
    %1 = arith.extf %0 : vector<128x64xbf16> to vector<128x64xf32>
    %c0_1 = arith.constant 0 : index
    %c0_2 = arith.constant 0 : index
    %2 = vector.load %arg2[%c0_1, %c0_2] : memref<1x64xf32, #tpu.memory_space<vmem>>, vector<1x64xf32>
    %3 = vector.broadcast %2 : vector<1x64xf32> to vector<128x64xf32>
    %4 = arith.mulf %1, %3 : vector<128x64xf32>
    %c0_3 = arith.constant 0 : index
    %c0_4 = arith.constant 0 : index
    %5 = vector.load %arg3[%c0_3, %c0_4] : memref<1x64xf32, #tpu.memory_space<vmem>>, vector<1x64xf32>
    %6 = vector.broadcast %5 : vector<1x64xf32> to vector<128x64xf32>
    %7 = arith.addf %4, %6 : vector<128x64xf32>
    %cst = arith.constant 2.000000e-01 : f32
    %8 = vector.broadcast %cst : f32 to vector<128x64xf32>
    %9 = arith.mulf %8, %7 : vector<128x64xf32>
    %10 = arith.maximumf %7, %9 : vector<128x64xf32>
    %11 = arith.truncf %10 : vector<128x64xf32> to vector<128x64xbf16>
    %c0_5 = arith.constant 0 : index
    %c0_6 = arith.constant 0 : index
    %12 = vector.load %arg4[%c0_5, %c0_6] : memref<128x64xbf16, #tpu.memory_space<vmem>>, vector<128x64xbf16>
    tpu.vector_store %arg4[%c0_5, %c0_6], %11 {strides = array<i32>} : memref<128x64xbf16, #tpu.memory_space<vmem>>, vector<128x64xbf16>,
    return
  }
  func.func @transform_0(%arg0: i32) -> (i32, i32) {
    %c0_i32 = arith.constant 0 : i32
    %c0_i32_0 = arith.constant 0 : i32
    return %arg0, %c0_i32 : i32, i32
  }
  func.func @transform_1(%arg0: i32) -> (i32, i32) {
    %c0_i32 = arith.constant 0 : i32
    %c0_i32_0 = arith.constant 0 : i32
    %c0_i32_1 = arith.constant 0 : i32
    return %c0_i32, %c0_i32_0 : i32, i32
  }
  func.func @transform_2(%arg0: i32) -> (i32, i32) {
    %c0_i32 = arith.constant 0 : i32
    %c0_i32_0 = arith.constant 0 : i32
    %c0_i32_1 = arith.constant 0 : i32
    return %c0_i32, %c0_i32_0 : i32, i32
  }
  func.func @transform_3(%arg0: i32) -> (i32, i32) {
    %c0_i32 = arith.constant 0 : i32
    %c0_i32_0 = arith.constant 0 : i32
    return %arg0, %c0_i32 : i32, i32
  }
}

module attributes {stable_mosaic.version = 11 : i64} {
  func.func @_matmul_stats_kernel(%arg0: i32, %arg1: memref<128x64xbf16, #tpu.memory_space<vmem>>, %arg2: memref<64x64xbf16, #tpu.memory_space<vmem>>, %arg3: memref<128x64xbf16, #tpu.memory_space<vmem>>, %arg4: memref<1x1x64xf32, #tpu.memory_space<vmem>>, %arg5: memref<1x1x64xf32, #tpu.memory_space<vmem>>) attributes {dimension_semantics = [#tpu.dimension_semantics<parallel>], iteration_bounds = array<i64: 1>, scalar_prefetch = 0 : i64, scratch_operands = 0 : i64, tpu.core_type = #tpu.core_type<tc>, window_params = [{transform_indices = @transform_0, window_bounds = array<i64: 128, 64>}, {pipeline_mode = #tpu.pipeline_mode<synchronous>, transform_indices = @transform_1, window_bounds = array<i64: 64, 64>}, {transform_indices = @transform_2, window_bounds = array<i64: 128, 64>}, {transform_indices = @transform_3, window_bounds = array<i64: 1, 1, 64>}, {transform_indices = @transform_4, window_bounds = array<i64: 1, 1, 64>}]} {
    %c0 = arith.constant 0 : index
    %c0_0 = arith.constant 0 : index
    %0 = vector.load %arg1[%c0, %c0_0] : memref<128x64xbf16, #tpu.memory_space<vmem>>, vector<128x64xbf16>
    %c0_1 = arith.constant 0 : index
    %c0_2 = arith.constant 0 : index
    %1 = vector.load %arg2[%c0_1, %c0_2] : memref<64x64xbf16, #tpu.memory_space<vmem>>, vector<64x64xbf16>
    %cst = arith.constant dense<0.000000e+00> : vector<128x64xf32>
    %2 = tpu.matmul %0, %1, %cst {dimension_numbers = #tpu.dot_dimension_numbers<[1], [0], [0], [1], [0, 0, 1, 1], [], []>} : vector<128x64xbf16>, vector<64x64xbf16>, vector<128x64xf32> -> vector<128x64xf32>
    %3 = arith.truncf %2 : vector<128x64xf32> to vector<128x64xbf16>
    %c0_3 = arith.constant 0 : index
    %c0_4 = arith.constant 0 : index
    %4 = vector.load %arg3[%c0_3, %c0_4] : memref<128x64xbf16, #tpu.memory_space<vmem>>, vector<128x64xbf16>
    tpu.vector_store %arg3[%c0_3, %c0_4], %3 {strides = array<i32>} : memref<128x64xbf16, #tpu.memory_space<vmem>>, vector<128x64xbf16>,
    %cst_5 = arith.constant dense<0.000000e+00> : vector<64xf32>
    %5 = vector.multi_reduction <add>, %2, %cst_5 [0] : vector<128x64xf32> to vector<64xf32>
    %6 = vector.shape_cast %5 : vector<64xf32> to vector<1x64xf32>
    %7 = arith.mulf %2, %2 : vector<128x64xf32>
    %cst_6 = arith.constant dense<0.000000e+00> : vector<64xf32>
    %8 = vector.multi_reduction <add>, %7, %cst_6 [0] : vector<128x64xf32> to vector<64xf32>
    %9 = vector.shape_cast %8 : vector<64xf32> to vector<1x64xf32>
    %10 = vector.shape_cast %6 : vector<1x64xf32> to vector<1x1x64xf32>
    %c0_7 = arith.constant 0 : index
    %c0_8 = arith.constant 0 : index
    %c0_9 = arith.constant 0 : index
    %11 = vector.load %arg4[%c0_7, %c0_8, %c0_9] : memref<1x1x64xf32, #tpu.memory_space<vmem>>, vector<1x1x64xf32>
    tpu.vector_store %arg4[%c0_7, %c0_8, %c0_9], %10 {strides = array<i32>} : memref<1x1x64xf32, #tpu.memory_space<vmem>>, vector<1x1x64xf32>,
    %12 = vector.shape_cast %9 : vector<1x64xf32> to vector<1x1x64xf32>
    %c0_10 = arith.constant 0 : index
    %c0_11 = arith.constant 0 : index
    %c0_12 = arith.constant 0 : index
    %13 = vector.load %arg5[%c0_10, %c0_11, %c0_12] : memref<1x1x64xf32, #tpu.memory_space<vmem>>, vector<1x1x64xf32>
    tpu.vector_store %arg5[%c0_10, %c0_11, %c0_12], %12 {strides = array<i32>} : memref<1x1x64xf32, #tpu.memory_space<vmem>>, vector<1x1x64xf32>,
    return
  }
  func.func @transform_0(%arg0: i32) -> (i32, i32) {
    %c0_i32 = arith.constant 0 : i32
    %c0_i32_0 = arith.constant 0 : i32
    return %arg0, %c0_i32 : i32, i32
  }
  func.func @transform_1(%arg0: i32) -> (i32, i32) {
    %c0_i32 = arith.constant 0 : i32
    %c0_i32_0 = arith.constant 0 : i32
    %c0_i32_1 = arith.constant 0 : i32
    return %c0_i32, %c0_i32_0 : i32, i32
  }
  func.func @transform_2(%arg0: i32) -> (i32, i32) {
    %c0_i32 = arith.constant 0 : i32
    %c0_i32_0 = arith.constant 0 : i32
    return %arg0, %c0_i32 : i32, i32
  }
  func.func @transform_3(%arg0: i32) -> (i32, i32, i32) {
    %c0_i32 = arith.constant 0 : i32
    %c0_i32_0 = arith.constant 0 : i32
    %c0_i32_1 = arith.constant 0 : i32
    return %arg0, %c0_i32, %c0_i32_0 : i32, i32, i32
  }
  func.func @transform_4(%arg0: i32) -> (i32, i32, i32) {
    %c0_i32 = arith.constant 0 : i32
    %c0_i32_0 = arith.constant 0 : i32
    %c0_i32_1 = arith.constant 0 : i32
    return %arg0, %c0_i32, %c0_i32_0 : i32, i32, i32
  }
}

module attributes {stable_mosaic.version = 11 : i64} {
  func.func @_matmul_stats_kernel(%arg0: i32, %arg1: memref<32x1024xbf16, #tpu.memory_space<vmem>>, %arg2: memref<1024x128xbf16, #tpu.memory_space<vmem>>, %arg3: memref<32x128xbf16, #tpu.memory_space<vmem>>, %arg4: memref<1x1x128xf32, #tpu.memory_space<vmem>>, %arg5: memref<1x1x128xf32, #tpu.memory_space<vmem>>) attributes {dimension_semantics = [#tpu.dimension_semantics<parallel>], iteration_bounds = array<i64: 1>, scalar_prefetch = 0 : i64, scratch_operands = 0 : i64, tpu.core_type = #tpu.core_type<tc>, window_params = [{transform_indices = @transform_0, window_bounds = array<i64: 32, 1024>}, {pipeline_mode = #tpu.pipeline_mode<synchronous>, transform_indices = @transform_1, window_bounds = array<i64: 1024, 128>}, {transform_indices = @transform_2, window_bounds = array<i64: 32, 128>}, {transform_indices = @transform_3, window_bounds = array<i64: 1, 1, 128>}, {transform_indices = @transform_4, window_bounds = array<i64: 1, 1, 128>}]} {
    %c0 = arith.constant 0 : index
    %c0_0 = arith.constant 0 : index
    %0 = vector.load %arg1[%c0, %c0_0] : memref<32x1024xbf16, #tpu.memory_space<vmem>>, vector<32x1024xbf16>
    %c0_1 = arith.constant 0 : index
    %c0_2 = arith.constant 0 : index
    %1 = vector.load %arg2[%c0_1, %c0_2] : memref<1024x128xbf16, #tpu.memory_space<vmem>>, vector<1024x128xbf16>
    %cst = arith.constant dense<0.000000e+00> : vector<32x128xf32>
    %2 = tpu.matmul %0, %1, %cst {dimension_numbers = #tpu.dot_dimension_numbers<[1], [0], [0], [1], [0, 0, 1, 1], [], []>} : vector<32x1024xbf16>, vector<1024x128xbf16>, vector<32x128xf32> -> vector<32x128xf32>
    %3 = arith.truncf %2 : vector<32x128xf32> to vector<32x128xbf16>
    %c0_3 = arith.constant 0 : index
    %c0_4 = arith.constant 0 : index
    %4 = vector.load %arg3[%c0_3, %c0_4] : memref<32x128xbf16, #tpu.memory_space<vmem>>, vector<32x128xbf16>
    tpu.vector_store %arg3[%c0_3, %c0_4], %3 {strides = array<i32>} : memref<32x128xbf16, #tpu.memory_space<vmem>>, vector<32x128xbf16>,
    %cst_5 = arith.constant dense<0.000000e+00> : vector<128xf32>
    %5 = vector.multi_reduction <add>, %2, %cst_5 [0] : vector<32x128xf32> to vector<128xf32>
    %6 = vector.shape_cast %5 : vector<128xf32> to vector<1x128xf32>
    %7 = arith.mulf %2, %2 : vector<32x128xf32>
    %cst_6 = arith.constant dense<0.000000e+00> : vector<128xf32>
    %8 = vector.multi_reduction <add>, %7, %cst_6 [0] : vector<32x128xf32> to vector<128xf32>
    %9 = vector.shape_cast %8 : vector<128xf32> to vector<1x128xf32>
    %10 = vector.shape_cast %6 : vector<1x128xf32> to vector<1x1x128xf32>
    %c0_7 = arith.constant 0 : index
    %c0_8 = arith.constant 0 : index
    %c0_9 = arith.constant 0 : index
    %11 = vector.load %arg4[%c0_7, %c0_8, %c0_9] : memref<1x1x128xf32, #tpu.memory_space<vmem>>, vector<1x1x128xf32>
    tpu.vector_store %arg4[%c0_7, %c0_8, %c0_9], %10 {strides = array<i32>} : memref<1x1x128xf32, #tpu.memory_space<vmem>>, vector<1x1x128xf32>,
    %12 = vector.shape_cast %9 : vector<1x128xf32> to vector<1x1x128xf32>
    %c0_10 = arith.constant 0 : index
    %c0_11 = arith.constant 0 : index
    %c0_12 = arith.constant 0 : index
    %13 = vector.load %arg5[%c0_10, %c0_11, %c0_12] : memref<1x1x128xf32, #tpu.memory_space<vmem>>, vector<1x1x128xf32>
    tpu.vector_store %arg5[%c0_10, %c0_11, %c0_12], %12 {strides = array<i32>} : memref<1x1x128xf32, #tpu.memory_space<vmem>>, vector<1x1x128xf32>,
    return
  }
  func.func @transform_0(%arg0: i32) -> (i32, i32) {
    %c0_i32 = arith.constant 0 : i32
    %c0_i32_0 = arith.constant 0 : i32
    return %arg0, %c0_i32 : i32, i32
  }
  func.func @transform_1(%arg0: i32) -> (i32, i32) {
    %c0_i32 = arith.constant 0 : i32
    %c0_i32_0 = arith.constant 0 : i32
    %c0_i32_1 = arith.constant 0 : i32
    return %c0_i32, %c0_i32_0 : i32, i32
  }
  func.func @transform_2(%arg0: i32) -> (i32, i32) {
    %c0_i32 = arith.constant 0 : i32
    %c0_i32_0 = arith.constant 0 : i32
    return %arg0, %c0_i32 : i32, i32
  }
  func.func @transform_3(%arg0: i32) -> (i32, i32, i32) {
    %c0_i32 = arith.constant 0 : i32
    %c0_i32_0 = arith.constant 0 : i32
    %c0_i32_1 = arith.constant 0 : i32
    return %arg0, %c0_i32, %c0_i32_0 : i32, i32, i32
  }
  func.func @transform_4(%arg0: i32) -> (i32, i32, i32) {
    %c0_i32 = arith.constant 0 : i32
    %c0_i32_0 = arith.constant 0 : i32
    %c0_i32_1 = arith.constant 0 : i32
    return %arg0, %c0_i32, %c0_i32_0 : i32, i32, i32
  }
}

module attributes {stable_mosaic.version = 11 : i64} {
  func.func @_affine_lrelu_kernel(%arg0: i32, %arg1: memref<32x128xbf16, #tpu.memory_space<vmem>>, %arg2: memref<1x128xf32, #tpu.memory_space<vmem>>, %arg3: memref<1x128xf32, #tpu.memory_space<vmem>>, %arg4: memref<32x128xbf16, #tpu.memory_space<vmem>>) attributes {dimension_semantics = [#tpu.dimension_semantics<parallel>], iteration_bounds = array<i64: 1>, scalar_prefetch = 0 : i64, scratch_operands = 0 : i64, tpu.core_type = #tpu.core_type<tc>, window_params = [{transform_indices = @transform_0, window_bounds = array<i64: 32, 128>}, {pipeline_mode = #tpu.pipeline_mode<synchronous>, transform_indices = @transform_1, window_bounds = array<i64: 1, 128>}, {pipeline_mode = #tpu.pipeline_mode<synchronous>, transform_indices = @transform_2, window_bounds = array<i64: 1, 128>}, {transform_indices = @transform_3, window_bounds = array<i64: 32, 128>}]} {
    %c0 = arith.constant 0 : index
    %c0_0 = arith.constant 0 : index
    %0 = vector.load %arg1[%c0, %c0_0] : memref<32x128xbf16, #tpu.memory_space<vmem>>, vector<32x128xbf16>
    %1 = arith.extf %0 : vector<32x128xbf16> to vector<32x128xf32>
    %c0_1 = arith.constant 0 : index
    %c0_2 = arith.constant 0 : index
    %2 = vector.load %arg2[%c0_1, %c0_2] : memref<1x128xf32, #tpu.memory_space<vmem>>, vector<1x128xf32>
    %3 = vector.broadcast %2 : vector<1x128xf32> to vector<32x128xf32>
    %4 = arith.mulf %1, %3 : vector<32x128xf32>
    %c0_3 = arith.constant 0 : index
    %c0_4 = arith.constant 0 : index
    %5 = vector.load %arg3[%c0_3, %c0_4] : memref<1x128xf32, #tpu.memory_space<vmem>>, vector<1x128xf32>
    %6 = vector.broadcast %5 : vector<1x128xf32> to vector<32x128xf32>
    %7 = arith.addf %4, %6 : vector<32x128xf32>
    %cst = arith.constant 2.000000e-01 : f32
    %8 = vector.broadcast %cst : f32 to vector<32x128xf32>
    %9 = arith.mulf %8, %7 : vector<32x128xf32>
    %10 = arith.maximumf %7, %9 : vector<32x128xf32>
    %11 = arith.truncf %10 : vector<32x128xf32> to vector<32x128xbf16>
    %c0_5 = arith.constant 0 : index
    %c0_6 = arith.constant 0 : index
    %12 = vector.load %arg4[%c0_5, %c0_6] : memref<32x128xbf16, #tpu.memory_space<vmem>>, vector<32x128xbf16>
    tpu.vector_store %arg4[%c0_5, %c0_6], %11 {strides = array<i32>} : memref<32x128xbf16, #tpu.memory_space<vmem>>, vector<32x128xbf16>,
    return
  }
  func.func @transform_0(%arg0: i32) -> (i32, i32) {
    %c0_i32 = arith.constant 0 : i32
    %c0_i32_0 = arith.constant 0 : i32
    return %arg0, %c0_i32 : i32, i32
  }
  func.func @transform_1(%arg0: i32) -> (i32, i32) {
    %c0_i32 = arith.constant 0 : i32
    %c0_i32_0 = arith.constant 0 : i32
    %c0_i32_1 = arith.constant 0 : i32
    return %c0_i32, %c0_i32_0 : i32, i32
  }
  func.func @transform_2(%arg0: i32) -> (i32, i32) {
    %c0_i32 = arith.constant 0 : i32
    %c0_i32_0 = arith.constant 0 : i32
    %c0_i32_1 = arith.constant 0 : i32
    return %c0_i32, %c0_i32_0 : i32, i32
  }
  func.func @transform_3(%arg0: i32) -> (i32, i32) {
    %c0_i32 = arith.constant 0 : i32
    %c0_i32_0 = arith.constant 0 : i32
    return %arg0, %c0_i32 : i32, i32
  }
}

module attributes {stable_mosaic.version = 11 : i64} {
  func.func @_matmul_stats_kernel(%arg0: i32, %arg1: memref<8x2048xbf16, #tpu.memory_space<vmem>>, %arg2: memref<2048x256xbf16, #tpu.memory_space<vmem>>, %arg3: memref<8x256xbf16, #tpu.memory_space<vmem>>, %arg4: memref<1x1x256xf32, #tpu.memory_space<vmem>>, %arg5: memref<1x1x256xf32, #tpu.memory_space<vmem>>) attributes {dimension_semantics = [#tpu.dimension_semantics<parallel>], iteration_bounds = array<i64: 1>, scalar_prefetch = 0 : i64, scratch_operands = 0 : i64, tpu.core_type = #tpu.core_type<tc>, window_params = [{transform_indices = @transform_0, window_bounds = array<i64: 8, 2048>}, {pipeline_mode = #tpu.pipeline_mode<synchronous>, transform_indices = @transform_1, window_bounds = array<i64: 2048, 256>}, {transform_indices = @transform_2, window_bounds = array<i64: 8, 256>}, {transform_indices = @transform_3, window_bounds = array<i64: 1, 1, 256>}, {transform_indices = @transform_4, window_bounds = array<i64: 1, 1, 256>}]} {
    %c0 = arith.constant 0 : index
    %c0_0 = arith.constant 0 : index
    %0 = vector.load %arg1[%c0, %c0_0] : memref<8x2048xbf16, #tpu.memory_space<vmem>>, vector<8x2048xbf16>
    %c0_1 = arith.constant 0 : index
    %c0_2 = arith.constant 0 : index
    %1 = vector.load %arg2[%c0_1, %c0_2] : memref<2048x256xbf16, #tpu.memory_space<vmem>>, vector<2048x256xbf16>
    %cst = arith.constant dense<0.000000e+00> : vector<8x256xf32>
    %2 = tpu.matmul %0, %1, %cst {dimension_numbers = #tpu.dot_dimension_numbers<[1], [0], [0], [1], [0, 0, 1, 1], [], []>} : vector<8x2048xbf16>, vector<2048x256xbf16>, vector<8x256xf32> -> vector<8x256xf32>
    %3 = arith.truncf %2 : vector<8x256xf32> to vector<8x256xbf16>
    %c0_3 = arith.constant 0 : index
    %c0_4 = arith.constant 0 : index
    %4 = vector.load %arg3[%c0_3, %c0_4] : memref<8x256xbf16, #tpu.memory_space<vmem>>, vector<8x256xbf16>
    tpu.vector_store %arg3[%c0_3, %c0_4], %3 {strides = array<i32>} : memref<8x256xbf16, #tpu.memory_space<vmem>>, vector<8x256xbf16>,
    %cst_5 = arith.constant dense<0.000000e+00> : vector<256xf32>
    %5 = vector.multi_reduction <add>, %2, %cst_5 [0] : vector<8x256xf32> to vector<256xf32>
    %6 = vector.shape_cast %5 : vector<256xf32> to vector<1x256xf32>
    %7 = arith.mulf %2, %2 : vector<8x256xf32>
    %cst_6 = arith.constant dense<0.000000e+00> : vector<256xf32>
    %8 = vector.multi_reduction <add>, %7, %cst_6 [0] : vector<8x256xf32> to vector<256xf32>
    %9 = vector.shape_cast %8 : vector<256xf32> to vector<1x256xf32>
    %10 = vector.shape_cast %6 : vector<1x256xf32> to vector<1x1x256xf32>
    %c0_7 = arith.constant 0 : index
    %c0_8 = arith.constant 0 : index
    %c0_9 = arith.constant 0 : index
    %11 = vector.load %arg4[%c0_7, %c0_8, %c0_9] : memref<1x1x256xf32, #tpu.memory_space<vmem>>, vector<1x1x256xf32>
    tpu.vector_store %arg4[%c0_7, %c0_8, %c0_9], %10 {strides = array<i32>} : memref<1x1x256xf32, #tpu.memory_space<vmem>>, vector<1x1x256xf32>,
    %12 = vector.shape_cast %9 : vector<1x256xf32> to vector<1x1x256xf32>
    %c0_10 = arith.constant 0 : index
    %c0_11 = arith.constant 0 : index
    %c0_12 = arith.constant 0 : index
    %13 = vector.load %arg5[%c0_10, %c0_11, %c0_12] : memref<1x1x256xf32, #tpu.memory_space<vmem>>, vector<1x1x256xf32>
    tpu.vector_store %arg5[%c0_10, %c0_11, %c0_12], %12 {strides = array<i32>} : memref<1x1x256xf32, #tpu.memory_space<vmem>>, vector<1x1x256xf32>,
    return
  }
  func.func @transform_0(%arg0: i32) -> (i32, i32) {
    %c0_i32 = arith.constant 0 : i32
    %c0_i32_0 = arith.constant 0 : i32
    return %arg0, %c0_i32 : i32, i32
  }
  func.func @transform_1(%arg0: i32) -> (i32, i32) {
    %c0_i32 = arith.constant 0 : i32
    %c0_i32_0 = arith.constant 0 : i32
    %c0_i32_1 = arith.constant 0 : i32
    return %c0_i32, %c0_i32_0 : i32, i32
  }
  func.func @transform_2(%arg0: i32) -> (i32, i32) {
    %c0_i32 = arith.constant 0 : i32
    %c0_i32_0 = arith.constant 0 : i32
    return %arg0, %c0_i32 : i32, i32
  }
  func.func @transform_3(%arg0: i32) -> (i32, i32, i32) {
    %c0_i32 = arith.constant 0 : i32
    %c0_i32_0 = arith.constant 0 : i32
    %c0_i32_1 = arith.constant 0 : i32
    return %arg0, %c0_i32, %c0_i32_0 : i32, i32, i32
  }
  func.func @transform_4(%arg0: i32) -> (i32, i32, i32) {
    %c0_i32 = arith.constant 0 : i32
    %c0_i32_0 = arith.constant 0 : i32
    %c0_i32_1 = arith.constant 0 : i32
    return %arg0, %c0_i32, %c0_i32_0 : i32, i32, i32
  }
}

module attributes {stable_mosaic.version = 11 : i64} {
  func.func @_affine_lrelu_kernel(%arg0: i32, %arg1: memref<8x256xbf16, #tpu.memory_space<vmem>>, %arg2: memref<1x256xf32, #tpu.memory_space<vmem>>, %arg3: memref<1x256xf32, #tpu.memory_space<vmem>>, %arg4: memref<8x256xbf16, #tpu.memory_space<vmem>>) attributes {dimension_semantics = [#tpu.dimension_semantics<parallel>], iteration_bounds = array<i64: 1>, scalar_prefetch = 0 : i64, scratch_operands = 0 : i64, tpu.core_type = #tpu.core_type<tc>, window_params = [{transform_indices = @transform_0, window_bounds = array<i64: 8, 256>}, {pipeline_mode = #tpu.pipeline_mode<synchronous>, transform_indices = @transform_1, window_bounds = array<i64: 1, 256>}, {pipeline_mode = #tpu.pipeline_mode<synchronous>, transform_indices = @transform_2, window_bounds = array<i64: 1, 256>}, {transform_indices = @transform_3, window_bounds = array<i64: 8, 256>}]} {
    %c0 = arith.constant 0 : index
    %c0_0 = arith.constant 0 : index
    %0 = vector.load %arg1[%c0, %c0_0] : memref<8x256xbf16, #tpu.memory_space<vmem>>, vector<8x256xbf16>
    %1 = arith.extf %0 : vector<8x256xbf16> to vector<8x256xf32>
    %c0_1 = arith.constant 0 : index
    %c0_2 = arith.constant 0 : index
    %2 = vector.load %arg2[%c0_1, %c0_2] : memref<1x256xf32, #tpu.memory_space<vmem>>, vector<1x256xf32>
    %3 = vector.broadcast %2 : vector<1x256xf32> to vector<8x256xf32>
    %4 = arith.mulf %1, %3 : vector<8x256xf32>
    %c0_3 = arith.constant 0 : index
    %c0_4 = arith.constant 0 : index
    %5 = vector.load %arg3[%c0_3, %c0_4] : memref<1x256xf32, #tpu.memory_space<vmem>>, vector<1x256xf32>
    %6 = vector.broadcast %5 : vector<1x256xf32> to vector<8x256xf32>
    %7 = arith.addf %4, %6 : vector<8x256xf32>
    %cst = arith.constant 2.000000e-01 : f32
    %8 = vector.broadcast %cst : f32 to vector<8x256xf32>
    %9 = arith.mulf %8, %7 : vector<8x256xf32>
    %10 = arith.maximumf %7, %9 : vector<8x256xf32>
    %11 = arith.truncf %10 : vector<8x256xf32> to vector<8x256xbf16>
    %c0_5 = arith.constant 0 : index
    %c0_6 = arith.constant 0 : index
    %12 = vector.load %arg4[%c0_5, %c0_6] : memref<8x256xbf16, #tpu.memory_space<vmem>>, vector<8x256xbf16>
    tpu.vector_store %arg4[%c0_5, %c0_6], %11 {strides = array<i32>} : memref<8x256xbf16, #tpu.memory_space<vmem>>, vector<8x256xbf16>,
    return
  }
  func.func @transform_0(%arg0: i32) -> (i32, i32) {
    %c0_i32 = arith.constant 0 : i32
    %c0_i32_0 = arith.constant 0 : i32
    return %arg0, %c0_i32 : i32, i32
  }
  func.func @transform_1(%arg0: i32) -> (i32, i32) {
    %c0_i32 = arith.constant 0 : i32
    %c0_i32_0 = arith.constant 0 : i32
    %c0_i32_1 = arith.constant 0 : i32
    return %c0_i32, %c0_i32_0 : i32, i32
  }
  func.func @transform_2(%arg0: i32) -> (i32, i32) {
    %c0_i32 = arith.constant 0 : i32
    %c0_i32_0 = arith.constant 0 : i32
    %c0_i32_1 = arith.constant 0 : i32
    return %c0_i32, %c0_i32_0 : i32, i32
  }
  func.func @transform_3(%arg0: i32) -> (i32, i32) {
    %c0_i32 = arith.constant 0 : i32
    %c0_i32_0 = arith.constant 0 : i32
    return %arg0, %c0_i32 : i32, i32
  }
}

module attributes {stable_mosaic.version = 11 : i64} {
  func.func @kernel(%arg0: i32, %arg1: memref<8x256xbf16, #tpu.memory_space<vmem>>, %arg2: memref<256x128xbf16, #tpu.memory_space<vmem>>, %arg3: memref<1x128xf32, #tpu.memory_space<vmem>>, %arg4: memref<8x128xf32, #tpu.memory_space<vmem>>) attributes {dimension_semantics = [#tpu.dimension_semantics<parallel>], iteration_bounds = array<i64: 1>, scalar_prefetch = 0 : i64, scratch_operands = 0 : i64, tpu.core_type = #tpu.core_type<tc>, window_params = [{transform_indices = @transform_0, window_bounds = array<i64: 8, 256>}, {pipeline_mode = #tpu.pipeline_mode<synchronous>, transform_indices = @transform_1, window_bounds = array<i64: 256, 128>}, {pipeline_mode = #tpu.pipeline_mode<synchronous>, transform_indices = @transform_2, window_bounds = array<i64: 1, 128>}, {transform_indices = @transform_3, window_bounds = array<i64: 8, 128>}]} {
    %c0 = arith.constant 0 : index
    %c0_0 = arith.constant 0 : index
    %0 = vector.load %arg1[%c0, %c0_0] : memref<8x256xbf16, #tpu.memory_space<vmem>>, vector<8x256xbf16>
    %c0_1 = arith.constant 0 : index
    %c0_2 = arith.constant 0 : index
    %1 = vector.load %arg2[%c0_1, %c0_2] : memref<256x128xbf16, #tpu.memory_space<vmem>>, vector<256x128xbf16>
    %cst = arith.constant dense<0.000000e+00> : vector<8x128xf32>
    %2 = tpu.matmul %0, %1, %cst {dimension_numbers = #tpu.dot_dimension_numbers<[1], [0], [0], [1], [0, 0, 1, 1], [], []>} : vector<8x256xbf16>, vector<256x128xbf16>, vector<8x128xf32> -> vector<8x128xf32>
    %c0_3 = arith.constant 0 : index
    %c0_4 = arith.constant 0 : index
    %3 = vector.load %arg3[%c0_3, %c0_4] : memref<1x128xf32, #tpu.memory_space<vmem>>, vector<1x128xf32>
    %4 = vector.broadcast %3 : vector<1x128xf32> to vector<8x128xf32>
    %5 = arith.addf %2, %4 : vector<8x128xf32>
    %6 = tpu.iota {dimensions = array<i32: 1>} : vector<8x128xi32>
    %c8_i32 = arith.constant 8 : i32
    %7 = vector.broadcast %c8_i32 : i32 to vector<8x128xi32>
    %8 = arith.cmpi sge, %6, %7 : vector<8x128xi32>
    %cst_5 = arith.constant -1.000000e+01 : f32
    %cst_6 = arith.constant 1.000000e+01 : f32
    %9 = vector.broadcast %cst_5 : f32 to vector<8x128xf32>
    %10 = arith.maximumf %9, %5 : vector<8x128xf32>
    %11 = vector.broadcast %cst_6 : f32 to vector<8x128xf32>
    %12 = arith.minimumf %11, %10 : vector<8x128xf32>
    %13 = arith.select %8, %12, %5 : vector<8x128xi1>, vector<8x128xf32>
    %c0_7 = arith.constant 0 : index
    %c0_8 = arith.constant 0 : index
    %14 = vector.load %arg4[%c0_7, %c0_8] : memref<8x128xf32, #tpu.memory_space<vmem>>, vector<8x128xf32>
    tpu.vector_store %arg4[%c0_7, %c0_8], %13 {strides = array<i32>} : memref<8x128xf32, #tpu.memory_space<vmem>>, vector<8x128xf32>,
    return
  }
  func.func @transform_0(%arg0: i32) -> (i32, i32) {
    %c0_i32 = arith.constant 0 : i32
    %c0_i32_0 = arith.constant 0 : i32
    return %arg0, %c0_i32 : i32, i32
  }
  func.func @transform_1(%arg0: i32) -> (i32, i32) {
    %c0_i32 = arith.constant 0 : i32
    %c0_i32_0 = arith.constant 0 : i32
    %c0_i32_1 = arith.constant 0 : i32
    return %c0_i32, %c0_i32_0 : i32, i32
  }
  func.func @transform_2(%arg0: i32) -> (i32, i32) {
    %c0_i32 = arith.constant 0 : i32
    %c0_i32_0 = arith.constant 0 : i32
    %c0_i32_1 = arith.constant 0 : i32
    return %c0_i32, %c0_i32_0 : i32, i32
  }
  func.func @transform_3(%arg0: i32) -> (i32, i32) {
    %c0_i32 = arith.constant 0 : i32
    %c0_i32_0 = arith.constant 0 : i32
    return %arg0, %c0_i32 : i32, i32
  }
}

module attributes {stable_mosaic.version = 11 : i64} {
  func.func @_reparam_kernel(%arg0: i32, %arg1: memref<8x8xf32, #tpu.memory_space<vmem>>, %arg2: memref<8x8xf32, #tpu.memory_space<vmem>>, %arg3: memref<8x8xf32, #tpu.memory_space<vmem>>, %arg4: memref<8x8xf32, #tpu.memory_space<vmem>>) attributes {dimension_semantics = [#tpu.dimension_semantics<parallel>], iteration_bounds = array<i64: 1>, scalar_prefetch = 0 : i64, scratch_operands = 0 : i64, tpu.core_type = #tpu.core_type<tc>, window_params = [{transform_indices = @transform_0, window_bounds = array<i64: 8, 8>}, {transform_indices = @transform_1, window_bounds = array<i64: 8, 8>}, {transform_indices = @transform_2, window_bounds = array<i64: 8, 8>}, {transform_indices = @transform_3, window_bounds = array<i64: 8, 8>}]} {
    %c0 = arith.constant 0 : index
    %c0_0 = arith.constant 0 : index
    %0 = vector.load %arg1[%c0, %c0_0] : memref<8x8xf32, #tpu.memory_space<vmem>>, vector<8x8xf32>
    %c0_1 = arith.constant 0 : index
    %c0_2 = arith.constant 0 : index
    %1 = vector.load %arg3[%c0_1, %c0_2] : memref<8x8xf32, #tpu.memory_space<vmem>>, vector<8x8xf32>
    %c0_3 = arith.constant 0 : index
    %c0_4 = arith.constant 0 : index
    %2 = vector.load %arg2[%c0_3, %c0_4] : memref<8x8xf32, #tpu.memory_space<vmem>>, vector<8x8xf32>
    %cst = arith.constant 5.000000e-01 : f32
    %3 = vector.broadcast %cst : f32 to vector<8x8xf32>
    %4 = arith.mulf %3, %2 : vector<8x8xf32>
    %5 = math.exp %4 : vector<8x8xf32>
    %6 = arith.mulf %1, %5 : vector<8x8xf32>
    %7 = arith.addf %0, %6 : vector<8x8xf32>
    %c0_5 = arith.constant 0 : index
    %c0_6 = arith.constant 0 : index
    %8 = vector.load %arg4[%c0_5, %c0_6] : memref<8x8xf32, #tpu.memory_space<vmem>>, vector<8x8xf32>
    tpu.vector_store %arg4[%c0_5, %c0_6], %7 {strides = array<i32>} : memref<8x8xf32, #tpu.memory_space<vmem>>, vector<8x8xf32>,
    return
  }
  func.func @transform_0(%arg0: i32) -> (i32, i32) {
    %c0_i32 = arith.constant 0 : i32
    %c0_i32_0 = arith.constant 0 : i32
    return %arg0, %c0_i32 : i32, i32
  }
  func.func @transform_1(%arg0: i32) -> (i32, i32) {
    %c0_i32 = arith.constant 0 : i32
    %c0_i32_0 = arith.constant 0 : i32
    return %arg0, %c0_i32 : i32, i32
  }
  func.func @transform_2(%arg0: i32) -> (i32, i32) {
    %c0_i32 = arith.constant 0 : i32
    %c0_i32_0 = arith.constant 0 : i32
    return %arg0, %c0_i32 : i32, i32
  }
  func.func @transform_3(%arg0: i32) -> (i32, i32) {
    %c0_i32 = arith.constant 0 : i32
    %c0_i32_0 = arith.constant 0 : i32
    return %arg0, %c0_i32 : i32, i32
  }
}

module attributes {stable_mosaic.version = 11 : i64} {
  func.func @_matmul_stats_kernel(%arg0: i32, %arg1: memref<8x8xbf16, #tpu.memory_space<vmem>>, %arg2: memref<8x256xbf16, #tpu.memory_space<vmem>>, %arg3: memref<8x256xbf16, #tpu.memory_space<vmem>>, %arg4: memref<1x1x256xf32, #tpu.memory_space<vmem>>, %arg5: memref<1x1x256xf32, #tpu.memory_space<vmem>>) attributes {dimension_semantics = [#tpu.dimension_semantics<parallel>], iteration_bounds = array<i64: 1>, scalar_prefetch = 0 : i64, scratch_operands = 0 : i64, tpu.core_type = #tpu.core_type<tc>, window_params = [{transform_indices = @transform_0, window_bounds = array<i64: 8, 8>}, {pipeline_mode = #tpu.pipeline_mode<synchronous>, transform_indices = @transform_1, window_bounds = array<i64: 8, 256>}, {transform_indices = @transform_2, window_bounds = array<i64: 8, 256>}, {transform_indices = @transform_3, window_bounds = array<i64: 1, 1, 256>}, {transform_indices = @transform_4, window_bounds = array<i64: 1, 1, 256>}]} {
    %c0 = arith.constant 0 : index
    %c0_0 = arith.constant 0 : index
    %0 = vector.load %arg1[%c0, %c0_0] : memref<8x8xbf16, #tpu.memory_space<vmem>>, vector<8x8xbf16>
    %c0_1 = arith.constant 0 : index
    %c0_2 = arith.constant 0 : index
    %1 = vector.load %arg2[%c0_1, %c0_2] : memref<8x256xbf16, #tpu.memory_space<vmem>>, vector<8x256xbf16>
    %cst = arith.constant dense<0.000000e+00> : vector<8x256xf32>
    %2 = tpu.matmul %0, %1, %cst {dimension_numbers = #tpu.dot_dimension_numbers<[1], [0], [0], [1], [0, 0, 1, 1], [], []>} : vector<8x8xbf16>, vector<8x256xbf16>, vector<8x256xf32> -> vector<8x256xf32>
    %3 = arith.truncf %2 : vector<8x256xf32> to vector<8x256xbf16>
    %c0_3 = arith.constant 0 : index
    %c0_4 = arith.constant 0 : index
    %4 = vector.load %arg3[%c0_3, %c0_4] : memref<8x256xbf16, #tpu.memory_space<vmem>>, vector<8x256xbf16>
    tpu.vector_store %arg3[%c0_3, %c0_4], %3 {strides = array<i32>} : memref<8x256xbf16, #tpu.memory_space<vmem>>, vector<8x256xbf16>,
    %cst_5 = arith.constant dense<0.000000e+00> : vector<256xf32>
    %5 = vector.multi_reduction <add>, %2, %cst_5 [0] : vector<8x256xf32> to vector<256xf32>
    %6 = vector.shape_cast %5 : vector<256xf32> to vector<1x256xf32>
    %7 = arith.mulf %2, %2 : vector<8x256xf32>
    %cst_6 = arith.constant dense<0.000000e+00> : vector<256xf32>
    %8 = vector.multi_reduction <add>, %7, %cst_6 [0] : vector<8x256xf32> to vector<256xf32>
    %9 = vector.shape_cast %8 : vector<256xf32> to vector<1x256xf32>
    %10 = vector.shape_cast %6 : vector<1x256xf32> to vector<1x1x256xf32>
    %c0_7 = arith.constant 0 : index
    %c0_8 = arith.constant 0 : index
    %c0_9 = arith.constant 0 : index
    %11 = vector.load %arg4[%c0_7, %c0_8, %c0_9] : memref<1x1x256xf32, #tpu.memory_space<vmem>>, vector<1x1x256xf32>
    tpu.vector_store %arg4[%c0_7, %c0_8, %c0_9], %10 {strides = array<i32>} : memref<1x1x256xf32, #tpu.memory_space<vmem>>, vector<1x1x256xf32>,
    %12 = vector.shape_cast %9 : vector<1x256xf32> to vector<1x1x256xf32>
    %c0_10 = arith.constant 0 : index
    %c0_11 = arith.constant 0 : index
    %c0_12 = arith.constant 0 : index
    %13 = vector.load %arg5[%c0_10, %c0_11, %c0_12] : memref<1x1x256xf32, #tpu.memory_space<vmem>>, vector<1x1x256xf32>
    tpu.vector_store %arg5[%c0_10, %c0_11, %c0_12], %12 {strides = array<i32>} : memref<1x1x256xf32, #tpu.memory_space<vmem>>, vector<1x1x256xf32>,
    return
  }
  func.func @transform_0(%arg0: i32) -> (i32, i32) {
    %c0_i32 = arith.constant 0 : i32
    %c0_i32_0 = arith.constant 0 : i32
    return %arg0, %c0_i32 : i32, i32
  }
  func.func @transform_1(%arg0: i32) -> (i32, i32) {
    %c0_i32 = arith.constant 0 : i32
    %c0_i32_0 = arith.constant 0 : i32
    %c0_i32_1 = arith.constant 0 : i32
    return %c0_i32, %c0_i32_0 : i32, i32
  }
  func.func @transform_2(%arg0: i32) -> (i32, i32) {
    %c0_i32 = arith.constant 0 : i32
    %c0_i32_0 = arith.constant 0 : i32
    return %arg0, %c0_i32 : i32, i32
  }
  func.func @transform_3(%arg0: i32) -> (i32, i32, i32) {
    %c0_i32 = arith.constant 0 : i32
    %c0_i32_0 = arith.constant 0 : i32
    %c0_i32_1 = arith.constant 0 : i32
    return %arg0, %c0_i32, %c0_i32_0 : i32, i32, i32
  }
  func.func @transform_4(%arg0: i32) -> (i32, i32, i32) {
    %c0_i32 = arith.constant 0 : i32
    %c0_i32_0 = arith.constant 0 : i32
    %c0_i32_1 = arith.constant 0 : i32
    return %arg0, %c0_i32, %c0_i32_0 : i32, i32, i32
  }
}

module attributes {stable_mosaic.version = 11 : i64} {
  func.func @_affine_lrelu_kernel(%arg0: i32, %arg1: memref<8x512xbf16, #tpu.memory_space<vmem>>, %arg2: memref<1x512xf32, #tpu.memory_space<vmem>>, %arg3: memref<1x512xf32, #tpu.memory_space<vmem>>, %arg4: memref<8x512xbf16, #tpu.memory_space<vmem>>) attributes {dimension_semantics = [#tpu.dimension_semantics<parallel>], iteration_bounds = array<i64: 1>, scalar_prefetch = 0 : i64, scratch_operands = 0 : i64, tpu.core_type = #tpu.core_type<tc>, window_params = [{transform_indices = @transform_0, window_bounds = array<i64: 8, 512>}, {pipeline_mode = #tpu.pipeline_mode<synchronous>, transform_indices = @transform_1, window_bounds = array<i64: 1, 512>}, {pipeline_mode = #tpu.pipeline_mode<synchronous>, transform_indices = @transform_2, window_bounds = array<i64: 1, 512>}, {transform_indices = @transform_3, window_bounds = array<i64: 8, 512>}]} {
    %c0 = arith.constant 0 : index
    %c0_0 = arith.constant 0 : index
    %0 = vector.load %arg1[%c0, %c0_0] : memref<8x512xbf16, #tpu.memory_space<vmem>>, vector<8x512xbf16>
    %1 = arith.extf %0 : vector<8x512xbf16> to vector<8x512xf32>
    %c0_1 = arith.constant 0 : index
    %c0_2 = arith.constant 0 : index
    %2 = vector.load %arg2[%c0_1, %c0_2] : memref<1x512xf32, #tpu.memory_space<vmem>>, vector<1x512xf32>
    %3 = vector.broadcast %2 : vector<1x512xf32> to vector<8x512xf32>
    %4 = arith.mulf %1, %3 : vector<8x512xf32>
    %c0_3 = arith.constant 0 : index
    %c0_4 = arith.constant 0 : index
    %5 = vector.load %arg3[%c0_3, %c0_4] : memref<1x512xf32, #tpu.memory_space<vmem>>, vector<1x512xf32>
    %6 = vector.broadcast %5 : vector<1x512xf32> to vector<8x512xf32>
    %7 = arith.addf %4, %6 : vector<8x512xf32>
    %cst = arith.constant 2.000000e-01 : f32
    %8 = vector.broadcast %cst : f32 to vector<8x512xf32>
    %9 = arith.mulf %8, %7 : vector<8x512xf32>
    %10 = arith.maximumf %7, %9 : vector<8x512xf32>
    %11 = arith.truncf %10 : vector<8x512xf32> to vector<8x512xbf16>
    %c0_5 = arith.constant 0 : index
    %c0_6 = arith.constant 0 : index
    %12 = vector.load %arg4[%c0_5, %c0_6] : memref<8x512xbf16, #tpu.memory_space<vmem>>, vector<8x512xbf16>
    tpu.vector_store %arg4[%c0_5, %c0_6], %11 {strides = array<i32>} : memref<8x512xbf16, #tpu.memory_space<vmem>>, vector<8x512xbf16>,
    return
  }
  func.func @transform_0(%arg0: i32) -> (i32, i32) {
    %c0_i32 = arith.constant 0 : i32
    %c0_i32_0 = arith.constant 0 : i32
    return %arg0, %c0_i32 : i32, i32
  }
  func.func @transform_1(%arg0: i32) -> (i32, i32) {
    %c0_i32 = arith.constant 0 : i32
    %c0_i32_0 = arith.constant 0 : i32
    %c0_i32_1 = arith.constant 0 : i32
    return %c0_i32, %c0_i32_0 : i32, i32
  }
  func.func @transform_2(%arg0: i32) -> (i32, i32) {
    %c0_i32 = arith.constant 0 : i32
    %c0_i32_0 = arith.constant 0 : i32
    %c0_i32_1 = arith.constant 0 : i32
    return %c0_i32, %c0_i32_0 : i32, i32
  }
  func.func @transform_3(%arg0: i32) -> (i32, i32) {
    %c0_i32 = arith.constant 0 : i32
    %c0_i32_0 = arith.constant 0 : i32
    return %arg0, %c0_i32 : i32, i32
  }
}

module attributes {stable_mosaic.version = 11 : i64} {
  func.func @_matmul_stats_kernel(%arg0: i32, %arg1: memref<8x2304xbf16, #tpu.memory_space<vmem>>, %arg2: memref<2304x512xbf16, #tpu.memory_space<vmem>>, %arg3: memref<8x512xbf16, #tpu.memory_space<vmem>>, %arg4: memref<1x1x512xf32, #tpu.memory_space<vmem>>, %arg5: memref<1x1x512xf32, #tpu.memory_space<vmem>>) attributes {dimension_semantics = [#tpu.dimension_semantics<parallel>], iteration_bounds = array<i64: 1>, scalar_prefetch = 0 : i64, scratch_operands = 0 : i64, tpu.core_type = #tpu.core_type<tc>, window_params = [{transform_indices = @transform_0, window_bounds = array<i64: 8, 2304>}, {pipeline_mode = #tpu.pipeline_mode<synchronous>, transform_indices = @transform_1, window_bounds = array<i64: 2304, 512>}, {transform_indices = @transform_2, window_bounds = array<i64: 8, 512>}, {transform_indices = @transform_3, window_bounds = array<i64: 1, 1, 512>}, {transform_indices = @transform_4, window_bounds = array<i64: 1, 1, 512>}]} {
    %c0 = arith.constant 0 : index
    %c0_0 = arith.constant 0 : index
    %0 = vector.load %arg1[%c0, %c0_0] : memref<8x2304xbf16, #tpu.memory_space<vmem>>, vector<8x2304xbf16>
    %c0_1 = arith.constant 0 : index
    %c0_2 = arith.constant 0 : index
    %1 = vector.load %arg2[%c0_1, %c0_2] : memref<2304x512xbf16, #tpu.memory_space<vmem>>, vector<2304x512xbf16>
    %cst = arith.constant dense<0.000000e+00> : vector<8x512xf32>
    %2 = tpu.matmul %0, %1, %cst {dimension_numbers = #tpu.dot_dimension_numbers<[1], [0], [0], [1], [0, 0, 1, 1], [], []>} : vector<8x2304xbf16>, vector<2304x512xbf16>, vector<8x512xf32> -> vector<8x512xf32>
    %3 = arith.truncf %2 : vector<8x512xf32> to vector<8x512xbf16>
    %c0_3 = arith.constant 0 : index
    %c0_4 = arith.constant 0 : index
    %4 = vector.load %arg3[%c0_3, %c0_4] : memref<8x512xbf16, #tpu.memory_space<vmem>>, vector<8x512xbf16>
    tpu.vector_store %arg3[%c0_3, %c0_4], %3 {strides = array<i32>} : memref<8x512xbf16, #tpu.memory_space<vmem>>, vector<8x512xbf16>,
    %cst_5 = arith.constant dense<0.000000e+00> : vector<512xf32>
    %5 = vector.multi_reduction <add>, %2, %cst_5 [0] : vector<8x512xf32> to vector<512xf32>
    %6 = vector.shape_cast %5 : vector<512xf32> to vector<1x512xf32>
    %7 = arith.mulf %2, %2 : vector<8x512xf32>
    %cst_6 = arith.constant dense<0.000000e+00> : vector<512xf32>
    %8 = vector.multi_reduction <add>, %7, %cst_6 [0] : vector<8x512xf32> to vector<512xf32>
    %9 = vector.shape_cast %8 : vector<512xf32> to vector<1x512xf32>
    %10 = vector.shape_cast %6 : vector<1x512xf32> to vector<1x1x512xf32>
    %c0_7 = arith.constant 0 : index
    %c0_8 = arith.constant 0 : index
    %c0_9 = arith.constant 0 : index
    %11 = vector.load %arg4[%c0_7, %c0_8, %c0_9] : memref<1x1x512xf32, #tpu.memory_space<vmem>>, vector<1x1x512xf32>
    tpu.vector_store %arg4[%c0_7, %c0_8, %c0_9], %10 {strides = array<i32>} : memref<1x1x512xf32, #tpu.memory_space<vmem>>, vector<1x1x512xf32>,
    %12 = vector.shape_cast %9 : vector<1x512xf32> to vector<1x1x512xf32>
    %c0_10 = arith.constant 0 : index
    %c0_11 = arith.constant 0 : index
    %c0_12 = arith.constant 0 : index
    %13 = vector.load %arg5[%c0_10, %c0_11, %c0_12] : memref<1x1x512xf32, #tpu.memory_space<vmem>>, vector<1x1x512xf32>
    tpu.vector_store %arg5[%c0_10, %c0_11, %c0_12], %12 {strides = array<i32>} : memref<1x1x512xf32, #tpu.memory_space<vmem>>, vector<1x1x512xf32>,
    return
  }
  func.func @transform_0(%arg0: i32) -> (i32, i32) {
    %c0_i32 = arith.constant 0 : i32
    %c0_i32_0 = arith.constant 0 : i32
    return %arg0, %c0_i32 : i32, i32
  }
  func.func @transform_1(%arg0: i32) -> (i32, i32) {
    %c0_i32 = arith.constant 0 : i32
    %c0_i32_0 = arith.constant 0 : i32
    %c0_i32_1 = arith.constant 0 : i32
    return %c0_i32, %c0_i32_0 : i32, i32
  }
  func.func @transform_2(%arg0: i32) -> (i32, i32) {
    %c0_i32 = arith.constant 0 : i32
    %c0_i32_0 = arith.constant 0 : i32
    return %arg0, %c0_i32 : i32, i32
  }
  func.func @transform_3(%arg0: i32) -> (i32, i32, i32) {
    %c0_i32 = arith.constant 0 : i32
    %c0_i32_0 = arith.constant 0 : i32
    %c0_i32_1 = arith.constant 0 : i32
    return %arg0, %c0_i32, %c0_i32_0 : i32, i32, i32
  }
  func.func @transform_4(%arg0: i32) -> (i32, i32, i32) {
    %c0_i32 = arith.constant 0 : i32
    %c0_i32_0 = arith.constant 0 : i32
    %c0_i32_1 = arith.constant 0 : i32
    return %arg0, %c0_i32, %c0_i32_0 : i32, i32, i32
  }
}

module attributes {stable_mosaic.version = 11 : i64} {
  func.func @_matmul_stats_kernel(%arg0: i32, %arg1: memref<32x1152xbf16, #tpu.memory_space<vmem>>, %arg2: memref<1152x256xbf16, #tpu.memory_space<vmem>>, %arg3: memref<32x256xbf16, #tpu.memory_space<vmem>>, %arg4: memref<1x1x256xf32, #tpu.memory_space<vmem>>, %arg5: memref<1x1x256xf32, #tpu.memory_space<vmem>>) attributes {dimension_semantics = [#tpu.dimension_semantics<parallel>], iteration_bounds = array<i64: 1>, scalar_prefetch = 0 : i64, scratch_operands = 0 : i64, tpu.core_type = #tpu.core_type<tc>, window_params = [{transform_indices = @transform_0, window_bounds = array<i64: 32, 1152>}, {pipeline_mode = #tpu.pipeline_mode<synchronous>, transform_indices = @transform_1, window_bounds = array<i64: 1152, 256>}, {transform_indices = @transform_2, window_bounds = array<i64: 32, 256>}, {transform_indices = @transform_3, window_bounds = array<i64: 1, 1, 256>}, {transform_indices = @transform_4, window_bounds = array<i64: 1, 1, 256>}]} {
    %c0 = arith.constant 0 : index
    %c0_0 = arith.constant 0 : index
    %0 = vector.load %arg1[%c0, %c0_0] : memref<32x1152xbf16, #tpu.memory_space<vmem>>, vector<32x1152xbf16>
    %c0_1 = arith.constant 0 : index
    %c0_2 = arith.constant 0 : index
    %1 = vector.load %arg2[%c0_1, %c0_2] : memref<1152x256xbf16, #tpu.memory_space<vmem>>, vector<1152x256xbf16>
    %cst = arith.constant dense<0.000000e+00> : vector<32x256xf32>
    %2 = tpu.matmul %0, %1, %cst {dimension_numbers = #tpu.dot_dimension_numbers<[1], [0], [0], [1], [0, 0, 1, 1], [], []>} : vector<32x1152xbf16>, vector<1152x256xbf16>, vector<32x256xf32> -> vector<32x256xf32>
    %3 = arith.truncf %2 : vector<32x256xf32> to vector<32x256xbf16>
    %c0_3 = arith.constant 0 : index
    %c0_4 = arith.constant 0 : index
    %4 = vector.load %arg3[%c0_3, %c0_4] : memref<32x256xbf16, #tpu.memory_space<vmem>>, vector<32x256xbf16>
    tpu.vector_store %arg3[%c0_3, %c0_4], %3 {strides = array<i32>} : memref<32x256xbf16, #tpu.memory_space<vmem>>, vector<32x256xbf16>,
    %cst_5 = arith.constant dense<0.000000e+00> : vector<256xf32>
    %5 = vector.multi_reduction <add>, %2, %cst_5 [0] : vector<32x256xf32> to vector<256xf32>
    %6 = vector.shape_cast %5 : vector<256xf32> to vector<1x256xf32>
    %7 = arith.mulf %2, %2 : vector<32x256xf32>
    %cst_6 = arith.constant dense<0.000000e+00> : vector<256xf32>
    %8 = vector.multi_reduction <add>, %7, %cst_6 [0] : vector<32x256xf32> to vector<256xf32>
    %9 = vector.shape_cast %8 : vector<256xf32> to vector<1x256xf32>
    %10 = vector.shape_cast %6 : vector<1x256xf32> to vector<1x1x256xf32>
    %c0_7 = arith.constant 0 : index
    %c0_8 = arith.constant 0 : index
    %c0_9 = arith.constant 0 : index
    %11 = vector.load %arg4[%c0_7, %c0_8, %c0_9] : memref<1x1x256xf32, #tpu.memory_space<vmem>>, vector<1x1x256xf32>
    tpu.vector_store %arg4[%c0_7, %c0_8, %c0_9], %10 {strides = array<i32>} : memref<1x1x256xf32, #tpu.memory_space<vmem>>, vector<1x1x256xf32>,
    %12 = vector.shape_cast %9 : vector<1x256xf32> to vector<1x1x256xf32>
    %c0_10 = arith.constant 0 : index
    %c0_11 = arith.constant 0 : index
    %c0_12 = arith.constant 0 : index
    %13 = vector.load %arg5[%c0_10, %c0_11, %c0_12] : memref<1x1x256xf32, #tpu.memory_space<vmem>>, vector<1x1x256xf32>
    tpu.vector_store %arg5[%c0_10, %c0_11, %c0_12], %12 {strides = array<i32>} : memref<1x1x256xf32, #tpu.memory_space<vmem>>, vector<1x1x256xf32>,
    return
  }
  func.func @transform_0(%arg0: i32) -> (i32, i32) {
    %c0_i32 = arith.constant 0 : i32
    %c0_i32_0 = arith.constant 0 : i32
    return %arg0, %c0_i32 : i32, i32
  }
  func.func @transform_1(%arg0: i32) -> (i32, i32) {
    %c0_i32 = arith.constant 0 : i32
    %c0_i32_0 = arith.constant 0 : i32
    %c0_i32_1 = arith.constant 0 : i32
    return %c0_i32, %c0_i32_0 : i32, i32
  }
  func.func @transform_2(%arg0: i32) -> (i32, i32) {
    %c0_i32 = arith.constant 0 : i32
    %c0_i32_0 = arith.constant 0 : i32
    return %arg0, %c0_i32 : i32, i32
  }
  func.func @transform_3(%arg0: i32) -> (i32, i32, i32) {
    %c0_i32 = arith.constant 0 : i32
    %c0_i32_0 = arith.constant 0 : i32
    %c0_i32_1 = arith.constant 0 : i32
    return %arg0, %c0_i32, %c0_i32_0 : i32, i32, i32
  }
  func.func @transform_4(%arg0: i32) -> (i32, i32, i32) {
    %c0_i32 = arith.constant 0 : i32
    %c0_i32_0 = arith.constant 0 : i32
    %c0_i32_1 = arith.constant 0 : i32
    return %arg0, %c0_i32, %c0_i32_0 : i32, i32, i32
  }
}

module attributes {stable_mosaic.version = 11 : i64} {
  func.func @_affine_lrelu_kernel(%arg0: i32, %arg1: memref<32x256xbf16, #tpu.memory_space<vmem>>, %arg2: memref<1x256xf32, #tpu.memory_space<vmem>>, %arg3: memref<1x256xf32, #tpu.memory_space<vmem>>, %arg4: memref<32x256xbf16, #tpu.memory_space<vmem>>) attributes {dimension_semantics = [#tpu.dimension_semantics<parallel>], iteration_bounds = array<i64: 1>, scalar_prefetch = 0 : i64, scratch_operands = 0 : i64, tpu.core_type = #tpu.core_type<tc>, window_params = [{transform_indices = @transform_0, window_bounds = array<i64: 32, 256>}, {pipeline_mode = #tpu.pipeline_mode<synchronous>, transform_indices = @transform_1, window_bounds = array<i64: 1, 256>}, {pipeline_mode = #tpu.pipeline_mode<synchronous>, transform_indices = @transform_2, window_bounds = array<i64: 1, 256>}, {transform_indices = @transform_3, window_bounds = array<i64: 32, 256>}]} {
    %c0 = arith.constant 0 : index
    %c0_0 = arith.constant 0 : index
    %0 = vector.load %arg1[%c0, %c0_0] : memref<32x256xbf16, #tpu.memory_space<vmem>>, vector<32x256xbf16>
    %1 = arith.extf %0 : vector<32x256xbf16> to vector<32x256xf32>
    %c0_1 = arith.constant 0 : index
    %c0_2 = arith.constant 0 : index
    %2 = vector.load %arg2[%c0_1, %c0_2] : memref<1x256xf32, #tpu.memory_space<vmem>>, vector<1x256xf32>
    %3 = vector.broadcast %2 : vector<1x256xf32> to vector<32x256xf32>
    %4 = arith.mulf %1, %3 : vector<32x256xf32>
    %c0_3 = arith.constant 0 : index
    %c0_4 = arith.constant 0 : index
    %5 = vector.load %arg3[%c0_3, %c0_4] : memref<1x256xf32, #tpu.memory_space<vmem>>, vector<1x256xf32>
    %6 = vector.broadcast %5 : vector<1x256xf32> to vector<32x256xf32>
    %7 = arith.addf %4, %6 : vector<32x256xf32>
    %cst = arith.constant 2.000000e-01 : f32
    %8 = vector.broadcast %cst : f32 to vector<32x256xf32>
    %9 = arith.mulf %8, %7 : vector<32x256xf32>
    %10 = arith.maximumf %7, %9 : vector<32x256xf32>
    %11 = arith.truncf %10 : vector<32x256xf32> to vector<32x256xbf16>
    %c0_5 = arith.constant 0 : index
    %c0_6 = arith.constant 0 : index
    %12 = vector.load %arg4[%c0_5, %c0_6] : memref<32x256xbf16, #tpu.memory_space<vmem>>, vector<32x256xbf16>
    tpu.vector_store %arg4[%c0_5, %c0_6], %11 {strides = array<i32>} : memref<32x256xbf16, #tpu.memory_space<vmem>>, vector<32x256xbf16>,
    return
  }
  func.func @transform_0(%arg0: i32) -> (i32, i32) {
    %c0_i32 = arith.constant 0 : i32
    %c0_i32_0 = arith.constant 0 : i32
    return %arg0, %c0_i32 : i32, i32
  }
  func.func @transform_1(%arg0: i32) -> (i32, i32) {
    %c0_i32 = arith.constant 0 : i32
    %c0_i32_0 = arith.constant 0 : i32
    %c0_i32_1 = arith.constant 0 : i32
    return %c0_i32, %c0_i32_0 : i32, i32
  }
  func.func @transform_2(%arg0: i32) -> (i32, i32) {
    %c0_i32 = arith.constant 0 : i32
    %c0_i32_0 = arith.constant 0 : i32
    %c0_i32_1 = arith.constant 0 : i32
    return %c0_i32, %c0_i32_0 : i32, i32
  }
  func.func @transform_3(%arg0: i32) -> (i32, i32) {
    %c0_i32 = arith.constant 0 : i32
    %c0_i32_0 = arith.constant 0 : i32
    return %arg0, %c0_i32 : i32, i32
  }
}

module attributes {stable_mosaic.version = 11 : i64} {
  func.func @kernel(%arg0: i32, %arg1: memref<128x576xbf16, #tpu.memory_space<vmem>>, %arg2: memref<576x128xbf16, #tpu.memory_space<vmem>>, %arg3: memref<1x128xf32, #tpu.memory_space<vmem>>, %arg4: memref<128x128xf32, #tpu.memory_space<vmem>>) attributes {dimension_semantics = [#tpu.dimension_semantics<parallel>], iteration_bounds = array<i64: 1>, scalar_prefetch = 0 : i64, scratch_operands = 0 : i64, tpu.core_type = #tpu.core_type<tc>, window_params = [{transform_indices = @transform_0, window_bounds = array<i64: 128, 576>}, {pipeline_mode = #tpu.pipeline_mode<synchronous>, transform_indices = @transform_1, window_bounds = array<i64: 576, 128>}, {pipeline_mode = #tpu.pipeline_mode<synchronous>, transform_indices = @transform_2, window_bounds = array<i64: 1, 128>}, {transform_indices = @transform_3, window_bounds = array<i64: 128, 128>}]} {
    %c0 = arith.constant 0 : index
    %c0_0 = arith.constant 0 : index
    %0 = vector.load %arg1[%c0, %c0_0] : memref<128x576xbf16, #tpu.memory_space<vmem>>, vector<128x576xbf16>
    %c0_1 = arith.constant 0 : index
    %c0_2 = arith.constant 0 : index
    %1 = vector.load %arg2[%c0_1, %c0_2] : memref<576x128xbf16, #tpu.memory_space<vmem>>, vector<576x128xbf16>
    %cst = arith.constant dense<0.000000e+00> : vector<128x128xf32>
    %2 = tpu.matmul %0, %1, %cst {dimension_numbers = #tpu.dot_dimension_numbers<[1], [0], [0], [1], [0, 0, 1, 1], [], []>} : vector<128x576xbf16>, vector<576x128xbf16>, vector<128x128xf32> -> vector<128x128xf32>
    %c0_3 = arith.constant 0 : index
    %c0_4 = arith.constant 0 : index
    %3 = vector.load %arg3[%c0_3, %c0_4] : memref<1x128xf32, #tpu.memory_space<vmem>>, vector<1x128xf32>
    %4 = vector.broadcast %3 : vector<1x128xf32> to vector<128x128xf32>
    %5 = arith.addf %2, %4 : vector<128x128xf32>
    %6 = math.tanh %5 : vector<128x128xf32>
    %c0_5 = arith.constant 0 : index
    %c0_6 = arith.constant 0 : index
    %7 = vector.load %arg4[%c0_5, %c0_6] : memref<128x128xf32, #tpu.memory_space<vmem>>, vector<128x128xf32>
    tpu.vector_store %arg4[%c0_5, %c0_6], %6 {strides = array<i32>} : memref<128x128xf32, #tpu.memory_space<vmem>>, vector<128x128xf32>,
    return
  }
  func.func @transform_0(%arg0: i32) -> (i32, i32) {
    %c0_i32 = arith.constant 0 : i32
    %c0_i32_0 = arith.constant 0 : i32
    return %arg0, %c0_i32 : i32, i32
  }
  func.func @transform_1(%arg0: i32) -> (i32, i32) {
    %c0_i32 = arith.constant 0 : i32
    %c0_i32_0 = arith.constant 0 : i32
    %c0_i32_1 = arith.constant 0 : i32
    return %c0_i32, %c0_i32_0 : i32, i32
  }
  func.func @transform_2(%arg0: i32) -> (i32, i32) {
    %c0_i32 = arith.constant 0 : i32
    %c0_i32_0 = arith.constant 0 : i32
    %c0_i32_1 = arith.constant 0 : i32
    return %c0_i32, %c0_i32_0 : i32, i32
  }
  func.func @transform_3(%arg0: i32) -> (i32, i32) {
    %c0_i32 = arith.constant 0 : i32
    %c0_i32_0 = arith.constant 0 : i32
    return %arg0, %c0_i32 : i32, i32
  }
}

</mosaic_0001>

<llo_original>
// kernel: ocean_vae_forward.16
$region0: #{ocean_vae_forward.16}
  #allocation0 [shape = 'u32[]', space=smem, size = 0x4, offset = 0x4, fixed_abs, tag = 'smem constant byte address 0x4 - core index']
  #allocation1 [shape = 'u32[144,128]{1,0:T(1,128)}', space=vmem, size = 0x12000, scoped, tag = 'internal scratch']
  %s0 = inlined_call_operand.vmem [shape: f32[16,128], index: 0, kind: input, shape index: {}]
  %s1 = inlined_call_operand.vmem [shape: bf16[16,128], index: 1, kind: output, shape index: {}]
  %s2 = sld [smem:[#allocation0]]
  $region14: #{ocean_vae_forward.16} parent=0
    _
  %s4 = ssub.s32 1, %s2
  %s5 = scalar_select 0, %s4, %s2
  // Predicated region
  $region2: #{ocean_vae_forward.16} parent=0 // pred_check
    _
  $region3: #{ocean_vae_forward.16} parent=0 // pred_check_branch
    %7 = sbr.rel (0) target = $region5
  $region4: #{ocean_vae_forward.16} parent=0 // pred_region
    _
  $region5: #{ocean_vae_forward.16} parent=0 // pred_fallthru
    _
  %v8 = vld [vmem:[%s0] sm:$0xff]
  %v9 = vld [vmem:[%s0 + $0x8] sm:$0xff]
  %vm10 = vcmp.ne.f32.partialorder %v8, %v8
  %vm11 = vcmp.ne.f32.partialorder %v9, %v9
  %v12 = vsel %vm10, 0.0, %v8
  %v13 = vsel %vm11, 0.0, %v9
  %v14 = vpack.c.bf16 %v13, %v12
  %v16 = vunpack.c.l.b16 %v14
  %v17 = vunpack.c.h.b16 %v14
  %v18 = vpack.c.b16 %v16, %v16
  %v19 = vpack.c.b16 %v17, %v17
  %22 = vst [vmem:[%s1] sm:$0xf] %v18
  %23 = vst [vmem:[%s1 + $0x4] sm:$0xf] %v19
  // Predicated region
  $region6: #{ocean_vae_forward.16} parent=0 // pred_check
    _
  $region7: #{ocean_vae_forward.16} parent=0 // pred_check_branch
    %25 = sbr.rel (0) target = $region9
  $region8: #{ocean_vae_forward.16} parent=0 // pred_region
    _
  $region9: #{ocean_vae_forward.16} parent=0 // pred_fallthru
    _
  // Predicated region
  $region10: #{ocean_vae_forward.16} parent=0 // pred_check
    _
  $region11: #{ocean_vae_forward.16} parent=0 // pred_check_branch
    %27 = sbr.rel (0) target = $region13
  $region12: #{ocean_vae_forward.16} parent=0 // pred_region
    _
  $region13: #{ocean_vae_forward.16} parent=0 // pred_fallthru
    _

// kernel: ocean_vae_forward.18
$region0: #{ocean_vae_forward.18}
  #allocation0 [shape = 'u32[]', space=smem, size = 0x4, offset = 0x4, fixed_abs, tag = 'smem constant byte address 0x4 - core index']
  #allocation1 [shape = 'u32[144,128]{1,0:T(1,128)}', space=vmem, size = 0x12000, scoped, tag = 'internal scratch']
  %s0 = inlined_call_operand.vmem [shape: bf16[128,64], index: 0, kind: input, shape index: {}]
  %s1 = inlined_call_operand.vmem [shape: f32[1,64], index: 1, kind: input, shape index: {}]
  %s2 = inlined_call_operand.vmem [shape: f32[1,64], index: 2, kind: input, shape index: {}]
  %s3 = inlined_call_operand.vmem [shape: bf16[128,64], index: 3, kind: output, shape index: {}]
  %s4 = sld [smem:[#allocation0]]
  $region22: #{ocean_vae_forward.18} parent=0
    _
  %s6 = ssub.s32 1, %s4
  %s7 = scalar_select 0, %s6, %s4
  // Predicated region
  $region2: #{ocean_vae_forward.18} parent=0 // pred_check
    _
  $region3: #{ocean_vae_forward.18} parent=0 // pred_check_branch
    %9 = sbr.rel (0) target = $region5
  $region4: #{ocean_vae_forward.18} parent=0 // pred_region
    _
  $region5: #{ocean_vae_forward.18} parent=0 // pred_fallthru
    _
  // Predicated region
  $region6: #{ocean_vae_forward.18} parent=0 // pred_check
    _
  $region7: #{ocean_vae_forward.18} parent=0 // pred_check_branch
    %11 = sbr.rel (0) target = $region9
  $region8: #{ocean_vae_forward.18} parent=0 // pred_region
    _
  $region9: #{ocean_vae_forward.18} parent=0 // pred_fallthru
    _
  // Predicated region
  $region10: #{ocean_vae_forward.18} parent=0 // pred_check
    _
  $region11: #{ocean_vae_forward.18} parent=0 // pred_check_branch
    %13 = sbr.rel (0) target = $region13
  $region12: #{ocean_vae_forward.18} parent=0 // pred_region
    _
  $region13: #{ocean_vae_forward.18} parent=0 // pred_fallthru
    _
  %v14 = vld [vmem:[%s0] sm:$0xf]
  %v15 = vld [vmem:[%s0 + $0x4] sm:$0xf]
  %v16 = vld [vmem:[%s0 + $0x8] sm:$0xf]
  %v17 = vld [vmem:[%s0 + $0xc] sm:$0xf]
  %v18 = vld [vmem:[%s0 + $0x10] sm:$0xf]
  %v19 = vld [vmem:[%s0 + $0x14] sm:$0xf]
  %v20 = vld [vmem:[%s0 + $0x18] sm:$0xf]
  %v21 = vld [vmem:[%s0 + $0x1c] sm:$0xf]
  %v22 = vld [vmem:[%s0 + $0x20] sm:$0xf]
  %v23 = vld [vmem:[%s0 + $0x24] sm:$0xf]
  %v24 = vld [vmem:[%s0 + $0x28] sm:$0xf]
  %v25 = vld [vmem:[%s0 + $0x2c] sm:$0xf]
  %v26 = vld [vmem:[%s0 + $0x30] sm:$0xf]
  %v27 = vld [vmem:[%s0 + $0x34] sm:$0xf]
  %v28 = vld [vmem:[%s0 + $0x38] sm:$0xf]
  %v29 = vld [vmem:[%s0 + $0x3c] sm:$0xf]
  %v30 = vunpack.c.l.bf16 %v14
  %v31 = vunpack.c.l.bf16 %v15
  %v32 = vunpack.c.l.bf16 %v16
  %v33 = vunpack.c.l.bf16 %v17
  %v34 = vunpack.c.l.bf16 %v18
  %v35 = vunpack.c.l.bf16 %v19
  %v36 = vunpack.c.l.bf16 %v20
  %v37 = vunpack.c.l.bf16 %v21
  %v38 = vunpack.c.l.bf16 %v22
  %v39 = vunpack.c.l.bf16 %v23
  %v40 = vunpack.c.l.bf16 %v24
  %v41 = vunpack.c.l.bf16 %v25
  %v42 = vunpack.c.l.bf16 %v26
  %v43 = vunpack.c.l.bf16 %v27
  %v44 = vunpack.c.l.bf16 %v28
  %v45 = vunpack.c.l.bf16 %v29
  %v46 = vld [vmem:[%s1] sm:$0x1]
  %v48 = vlaneseq
  %v49 = vshrl.u32 %v48, 7
  %v50 = vsub.s32 0, %v49
  %v51 = vrot.slane %v46, %v50
  %v53 = vmul.f32 %v30, %v51
  %v54 = vmul.f32 %v31, %v51
  %v55 = vmul.f32 %v32, %v51
  %v56 = vmul.f32 %v33, %v51
  %v57 = vmul.f32 %v34, %v51
  %v58 = vmul.f32 %v35, %v51
  %v59 = vmul.f32 %v36, %v51
  %v60 = vmul.f32 %v37, %v51
  %v61 = vmul.f32 %v38, %v51
  %v62 = vmul.f32 %v39, %v51
  %v63 = vmul.f32 %v40, %v51
  %v64 = vmul.f32 %v41, %v51
  %v65 = vmul.f32 %v42, %v51
  %v66 = vmul.f32 %v43, %v51
  %v67 = vmul.f32 %v44, %v51
  %v68 = vmul.f32 %v45, %v51
  %v69 = vld [vmem:[%s2] sm:$0x1]
  %v71 = vlaneseq
  %v72 = vshrl.u32 %v71, 7
  %v73 = vsub.s32 0, %v72
  %v74 = vrot.slane %v69, %v73
  %v76 = vadd.f32 %v53, %v74
  %v77 = vadd.f32 %v54, %v74
  %v78 = vadd.f32 %v55, %v74
  %v79 = vadd.f32 %v56, %v74
  %v80 = vadd.f32 %v57, %v74
  %v81 = vadd.f32 %v58, %v74
  %v82 = vadd.f32 %v59, %v74
  %v83 = vadd.f32 %v60, %v74
  %v84 = vadd.f32 %v61, %v74
  %v85 = vadd.f32 %v62, %v74
  %v86 = vadd.f32 %v63, %v74
  %v87 = vadd.f32 %v64, %v74
  %v88 = vadd.f32 %v65, %v74
  %v89 = vadd.f32 %v66, %v74
  %v90 = vadd.f32 %v67, %v74
  %v91 = vadd.f32 %v68, %v74
  %v92 = vmul.f32 %v76, 0.2
  %v93 = vmul.f32 %v77, 0.2
  %v94 = vmul.f32 %v78, 0.2
  %v95 = vmul.f32 %v79, 0.2
  %v96 = vmul.f32 %v80, 0.2
  %v97 = vmul.f32 %v81, 0.2
  %v98 = vmul.f32 %v82, 0.2
  %v99 = vmul.f32 %v83, 0.2
  %v100 = vmul.f32 %v84, 0.2
  %v101 = vmul.f32 %v85, 0.2
  %v102 = vmul.f32 %v86, 0.2
  %v103 = vmul.f32 %v87, 0.2
  %v104 = vmul.f32 %v88, 0.2
  %v105 = vmul.f32 %v89, 0.2
  %v106 = vmul.f32 %v90, 0.2
  %v107 = vmul.f32 %v91, 0.2
  %v108 = vmax.f32 %v76, %v92
  %v109 = vmax.f32 %v77, %v93
  %v110 = vmax.f32 %v78, %v94
  %v111 = vmax.f32 %v79, %v95
  %v112 = vmax.f32 %v80, %v96
  %v113 = vmax.f32 %v81, %v97
  %v114 = vmax.f32 %v82, %v98
  %v115 = vmax.f32 %v83, %v99
  %v116 = vmax.f32 %v84, %v100
  %v117 = vmax.f32 %v85, %v101
  %v118 = vmax.f32 %v86, %v102
  %v119 = vmax.f32 %v87, %v103
  %v120 = vmax.f32 %v88, %v104
  %v121 = vmax.f32 %v89, %v105
  %v122 = vmax.f32 %v90, %v106
  %v123 = vmax.f32 %v91, %v107
  %v124 = vpack.c.bf16 %v109, %v108
  %v125 = vpack.c.bf16 %v111, %v110
  %v126 = vpack.c.bf16 %v113, %v112
  %v127 = vpack.c.bf16 %v115, %v114
  %v128 = vpack.c.bf16 %v117, %v116
  %v129 = vpack.c.bf16 %v119, %v118
  %v130 = vpack.c.bf16 %v121, %v120
  %v131 = vpack.c.bf16 %v123, %v122
  %v140 = vunpack.c.l.b16 %v124
  %v141 = vunpack.c.h.b16 %v124
  %v142 = vunpack.c.l.b16 %v125
  %v143 = vunpack.c.h.b16 %v125
  %v144 = vunpack.c.l.b16 %v126
  %v145 = vunpack.c.h.b16 %v126
  %v146 = vunpack.c.l.b16 %v127
  %v147 = vunpack.c.h.b16 %v127
  %v148 = vunpack.c.l.b16 %v128
  %v149 = vunpack.c.h.b16 %v128
  %v150 = vunpack.c.l.b16 %v129
  %v151 = vunpack.c.h.b16 %v129
  %v152 = vunpack.c.l.b16 %v130
  %v153 = vunpack.c.h.b16 %v130
  %v154 = vunpack.c.l.b16 %v131
  %v155 = vunpack.c.h.b16 %v131
  %v156 = vpack.c.b16 %v140, %v140
  %v157 = vpack.c.b16 %v141, %v141
  %v158 = vpack.c.b16 %v142, %v142
  %v159 = vpack.c.b16 %v143, %v143
  %v160 = vpack.c.b16 %v144, %v144
  %v161 = vpack.c.b16 %v145, %v145
  %v162 = vpack.c.b16 %v146, %v146
  %v163 = vpack.c.b16 %v147, %v147
  %v164 = vpack.c.b16 %v148, %v148
  %v165 = vpack.c.b16 %v149, %v149
  %v166 = vpack.c.b16 %v150, %v150
  %v167 = vpack.c.b16 %v151, %v151
  %v168 = vpack.c.b16 %v152, %v152
  %v169 = vpack.c.b16 %v153, %v153
  %v170 = vpack.c.b16 %v154, %v154
  %v171 = vpack.c.b16 %v155, %v155
  %vm188 = vcmask 519168
  %189 = vst.msk [vmem:[%s3] sm:$0xf] %vm188, %v156
  %190 = vst.msk [vmem:[%s3 + $0x4] sm:$0xf] %vm188, %v157
  %191 = vst.msk [vmem:[%s3 + $0x8] sm:$0xf] %vm188, %v158
  %192 = vst.msk [vmem:[%s3 + $0xc] sm:$0xf] %vm188, %v159
  %193 = vst.msk [vmem:[%s3 + $0x10] sm:$0xf] %vm188, %v160
  %194 = vst.msk [vmem:[%s3 + $0x14] sm:$0xf] %vm188, %v161
  %195 = vst.msk [vmem:[%s3 + $0x18] sm:$0xf] %vm188, %v162
  %196 = vst.msk [vmem:[%s3 + $0x1c] sm:$0xf] %vm188, %v163
  %197 = vst.msk [vmem:[%s3 + $0x20] sm:$0xf] %vm188, %v164
  %198 = vst.msk [vmem:[%s3 + $0x24] sm:$0xf] %vm188, %v165
  %199 = vst.msk [vmem:[%s3 + $0x28] sm:$0xf] %vm188, %v166
  %200 = vst.msk [vmem:[%s3 + $0x2c] sm:$0xf] %vm188, %v167
  %201 = vst.msk [vmem:[%s3 + $0x30] sm:$0xf] %vm188, %v168
  %202 = vst.msk [vmem:[%s3 + $0x34] sm:$0xf] %vm188, %v169
  %203 = vst.msk [vmem:[%s3 + $0x38] sm:$0xf] %vm188, %v170
  %204 = vst.msk [vmem:[%s3 + $0x3c] sm:$0xf] %vm188, %v171
  // Predicated region
  $region14: #{ocean_vae_forward.18} parent=0 // pred_check
    _
  $region15: #{ocean_vae_forward.18} parent=0 // pred_check_branch
    %206 = sbr.rel (0) target = $region17
  $region16: #{ocean_vae_forward.18} parent=0 // pred_region
    _
  $region17: #{ocean_vae_forward.18} parent=0 // pred_fallthru
    _
  // Predicated region
  $region18: #{ocean_vae_forward.18} parent=0 // pred_check
    _
  $region19: #{ocean_vae_forward.18} parent=0 // pred_check_branch
    %208 = sbr.rel (0) target = $region21
  $region20: #{ocean_vae_forward.18} parent=0 // pred_region
    _
  $region21: #{ocean_vae_forward.18} parent=0 // pred_fallthru
    _

// kernel: ocean_vae_forward.17
$region0: #{ocean_vae_forward.17}
  #allocation0 [shape = 'u32[]', space=smem, size = 0x4, offset = 0x4, fixed_abs, tag = 'smem constant byte address 0x4 - core index']
  #allocation1 [shape = 'u32[144,128]{1,0:T(1,128)}', space=vmem, size = 0x12000, scoped, tag = 'internal scratch']
  %s0 = inlined_call_operand.vmem [shape: bf16[128,64], index: 0, kind: input, shape index: {}]
  %s1 = inlined_call_operand.vmem [shape: bf16[64,64], index: 1, kind: input, shape index: {}]
  %s2 = inlined_call_operand.vmem [shape: bf16[128,64], index: 2, kind: output, shape index: {0}]
  %s3 = inlined_call_operand.vmem [shape: f32[1,1,64], index: 3, kind: output, shape index: {1}]
  %s4 = inlined_call_operand.vmem [shape: f32[1,1,64], index: 4, kind: output, shape index: {2}]
  %5 = xla_tuple %s2, %s3, %s4
  %s6 = sld [smem:[#allocation0]]
  $region34: #{ocean_vae_forward.17} parent=0
    _
  %s8 = ssub.s32 1, %s6
  %s9 = scalar_select 0, %s8, %s6
  // Predicated region
  $region2: #{ocean_vae_forward.17} parent=0 // pred_check
    _
  $region3: #{ocean_vae_forward.17} parent=0 // pred_check_branch
    %11 = sbr.rel (0) target = $region5
  $region4: #{ocean_vae_forward.17} parent=0 // pred_region
    _
  $region5: #{ocean_vae_forward.17} parent=0 // pred_fallthru
    _
  // Predicated region
  $region6: #{ocean_vae_forward.17} parent=0 // pred_check
    _
  $region7: #{ocean_vae_forward.17} parent=0 // pred_check_branch
    %13 = sbr.rel (0) target = $region9
  $region8: #{ocean_vae_forward.17} parent=0 // pred_region
    _
  $region9: #{ocean_vae_forward.17} parent=0 // pred_fallthru
    _
  %v15 = vld [vmem:[%s0] sm:$0xf]
  %v16 = vld [vmem:[%s0 + $0x4] sm:$0xf]
  %v17 = vld [vmem:[%s0 + $0x8] sm:$0xf]
  %v18 = vld [vmem:[%s0 + $0xc] sm:$0xf]
  %v19 = vld [vmem:[%s0 + $0x10] sm:$0xf]
  %v20 = vld [vmem:[%s0 + $0x14] sm:$0xf]
  %v21 = vld [vmem:[%s0 + $0x18] sm:$0xf]
  %v22 = vld [vmem:[%s0 + $0x1c] sm:$0xf]
  %v23 = vld [vmem:[%s0 + $0x20] sm:$0xf]
  %v24 = vld [vmem:[%s0 + $0x24] sm:$0xf]
  %v25 = vld [vmem:[%s0 + $0x28] sm:$0xf]
  %v26 = vld [vmem:[%s0 + $0x2c] sm:$0xf]
  %v27 = vld [vmem:[%s0 + $0x30] sm:$0xf]
  %v28 = vld [vmem:[%s0 + $0x34] sm:$0xf]
  %v29 = vld [vmem:[%s0 + $0x38] sm:$0xf]
  %v30 = vld [vmem:[%s0 + $0x3c] sm:$0xf]
  %v31 = vld [vmem:[%s1] sm:$0xf]
  %v32 = vld [vmem:[%s1 + $0x4] sm:$0xf]
  %v33 = vld [vmem:[%s1 + $0x8] sm:$0xf]
  %v34 = vld [vmem:[%s1 + $0xc] sm:$0xf]
  %v35 = vld [vmem:[%s1 + $0x10] sm:$0xf]
  %v36 = vld [vmem:[%s1 + $0x14] sm:$0xf]
  %v37 = vld [vmem:[%s1 + $0x18] sm:$0xf]
  %v38 = vld [vmem:[%s1 + $0x1c] sm:$0xf]
  %v55 = vunpack.c.l.b16 %v15
  %v56 = vunpack.c.l.b16 %v16
  %v57 = vunpack.c.l.b16 %v17
  %v58 = vunpack.c.l.b16 %v18
  %v59 = vunpack.c.l.b16 %v19
  %v60 = vunpack.c.l.b16 %v20
  %v61 = vunpack.c.l.b16 %v21
  %v62 = vunpack.c.l.b16 %v22
  %v63 = vunpack.c.l.b16 %v23
  %v64 = vunpack.c.l.b16 %v24
  %v65 = vunpack.c.l.b16 %v25
  %v66 = vunpack.c.l.b16 %v26
  %v67 = vunpack.c.l.b16 %v27
  %v68 = vunpack.c.l.b16 %v28
  %v69 = vunpack.c.l.b16 %v29
  %v70 = vunpack.c.l.b16 %v30
  %v71 = vpack.c.b16 %v56, %v55
  %v72 = vpack.c.b16 %v58, %v57
  %v73 = vpack.c.b16 %v60, %v59
  %v74 = vpack.c.b16 %v62, %v61
  %v75 = vpack.c.b16 %v64, %v63
  %v76 = vpack.c.b16 %v66, %v65
  %v77 = vpack.c.b16 %v68, %v67
  %v78 = vpack.c.b16 %v70, %v69
  %v87 = vunpack.c.l.b16 %v31
  %v88 = vunpack.c.l.b16 %v32
  %v89 = vunpack.c.l.b16 %v33
  %v90 = vunpack.c.l.b16 %v34
  %v91 = vunpack.c.l.b16 %v35
  %v92 = vunpack.c.l.b16 %v36
  %v93 = vunpack.c.l.b16 %v37
  %v94 = vunpack.c.l.b16 %v38
  %v95 = vpack.c.b16 %v88, %v87
  %v96 = vpack.c.b16 %v90, %v89
  %v97 = vpack.c.b16 %v92, %v91
  %v98 = vpack.c.b16 %v94, %v93
  %vm103 = vcmask 523264
  %v105 = vsel %vm103, %v71, 0
  %v108 = vsel %vm103, %v72, 0
  %v111 = vsel %vm103, %v73, 0
  %v114 = vsel %vm103, %v74, 0
  %v117 = vsel %vm103, %v75, 0
  %v120 = vsel %vm103, %v76, 0
  %v123 = vsel %vm103, %v77, 0
  %v126 = vsel %vm103, %v78, 0
  %128 = vmatprep.subr.bf16.mxu0 0
  %129 = vmatpush1.bf16.msra.mxu0 %v95
  %130 = vmatprep.subr.bf16.mxu0 0
  %131 = vmatpush1.bf16.msra.mxu0 %v96
  %132 = vmatprep.subr.bf16.mxu0 0
  %133 = vmatpush1.bf16.msra.mxu0 %v97
  %134 = vmatprep.subr.bf16.mxu0 0
  %135 = vmatpush1.bf16.msra.mxu0 %v98
  %136 = vmatprep.subr.bf16.mxu0 0
  %137 = vmatpush1.bf16.msra.mxu0 0
  %138 = vmatprep.subr.bf16.mxu0 0
  %139 = vmatpush1.bf16.msra.mxu0 0
  %140 = vmatprep.subr.bf16.mxu0 0
  %141 = vmatpush1.bf16.msra.mxu0 0
  %142 = vmatprep.subr.bf16.mxu0 0
  %143 = vmatpush1.bf16.msra.mxu0 0
  %144 = vmatprep.subr.bf16.mxu0 0
  %145 = vmatpush1.bf16.msra.mxu0 0
  %146 = vmatprep.subr.bf16.mxu0 0
  %147 = vmatpush1.bf16.msra.mxu0 0
  %148 = vmatprep.subr.bf16.mxu0 0
  %149 = vmatpush1.bf16.msra.mxu0 0
  %150 = vmatprep.subr.bf16.mxu0 0
  %151 = vmatpush1.bf16.msra.mxu0 0
  %152 = vmatprep.subr.bf16.mxu0 0
  %153 = vmatpush1.bf16.msra.mxu0 0
  %154 = vmatprep.subr.bf16.mxu0 0
  %155 = vmatpush1.bf16.msra.mxu0 0
  %156 = vmatprep.subr.bf16.mxu0 0
  %157 = vmatpush1.bf16.msra.mxu0 0
  %158 = vmatprep.subr.bf16.mxu0 0
  %159 = vmatpush1.bf16.msra.mxu0 0
  %160 = vmatprep.mubr.bf16.mxu0 0
  %161 = vmatmul.mubr.bf16.gmra.mrb[0].mxu0 %v105
  %v162 = vpop.f32.mrb[0].mxu0
  %v163 = vadd.f32 0.0, %v162
  %v164 = vpop.f32.mrb[0].mxu0
  %v165 = vpop.f32.mrb[0].mxu0
  %v166 = vadd.f32 0.0, %v165
  %v167 = vpop.f32.mrb[0].mxu0
  %168 = vmatprep.mubr.bf16.mxu0 0
  %169 = vmatmul.mubr.bf16.gmra.mrb[0].mxu0 %v108
  %v170 = vpop.f32.mrb[0].mxu0
  %v171 = vadd.f32 0.0, %v170
  %v172 = vpop.f32.mrb[0].mxu0
  %v173 = vpop.f32.mrb[0].mxu0
  %v174 = vadd.f32 0.0, %v173
  %v175 = vpop.f32.mrb[0].mxu0
  %176 = vmatprep.mubr.bf16.mxu0 0
  %177 = vmatmul.mubr.bf16.gmra.mrb[0].mxu0 %v111
  %v178 = vpop.f32.mrb[0].mxu0
  %v179 = vadd.f32 0.0, %v178
  %v180 = vpop.f32.mrb[0].mxu0
  %v181 = vpop.f32.mrb[0].mxu0
  %v182 = vadd.f32 0.0, %v181
  %v183 = vpop.f32.mrb[0].mxu0
  %184 = vmatprep.mubr.bf16.mxu0 0
  %185 = vmatmul.mubr.bf16.gmra.mrb[0].mxu0 %v114
  %v186 = vpop.f32.mrb[0].mxu0
  %v187 = vadd.f32 0.0, %v186
  %v188 = vpop.f32.mrb[0].mxu0
  %v189 = vpop.f32.mrb[0].mxu0
  %v190 = vadd.f32 0.0, %v189
  %v191 = vpop.f32.mrb[0].mxu0
  %192 = vmatprep.mubr.bf16.mxu0 0
  %193 = vmatmul.mubr.bf16.gmra.mrb[0].mxu0 %v117
  %v194 = vpop.f32.mrb[0].mxu0
  %v195 = vadd.f32 0.0, %v194
  %v196 = vpop.f32.mrb[0].mxu0
  %v197 = vpop.f32.mrb[0].mxu0
  %v198 = vadd.f32 0.0, %v197
  %v199 = vpop.f32.mrb[0].mxu0
  %200 = vmatprep.mubr.bf16.mxu0 0
  %201 = vmatmul.mubr.bf16.gmra.mrb[0].mxu0 %v120
  %v202 = vpop.f32.mrb[0].mxu0
  %v203 = vadd.f32 0.0, %v202
  %v204 = vpop.f32.mrb[0].mxu0
  %v205 = vpop.f32.mrb[0].mxu0
  %v206 = vadd.f32 0.0, %v205
  %v207 = vpop.f32.mrb[0].mxu0
  %208 = vmatprep.mubr.bf16.mxu0 0
  %209 = vmatmul.mubr.bf16.gmra.mrb[0].mxu0 %v123
  %v210 = vpop.f32.mrb[0].mxu0
  %v211 = vadd.f32 0.0, %v210
  %v212 = vpop.f32.mrb[0].mxu0
  %v213 = vpop.f32.mrb[0].mxu0
  %v214 = vadd.f32 0.0, %v213
  %v215 = vpop.f32.mrb[0].mxu0
  %216 = vmatprep.mubr.bf16.mxu0 0
  %217 = vmatmul.mubr.bf16.gmra.mrb[0].mxu0 %v126
  %v218 = vpop.f32.mrb[0].mxu0
  %v219 = vadd.f32 0.0, %v218
  %v220 = vpop.f32.mrb[0].mxu0
  %v221 = vpop.f32.mrb[0].mxu0
  %v222 = vadd.f32 0.0, %v221
  %v223 = vpop.f32.mrb[0].mxu0
  %224 = vdwg.mxu0
  %v225 = vpack.c.bf16 %v166, %v163
  %v226 = vpack.c.bf16 %v174, %v171
  %v227 = vpack.c.bf16 %v182, %v179
  %v228 = vpack.c.bf16 %v190, %v187
  %v229 = vpack.c.bf16 %v198, %v195
  %v230 = vpack.c.bf16 %v206, %v203
  %v231 = vpack.c.bf16 %v214, %v211
  %v232 = vpack.c.bf16 %v222, %v219
  %v241 = vunpack.c.l.b16 %v225
  %v242 = vunpack.c.h.b16 %v225
  %v243 = vunpack.c.l.b16 %v226
  %v244 = vunpack.c.h.b16 %v226
  %v245 = vunpack.c.l.b16 %v227
  %v246 = vunpack.c.h.b16 %v227
  %v247 = vunpack.c.l.b16 %v228
  %v248 = vunpack.c.h.b16 %v228
  %v249 = vunpack.c.l.b16 %v229
  %v250 = vunpack.c.h.b16 %v229
  %v251 = vunpack.c.l.b16 %v230
  %v252 = vunpack.c.h.b16 %v230
  %v253 = vunpack.c.l.b16 %v231
  %v254 = vunpack.c.h.b16 %v231
  %v255 = vunpack.c.l.b16 %v232
  %v256 = vunpack.c.h.b16 %v232
  %v257 = vpack.c.b16 %v241, %v241
  %v258 = vpack.c.b16 %v242, %v242
  %v259 = vpack.c.b16 %v243, %v243
  %v260 = vpack.c.b16 %v244, %v244
  %v261 = vpack.c.b16 %v245, %v245
  %v262 = vpack.c.b16 %v246, %v246
  %v263 = vpack.c.b16 %v247, %v247
  %v264 = vpack.c.b16 %v248, %v248
  %v265 = vpack.c.b16 %v249, %v249
  %v266 = vpack.c.b16 %v250, %v250
  %v267 = vpack.c.b16 %v251, %v251
  %v268 = vpack.c.b16 %v252, %v252
  %v269 = vpack.c.b16 %v253, %v253
  %v270 = vpack.c.b16 %v254, %v254
  %v271 = vpack.c.b16 %v255, %v255
  %v272 = vpack.c.b16 %v256, %v256
  %vm289 = vcmask 519168
  %290 = vst.msk [vmem:[%s2] sm:$0xf] %vm289, %v257
  %291 = vst.msk [vmem:[%s2 + $0x4] sm:$0xf] %vm289, %v258
  %292 = vst.msk [vmem:[%s2 + $0x8] sm:$0xf] %vm289, %v259
  %293 = vst.msk [vmem:[%s2 + $0xc] sm:$0xf] %vm289, %v260
  %294 = vst.msk [vmem:[%s2 + $0x10] sm:$0xf] %vm289, %v261
  %295 = vst.msk [vmem:[%s2 + $0x14] sm:$0xf] %vm289, %v262
  %296 = vst.msk [vmem:[%s2 + $0x18] sm:$0xf] %vm289, %v263
  %297 = vst.msk [vmem:[%s2 + $0x1c] sm:$0xf] %vm289, %v264
  %298 = vst.msk [vmem:[%s2 + $0x20] sm:$0xf] %vm289, %v265
  %299 = vst.msk [vmem:[%s2 + $0x24] sm:$0xf] %vm289, %v266
  %300 = vst.msk [vmem:[%s2 + $0x28] sm:$0xf] %vm289, %v267
  %301 = vst.msk [vmem:[%s2 + $0x2c] sm:$0xf] %vm289, %v268
  %302 = vst.msk [vmem:[%s2 + $0x30] sm:$0xf] %vm289, %v269
  %303 = vst.msk [vmem:[%s2 + $0x34] sm:$0xf] %vm289, %v270
  %304 = vst.msk [vmem:[%s2 + $0x38] sm:$0xf] %vm289, %v271
  %305 = vst.msk [vmem:[%s2 + $0x3c] sm:$0xf] %vm289, %v272
  %v306 = vsel %vm103, %v163, 0.0
  %v307 = vsel %vm103, %v166, 0.0
  %v308 = vadd.f32 %v306, %v307
  %v309 = vsel %vm103, %v171, 0.0
  %v310 = vadd.f32 %v308, %v309
  %v311 = vsel %vm103, %v174, 0.0
  %v312 = vadd.f32 %v310, %v311
  %v313 = vsel %vm103, %v179, 0.0
  %v314 = vadd.f32 %v312, %v313
  %v315 = vsel %vm103, %v182, 0.0
  %v316 = vadd.f32 %v314, %v315
  %v317 = vsel %vm103, %v187, 0.0
  %v318 = vadd.f32 %v316, %v317
  %v319 = vsel %vm103, %v190, 0.0
  %v320 = vadd.f32 %v318, %v319
  %v321 = vsel %vm103, %v195, 0.0
  %v322 = vadd.f32 %v320, %v321
  %v323 = vsel %vm103, %v198, 0.0
  %v324 = vadd.f32 %v322, %v323
  %v325 = vsel %vm103, %v203, 0.0
  %v326 = vadd.f32 %v324, %v325
  %v327 = vsel %vm103, %v206, 0.0
  %v328 = vadd.f32 %v326, %v327
  %v329 = vsel %vm103, %v211, 0.0
  %v330 = vadd.f32 %v328, %v329
  %v331 = vsel %vm103, %v214, 0.0
  %v332 = vadd.f32 %v330, %v331
  %v333 = vsel %vm103, %v219, 0.0
  %v334 = vadd.f32 %v332, %v333
  %v335 = vsel %vm103, %v222, 0.0
  %v336 = vadd.f32 %v334, %v335
  %v337 = vrot.slane %v336, 4
  %v338 = vadd.f32 %v336, %v337
  %v339 = vrot.slane %v338, 2
  %v340 = vadd.f32 %v338, %v339
  %v341 = vrot.slane %v340, 1
  %v342 = vadd.f32 %v340, %v341
  %v343 = vmul.f32 %v163, %v163
  %v344 = vmul.f32 %v166, %v166
  %v345 = vmul.f32 %v171, %v171
  %v346 = vmul.f32 %v174, %v174
  %v347 = vmul.f32 %v179, %v179
  %v348 = vmul.f32 %v182, %v182
  %v349 = vmul.f32 %v187, %v187
  %v350 = vmul.f32 %v190, %v190
  %v351 = vmul.f32 %v195, %v195
  %v352 = vmul.f32 %v198, %v198
  %v353 = vmul.f32 %v203, %v203
  %v354 = vmul.f32 %v206, %v206
  %v355 = vmul.f32 %v211, %v211
  %v356 = vmul.f32 %v214, %v214
  %v357 = vmul.f32 %v219, %v219
  %v358 = vmul.f32 %v222, %v222
  %v359 = vsel %vm103, %v343, 0.0
  %v360 = vsel %vm103, %v344, 0.0
  %v361 = vadd.f32 %v359, %v360
  %v362 = vsel %vm103, %v345, 0.0
  %v363 = vadd.f32 %v361, %v362
  %v364 = vsel %vm103, %v346, 0.0
  %v365 = vadd.f32 %v363, %v364
  %v366 = vsel %vm103, %v347, 0.0
  %v367 = vadd.f32 %v365, %v366
  %v368 = vsel %vm103, %v348, 0.0
  %v369 = vadd.f32 %v367, %v368
  %v370 = vsel %vm103, %v349, 0.0
  %v371 = vadd.f32 %v369, %v370
  %v372 = vsel %vm103, %v350, 0.0
  %v373 = vadd.f32 %v371, %v372
  %v374 = vsel %vm103, %v351, 0.0
  %v375 = vadd.f32 %v373, %v374
  %v376 = vsel %vm103, %v352, 0.0
  %v377 = vadd.f32 %v375, %v376
  %v378 = vsel %vm103, %v353, 0.0
  %v379 = vadd.f32 %v377, %v378
  %v380 = vsel %vm103, %v354, 0.0
  %v381 = vadd.f32 %v379, %v380
  %v382 = vsel %vm103, %v355, 0.0
  %v383 = vadd.f32 %v381, %v382
  %v384 = vsel %vm103, %v356, 0.0
  %v385 = vadd.f32 %v383, %v384
  %v386 = vsel %vm103, %v357, 0.0
  %v387 = vadd.f32 %v385, %v386
  %v388 = vsel %vm103, %v358, 0.0
  %v389 = vadd.f32 %v387, %v388
  %v390 = vrot.slane %v389, 4
  %v391 = vadd.f32 %v389, %v390
  %v392 = vrot.slane %v391, 2
  %v393 = vadd.f32 %v391, %v392
  %v394 = vrot.slane %v393, 1
  %v395 = vadd.f32 %v393, %v394
  %vm396 = vcmask 516096
  %397 = vst.msk [vmem:[%s3] sm:$0x1] %vm396, %v342
  %398 = vst.msk [vmem:[%s4] sm:$0x1] %vm396, %v395
  // Predicated region
  $region10: #{ocean_vae_forward.17} parent=0 // pred_check
    _
  $region11: #{ocean_vae_forward.17} parent=0 // pred_check_branch
    %400 = sbr.rel (0) target = $region13
  $region12: #{ocean_vae_forward.17} parent=0 // pred_region
    _
  $region13: #{ocean_vae_forward.17} parent=0 // pred_fallthru
    _
  // Predicated region
  $region14: #{ocean_vae_forward.17} parent=0 // pred_check
    _
  $region15: #{ocean_vae_forward.17} parent=0 // pred_check_branch
    %402 = sbr.rel (0) target = $region17
  $region16: #{ocean_vae_forward.17} parent=0 // pred_region
    _
  $region17: #{ocean_vae_forward.17} parent=0 // pred_fallthru
    _
  // Predicated region
  $region18: #{ocean_vae_forward.17} parent=0 // pred_check
    _
  $region19: #{ocean_vae_forward.17} parent=0 // pred_check_branch
    %404 = sbr.rel (0) target = $region21
  $region20: #{ocean_vae_forward.17} parent=0 // pred_region
    _
  $region21: #{ocean_vae_forward.17} parent=0 // pred_fallthru
    _
  // Predicated region
  $region22: #{ocean_vae_forward.17} parent=0 // pred_check
    _
  $region23: #{ocean_vae_forward.17} parent=0 // pred_check_branch
    %406 = sbr.rel (0) target = $region25
  $region24: #{ocean_vae_forward.17} parent=0 // pred_region
    _
  $region25: #{ocean_vae_forward.17} parent=0 // pred_fallthru
    _
  // Predicated region
  $region26: #{ocean_vae_forward.17} parent=0 // pred_check
    _
  $region27: #{ocean_vae_forward.17} parent=0 // pred_check_branch
    %408 = sbr.rel (0) target = $region29
  $region28: #{ocean_vae_forward.17} parent=0 // pred_region
    _
  $region29: #{ocean_vae_forward.17} parent=0 // pred_fallthru
    _
  // Predicated region
  $region30: #{ocean_vae_forward.17} parent=0 // pred_check
    _
  $region31: #{ocean_vae_forward.17} parent=0 // pred_check_branch
    %410 = sbr.rel (0) target = $region33
  $region32: #{ocean_vae_forward.17} parent=0 // pred_region
    _
  $region33: #{ocean_vae_forward.17} parent=0 // pred_fallthru
    _

// kernel: ocean_vae_forward.20
$region0: #{ocean_vae_forward.20}
  #allocation0 [shape = 'u32[]', space=smem, size = 0x4, offset = 0x4, fixed_abs, tag = 'smem constant byte address 0x4 - core index']
  #allocation1 [shape = 'u32[144,128]{1,0:T(1,128)}', space=vmem, size = 0x12000, scoped, tag = 'internal scratch']
  %s0 = inlined_call_operand.vmem [shape: bf16[32,128], index: 0, kind: input, shape index: {}]
  %s1 = inlined_call_operand.vmem [shape: f32[1,128], index: 1, kind: input, shape index: {}]
  %s2 = inlined_call_operand.vmem [shape: f32[1,128], index: 2, kind: input, shape index: {}]
  %s3 = inlined_call_operand.vmem [shape: bf16[32,128], index: 3, kind: output, shape index: {}]
  %s4 = sld [smem:[#allocation0]]
  $region22: #{ocean_vae_forward.20} parent=0
    _
  %s6 = ssub.s32 1, %s4
  %s7 = scalar_select 0, %s6, %s4
  // Predicated region
  $region2: #{ocean_vae_forward.20} parent=0 // pred_check
    _
  $region3: #{ocean_vae_forward.20} parent=0 // pred_check_branch
    %9 = sbr.rel (0) target = $region5
  $region4: #{ocean_vae_forward.20} parent=0 // pred_region
    _
  $region5: #{ocean_vae_forward.20} parent=0 // pred_fallthru
    _
  // Predicated region
  $region6: #{ocean_vae_forward.20} parent=0 // pred_check
    _
  $region7: #{ocean_vae_forward.20} parent=0 // pred_check_branch
    %11 = sbr.rel (0) target = $region9
  $region8: #{ocean_vae_forward.20} parent=0 // pred_region
    _
  $region9: #{ocean_vae_forward.20} parent=0 // pred_fallthru
    _
  // Predicated region
  $region10: #{ocean_vae_forward.20} parent=0 // pred_check
    _
  $region11: #{ocean_vae_forward.20} parent=0 // pred_check_branch
    %13 = sbr.rel (0) target = $region13
  $region12: #{ocean_vae_forward.20} parent=0 // pred_region
    _
  $region13: #{ocean_vae_forward.20} parent=0 // pred_fallthru
    _
  %v14 = vld [vmem:[%s0] sm:$0xf]
  %v15 = vld [vmem:[%s0 + $0x4] sm:$0xf]
  %v16 = vld [vmem:[%s0 + $0x8] sm:$0xf]
  %v17 = vld [vmem:[%s0 + $0xc] sm:$0xf]
  %v18 = vunpack.c.l.bf16 %v14
  %v19 = vunpack.c.l.bf16 %v15
  %v20 = vunpack.c.l.bf16 %v16
  %v21 = vunpack.c.l.bf16 %v17
  %v22 = vld [vmem:[%s1] sm:$0x1]
  %v24 = vlaneseq
  %v25 = vshrl.u32 %v24, 7
  %v26 = vsub.s32 0, %v25
  %v27 = vrot.slane %v22, %v26
  %v29 = vmul.f32 %v18, %v27
  %v30 = vmul.f32 %v19, %v27
  %v31 = vmul.f32 %v20, %v27
  %v32 = vmul.f32 %v21, %v27
  %v33 = vld [vmem:[%s2] sm:$0x1]
  %v35 = vlaneseq
  %v36 = vshrl.u32 %v35, 7
  %v37 = vsub.s32 0, %v36
  %v38 = vrot.slane %v33, %v37
  %v40 = vadd.f32 %v29, %v38
  %v41 = vadd.f32 %v30, %v38
  %v42 = vadd.f32 %v31, %v38
  %v43 = vadd.f32 %v32, %v38
  %v44 = vmul.f32 %v40, 0.2
  %v45 = vmul.f32 %v41, 0.2
  %v46 = vmul.f32 %v42, 0.2
  %v47 = vmul.f32 %v43, 0.2
  %v48 = vmax.f32 %v40, %v44
  %v49 = vmax.f32 %v41, %v45
  %v50 = vmax.f32 %v42, %v46
  %v51 = vmax.f32 %v43, %v47
  %v52 = vpack.c.bf16 %v49, %v48
  %v53 = vpack.c.bf16 %v51, %v50
  %v56 = vunpack.c.l.b16 %v52
  %v57 = vunpack.c.h.b16 %v52
  %v58 = vunpack.c.l.b16 %v53
  %v59 = vunpack.c.h.b16 %v53
  %v60 = vpack.c.b16 %v56, %v56
  %v61 = vpack.c.b16 %v57, %v57
  %v62 = vpack.c.b16 %v58, %v58
  %v63 = vpack.c.b16 %v59, %v59
  %68 = vst [vmem:[%s3] sm:$0xf] %v60
  %69 = vst [vmem:[%s3 + $0x4] sm:$0xf] %v61
  %70 = vst [vmem:[%s3 + $0x8] sm:$0xf] %v62
  %71 = vst [vmem:[%s3 + $0xc] sm:$0xf] %v63
  // Predicated region
  $region14: #{ocean_vae_forward.20} parent=0 // pred_check
    _
  $region15: #{ocean_vae_forward.20} parent=0 // pred_check_branch
    %73 = sbr.rel (0) target = $region17
  $region16: #{ocean_vae_forward.20} parent=0 // pred_region
    _
  $region17: #{ocean_vae_forward.20} parent=0 // pred_fallthru
    _
  // Predicated region
  $region18: #{ocean_vae_forward.20} parent=0 // pred_check
    _
  $region19: #{ocean_vae_forward.20} parent=0 // pred_check_branch
    %75 = sbr.rel (0) target = $region21
  $region20: #{ocean_vae_forward.20} parent=0 // pred_region
    _
  $region21: #{ocean_vae_forward.20} parent=0 // pred_fallthru
    _

// kernel: ocean_vae_forward.19
$region0: #{ocean_vae_forward.19}
  #allocation0 [shape = 'u32[]', space=smem, size = 0x4, offset = 0x4, fixed_abs, tag = 'smem constant byte address 0x4 - core index']
  #allocation1 [shape = 'u32[144,128]{1,0:T(1,128)}', space=vmem, size = 0x12000, scoped, tag = 'internal scratch']
  %s0 = inlined_call_operand.vmem [shape: bf16[32,1024], index: 0, kind: input, shape index: {}]
  %s1 = inlined_call_operand.vmem [shape: bf16[1024,128], index: 1, kind: input, shape index: {}]
  %s2 = inlined_call_operand.vmem [shape: bf16[32,128], index: 2, kind: output, shape index: {0}]
  %s3 = inlined_call_operand.vmem [shape: f32[1,1,128], index: 3, kind: output, shape index: {1}]
  %s4 = inlined_call_operand.vmem [shape: f32[1,1,128], index: 4, kind: output, shape index: {2}]
  %5 = xla_tuple %s2, %s3, %s4
  %s6 = sld [smem:[#allocation0]]
  $region34: #{ocean_vae_forward.19} parent=0
    _
  %s8 = ssub.s32 1, %s6
  %s9 = scalar_select 0, %s8, %s6
  // Predicated region
  $region2: #{ocean_vae_forward.19} parent=0 // pred_check
    _
  $region3: #{ocean_vae_forward.19} parent=0 // pred_check_branch
    %11 = sbr.rel (0) target = $region5
  $region4: #{ocean_vae_forward.19} parent=0 // pred_region
    _
  $region5: #{ocean_vae_forward.19} parent=0 // pred_fallthru
    _
  // Predicated region
  $region6: #{ocean_vae_forward.19} parent=0 // pred_check
    _
  $region7: #{ocean_vae_forward.19} parent=0 // pred_check_branch
    %13 = sbr.rel (0) target = $region9
  $region8: #{ocean_vae_forward.19} parent=0 // pred_region
    _
  $region9: #{ocean_vae_forward.19} parent=0 // pred_fallthru
    _
  %v15 = vld [vmem:[%s0] sm:$0xff]
  %v16 = vld [vmem:[%s0 + $0x8] sm:$0xff]
  %v17 = vld [vmem:[%s0 + $0x10] sm:$0xff]
  %v18 = vld [vmem:[%s0 + $0x18] sm:$0xff]
  %v19 = vld [vmem:[%s0 + $0x20] sm:$0xff]
  %v20 = vld [vmem:[%s0 + $0x28] sm:$0xff]
  %v21 = vld [vmem:[%s0 + $0x30] sm:$0xff]
  %v22 = vld [vmem:[%s0 + $0x38] sm:$0xff]
  %v23 = vld [vmem:[%s0 + $0x40] sm:$0xff]
  %v24 = vld [vmem:[%s0 + $0x48] sm:$0xff]
  %v25 = vld [vmem:[%s0 + $0x50] sm:$0xff]
  %v26 = vld [vmem:[%s0 + $0x58] sm:$0xff]
  %v27 = vld [vmem:[%s0 + $0x60] sm:$0xff]
  %v28 = vld [vmem:[%s0 + $0x68] sm:$0xff]
  %v29 = vld [vmem:[%s0 + $0x70] sm:$0xff]
  %v30 = vld [vmem:[%s0 + $0x78] sm:$0xff]
  %v31 = vld [vmem:[%s1] sm:$0xf]
  %v32 = vld [vmem:[%s1 + $0x4] sm:$0xf]
  %v33 = vld [vmem:[%s1 + $0x8] sm:$0xf]
  %v34 = vld [vmem:[%s1 + $0xc] sm:$0xf]
  %v35 = vld [vmem:[%s1 + $0x10] sm:$0xf]
  %v36 = vld [vmem:[%s1 + $0x14] sm:$0xf]
  %v37 = vld [vmem:[%s1 + $0x18] sm:$0xf]
  %v38 = vld [vmem:[%s1 + $0x1c] sm:$0xf]
  %v39 = vld [vmem:[%s1 + $0x20] sm:$0xf]
  %v40 = vld [vmem:[%s1 + $0x24] sm:$0xf]
  %v41 = vld [vmem:[%s1 + $0x28] sm:$0xf]
  %v42 = vld [vmem:[%s1 + $0x2c] sm:$0xf]
  %v43 = vld [vmem:[%s1 + $0x30] sm:$0xf]
  %v44 = vld [vmem:[%s1 + $0x34] sm:$0xf]
  %v45 = vld [vmem:[%s1 + $0x38] sm:$0xf]
  %v46 = vld [vmem:[%s1 + $0x3c] sm:$0xf]
  %v47 = vld [vmem:[%s1 + $0x40] sm:$0xf]
  %v48 = vld [vmem:[%s1 + $0x44] sm:$0xf]
  %v49 = vld [vmem:[%s1 + $0x48] sm:$0xf]
  %v50 = vld [vmem:[%s1 + $0x4c] sm:$0xf]
  %v51 = vld [vmem:[%s1 + $0x50] sm:$0xf]
  %v52 = vld [vmem:[%s1 + $0x54] sm:$0xf]
  %v53 = vld [vmem:[%s1 + $0x58] sm:$0xf]
  %v54 = vld [vmem:[%s1 + $0x5c] sm:$0xf]
  %v55 = vld [vmem:[%s1 + $0x60] sm:$0xf]
  %v56 = vld [vmem:[%s1 + $0x64] sm:$0xf]
  %v57 = vld [vmem:[%s1 + $0x68] sm:$0xf]
  %v58 = vld [vmem:[%s1 + $0x6c] sm:$0xf]
  %v59 = vld [vmem:[%s1 + $0x70] sm:$0xf]
  %v60 = vld [vmem:[%s1 + $0x74] sm:$0xf]
  %v61 = vld [vmem:[%s1 + $0x78] sm:$0xf]
  %v62 = vld [vmem:[%s1 + $0x7c] sm:$0xf]
  %v63 = vld [vmem:[%s1 + $0x80] sm:$0xf]
  %v64 = vld [vmem:[%s1 + $0x84] sm:$0xf]
  %v65 = vld [vmem:[%s1 + $0x88] sm:$0xf]
  %v66 = vld [vmem:[%s1 + $0x8c] sm:$0xf]
  %v67 = vld [vmem:[%s1 + $0x90] sm:$0xf]
  %v68 = vld [vmem:[%s1 + $0x94] sm:$0xf]
  %v69 = vld [vmem:[%s1 + $0x98] sm:$0xf]
  %v70 = vld [vmem:[%s1 + $0x9c] sm:$0xf]
  %v71 = vld [vmem:[%s1 + $0xa0] sm:$0xf]
  %v72 = vld [vmem:[%s1 + $0xa4] sm:$0xf]
  %v73 = vld [vmem:[%s1 + $0xa8] sm:$0xf]
  %v74 = vld [vmem:[%s1 + $0xac] sm:$0xf]
  %v75 = vld [vmem:[%s1 + $0xb0] sm:$0xf]
  %v76 = vld [vmem:[%s1 + $0xb4] sm:$0xf]
  %v77 = vld [vmem:[%s1 + $0xb8] sm:$0xf]
  %v78 = vld [vmem:[%s1 + $0xbc] sm:$0xf]
  %v79 = vld [vmem:[%s1 + $0xc0] sm:$0xf]
  %v80 = vld [vmem:[%s1 + $0xc4] sm:$0xf]
  %v81 = vld [vmem:[%s1 + $0xc8] sm:$0xf]
  %v82 = vld [vmem:[%s1 + $0xcc] sm:$0xf]
  %v83 = vld [vmem:[%s1 + $0xd0] sm:$0xf]
  %v84 = vld [vmem:[%s1 + $0xd4] sm:$0xf]
  %v85 = vld [vmem:[%s1 + $0xd8] sm:$0xf]
  %v86 = vld [vmem:[%s1 + $0xdc] sm:$0xf]
  %v87 = vld [vmem:[%s1 + $0xe0] sm:$0xf]
  %v88 = vld [vmem:[%s1 + $0xe4] sm:$0xf]
  %v89 = vld [vmem:[%s1 + $0xe8] sm:$0xf]
  %v90 = vld [vmem:[%s1 + $0xec] sm:$0xf]
  %v91 = vld [vmem:[%s1 + $0xf0] sm:$0xf]
  %v92 = vld [vmem:[%s1 + $0xf4] sm:$0xf]
  %v93 = vld [vmem:[%s1 + $0xf8] sm:$0xf]
  %v94 = vld [vmem:[%s1 + $0xfc] sm:$0xf]
  %v95 = vld [vmem:[%s1 + $0x100] sm:$0xf]
  %v96 = vld [vmem:[%s1 + $0x104] sm:$0xf]
  %v97 = vld [vmem:[%s1 + $0x108] sm:$0xf]
  %v98 = vld [vmem:[%s1 + $0x10c] sm:$0xf]
  %v99 = vld [vmem:[%s1 + $0x110] sm:$0xf]
  %v100 = vld [vmem:[%s1 + $0x114] sm:$0xf]
  %v101 = vld [vmem:[%s1 + $0x118] sm:$0xf]
  %v102 = vld [vmem:[%s1 + $0x11c] sm:$0xf]
  %v103 = vld [vmem:[%s1 + $0x120] sm:$0xf]
  %v104 = vld [vmem:[%s1 + $0x124] sm:$0xf]
  %v105 = vld [vmem:[%s1 + $0x128] sm:$0xf]
  %v106 = vld [vmem:[%s1 + $0x12c] sm:$0xf]
  %v107 = vld [vmem:[%s1 + $0x130] sm:$0xf]
  %v108 = vld [vmem:[%s1 + $0x134] sm:$0xf]
  %v109 = vld [vmem:[%s1 + $0x138] sm:$0xf]
  %v110 = vld [vmem:[%s1 + $0x13c] sm:$0xf]
  %v111 = vld [vmem:[%s1 + $0x140] sm:$0xf]
  %v112 = vld [vmem:[%s1 + $0x144] sm:$0xf]
  %v113 = vld [vmem:[%s1 + $0x148] sm:$0xf]
  %v114 = vld [vmem:[%s1 + $0x14c] sm:$0xf]
  %v115 = vld [vmem:[%s1 + $0x150] sm:$0xf]
  %v116 = vld [vmem:[%s1 + $0x154] sm:$0xf]
  %v117 = vld [vmem:[%s1 + $0x158] sm:$0xf]
  %v118 = vld [vmem:[%s1 + $0x15c] sm:$0xf]
  %v119 = vld [vmem:[%s1 + $0x160] sm:$0xf]
  %v120 = vld [vmem:[%s1 + $0x164] sm:$0xf]
  %v121 = vld [vmem:[%s1 + $0x168] sm:$0xf]
  %v122 = vld [vmem:[%s1 + $0x16c] sm:$0xf]
  %v123 = vld [vmem:[%s1 + $0x170] sm:$0xf]
  %v124 = vld [vmem:[%s1 + $0x174] sm:$0xf]
  %v125 = vld [vmem:[%s1 + $0x178] sm:$0xf]
  %v126 = vld [vmem:[%s1 + $0x17c] sm:$0xf]
  %v127 = vld [vmem:[%s1 + $0x180] sm:$0xf]
  %v128 = vld [vmem:[%s1 + $0x184] sm:$0xf]
  %v129 = vld [vmem:[%s1 + $0x188] sm:$0xf]
  %v130 = vld [vmem:[%s1 + $0x18c] sm:$0xf]
  %v131 = vld [vmem:[%s1 + $0x190] sm:$0xf]
  %v132 = vld [vmem:[%s1 + $0x194] sm:$0xf]
  %v133 = vld [vmem:[%s1 + $0x198] sm:$0xf]
  %v134 = vld [vmem:[%s1 + $0x19c] sm:$0xf]
  %v135 = vld [vmem:[%s1 + $0x1a0] sm:$0xf]
  %v136 = vld [vmem:[%s1 + $0x1a4] sm:$0xf]
  %v137 = vld [vmem:[%s1 + $0x1a8] sm:$0xf]
  %v138 = vld [vmem:[%s1 + $0x1ac] sm:$0xf]
  %v139 = vld [vmem:[%s1 + $0x1b0] sm:$0xf]
  %v140 = vld [vmem:[%s1 + $0x1b4] sm:$0xf]
  %v141 = vld [vmem:[%s1 + $0x1b8] sm:$0xf]
  %v142 = vld [vmem:[%s1 + $0x1bc] sm:$0xf]
  %v143 = vld [vmem:[%s1 + $0x1c0] sm:$0xf]
  %v144 = vld [vmem:[%s1 + $0x1c4] sm:$0xf]
  %v145 = vld [vmem:[%s1 + $0x1c8] sm:$0xf]
  %v146 = vld [vmem:[%s1 + $0x1cc] sm:$0xf]
  %v147 = vld [vmem:[%s1 + $0x1d0] sm:$0xf]
  %v148 = vld [vmem:[%s1 + $0x1d4] sm:$0xf]
  %v149 = vld [vmem:[%s1 + $0x1d8] sm:$0xf]
  %v150 = vld [vmem:[%s1 + $0x1dc] sm:$0xf]
  %v151 = vld [vmem:[%s1 + $0x1e0] sm:$0xf]
  %v152 = vld [vmem:[%s1 + $0x1e4] sm:$0xf]
  %v153 = vld [vmem:[%s1 + $0x1e8] sm:$0xf]
  %v154 = vld [vmem:[%s1 + $0x1ec] sm:$0xf]
  %v155 = vld [vmem:[%s1 + $0x1f0] sm:$0xf]
  %v156 = vld [vmem:[%s1 + $0x1f4] sm:$0xf]
  %v157 = vld [vmem:[%s1 + $0x1f8] sm:$0xf]
  %v158 = vld [vmem:[%s1 + $0x1fc] sm:$0xf]
  %v175 = vunpack.c.l.b16 %v15
  %v176 = vunpack.c.h.b16 %v15
  %v177 = vunpack.c.l.b16 %v16
  %v178 = vunpack.c.h.b16 %v16
  %v179 = vunpack.c.l.b16 %v17
  %v180 = vunpack.c.h.b16 %v17
  %v181 = vunpack.c.l.b16 %v18
  %v182 = vunpack.c.h.b16 %v18
  %v183 = vunpack.c.l.b16 %v19
  %v184 = vunpack.c.h.b16 %v19
  %v185 = vunpack.c.l.b16 %v20
  %v186 = vunpack.c.h.b16 %v20
  %v187 = vunpack.c.l.b16 %v21
  %v188 = vunpack.c.h.b16 %v21
  %v189 = vunpack.c.l.b16 %v22
  %v190 = vunpack.c.h.b16 %v22
  %v191 = vunpack.c.l.b16 %v23
  %v192 = vunpack.c.h.b16 %v23
  %v193 = vunpack.c.l.b16 %v24
  %v194 = vunpack.c.h.b16 %v24
  %v195 = vunpack.c.l.b16 %v25
  %v196 = vunpack.c.h.b16 %v25
  %v197 = vunpack.c.l.b16 %v26
  %v198 = vunpack.c.h.b16 %v26
  %v199 = vunpack.c.l.b16 %v27
  %v200 = vunpack.c.h.b16 %v27
  %v201 = vunpack.c.l.b16 %v28
  %v202 = vunpack.c.h.b16 %v28
  %v203 = vunpack.c.l.b16 %v29
  %v204 = vunpack.c.h.b16 %v29
  %v205 = vunpack.c.l.b16 %v30
  %v206 = vunpack.c.h.b16 %v30
  %v207 = vpack.c.b16 %v183, %v175
  %v208 = vpack.c.b16 %v184, %v176
  %v209 = vpack.c.b16 %v185, %v177
  %v210 = vpack.c.b16 %v186, %v178
  %v211 = vpack.c.b16 %v187, %v179
  %v212 = vpack.c.b16 %v188, %v180
  %v213 = vpack.c.b16 %v189, %v181
  %v214 = vpack.c.b16 %v190, %v182
  %v215 = vpack.c.b16 %v199, %v191
  %v216 = vpack.c.b16 %v200, %v192
  %v217 = vpack.c.b16 %v201, %v193
  %v218 = vpack.c.b16 %v202, %v194
  %v219 = vpack.c.b16 %v203, %v195
  %v220 = vpack.c.b16 %v204, %v196
  %v221 = vpack.c.b16 %v205, %v197
  %v222 = vpack.c.b16 %v206, %v198
  %v367 = vunpack.c.l.b16 %v31
  %v368 = vunpack.c.l.b16 %v32
  %v369 = vunpack.c.l.b16 %v33
  %v370 = vunpack.c.l.b16 %v34
  %v371 = vunpack.c.l.b16 %v35
  %v372 = vunpack.c.l.b16 %v36
  %v373 = vunpack.c.l.b16 %v37
  %v374 = vunpack.c.l.b16 %v38
  %v375 = vunpack.c.l.b16 %v39
  %v376 = vunpack.c.l.b16 %v40
  %v377 = vunpack.c.l.b16 %v41
  %v378 = vunpack.c.l.b16 %v42
  %v379 = vunpack.c.l.b16 %v43
  %v380 = vunpack.c.l.b16 %v44
  %v381 = vunpack.c.l.b16 %v45
  %v382 = vunpack.c.l.b16 %v46
  %v383 = vunpack.c.l.b16 %v47
  %v384 = vunpack.c.l.b16 %v48
  %v385 = vunpack.c.l.b16 %v49
  %v386 = vunpack.c.l.b16 %v50
  %v387 = vunpack.c.l.b16 %v51
  %v388 = vunpack.c.l.b16 %v52
  %v389 = vunpack.c.l.b16 %v53
  %v390 = vunpack.c.l.b16 %v54
  %v391 = vunpack.c.l.b16 %v55
  %v392 = vunpack.c.l.b16 %v56
  %v393 = vunpack.c.l.b16 %v57
  %v394 = vunpack.c.l.b16 %v58
  %v395 = vunpack.c.l.b16 %v59
  %v396 = vunpack.c.l.b16 %v60
  %v397 = vunpack.c.l.b16 %v61
  %v398 = vunpack.c.l.b16 %v62
  %v399 = vunpack.c.l.b16 %v63
  %v400 = vunpack.c.l.b16 %v64
  %v401 = vunpack.c.l.b16 %v65
  %v402 = vunpack.c.l.b16 %v66
  %v403 = vunpack.c.l.b16 %v67
  %v404 = vunpack.c.l.b16 %v68
  %v405 = vunpack.c.l.b16 %v69
  %v406 = vunpack.c.l.b16 %v70
  %v407 = vunpack.c.l.b16 %v71
  %v408 = vunpack.c.l.b16 %v72
  %v409 = vunpack.c.l.b16 %v73
  %v410 = vunpack.c.l.b16 %v74
  %v411 = vunpack.c.l.b16 %v75
  %v412 = vunpack.c.l.b16 %v76
  %v413 = vunpack.c.l.b16 %v77
  %v414 = vunpack.c.l.b16 %v78
  %v415 = vunpack.c.l.b16 %v79
  %v416 = vunpack.c.l.b16 %v80
  %v417 = vunpack.c.l.b16 %v81
  %v418 = vunpack.c.l.b16 %v82
  %v419 = vunpack.c.l.b16 %v83
  %v420 = vunpack.c.l.b16 %v84
  %v421 = vunpack.c.l.b16 %v85
  %v422 = vunpack.c.l.b16 %v86
  %v423 = vunpack.c.l.b16 %v87
  %v424 = vunpack.c.l.b16 %v88
  %v425 = vunpack.c.l.b16 %v89
  %v426 = vunpack.c.l.b16 %v90
  %v427 = vunpack.c.l.b16 %v91
  %v428 = vunpack.c.l.b16 %v92
  %v429 = vunpack.c.l.b16 %v93
  %v430 = vunpack.c.l.b16 %v94
  %v431 = vunpack.c.l.b16 %v95
  %v432 = vunpack.c.l.b16 %v96
  %v433 = vunpack.c.l.b16 %v97
  %v434 = vunpack.c.l.b16 %v98
  %v435 = vunpack.c.l.b16 %v99
  %v436 = vunpack.c.l.b16 %v100
  %v437 = vunpack.c.l.b16 %v101
  %v438 = vunpack.c.l.b16 %v102
  %v439 = vunpack.c.l.b16 %v103
  %v440 = vunpack.c.l.b16 %v104
  %v441 = vunpack.c.l.b16 %v105
  %v442 = vunpack.c.l.b16 %v106
  %v443 = vunpack.c.l.b16 %v107
  %v444 = vunpack.c.l.b16 %v108
  %v445 = vunpack.c.l.b16 %v109
  %v446 = vunpack.c.l.b16 %v110
  %v447 = vunpack.c.l.b16 %v111
  %v448 = vunpack.c.l.b16 %v112
  %v449 = vunpack.c.l.b16 %v113
  %v450 = vunpack.c.l.b16 %v114
  %v451 = vunpack.c.l.b16 %v115
  %v452 = vunpack.c.l.b16 %v116
  %v453 = vunpack.c.l.b16 %v117
  %v454 = vunpack.c.l.b16 %v118
  %v455 = vunpack.c.l.b16 %v119
  %v456 = vunpack.c.l.b16 %v120
  %v457 = vunpack.c.l.b16 %v121
  %v458 = vunpack.c.l.b16 %v122
  %v459 = vunpack.c.l.b16 %v123
  %v460 = vunpack.c.l.b16 %v124
  %v461 = vunpack.c.l.b16 %v125
  %v462 = vunpack.c.l.b16 %v126
  %v463 = vunpack.c.l.b16 %v127
  %v464 = vunpack.c.l.b16 %v128
  %v465 = vunpack.c.l.b16 %v129
  %v466 = vunpack.c.l.b16 %v130
  %v467 = vunpack.c.l.b16 %v131
  %v468 = vunpack.c.l.b16 %v132
  %v469 = vunpack.c.l.b16 %v133
  %v470 = vunpack.c.l.b16 %v134
  %v471 = vunpack.c.l.b16 %v135
  %v472 = vunpack.c.l.b16 %v136
  %v473 = vunpack.c.l.b16 %v137
  %v474 = vunpack.c.l.b16 %v138
  %v475 = vunpack.c.l.b16 %v139
  %v476 = vunpack.c.l.b16 %v140
  %v477 = vunpack.c.l.b16 %v141
  %v478 = vunpack.c.l.b16 %v142
  %v479 = vunpack.c.l.b16 %v143
  %v480 = vunpack.c.l.b16 %v144
  %v481 = vunpack.c.l.b16 %v145
  %v482 = vunpack.c.l.b16 %v146
  %v483 = vunpack.c.l.b16 %v147
  %v484 = vunpack.c.l.b16 %v148
  %v485 = vunpack.c.l.b16 %v149
  %v486 = vunpack.c.l.b16 %v150
  %v487 = vunpack.c.l.b16 %v151
  %v488 = vunpack.c.l.b16 %v152
  %v489 = vunpack.c.l.b16 %v153
  %v490 = vunpack.c.l.b16 %v154
  %v491 = vunpack.c.l.b16 %v155
  %v492 = vunpack.c.l.b16 %v156
  %v493 = vunpack.c.l.b16 %v157
  %v494 = vunpack.c.l.b16 %v158
  %v495 = vpack.c.b16 %v368, %v367
  %v496 = vpack.c.b16 %v370, %v369
  %v497 = vpack.c.b16 %v372, %v371
  %v498 = vpack.c.b16 %v374, %v373
  %v499 = vpack.c.b16 %v376, %v375
  %v500 = vpack.c.b16 %v378, %v377
  %v501 = vpack.c.b16 %v380, %v379
  %v502 = vpack.c.b16 %v382, %v381
  %v503 = vpack.c.b16 %v384, %v383
  %v504 = vpack.c.b16 %v386, %v385
  %v505 = vpack.c.b16 %v388, %v387
  %v506 = vpack.c.b16 %v390, %v389
  %v507 = vpack.c.b16 %v392, %v391
  %v508 = vpack.c.b16 %v394, %v393
  %v509 = vpack.c.b16 %v396, %v395
  %v510 = vpack.c.b16 %v398, %v397
  %v511 = vpack.c.b16 %v400, %v399
  %v512 = vpack.c.b16 %v402, %v401
  %v513 = vpack.c.b16 %v404, %v403
  %v514 = vpack.c.b16 %v406, %v405
  %v515 = vpack.c.b16 %v408, %v407
  %v516 = vpack.c.b16 %v410, %v409
  %v517 = vpack.c.b16 %v412, %v411
  %v518 = vpack.c.b16 %v414, %v413
  %v519 = vpack.c.b16 %v416, %v415
  %v520 = vpack.c.b16 %v418, %v417
  %v521 = vpack.c.b16 %v420, %v419
  %v522 = vpack.c.b16 %v422, %v421
  %v523 = vpack.c.b16 %v424, %v423
  %v524 = vpack.c.b16 %v426, %v425
  %v525 = vpack.c.b16 %v428, %v427
  %v526 = vpack.c.b16 %v430, %v429
  %v527 = vpack.c.b16 %v432, %v431
  %v528 = vpack.c.b16 %v434, %v433
  %v529 = vpack.c.b16 %v436, %v435
  %v530 = vpack.c.b16 %v438, %v437
  %v531 = vpack.c.b16 %v440, %v439
  %v532 = vpack.c.b16 %v442, %v441
  %v533 = vpack.c.b16 %v444, %v443
  %v534 = vpack.c.b16 %v446, %v445
  %v535 = vpack.c.b16 %v448, %v447
  %v536 = vpack.c.b16 %v450, %v449
  %v537 = vpack.c.b16 %v452, %v451
  %v538 = vpack.c.b16 %v454, %v453
  %v539 = vpack.c.b16 %v456, %v455
  %v540 = vpack.c.b16 %v458, %v457
  %v541 = vpack.c.b16 %v460, %v459
  %v542 = vpack.c.b16 %v462, %v461
  %v543 = vpack.c.b16 %v464, %v463
  %v544 = vpack.c.b16 %v466, %v465
  %v545 = vpack.c.b16 %v468, %v467
  %v546 = vpack.c.b16 %v470, %v469
  %v547 = vpack.c.b16 %v472, %v471
  %v548 = vpack.c.b16 %v474, %v473
  %v549 = vpack.c.b16 %v476, %v475
  %v550 = vpack.c.b16 %v478, %v477
  %v551 = vpack.c.b16 %v480, %v479
  %v552 = vpack.c.b16 %v482, %v481
  %v553 = vpack.c.b16 %v484, %v483
  %v554 = vpack.c.b16 %v486, %v485
  %v555 = vpack.c.b16 %v488, %v487
  %v556 = vpack.c.b16 %v490, %v489
  %v557 = vpack.c.b16 %v492, %v491
  %v558 = vpack.c.b16 %v494, %v493
  %623 = vmatprep.subr.bf16.mxu0 0
  %624 = vmatpush1.bf16.msra.mxu0 %v495
  %625 = vmatprep.subr.bf16.mxu0 0
  %626 = vmatpush1.bf16.msra.mxu0 %v496
  %627 = vmatprep.subr.bf16.mxu0 0
  %628 = vmatpush1.bf16.msra.mxu0 %v497
  %629 = vmatprep.subr.bf16.mxu0 0
  %630 = vmatpush1.bf16.msra.mxu0 %v498
  %631 = vmatprep.subr.bf16.mxu0 0
  %632 = vmatpush1.bf16.msra.mxu0 %v499
  %633 = vmatprep.subr.bf16.mxu0 0
  %634 = vmatpush1.bf16.msra.mxu0 %v500
  %635 = vmatprep.subr.bf16.mxu0 0
  %636 = vmatpush1.bf16.msra.mxu0 %v501
  %637 = vmatprep.subr.bf16.mxu0 0
  %638 = vmatpush1.bf16.msra.mxu0 %v502
  %639 = vmatprep.subr.bf16.mxu0 0
  %640 = vmatpush1.bf16.msra.mxu0 %v503
  %641 = vmatprep.subr.bf16.mxu0 0
  %642 = vmatpush1.bf16.msra.mxu0 %v504
  %643 = vmatprep.subr.bf16.mxu0 0
  %644 = vmatpush1.bf16.msra.mxu0 %v505
  %645 = vmatprep.subr.bf16.mxu0 0
  %646 = vmatpush1.bf16.msra.mxu0 %v506
  %647 = vmatprep.subr.bf16.mxu0 0
  %648 = vmatpush1.bf16.msra.mxu0 %v507
  %649 = vmatprep.subr.bf16.mxu0 0
  %650 = vmatpush1.bf16.msra.mxu0 %v508
  %651 = vmatprep.subr.bf16.mxu0 0
  %652 = vmatpush1.bf16.msra.mxu0 %v509
  %653 = vmatprep.subr.bf16.mxu0 0
  %654 = vmatpush1.bf16.msra.mxu0 %v510
  %655 = vmatprep.mubr.bf16.mxu0 %v208
  %656 = vmatmul.mubr.bf16.gmra.mrb[0].mxu0 %v207
  %v657 = vpop.f32.mrb[0].mxu0
  %v658 = vadd.f32 0.0, %v657
  %v659 = vpop.f32.mrb[0].mxu0
  %v660 = vpop.f32.mrb[0].mxu0
  %v661 = vadd.f32 0.0, %v660
  %v662 = vpop.f32.mrb[0].mxu0
  %663 = vmatprep.mubr.bf16.mxu0 %v216
  %664 = vmatmul.mubr.bf16.gmra.mrb[0].mxu0 %v215
  %v665 = vpop.f32.mrb[0].mxu0
  %v666 = vadd.f32 0.0, %v665
  %v667 = vpop.f32.mrb[0].mxu0
  %v668 = vpop.f32.mrb[0].mxu0
  %v669 = vadd.f32 0.0, %v668
  %v670 = vpop.f32.mrb[0].mxu0
  %671 = vdwg.mxu0
  %672 = vmatprep.subr.bf16.mxu0 0
  %673 = vmatpush1.bf16.msra.mxu0 %v511
  %674 = vmatprep.subr.bf16.mxu0 0
  %675 = vmatpush1.bf16.msra.mxu0 %v512
  %676 = vmatprep.subr.bf16.mxu0 0
  %677 = vmatpush1.bf16.msra.mxu0 %v513
  %678 = vmatprep.subr.bf16.mxu0 0
  %679 = vmatpush1.bf16.msra.mxu0 %v514
  %680 = vmatprep.subr.bf16.mxu0 0
  %681 = vmatpush1.bf16.msra.mxu0 %v515
  %682 = vmatprep.subr.bf16.mxu0 0
  %683 = vmatpush1.bf16.msra.mxu0 %v516
  %684 = vmatprep.subr.bf16.mxu0 0
  %685 = vmatpush1.bf16.msra.mxu0 %v517
  %686 = vmatprep.subr.bf16.mxu0 0
  %687 = vmatpush1.bf16.msra.mxu0 %v518
  %688 = vmatprep.subr.bf16.mxu0 0
  %689 = vmatpush1.bf16.msra.mxu0 %v519
  %690 = vmatprep.subr.bf16.mxu0 0
  %691 = vmatpush1.bf16.msra.mxu0 %v520
  %692 = vmatprep.subr.bf16.mxu0 0
  %693 = vmatpush1.bf16.msra.mxu0 %v521
  %694 = vmatprep.subr.bf16.mxu0 0
  %695 = vmatpush1.bf16.msra.mxu0 %v522
  %696 = vmatprep.subr.bf16.mxu0 0
  %697 = vmatpush1.bf16.msra.mxu0 %v523
  %698 = vmatprep.subr.bf16.mxu0 0
  %699 = vmatpush1.bf16.msra.mxu0 %v524
  %700 = vmatprep.subr.bf16.mxu0 0
  %701 = vmatpush1.bf16.msra.mxu0 %v525
  %702 = vmatprep.subr.bf16.mxu0 0
  %703 = vmatpush1.bf16.msra.mxu0 %v526
  %704 = vmatprep.mubr.bf16.mxu0 %v210
  %705 = vmatmul.mubr.bf16.gmra.mrb[0].mxu0 %v209
  %v706 = vpop.f32.mrb[0].mxu0
  %v707 = vadd.f32 %v658, %v706
  %v708 = vpop.f32.mrb[0].mxu0
  %v709 = vpop.f32.mrb[0].mxu0
  %v710 = vadd.f32 %v661, %v709
  %v711 = vpop.f32.mrb[0].mxu0
  %712 = vmatprep.mubr.bf16.mxu0 %v218
  %713 = vmatmul.mubr.bf16.gmra.mrb[0].mxu0 %v217
  %v714 = vpop.f32.mrb[0].mxu0
  %v715 = vadd.f32 %v666, %v714
  %v716 = vpop.f32.mrb[0].mxu0
  %v717 = vpop.f32.mrb[0].mxu0
  %v718 = vadd.f32 %v669, %v717
  %v719 = vpop.f32.mrb[0].mxu0
  %720 = vdwg.mxu0
  %721 = vmatprep.subr.bf16.mxu0 0
  %722 = vmatpush1.bf16.msra.mxu0 %v527
  %723 = vmatprep.subr.bf16.mxu0 0
  %724 = vmatpush1.bf16.msra.mxu0 %v528
  %725 = vmatprep.subr.bf16.mxu0 0
  %726 = vmatpush1.bf16.msra.mxu0 %v529
  %727 = vmatprep.subr.bf16.mxu0 0
  %728 = vmatpush1.bf16.msra.mxu0 %v530
  %729 = vmatprep.subr.bf16.mxu0 0
  %730 = vmatpush1.bf16.msra.mxu0 %v531
  %731 = vmatprep.subr.bf16.mxu0 0
  %732 = vmatpush1.bf16.msra.mxu0 %v532
  %733 = vmatprep.subr.bf16.mxu0 0
  %734 = vmatpush1.bf16.msra.mxu0 %v533
  %735 = vmatprep.subr.bf16.mxu0 0
  %736 = vmatpush1.bf16.msra.mxu0 %v534
  %737 = vmatprep.subr.bf16.mxu0 0
  %738 = vmatpush1.bf16.msra.mxu0 %v535
  %739 = vmatprep.subr.bf16.mxu0 0
  %740 = vmatpush1.bf16.msra.mxu0 %v536
  %741 = vmatprep.subr.bf16.mxu0 0
  %742 = vmatpush1.bf16.msra.mxu0 %v537
  %743 = vmatprep.subr.bf16.mxu0 0
  %744 = vmatpush1.bf16.msra.mxu0 %v538
  %745 = vmatprep.subr.bf16.mxu0 0
  %746 = vmatpush1.bf16.msra.mxu0 %v539
  %747 = vmatprep.subr.bf16.mxu0 0
  %748 = vmatpush1.bf16.msra.mxu0 %v540
  %749 = vmatprep.subr.bf16.mxu0 0
  %750 = vmatpush1.bf16.msra.mxu0 %v541
  %751 = vmatprep.subr.bf16.mxu0 0
  %752 = vmatpush1.bf16.msra.mxu0 %v542
  %753 = vmatprep.mubr.bf16.mxu0 %v212
  %754 = vmatmul.mubr.bf16.gmra.mrb[0].mxu0 %v211
  %v755 = vpop.f32.mrb[0].mxu0
  %v756 = vadd.f32 %v707, %v755
  %v757 = vpop.f32.mrb[0].mxu0
  %v758 = vpop.f32.mrb[0].mxu0
  %v759 = vadd.f32 %v710, %v758
  %v760 = vpop.f32.mrb[0].mxu0
  %761 = vmatprep.mubr.bf16.mxu0 %v220
  %762 = vmatmul.mubr.bf16.gmra.mrb[0].mxu0 %v219
  %v763 = vpop.f32.mrb[0].mxu0
  %v764 = vadd.f32 %v715, %v763
  %v765 = vpop.f32.mrb[0].mxu0
  %v766 = vpop.f32.mrb[0].mxu0
  %v767 = vadd.f32 %v718, %v766
  %v768 = vpop.f32.mrb[0].mxu0
  %769 = vdwg.mxu0
  %770 = vmatprep.subr.bf16.mxu0 0
  %771 = vmatpush1.bf16.msra.mxu0 %v543
  %772 = vmatprep.subr.bf16.mxu0 0
  %773 = vmatpush1.bf16.msra.mxu0 %v544
  %774 = vmatprep.subr.bf16.mxu0 0
  %775 = vmatpush1.bf16.msra.mxu0 %v545
  %776 = vmatprep.subr.bf16.mxu0 0
  %777 = vmatpush1.bf16.msra.mxu0 %v546
  %778 = vmatprep.subr.bf16.mxu0 0
  %779 = vmatpush1.bf16.msra.mxu0 %v547
  %780 = vmatprep.subr.bf16.mxu0 0
  %781 = vmatpush1.bf16.msra.mxu0 %v548
  %782 = vmatprep.subr.bf16.mxu0 0
  %783 = vmatpush1.bf16.msra.mxu0 %v549
  %784 = vmatprep.subr.bf16.mxu0 0
  %785 = vmatpush1.bf16.msra.mxu0 %v550
  %786 = vmatprep.subr.bf16.mxu0 0
  %787 = vmatpush1.bf16.msra.mxu0 %v551
  %788 = vmatprep.subr.bf16.mxu0 0
  %789 = vmatpush1.bf16.msra.mxu0 %v552
  %790 = vmatprep.subr.bf16.mxu0 0
  %791 = vmatpush1.bf16.msra.mxu0 %v553
  %792 = vmatprep.subr.bf16.mxu0 0
  %793 = vmatpush1.bf16.msra.mxu0 %v554
  %794 = vmatprep.subr.bf16.mxu0 0
  %795 = vmatpush1.bf16.msra.mxu0 %v555
  %796 = vmatprep.subr.bf16.mxu0 0
  %797 = vmatpush1.bf16.msra.mxu0 %v556
  %798 = vmatprep.subr.bf16.mxu0 0
  %799 = vmatpush1.bf16.msra.mxu0 %v557
  %800 = vmatprep.subr.bf16.mxu0 0
  %801 = vmatpush1.bf16.msra.mxu0 %v558
  %802 = vmatprep.mubr.bf16.mxu0 %v214
  %803 = vmatmul.mubr.bf16.gmra.mrb[0].mxu0 %v213
  %v804 = vpop.f32.mrb[0].mxu0
  %v805 = vadd.f32 %v756, %v804
  %v806 = vpop.f32.mrb[0].mxu0
  %v807 = vpop.f32.mrb[0].mxu0
  %v808 = vadd.f32 %v759, %v807
  %v809 = vpop.f32.mrb[0].mxu0
  %810 = vmatprep.mubr.bf16.mxu0 %v222
  %811 = vmatmul.mubr.bf16.gmra.mrb[0].mxu0 %v221
  %v812 = vpop.f32.mrb[0].mxu0
  %v813 = vadd.f32 %v764, %v812
  %v814 = vpop.f32.mrb[0].mxu0
  %v815 = vpop.f32.mrb[0].mxu0
  %v816 = vadd.f32 %v767, %v815
  %v817 = vpop.f32.mrb[0].mxu0
  %818 = vdwg.mxu0
  %v819 = vpack.c.bf16 %v808, %v805
  %v820 = vpack.c.bf16 %v816, %v813
  %v823 = vunpack.c.l.b16 %v819
  %v824 = vunpack.c.h.b16 %v819
  %v825 = vunpack.c.l.b16 %v820
  %v826 = vunpack.c.h.b16 %v820
  %v827 = vpack.c.b16 %v823, %v823
  %v828 = vpack.c.b16 %v824, %v824
  %v829 = vpack.c.b16 %v825, %v825
  %v830 = vpack.c.b16 %v826, %v826
  %835 = vst [vmem:[%s2] sm:$0xf] %v827
  %836 = vst [vmem:[%s2 + $0x4] sm:$0xf] %v828
  %837 = vst [vmem:[%s2 + $0x8] sm:$0xf] %v829
  %838 = vst [vmem:[%s2 + $0xc] sm:$0xf] %v830
  %v839 = vadd.f32 %v805, %v808
  %v840 = vadd.f32 %v839, %v813
  %v841 = vadd.f32 %v840, %v816
  %v842 = vrot.slane %v841, 4
  %v843 = vadd.f32 %v841, %v842
  %v844 = vrot.slane %v843, 2
  %v845 = vadd.f32 %v843, %v844
  %v846 = vrot.slane %v845, 1
  %v847 = vadd.f32 %v845, %v846
  %v848 = vmul.f32 %v805, %v805
  %v849 = vmul.f32 %v808, %v808
  %v850 = vmul.f32 %v813, %v813
  %v851 = vmul.f32 %v816, %v816
  %v852 = vadd.f32 %v848, %v849
  %v853 = vadd.f32 %v852, %v850
  %v854 = vadd.f32 %v853, %v851
  %v855 = vrot.slane %v854, 4
  %v856 = vadd.f32 %v854, %v855
  %v857 = vrot.slane %v856, 2
  %v858 = vadd.f32 %v856, %v857
  %v859 = vrot.slane %v858, 1
  %v860 = vadd.f32 %v858, %v859
  %861 = vst [vmem:[%s3] sm:$0x1] %v847
  %862 = vst [vmem:[%s4] sm:$0x1] %v860
  // Predicated region
  $region10: #{ocean_vae_forward.19} parent=0 // pred_check
    _
  $region11: #{ocean_vae_forward.19} parent=0 // pred_check_branch
    %864 = sbr.rel (0) target = $region13
  $region12: #{ocean_vae_forward.19} parent=0 // pred_region
    _
  $region13: #{ocean_vae_forward.19} parent=0 // pred_fallthru
    _
  // Predicated region
  $region14: #{ocean_vae_forward.19} parent=0 // pred_check
    _
  $region15: #{ocean_vae_forward.19} parent=0 // pred_check_branch
    %866 = sbr.rel (0) target = $region17
  $region16: #{ocean_vae_forward.19} parent=0 // pred_region
    _
  $region17: #{ocean_vae_forward.19} parent=0 // pred_fallthru
    _
  // Predicated region
  $region18: #{ocean_vae_forward.19} parent=0 // pred_check
    _
  $region19: #{ocean_vae_forward.19} parent=0 // pred_check_branch
    %868 = sbr.rel (0) target = $region21
  $region20: #{ocean_vae_forward.19} parent=0 // pred_region
    _
  $region21: #{ocean_vae_forward.19} parent=0 // pred_fallthru
    _
  // Predicated region
  $region22: #{ocean_vae_forward.19} parent=0 // pred_check
    _
  $region23: #{ocean_vae_forward.19} parent=0 // pred_check_branch
    %870 = sbr.rel (0) target = $region25
  $region24: #{ocean_vae_forward.19} parent=0 // pred_region
    _
  $region25: #{ocean_vae_forward.19} parent=0 // pred_fallthru
    _
  // Predicated region
  $region26: #{ocean_vae_forward.19} parent=0 // pred_check
    _
  $region27: #{ocean_vae_forward.19} parent=0 // pred_check_branch
    %872 = sbr.rel (0) target = $region29
  $region28: #{ocean_vae_forward.19} parent=0 // pred_region
    _
  $region29: #{ocean_vae_forward.19} parent=0 // pred_fallthru
    _
  // Predicated region
  $region30: #{ocean_vae_forward.19} parent=0 // pred_check
    _
  $region31: #{ocean_vae_forward.19} parent=0 // pred_check_branch
    %874 = sbr.rel (0) target = $region33
  $region32: #{ocean_vae_forward.19} parent=0 // pred_region
    _
  $region33: #{ocean_vae_forward.19} parent=0 // pred_fallthru
    _

// kernel: ocean_vae_forward.22
$region0: #{ocean_vae_forward.22}
  #allocation0 [shape = 'u32[]', space=smem, size = 0x4, offset = 0x4, fixed_abs, tag = 'smem constant byte address 0x4 - core index']
  #allocation1 [shape = 'u32[144,128]{1,0:T(1,128)}', space=vmem, size = 0x12000, scoped, tag = 'internal scratch']
  %s0 = inlined_call_operand.vmem [shape: bf16[8,256], index: 0, kind: input, shape index: {}]
  %s1 = inlined_call_operand.vmem [shape: f32[1,256], index: 1, kind: input, shape index: {}]
  %s2 = inlined_call_operand.vmem [shape: f32[1,256], index: 2, kind: input, shape index: {}]
  %s3 = inlined_call_operand.vmem [shape: bf16[8,256], index: 3, kind: output, shape index: {}]
  %s4 = sld [smem:[#allocation0]]
  $region22: #{ocean_vae_forward.22} parent=0
    _
  %s6 = ssub.s32 1, %s4
  %s7 = scalar_select 0, %s6, %s4
  // Predicated region
  $region2: #{ocean_vae_forward.22} parent=0 // pred_check
    _
  $region3: #{ocean_vae_forward.22} parent=0 // pred_check_branch
    %9 = sbr.rel (0) target = $region5
  $region4: #{ocean_vae_forward.22} parent=0 // pred_region
    _
  $region5: #{ocean_vae_forward.22} parent=0 // pred_fallthru
    _
  // Predicated region
  $region6: #{ocean_vae_forward.22} parent=0 // pred_check
    _
  $region7: #{ocean_vae_forward.22} parent=0 // pred_check_branch
    %11 = sbr.rel (0) target = $region9
  $region8: #{ocean_vae_forward.22} parent=0 // pred_region
    _
  $region9: #{ocean_vae_forward.22} parent=0 // pred_fallthru
    _
  // Predicated region
  $region10: #{ocean_vae_forward.22} parent=0 // pred_check
    _
  $region11: #{ocean_vae_forward.22} parent=0 // pred_check_branch
    %13 = sbr.rel (0) target = $region13
  $region12: #{ocean_vae_forward.22} parent=0 // pred_region
    _
  $region13: #{ocean_vae_forward.22} parent=0 // pred_fallthru
    _
  %v14 = vld [vmem:[%s0] sm:$0xff]
  %v15 = vunpack.c.l.bf16 %v14
  %v16 = vunpack.c.h.bf16 %v14
  %v17 = vld [vmem:[%s1] sm:$0x3]
  %v19 = vlaneseq
  %v20 = vshrl.u32 %v19, 7
  %v21 = vsub.s32 0, %v20
  %v22 = vrot.slane %v17, %v21
  %v23 = vlaneseq
  %v24 = vshrl.u32 %v23, 7
  %v25 = vsub.s32 1, %v24
  %v26 = vrot.slane %v17, %v25
  %v29 = vmul.f32 %v15, %v22
  %v30 = vmul.f32 %v16, %v26
  %v31 = vld [vmem:[%s2] sm:$0x3]
  %v33 = vlaneseq
  %v34 = vshrl.u32 %v33, 7
  %v35 = vsub.s32 0, %v34
  %v36 = vrot.slane %v31, %v35
  %v37 = vlaneseq
  %v38 = vshrl.u32 %v37, 7
  %v39 = vsub.s32 1, %v38
  %v40 = vrot.slane %v31, %v39
  %v43 = vadd.f32 %v29, %v36
  %v44 = vadd.f32 %v30, %v40
  %v45 = vmul.f32 %v43, 0.2
  %v46 = vmul.f32 %v44, 0.2
  %v47 = vmax.f32 %v43, %v45
  %v48 = vmax.f32 %v44, %v46
  %v49 = vpack.c.bf16 %v47, %v47
  %v50 = vpack.c.bf16 %v48, %v48
  %v53 = vunpack.c.l.b16 %v49
  %v54 = vunpack.c.l.b16 %v50
  %v55 = vpack.c.b16 %v54, %v53
  %57 = vst [vmem:[%s3] sm:$0xff] %v55
  // Predicated region
  $region14: #{ocean_vae_forward.22} parent=0 // pred_check
    _
  $region15: #{ocean_vae_forward.22} parent=0 // pred_check_branch
    %59 = sbr.rel (0) target = $region17
  $region16: #{ocean_vae_forward.22} parent=0 // pred_region
    _
  $region17: #{ocean_vae_forward.22} parent=0 // pred_fallthru
    _
  // Predicated region
  $region18: #{ocean_vae_forward.22} parent=0 // pred_check
    _
  $region19: #{ocean_vae_forward.22} parent=0 // pred_check_branch
    %61 = sbr.rel (0) target = $region21
  $region20: #{ocean_vae_forward.22} parent=0 // pred_region
    _
  $region21: #{ocean_vae_forward.22} parent=0 // pred_fallthru
    _

// kernel: ocean_vae_forward.21
$region0: #{ocean_vae_forward.21}
  #allocation0 [shape = 'u32[]', space=smem, size = 0x4, offset = 0x4, fixed_abs, tag = 'smem constant byte address 0x4 - core index']
  #allocation1 [shape = 'u32[144,128]{1,0:T(1,128)}', space=vmem, size = 0x12000, scoped, tag = 'internal scratch']
  %s0 = inlined_call_operand.vmem [shape: bf16[8,2048], index: 0, kind: input, shape index: {}]
  %s1 = inlined_call_operand.vmem [shape: bf16[2048,256], index: 1, kind: input, shape index: {}]
  %s2 = inlined_call_operand.vmem [shape: bf16[8,256], index: 2, kind: output, shape index: {0}]
  %s3 = inlined_call_operand.vmem [shape: f32[1,1,256], index: 3, kind: output, shape index: {1}]
  %s4 = inlined_call_operand.vmem [shape: f32[1,1,256], index: 4, kind: output, shape index: {2}]
  %5 = xla_tuple %s2, %s3, %s4
  %s6 = sld [smem:[#allocation0]]
  $region34: #{ocean_vae_forward.21} parent=0
    _
  %s8 = ssub.s32 1, %s6
  %s9 = scalar_select 0, %s8, %s6
  // Predicated region
  $region2: #{ocean_vae_forward.21} parent=0 // pred_check
    _
  $region3: #{ocean_vae_forward.21} parent=0 // pred_check_branch
    %11 = sbr.rel (0) target = $region5
  $region4: #{ocean_vae_forward.21} parent=0 // pred_region
    _
  $region5: #{ocean_vae_forward.21} parent=0 // pred_fallthru
    _
  // Predicated region
  $region6: #{ocean_vae_forward.21} parent=0 // pred_check
    _
  $region7: #{ocean_vae_forward.21} parent=0 // pred_check_branch
    %13 = sbr.rel (0) target = $region9
  $region8: #{ocean_vae_forward.21} parent=0 // pred_region
    _
  $region9: #{ocean_vae_forward.21} parent=0 // pred_fallthru
    _
  %v14 = vld [vmem:[%s0] sm:$0xff]
  %v15 = vld [vmem:[%s0 + $0x8] sm:$0xff]
  %v16 = vld [vmem:[%s0 + $0x10] sm:$0xff]
  %v17 = vld [vmem:[%s0 + $0x18] sm:$0xff]
  %v18 = vld [vmem:[%s0 + $0x20] sm:$0xff]
  %v19 = vld [vmem:[%s0 + $0x28] sm:$0xff]
  %v20 = vld [vmem:[%s0 + $0x30] sm:$0xff]
  %v21 = vld [vmem:[%s0 + $0x38] sm:$0xff]
  %v22 = vld [vmem:[%s1] sm:$0xff]
  %v23 = vld [vmem:[%s1 + $0x8] sm:$0xff]
  %v24 = vld [vmem:[%s1 + $0x10] sm:$0xff]
  %v25 = vld [vmem:[%s1 + $0x18] sm:$0xff]
  %v26 = vld [vmem:[%s1 + $0x20] sm:$0xff]
  %v27 = vld [vmem:[%s1 + $0x28] sm:$0xff]
  %v28 = vld [vmem:[%s1 + $0x30] sm:$0xff]
  %v29 = vld [vmem:[%s1 + $0x38] sm:$0xff]
  %v30 = vld [vmem:[%s1 + $0x40] sm:$0xff]
  %v31 = vld [vmem:[%s1 + $0x48] sm:$0xff]
  %v32 = vld [vmem:[%s1 + $0x50] sm:$0xff]
  %v33 = vld [vmem:[%s1 + $0x58] sm:$0xff]
  %v34 = vld [vmem:[%s1 + $0x60] sm:$0xff]
  %v35 = vld [vmem:[%s1 + $0x68] sm:$0xff]
  %v36 = vld [vmem:[%s1 + $0x70] sm:$0xff]
  %v37 = vld [vmem:[%s1 + $0x78] sm:$0xff]
  %v38 = vld [vmem:[%s1 + $0x80] sm:$0xff]
  %v39 = vld [vmem:[%s1 + $0x88] sm:$0xff]
  %v40 = vld [vmem:[%s1 + $0x90] sm:$0xff]
  %v41 = vld [vmem:[%s1 + $0x98] sm:$0xff]
  %v42 = vld [vmem:[%s1 + $0xa0] sm:$0xff]
  %v43 = vld [vmem:[%s1 + $0xa8] sm:$0xff]
  %v44 = vld [vmem:[%s1 + $0xb0] sm:$0xff]
  %v45 = vld [vmem:[%s1 + $0xb8] sm:$0xff]
  %v46 = vld [vmem:[%s1 + $0xc0] sm:$0xff]
  %v47 = vld [vmem:[%s1 + $0xc8] sm:$0xff]
  %v48 = vld [vmem:[%s1 + $0xd0] sm:$0xff]
  %v49 = vld [vmem:[%s1 + $0xd8] sm:$0xff]
  %v50 = vld [vmem:[%s1 + $0xe0] sm:$0xff]
  %v51 = vld [vmem:[%s1 + $0xe8] sm:$0xff]
  %v52 = vld [vmem:[%s1 + $0xf0] sm:$0xff]
  %v53 = vld [vmem:[%s1 + $0xf8] sm:$0xff]
  %v54 = vld [vmem:[%s1 + $0x100] sm:$0xff]
  %v55 = vld [vmem:[%s1 + $0x108] sm:$0xff]
  %v56 = vld [vmem:[%s1 + $0x110] sm:$0xff]
  %v57 = vld [vmem:[%s1 + $0x118] sm:$0xff]
  %v58 = vld [vmem:[%s1 + $0x120] sm:$0xff]
  %v59 = vld [vmem:[%s1 + $0x128] sm:$0xff]
  %v60 = vld [vmem:[%s1 + $0x130] sm:$0xff]
  %v61 = vld [vmem:[%s1 + $0x138] sm:$0xff]
  %v62 = vld [vmem:[%s1 + $0x140] sm:$0xff]
  %v63 = vld [vmem:[%s1 + $0x148] sm:$0xff]
  %v64 = vld [vmem:[%s1 + $0x150] sm:$0xff]
  %v65 = vld [vmem:[%s1 + $0x158] sm:$0xff]
  %v66 = vld [vmem:[%s1 + $0x160] sm:$0xff]
  %v67 = vld [vmem:[%s1 + $0x168] sm:$0xff]
  %v68 = vld [vmem:[%s1 + $0x170] sm:$0xff]
  %v69 = vld [vmem:[%s1 + $0x178] sm:$0xff]
  %v70 = vld [vmem:[%s1 + $0x180] sm:$0xff]
  %v71 = vld [vmem:[%s1 + $0x188] sm:$0xff]
  %v72 = vld [vmem:[%s1 + $0x190] sm:$0xff]
  %v73 = vld [vmem:[%s1 + $0x198] sm:$0xff]
  %v74 = vld [vmem:[%s1 + $0x1a0] sm:$0xff]
  %v75 = vld [vmem:[%s1 + $0x1a8] sm:$0xff]
  %v76 = vld [vmem:[%s1 + $0x1b0] sm:$0xff]
  %v77 = vld [vmem:[%s1 + $0x1b8] sm:$0xff]
  %v78 = vld [vmem:[%s1 + $0x1c0] sm:$0xff]
  %v79 = vld [vmem:[%s1 + $0x1c8] sm:$0xff]
  %v80 = vld [vmem:[%s1 + $0x1d0] sm:$0xff]
  %v81 = vld [vmem:[%s1 + $0x1d8] sm:$0xff]
  %v82 = vld [vmem:[%s1 + $0x1e0] sm:$0xff]
  %v83 = vld [vmem:[%s1 + $0x1e8] sm:$0xff]
  %v84 = vld [vmem:[%s1 + $0x1f0] sm:$0xff]
  %v85 = vld [vmem:[%s1 + $0x1f8] sm:$0xff]
  %v86 = vld [vmem:[%s1 + $0x200] sm:$0xff]
  %v87 = vld [vmem:[%s1 + $0x208] sm:$0xff]
  %v88 = vld [vmem:[%s1 + $0x210] sm:$0xff]
  %v89 = vld [vmem:[%s1 + $0x218] sm:$0xff]
  %v90 = vld [vmem:[%s1 + $0x220] sm:$0xff]
  %v91 = vld [vmem:[%s1 + $0x228] sm:$0xff]
  %v92 = vld [vmem:[%s1 + $0x230] sm:$0xff]
  %v93 = vld [vmem:[%s1 + $0x238] sm:$0xff]
  %v94 = vld [vmem:[%s1 + $0x240] sm:$0xff]
  %v95 = vld [vmem:[%s1 + $0x248] sm:$0xff]
  %v96 = vld [vmem:[%s1 + $0x250] sm:$0xff]
  %v97 = vld [vmem:[%s1 + $0x258] sm:$0xff]
  %v98 = vld [vmem:[%s1 + $0x260] sm:$0xff]
  %v99 = vld [vmem:[%s1 + $0x268] sm:$0xff]
  %v100 = vld [vmem:[%s1 + $0x270] sm:$0xff]
  %v101 = vld [vmem:[%s1 + $0x278] sm:$0xff]
  %v102 = vld [vmem:[%s1 + $0x280] sm:$0xff]
  %v103 = vld [vmem:[%s1 + $0x288] sm:$0xff]
  %v104 = vld [vmem:[%s1 + $0x290] sm:$0xff]
  %v105 = vld [vmem:[%s1 + $0x298] sm:$0xff]
  %v106 = vld [vmem:[%s1 + $0x2a0] sm:$0xff]
  %v107 = vld [vmem:[%s1 + $0x2a8] sm:$0xff]
  %v108 = vld [vmem:[%s1 + $0x2b0] sm:$0xff]
  %v109 = vld [vmem:[%s1 + $0x2b8] sm:$0xff]
  %v110 = vld [vmem:[%s1 + $0x2c0] sm:$0xff]
  %v111 = vld [vmem:[%s1 + $0x2c8] sm:$0xff]
  %v112 = vld [vmem:[%s1 + $0x2d0] sm:$0xff]
  %v113 = vld [vmem:[%s1 + $0x2d8] sm:$0xff]
  %v114 = vld [vmem:[%s1 + $0x2e0] sm:$0xff]
  %v115 = vld [vmem:[%s1 + $0x2e8] sm:$0xff]
  %v116 = vld [vmem:[%s1 + $0x2f0] sm:$0xff]
  %v117 = vld [vmem:[%s1 + $0x2f8] sm:$0xff]
  %v118 = vld [vmem:[%s1 + $0x300] sm:$0xff]
  %v119 = vld [vmem:[%s1 + $0x308] sm:$0xff]
  %v120 = vld [vmem:[%s1 + $0x310] sm:$0xff]
  %v121 = vld [vmem:[%s1 + $0x318] sm:$0xff]
  %v122 = vld [vmem:[%s1 + $0x320] sm:$0xff]
  %v123 = vld [vmem:[%s1 + $0x328] sm:$0xff]
  %v124 = vld [vmem:[%s1 + $0x330] sm:$0xff]
  %v125 = vld [vmem:[%s1 + $0x338] sm:$0xff]
  %v126 = vld [vmem:[%s1 + $0x340] sm:$0xff]
  %v127 = vld [vmem:[%s1 + $0x348] sm:$0xff]
  %v128 = vld [vmem:[%s1 + $0x350] sm:$0xff]
  %v129 = vld [vmem:[%s1 + $0x358] sm:$0xff]
  %v130 = vld [vmem:[%s1 + $0x360] sm:$0xff]
  %v131 = vld [vmem:[%s1 + $0x368] sm:$0xff]
  %v132 = vld [vmem:[%s1 + $0x370] sm:$0xff]
  %v133 = vld [vmem:[%s1 + $0x378] sm:$0xff]
  %v134 = vld [vmem:[%s1 + $0x380] sm:$0xff]
  %v135 = vld [vmem:[%s1 + $0x388] sm:$0xff]
  %v136 = vld [vmem:[%s1 + $0x390] sm:$0xff]
  %v137 = vld [vmem:[%s1 + $0x398] sm:$0xff]
  %v138 = vld [vmem:[%s1 + $0x3a0] sm:$0xff]
  %v139 = vld [vmem:[%s1 + $0x3a8] sm:$0xff]
  %v140 = vld [vmem:[%s1 + $0x3b0] sm:$0xff]
  %v141 = vld [vmem:[%s1 + $0x3b8] sm:$0xff]
  %v142 = vld [vmem:[%s1 + $0x3c0] sm:$0xff]
  %v143 = vld [vmem:[%s1 + $0x3c8] sm:$0xff]
  %v144 = vld [vmem:[%s1 + $0x3d0] sm:$0xff]
  %v145 = vld [vmem:[%s1 + $0x3d8] sm:$0xff]
  %v146 = vld [vmem:[%s1 + $0x3e0] sm:$0xff]
  %v147 = vld [vmem:[%s1 + $0x3e8] sm:$0xff]
  %v148 = vld [vmem:[%s1 + $0x3f0] sm:$0xff]
  %v149 = vld [vmem:[%s1 + $0x3f8] sm:$0xff]
  %v150 = vld [vmem:[%s1 + $0x400] sm:$0xff]
  %v151 = vld [vmem:[%s1 + $0x408] sm:$0xff]
  %v152 = vld [vmem:[%s1 + $0x410] sm:$0xff]
  %v153 = vld [vmem:[%s1 + $0x418] sm:$0xff]
  %v154 = vld [vmem:[%s1 + $0x420] sm:$0xff]
  %v155 = vld [vmem:[%s1 + $0x428] sm:$0xff]
  %v156 = vld [vmem:[%s1 + $0x430] sm:$0xff]
  %v157 = vld [vmem:[%s1 + $0x438] sm:$0xff]
  %v158 = vld [vmem:[%s1 + $0x440] sm:$0xff]
  %v159 = vld [vmem:[%s1 + $0x448] sm:$0xff]
  %v160 = vld [vmem:[%s1 + $0x450] sm:$0xff]
  %v161 = vld [vmem:[%s1 + $0x458] sm:$0xff]
  %v162 = vld [vmem:[%s1 + $0x460] sm:$0xff]
  %v163 = vld [vmem:[%s1 + $0x468] sm:$0xff]
  %v164 = vld [vmem:[%s1 + $0x470] sm:$0xff]
  %v165 = vld [vmem:[%s1 + $0x478] sm:$0xff]
  %v166 = vld [vmem:[%s1 + $0x480] sm:$0xff]
  %v167 = vld [vmem:[%s1 + $0x488] sm:$0xff]
  %v168 = vld [vmem:[%s1 + $0x490] sm:$0xff]
  %v169 = vld [vmem:[%s1 + $0x498] sm:$0xff]
  %v170 = vld [vmem:[%s1 + $0x4a0] sm:$0xff]
  %v171 = vld [vmem:[%s1 + $0x4a8] sm:$0xff]
  %v172 = vld [vmem:[%s1 + $0x4b0] sm:$0xff]
  %v173 = vld [vmem:[%s1 + $0x4b8] sm:$0xff]
  %v174 = vld [vmem:[%s1 + $0x4c0] sm:$0xff]
  %v175 = vld [vmem:[%s1 + $0x4c8] sm:$0xff]
  %v176 = vld [vmem:[%s1 + $0x4d0] sm:$0xff]
  %v177 = vld [vmem:[%s1 + $0x4d8] sm:$0xff]
  %v178 = vld [vmem:[%s1 + $0x4e0] sm:$0xff]
  %v179 = vld [vmem:[%s1 + $0x4e8] sm:$0xff]
  %v180 = vld [vmem:[%s1 + $0x4f0] sm:$0xff]
  %v181 = vld [vmem:[%s1 + $0x4f8] sm:$0xff]
  %v182 = vld [vmem:[%s1 + $0x500] sm:$0xff]
  %v183 = vld [vmem:[%s1 + $0x508] sm:$0xff]
  %v184 = vld [vmem:[%s1 + $0x510] sm:$0xff]
  %v185 = vld [vmem:[%s1 + $0x518] sm:$0xff]
  %v186 = vld [vmem:[%s1 + $0x520] sm:$0xff]
  %v187 = vld [vmem:[%s1 + $0x528] sm:$0xff]
  %v188 = vld [vmem:[%s1 + $0x530] sm:$0xff]
  %v189 = vld [vmem:[%s1 + $0x538] sm:$0xff]
  %v190 = vld [vmem:[%s1 + $0x540] sm:$0xff]
  %v191 = vld [vmem:[%s1 + $0x548] sm:$0xff]
  %v192 = vld [vmem:[%s1 + $0x550] sm:$0xff]
  %v193 = vld [vmem:[%s1 + $0x558] sm:$0xff]
  %v194 = vld [vmem:[%s1 + $0x560] sm:$0xff]
  %v195 = vld [vmem:[%s1 + $0x568] sm:$0xff]
  %v196 = vld [vmem:[%s1 + $0x570] sm:$0xff]
  %v197 = vld [vmem:[%s1 + $0x578] sm:$0xff]
  %v198 = vld [vmem:[%s1 + $0x580] sm:$0xff]
  %v199 = vld [vmem:[%s1 + $0x588] sm:$0xff]
  %v200 = vld [vmem:[%s1 + $0x590] sm:$0xff]
  %v201 = vld [vmem:[%s1 + $0x598] sm:$0xff]
  %v202 = vld [vmem:[%s1 + $0x5a0] sm:$0xff]
  %v203 = vld [vmem:[%s1 + $0x5a8] sm:$0xff]
  %v204 = vld [vmem:[%s1 + $0x5b0] sm:$0xff]
  %v205 = vld [vmem:[%s1 + $0x5b8] sm:$0xff]
  %v206 = vld [vmem:[%s1 + $0x5c0] sm:$0xff]
  %v207 = vld [vmem:[%s1 + $0x5c8] sm:$0xff]
  %v208 = vld [vmem:[%s1 + $0x5d0] sm:$0xff]
  %v209 = vld [vmem:[%s1 + $0x5d8] sm:$0xff]
  %v210 = vld [vmem:[%s1 + $0x5e0] sm:$0xff]
  %v211 = vld [vmem:[%s1 + $0x5e8] sm:$0xff]
  %v212 = vld [vmem:[%s1 + $0x5f0] sm:$0xff]
  %v213 = vld [vmem:[%s1 + $0x5f8] sm:$0xff]
  %v214 = vld [vmem:[%s1 + $0x600] sm:$0xff]
  %v215 = vld [vmem:[%s1 + $0x608] sm:$0xff]
  %v216 = vld [vmem:[%s1 + $0x610] sm:$0xff]
  %v217 = vld [vmem:[%s1 + $0x618] sm:$0xff]
  %v218 = vld [vmem:[%s1 + $0x620] sm:$0xff]
  %v219 = vld [vmem:[%s1 + $0x628] sm:$0xff]
  %v220 = vld [vmem:[%s1 + $0x630] sm:$0xff]
  %v221 = vld [vmem:[%s1 + $0x638] sm:$0xff]
  %v222 = vld [vmem:[%s1 + $0x640] sm:$0xff]
  %v223 = vld [vmem:[%s1 + $0x648] sm:$0xff]
  %v224 = vld [vmem:[%s1 + $0x650] sm:$0xff]
  %v225 = vld [vmem:[%s1 + $0x658] sm:$0xff]
  %v226 = vld [vmem:[%s1 + $0x660] sm:$0xff]
  %v227 = vld [vmem:[%s1 + $0x668] sm:$0xff]
  %v228 = vld [vmem:[%s1 + $0x670] sm:$0xff]
  %v229 = vld [vmem:[%s1 + $0x678] sm:$0xff]
  %v230 = vld [vmem:[%s1 + $0x680] sm:$0xff]
  %v231 = vld [vmem:[%s1 + $0x688] sm:$0xff]
  %v232 = vld [vmem:[%s1 + $0x690] sm:$0xff]
  %v233 = vld [vmem:[%s1 + $0x698] sm:$0xff]
  %v234 = vld [vmem:[%s1 + $0x6a0] sm:$0xff]
  %v235 = vld [vmem:[%s1 + $0x6a8] sm:$0xff]
  %v236 = vld [vmem:[%s1 + $0x6b0] sm:$0xff]
  %v237 = vld [vmem:[%s1 + $0x6b8] sm:$0xff]
  %v238 = vld [vmem:[%s1 + $0x6c0] sm:$0xff]
  %v239 = vld [vmem:[%s1 + $0x6c8] sm:$0xff]
  %v240 = vld [vmem:[%s1 + $0x6d0] sm:$0xff]
  %v241 = vld [vmem:[%s1 + $0x6d8] sm:$0xff]
  %v242 = vld [vmem:[%s1 + $0x6e0] sm:$0xff]
  %v243 = vld [vmem:[%s1 + $0x6e8] sm:$0xff]
  %v244 = vld [vmem:[%s1 + $0x6f0] sm:$0xff]
  %v245 = vld [vmem:[%s1 + $0x6f8] sm:$0xff]
  %v246 = vld [vmem:[%s1 + $0x700] sm:$0xff]
  %v247 = vld [vmem:[%s1 + $0x708] sm:$0xff]
  %v248 = vld [vmem:[%s1 + $0x710] sm:$0xff]
  %v249 = vld [vmem:[%s1 + $0x718] sm:$0xff]
  %v250 = vld [vmem:[%s1 + $0x720] sm:$0xff]
  %v251 = vld [vmem:[%s1 + $0x728] sm:$0xff]
  %v252 = vld [vmem:[%s1 + $0x730] sm:$0xff]
  %v253 = vld [vmem:[%s1 + $0x738] sm:$0xff]
  %v254 = vld [vmem:[%s1 + $0x740] sm:$0xff]
  %v255 = vld [vmem:[%s1 + $0x748] sm:$0xff]
  %v256 = vld [vmem:[%s1 + $0x750] sm:$0xff]
  %v257 = vld [vmem:[%s1 + $0x758] sm:$0xff]
  %v258 = vld [vmem:[%s1 + $0x760] sm:$0xff]
  %v259 = vld [vmem:[%s1 + $0x768] sm:$0xff]
  %v260 = vld [vmem:[%s1 + $0x770] sm:$0xff]
  %v261 = vld [vmem:[%s1 + $0x778] sm:$0xff]
  %v262 = vld [vmem:[%s1 + $0x780] sm:$0xff]
  %v263 = vld [vmem:[%s1 + $0x788] sm:$0xff]
  %v264 = vld [vmem:[%s1 + $0x790] sm:$0xff]
  %v265 = vld [vmem:[%s1 + $0x798] sm:$0xff]
  %v266 = vld [vmem:[%s1 + $0x7a0] sm:$0xff]
  %v267 = vld [vmem:[%s1 + $0x7a8] sm:$0xff]
  %v268 = vld [vmem:[%s1 + $0x7b0] sm:$0xff]
  %v269 = vld [vmem:[%s1 + $0x7b8] sm:$0xff]
  %v270 = vld [vmem:[%s1 + $0x7c0] sm:$0xff]
  %v271 = vld [vmem:[%s1 + $0x7c8] sm:$0xff]
  %v272 = vld [vmem:[%s1 + $0x7d0] sm:$0xff]
  %v273 = vld [vmem:[%s1 + $0x7d8] sm:$0xff]
  %v274 = vld [vmem:[%s1 + $0x7e0] sm:$0xff]
  %v275 = vld [vmem:[%s1 + $0x7e8] sm:$0xff]
  %v276 = vld [vmem:[%s1 + $0x7f0] sm:$0xff]
  %v277 = vld [vmem:[%s1 + $0x7f8] sm:$0xff]
  %v286 = vunpack.c.l.b16 %v14
  %v287 = vunpack.c.h.b16 %v14
  %v288 = vunpack.c.l.b16 %v15
  %v289 = vunpack.c.h.b16 %v15
  %v290 = vunpack.c.l.b16 %v16
  %v291 = vunpack.c.h.b16 %v16
  %v292 = vunpack.c.l.b16 %v17
  %v293 = vunpack.c.h.b16 %v17
  %v294 = vunpack.c.l.b16 %v18
  %v295 = vunpack.c.h.b16 %v18
  %v296 = vunpack.c.l.b16 %v19
  %v297 = vunpack.c.h.b16 %v19
  %v298 = vunpack.c.l.b16 %v20
  %v299 = vunpack.c.h.b16 %v20
  %v300 = vunpack.c.l.b16 %v21
  %v301 = vunpack.c.h.b16 %v21
  %v302 = vpack.c.b16 %v286, %v286
  %v303 = vpack.c.b16 %v287, %v287
  %v304 = vpack.c.b16 %v288, %v288
  %v305 = vpack.c.b16 %v289, %v289
  %v306 = vpack.c.b16 %v290, %v290
  %v307 = vpack.c.b16 %v291, %v291
  %v308 = vpack.c.b16 %v292, %v292
  %v309 = vpack.c.b16 %v293, %v293
  %v310 = vpack.c.b16 %v294, %v294
  %v311 = vpack.c.b16 %v295, %v295
  %v312 = vpack.c.b16 %v296, %v296
  %v313 = vpack.c.b16 %v297, %v297
  %v314 = vpack.c.b16 %v298, %v298
  %v315 = vpack.c.b16 %v299, %v299
  %v316 = vpack.c.b16 %v300, %v300
  %v317 = vpack.c.b16 %v301, %v301
  %v590 = vunpack.c.l.b16 %v22
  %v591 = vunpack.c.h.b16 %v22
  %v592 = vunpack.c.l.b16 %v23
  %v593 = vunpack.c.h.b16 %v23
  %v594 = vunpack.c.l.b16 %v24
  %v595 = vunpack.c.h.b16 %v24
  %v596 = vunpack.c.l.b16 %v25
  %v597 = vunpack.c.h.b16 %v25
  %v598 = vunpack.c.l.b16 %v26
  %v599 = vunpack.c.h.b16 %v26
  %v600 = vunpack.c.l.b16 %v27
  %v601 = vunpack.c.h.b16 %v27
  %v602 = vunpack.c.l.b16 %v28
  %v603 = vunpack.c.h.b16 %v28
  %v604 = vunpack.c.l.b16 %v29
  %v605 = vunpack.c.h.b16 %v29
  %v606 = vunpack.c.l.b16 %v30
  %v607 = vunpack.c.h.b16 %v30
  %v608 = vunpack.c.l.b16 %v31
  %v609 = vunpack.c.h.b16 %v31
  %v610 = vunpack.c.l.b16 %v32
  %v611 = vunpack.c.h.b16 %v32
  %v612 = vunpack.c.l.b16 %v33
  %v613 = vunpack.c.h.b16 %v33
  %v614 = vunpack.c.l.b16 %v34
  %v615 = vunpack.c.h.b16 %v34
  %v616 = vunpack.c.l.b16 %v35
  %v617 = vunpack.c.h.b16 %v35
  %v618 = vunpack.c.l.b16 %v36
  %v619 = vunpack.c.h.b16 %v36
  %v620 = vunpack.c.l.b16 %v37
  %v621 = vunpack.c.h.b16 %v37
  %v622 = vunpack.c.l.b16 %v38
  %v623 = vunpack.c.h.b16 %v38
  %v624 = vunpack.c.l.b16 %v39
  %v625 = vunpack.c.h.b16 %v39
  %v626 = vunpack.c.l.b16 %v40
  %v627 = vunpack.c.h.b16 %v40
  %v628 = vunpack.c.l.b16 %v41
  %v629 = vunpack.c.h.b16 %v41
  %v630 = vunpack.c.l.b16 %v42
  %v631 = vunpack.c.h.b16 %v42
  %v632 = vunpack.c.l.b16 %v43
  %v633 = vunpack.c.h.b16 %v43
  %v634 = vunpack.c.l.b16 %v44
  %v635 = vunpack.c.h.b16 %v44
  %v636 = vunpack.c.l.b16 %v45
  %v637 = vunpack.c.h.b16 %v45
  %v638 = vunpack.c.l.b16 %v46
  %v639 = vunpack.c.h.b16 %v46
  %v640 = vunpack.c.l.b16 %v47
  %v641 = vunpack.c.h.b16 %v47
  %v642 = vunpack.c.l.b16 %v48
  %v643 = vunpack.c.h.b16 %v48
  %v644 = vunpack.c.l.b16 %v49
  %v645 = vunpack.c.h.b16 %v49
  %v646 = vunpack.c.l.b16 %v50
  %v647 = vunpack.c.h.b16 %v50
  %v648 = vunpack.c.l.b16 %v51
  %v649 = vunpack.c.h.b16 %v51
  %v650 = vunpack.c.l.b16 %v52
  %v651 = vunpack.c.h.b16 %v52
  %v652 = vunpack.c.l.b16 %v53
  %v653 = vunpack.c.h.b16 %v53
  %v654 = vunpack.c.l.b16 %v54
  %v655 = vunpack.c.h.b16 %v54
  %v656 = vunpack.c.l.b16 %v55
  %v657 = vunpack.c.h.b16 %v55
  %v658 = vunpack.c.l.b16 %v56
  %v659 = vunpack.c.h.b16 %v56
  %v660 = vunpack.c.l.b16 %v57
  %v661 = vunpack.c.h.b16 %v57
  %v662 = vunpack.c.l.b16 %v58
  %v663 = vunpack.c.h.b16 %v58
  %v664 = vunpack.c.l.b16 %v59
  %v665 = vunpack.c.h.b16 %v59
  %v666 = vunpack.c.l.b16 %v60
  %v667 = vunpack.c.h.b16 %v60
  %v668 = vunpack.c.l.b16 %v61
  %v669 = vunpack.c.h.b16 %v61
  %v670 = vunpack.c.l.b16 %v62
  %v671 = vunpack.c.h.b16 %v62
  %v672 = vunpack.c.l.b16 %v63
  %v673 = vunpack.c.h.b16 %v63
  %v674 = vunpack.c.l.b16 %v64
  %v675 = vunpack.c.h.b16 %v64
  %v676 = vunpack.c.l.b16 %v65
  %v677 = vunpack.c.h.b16 %v65
  %v678 = vunpack.c.l.b16 %v66
  %v679 = vunpack.c.h.b16 %v66
  %v680 = vunpack.c.l.b16 %v67
  %v681 = vunpack.c.h.b16 %v67
  %v682 = vunpack.c.l.b16 %v68
  %v683 = vunpack.c.h.b16 %v68
  %v684 = vunpack.c.l.b16 %v69
  %v685 = vunpack.c.h.b16 %v69
  %v686 = vunpack.c.l.b16 %v70
  %v687 = vunpack.c.h.b16 %v70
  %v688 = vunpack.c.l.b16 %v71
  %v689 = vunpack.c.h.b16 %v71
  %v690 = vunpack.c.l.b16 %v72
  %v691 = vunpack.c.h.b16 %v72
  %v692 = vunpack.c.l.b16 %v73
  %v693 = vunpack.c.h.b16 %v73
  %v694 = vunpack.c.l.b16 %v74
  %v695 = vunpack.c.h.b16 %v74
  %v696 = vunpack.c.l.b16 %v75
  %v697 = vunpack.c.h.b16 %v75
  %v698 = vunpack.c.l.b16 %v76
  %v699 = vunpack.c.h.b16 %v76
  %v700 = vunpack.c.l.b16 %v77
  %v701 = vunpack.c.h.b16 %v77
  %v702 = vunpack.c.l.b16 %v78
  %v703 = vunpack.c.h.b16 %v78
  %v704 = vunpack.c.l.b16 %v79
  %v705 = vunpack.c.h.b16 %v79
  %v706 = vunpack.c.l.b16 %v80
  %v707 = vunpack.c.h.b16 %v80
  %v708 = vunpack.c.l.b16 %v81
  %v709 = vunpack.c.h.b16 %v81
  %v710 = vunpack.c.l.b16 %v82
  %v711 = vunpack.c.h.b16 %v82
  %v712 = vunpack.c.l.b16 %v83
  %v713 = vunpack.c.h.b16 %v83
  %v714 = vunpack.c.l.b16 %v84
  %v715 = vunpack.c.h.b16 %v84
  %v716 = vunpack.c.l.b16 %v85
  %v717 = vunpack.c.h.b16 %v85
  %v718 = vunpack.c.l.b16 %v86
  %v719 = vunpack.c.h.b16 %v86
  %v720 = vunpack.c.l.b16 %v87
  %v721 = vunpack.c.h.b16 %v87
  %v722 = vunpack.c.l.b16 %v88
  %v723 = vunpack.c.h.b16 %v88
  %v724 = vunpack.c.l.b16 %v89
  %v725 = vunpack.c.h.b16 %v89
  %v726 = vunpack.c.l.b16 %v90
  %v727 = vunpack.c.h.b16 %v90
  %v728 = vunpack.c.l.b16 %v91
  %v729 = vunpack.c.h.b16 %v91
  %v730 = vunpack.c.l.b16 %v92
  %v731 = vunpack.c.h.b16 %v92
  %v732 = vunpack.c.l.b16 %v93
  %v733 = vunpack.c.h.b16 %v93
  %v734 = vunpack.c.l.b16 %v94
  %v735 = vunpack.c.h.b16 %v94
  %v736 = vunpack.c.l.b16 %v95
  %v737 = vunpack.c.h.b16 %v95
  %v738 = vunpack.c.l.b16 %v96
  %v739 = vunpack.c.h.b16 %v96
  %v740 = vunpack.c.l.b16 %v97
  %v741 = vunpack.c.h.b16 %v97
  %v742 = vunpack.c.l.b16 %v98
  %v743 = vunpack.c.h.b16 %v98
  %v744 = vunpack.c.l.b16 %v99
  %v745 = vunpack.c.h.b16 %v99
  %v746 = vunpack.c.l.b16 %v100
  %v747 = vunpack.c.h.b16 %v100
  %v748 = vunpack.c.l.b16 %v101
  %v749 = vunpack.c.h.b16 %v101
  %v750 = vunpack.c.l.b16 %v102
  %v751 = vunpack.c.h.b16 %v102
  %v752 = vunpack.c.l.b16 %v103
  %v753 = vunpack.c.h.b16 %v103
  %v754 = vunpack.c.l.b16 %v104
  %v755 = vunpack.c.h.b16 %v104
  %v756 = vunpack.c.l.b16 %v105
  %v757 = vunpack.c.h.b16 %v105
  %v758 = vunpack.c.l.b16 %v106
  %v759 = vunpack.c.h.b16 %v106
  %v760 = vunpack.c.l.b16 %v107
  %v761 = vunpack.c.h.b16 %v107
  %v762 = vunpack.c.l.b16 %v108
  %v763 = vunpack.c.h.b16 %v108
  %v764 = vunpack.c.l.b16 %v109
  %v765 = vunpack.c.h.b16 %v109
  %v766 = vunpack.c.l.b16 %v110
  %v767 = vunpack.c.h.b16 %v110
  %v768 = vunpack.c.l.b16 %v111
  %v769 = vunpack.c.h.b16 %v111
  %v770 = vunpack.c.l.b16 %v112
  %v771 = vunpack.c.h.b16 %v112
  %v772 = vunpack.c.l.b16 %v113
  %v773 = vunpack.c.h.b16 %v113
  %v774 = vunpack.c.l.b16 %v114
  %v775 = vunpack.c.h.b16 %v114
  %v776 = vunpack.c.l.b16 %v115
  %v777 = vunpack.c.h.b16 %v115
  %v778 = vunpack.c.l.b16 %v116
  %v779 = vunpack.c.h.b16 %v116
  %v780 = vunpack.c.l.b16 %v117
  %v781 = vunpack.c.h.b16 %v117
  %v782 = vunpack.c.l.b16 %v118
  %v783 = vunpack.c.h.b16 %v118
  %v784 = vunpack.c.l.b16 %v119
  %v785 = vunpack.c.h.b16 %v119
  %v786 = vunpack.c.l.b16 %v120
  %v787 = vunpack.c.h.b16 %v120
  %v788 = vunpack.c.l.b16 %v121
  %v789 = vunpack.c.h.b16 %v121
  %v790 = vunpack.c.l.b16 %v122
  %v791 = vunpack.c.h.b16 %v122
  %v792 = vunpack.c.l.b16 %v123
  %v793 = vunpack.c.h.b16 %v123
  %v794 = vunpack.c.l.b16 %v124
  %v795 = vunpack.c.h.b16 %v124
  %v796 = vunpack.c.l.b16 %v125
  %v797 = vunpack.c.h.b16 %v125
  %v798 = vunpack.c.l.b16 %v126
  %v799 = vunpack.c.h.b16 %v126
  %v800 = vunpack.c.l.b16 %v127
  %v801 = vunpack.c.h.b16 %v127
  %v802 = vunpack.c.l.b16 %v128
  %v803 = vunpack.c.h.b16 %v128
  %v804 = vunpack.c.l.b16 %v129
  %v805 = vunpack.c.h.b16 %v129
  %v806 = vunpack.c.l.b16 %v130
  %v807 = vunpack.c.h.b16 %v130
  %v808 = vunpack.c.l.b16 %v131
  %v809 = vunpack.c.h.b16 %v131
  %v810 = vunpack.c.l.b16 %v132
  %v811 = vunpack.c.h.b16 %v132
  %v812 = vunpack.c.l.b16 %v133
  %v813 = vunpack.c.h.b16 %v133
  %v814 = vunpack.c.l.b16 %v134
  %v815 = vunpack.c.h.b16 %v134
  %v816 = vunpack.c.l.b16 %v135
  %v817 = vunpack.c.h.b16 %v135
  %v818 = vunpack.c.l.b16 %v136
  %v819 = vunpack.c.h.b16 %v136
  %v820 = vunpack.c.l.b16 %v137
  %v821 = vunpack.c.h.b16 %v137
  %v822 = vunpack.c.l.b16 %v138
  %v823 = vunpack.c.h.b16 %v138
  %v824 = vunpack.c.l.b16 %v139
  %v825 = vunpack.c.h.b16 %v139
  %v826 = vunpack.c.l.b16 %v140
  %v827 = vunpack.c.h.b16 %v140
  %v828 = vunpack.c.l.b16 %v141
  %v829 = vunpack.c.h.b16 %v141
  %v830 = vunpack.c.l.b16 %v142
  %v831 = vunpack.c.h.b16 %v142
  %v832 = vunpack.c.l.b16 %v143
  %v833 = vunpack.c.h.b16 %v143
  %v834 = vunpack.c.l.b16 %v144
  %v835 = vunpack.c.h.b16 %v144
  %v836 = vunpack.c.l.b16 %v145
  %v837 = vunpack.c.h.b16 %v145
  %v838 = vunpack.c.l.b16 %v146
  %v839 = vunpack.c.h.b16 %v146
  %v840 = vunpack.c.l.b16 %v147
  %v841 = vunpack.c.h.b16 %v147
  %v842 = vunpack.c.l.b16 %v148
  %v843 = vunpack.c.h.b16 %v148
  %v844 = vunpack.c.l.b16 %v149
  %v845 = vunpack.c.h.b16 %v149
  %v846 = vunpack.c.l.b16 %v150
  %v847 = vunpack.c.h.b16 %v150
  %v848 = vunpack.c.l.b16 %v151
  %v849 = vunpack.c.h.b16 %v151
  %v850 = vunpack.c.l.b16 %v152
  %v851 = vunpack.c.h.b16 %v152
  %v852 = vunpack.c.l.b16 %v153
  %v853 = vunpack.c.h.b16 %v153
  %v854 = vunpack.c.l.b16 %v154
  %v855 = vunpack.c.h.b16 %v154
  %v856 = vunpack.c.l.b16 %v155
  %v857 = vunpack.c.h.b16 %v155
  %v858 = vunpack.c.l.b16 %v156
  %v859 = vunpack.c.h.b16 %v156
  %v860 = vunpack.c.l.b16 %v157
  %v861 = vunpack.c.h.b16 %v157
  %v862 = vunpack.c.l.b16 %v158
  %v863 = vunpack.c.h.b16 %v158
  %v864 = vunpack.c.l.b16 %v159
  %v865 = vunpack.c.h.b16 %v159
  %v866 = vunpack.c.l.b16 %v160
  %v867 = vunpack.c.h.b16 %v160
  %v868 = vunpack.c.l.b16 %v161
  %v869 = vunpack.c.h.b16 %v161
  %v870 = vunpack.c.l.b16 %v162
  %v871 = vunpack.c.h.b16 %v162
  %v872 = vunpack.c.l.b16 %v163
  %v873 = vunpack.c.h.b16 %v163
  %v874 = vunpack.c.l.b16 %v164
  %v875 = vunpack.c.h.b16 %v164
  %v876 = vunpack.c.l.b16 %v165
  %v877 = vunpack.c.h.b16 %v165
  %v878 = vunpack.c.l.b16 %v166
  %v879 = vunpack.c.h.b16 %v166
  %v880 = vunpack.c.l.b16 %v167
  %v881 = vunpack.c.h.b16 %v167
  %v882 = vunpack.c.l.b16 %v168
  %v883 = vunpack.c.h.b16 %v168
  %v884 = vunpack.c.l.b16 %v169
  %v885 = vunpack.c.h.b16 %v169
  %v886 = vunpack.c.l.b16 %v170
  %v887 = vunpack.c.h.b16 %v170
  %v888 = vunpack.c.l.b16 %v171
  %v889 = vunpack.c.h.b16 %v171
  %v890 = vunpack.c.l.b16 %v172
  %v891 = vunpack.c.h.b16 %v172
  %v892 = vunpack.c.l.b16 %v173
  %v893 = vunpack.c.h.b16 %v173
  %v894 = vunpack.c.l.b16 %v174
  %v895 = vunpack.c.h.b16 %v174
  %v896 = vunpack.c.l.b16 %v175
  %v897 = vunpack.c.h.b16 %v175
  %v898 = vunpack.c.l.b16 %v176
  %v899 = vunpack.c.h.b16 %v176
  %v900 = vunpack.c.l.b16 %v177
  %v901 = vunpack.c.h.b16 %v177
  %v902 = vunpack.c.l.b16 %v178
  %v903 = vunpack.c.h.b16 %v178
  %v904 = vunpack.c.l.b16 %v179
  %v905 = vunpack.c.h.b16 %v179
  %v906 = vunpack.c.l.b16 %v180
  %v907 = vunpack.c.h.b16 %v180
  %v908 = vunpack.c.l.b16 %v181
  %v909 = vunpack.c.h.b16 %v181
  %v910 = vunpack.c.l.b16 %v182
  %v911 = vunpack.c.h.b16 %v182
  %v912 = vunpack.c.l.b16 %v183
  %v913 = vunpack.c.h.b16 %v183
  %v914 = vunpack.c.l.b16 %v184
  %v915 = vunpack.c.h.b16 %v184
  %v916 = vunpack.c.l.b16 %v185
  %v917 = vunpack.c.h.b16 %v185
  %v918 = vunpack.c.l.b16 %v186
  %v919 = vunpack.c.h.b16 %v186
  %v920 = vunpack.c.l.b16 %v187
  %v921 = vunpack.c.h.b16 %v187
  %v922 = vunpack.c.l.b16 %v188
  %v923 = vunpack.c.h.b16 %v188
  %v924 = vunpack.c.l.b16 %v189
  %v925 = vunpack.c.h.b16 %v189
  %v926 = vunpack.c.l.b16 %v190
  %v927 = vunpack.c.h.b16 %v190
  %v928 = vunpack.c.l.b16 %v191
  %v929 = vunpack.c.h.b16 %v191
  %v930 = vunpack.c.l.b16 %v192
  %v931 = vunpack.c.h.b16 %v192
  %v932 = vunpack.c.l.b16 %v193
  %v933 = vunpack.c.h.b16 %v193
  %v934 = vunpack.c.l.b16 %v194
  %v935 = vunpack.c.h.b16 %v194
  %v936 = vunpack.c.l.b16 %v195
  %v937 = vunpack.c.h.b16 %v195
  %v938 = vunpack.c.l.b16 %v196
  %v939 = vunpack.c.h.b16 %v196
  %v940 = vunpack.c.l.b16 %v197
  %v941 = vunpack.c.h.b16 %v197
  %v942 = vunpack.c.l.b16 %v198
  %v943 = vunpack.c.h.b16 %v198
  %v944 = vunpack.c.l.b16 %v199
  %v945 = vunpack.c.h.b16 %v199
  %v946 = vunpack.c.l.b16 %v200
  %v947 = vunpack.c.h.b16 %v200
  %v948 = vunpack.c.l.b16 %v201
  %v949 = vunpack.c.h.b16 %v201
  %v950 = vunpack.c.l.b16 %v202
  %v951 = vunpack.c.h.b16 %v202
  %v952 = vunpack.c.l.b16 %v203
  %v953 = vunpack.c.h.b16 %v203
  %v954 = vunpack.c.l.b16 %v204
  %v955 = vunpack.c.h.b16 %v204
  %v956 = vunpack.c.l.b16 %v205
  %v957 = vunpack.c.h.b16 %v205
  %v958 = vunpack.c.l.b16 %v206
  %v959 = vunpack.c.h.b16 %v206
  %v960 = vunpack.c.l.b16 %v207
  %v961 = vunpack.c.h.b16 %v207
  %v962 = vunpack.c.l.b16 %v208
  %v963 = vunpack.c.h.b16 %v208
  %v964 = vunpack.c.l.b16 %v209
  %v965 = vunpack.c.h.b16 %v209
  %v966 = vunpack.c.l.b16 %v210
  %v967 = vunpack.c.h.b16 %v210
  %v968 = vunpack.c.l.b16 %v211
  %v969 = vunpack.c.h.b16 %v211
  %v970 = vunpack.c.l.b16 %v212
  %v971 = vunpack.c.h.b16 %v212
  %v972 = vunpack.c.l.b16 %v213
  %v973 = vunpack.c.h.b16 %v213
  %v974 = vunpack.c.l.b16 %v214
  %v975 = vunpack.c.h.b16 %v214
  %v976 = vunpack.c.l.b16 %v215
  %v977 = vunpack.c.h.b16 %v215
  %v978 = vunpack.c.l.b16 %v216
  %v979 = vunpack.c.h.b16 %v216
  %v980 = vunpack.c.l.b16 %v217
  %v981 = vunpack.c.h.b16 %v217
  %v982 = vunpack.c.l.b16 %v218
  %v983 = vunpack.c.h.b16 %v218
  %v984 = vunpack.c.l.b16 %v219
  %v985 = vunpack.c.h.b16 %v219
  %v986 = vunpack.c.l.b16 %v220
  %v987 = vunpack.c.h.b16 %v220
  %v988 = vunpack.c.l.b16 %v221
  %v989 = vunpack.c.h.b16 %v221
  %v990 = vunpack.c.l.b16 %v222
  %v991 = vunpack.c.h.b16 %v222
  %v992 = vunpack.c.l.b16 %v223
  %v993 = vunpack.c.h.b16 %v223
  %v994 = vunpack.c.l.b16 %v224
  %v995 = vunpack.c.h.b16 %v224
  %v996 = vunpack.c.l.b16 %v225
  %v997 = vunpack.c.h.b16 %v225
  %v998 = vunpack.c.l.b16 %v226
  %v999 = vunpack.c.h.b16 %v226
  %v1000 = vunpack.c.l.b16 %v227
  %v1001 = vunpack.c.h.b16 %v227
  %v1002 = vunpack.c.l.b16 %v228
  %v1003 = vunpack.c.h.b16 %v228
  %v1004 = vunpack.c.l.b16 %v229
  %v1005 = vunpack.c.h.b16 %v229
  %v1006 = vunpack.c.l.b16 %v230
  %v1007 = vunpack.c.h.b16 %v230
  %v1008 = vunpack.c.l.b16 %v231
  %v1009 = vunpack.c.h.b16 %v231
  %v1010 = vunpack.c.l.b16 %v232
  %v1011 = vunpack.c.h.b16 %v232
  %v1012 = vunpack.c.l.b16 %v233
  %v1013 = vunpack.c.h.b16 %v233
  %v1014 = vunpack.c.l.b16 %v234
  %v1015 = vunpack.c.h.b16 %v234
  %v1016 = vunpack.c.l.b16 %v235
  %v1017 = vunpack.c.h.b16 %v235
  %v1018 = vunpack.c.l.b16 %v236
  %v1019 = vunpack.c.h.b16 %v236
  %v1020 = vunpack.c.l.b16 %v237
  %v1021 = vunpack.c.h.b16 %v237
  %v1022 = vunpack.c.l.b16 %v238
  %v1023 = vunpack.c.h.b16 %v238
  %v1024 = vunpack.c.l.b16 %v239
  %v1025 = vunpack.c.h.b16 %v239
  %v1026 = vunpack.c.l.b16 %v240
  %v1027 = vunpack.c.h.b16 %v240
  %v1028 = vunpack.c.l.b16 %v241
  %v1029 = vunpack.c.h.b16 %v241
  %v1030 = vunpack.c.l.b16 %v242
  %v1031 = vunpack.c.h.b16 %v242
  %v1032 = vunpack.c.l.b16 %v243
  %v1033 = vunpack.c.h.b16 %v243
  %v1034 = vunpack.c.l.b16 %v244
  %v1035 = vunpack.c.h.b16 %v244
  %v1036 = vunpack.c.l.b16 %v245
  %v1037 = vunpack.c.h.b16 %v245
  %v1038 = vunpack.c.l.b16 %v246
  %v1039 = vunpack.c.h.b16 %v246
  %v1040 = vunpack.c.l.b16 %v247
  %v1041 = vunpack.c.h.b16 %v247
  %v1042 = vunpack.c.l.b16 %v248
  %v1043 = vunpack.c.h.b16 %v248
  %v1044 = vunpack.c.l.b16 %v249
  %v1045 = vunpack.c.h.b16 %v249
  %v1046 = vunpack.c.l.b16 %v250
  %v1047 = vunpack.c.h.b16 %v250
  %v1048 = vunpack.c.l.b16 %v251
  %v1049 = vunpack.c.h.b16 %v251
  %v1050 = vunpack.c.l.b16 %v252
  %v1051 = vunpack.c.h.b16 %v252
  %v1052 = vunpack.c.l.b16 %v253
  %v1053 = vunpack.c.h.b16 %v253
  %v1054 = vunpack.c.l.b16 %v254
  %v1055 = vunpack.c.h.b16 %v254
  %v1056 = vunpack.c.l.b16 %v255
  %v1057 = vunpack.c.h.b16 %v255
  %v1058 = vunpack.c.l.b16 %v256
  %v1059 = vunpack.c.h.b16 %v256
  %v1060 = vunpack.c.l.b16 %v257
  %v1061 = vunpack.c.h.b16 %v257
  %v1062 = vunpack.c.l.b16 %v258
  %v1063 = vunpack.c.h.b16 %v258
  %v1064 = vunpack.c.l.b16 %v259
  %v1065 = vunpack.c.h.b16 %v259
  %v1066 = vunpack.c.l.b16 %v260
  %v1067 = vunpack.c.h.b16 %v260
  %v1068 = vunpack.c.l.b16 %v261
  %v1069 = vunpack.c.h.b16 %v261
  %v1070 = vunpack.c.l.b16 %v262
  %v1071 = vunpack.c.h.b16 %v262
  %v1072 = vunpack.c.l.b16 %v263
  %v1073 = vunpack.c.h.b16 %v263
  %v1074 = vunpack.c.l.b16 %v264
  %v1075 = vunpack.c.h.b16 %v264
  %v1076 = vunpack.c.l.b16 %v265
  %v1077 = vunpack.c.h.b16 %v265
  %v1078 = vunpack.c.l.b16 %v266
  %v1079 = vunpack.c.h.b16 %v266
  %v1080 = vunpack.c.l.b16 %v267
  %v1081 = vunpack.c.h.b16 %v267
  %v1082 = vunpack.c.l.b16 %v268
  %v1083 = vunpack.c.h.b16 %v268
  %v1084 = vunpack.c.l.b16 %v269
  %v1085 = vunpack.c.h.b16 %v269
  %v1086 = vunpack.c.l.b16 %v270
  %v1087 = vunpack.c.h.b16 %v270
  %v1088 = vunpack.c.l.b16 %v271
  %v1089 = vunpack.c.h.b16 %v271
  %v1090 = vunpack.c.l.b16 %v272
  %v1091 = vunpack.c.h.b16 %v272
  %v1092 = vunpack.c.l.b16 %v273
  %v1093 = vunpack.c.h.b16 %v273
  %v1094 = vunpack.c.l.b16 %v274
  %v1095 = vunpack.c.h.b16 %v274
  %v1096 = vunpack.c.l.b16 %v275
  %v1097 = vunpack.c.h.b16 %v275
  %v1098 = vunpack.c.l.b16 %v276
  %v1099 = vunpack.c.h.b16 %v276
  %v1100 = vunpack.c.l.b16 %v277
  %v1101 = vunpack.c.h.b16 %v277
  %v1102 = vpack.c.b16 %v592, %v590
  %v1103 = vpack.c.b16 %v593, %v591
  %v1104 = vpack.c.b16 %v596, %v594
  %v1105 = vpack.c.b16 %v597, %v595
  %v1106 = vpack.c.b16 %v600, %v598
  %v1107 = vpack.c.b16 %v601, %v599
  %v1108 = vpack.c.b16 %v604, %v602
  %v1109 = vpack.c.b16 %v605, %v603
  %v1110 = vpack.c.b16 %v608, %v606
  %v1111 = vpack.c.b16 %v609, %v607
  %v1112 = vpack.c.b16 %v612, %v610
  %v1113 = vpack.c.b16 %v613, %v611
  %v1114 = vpack.c.b16 %v616, %v614
  %v1115 = vpack.c.b16 %v617, %v615
  %v1116 = vpack.c.b16 %v620, %v618
  %v1117 = vpack.c.b16 %v621, %v619
  %v1118 = vpack.c.b16 %v624, %v622
  %v1119 = vpack.c.b16 %v625, %v623
  %v1120 = vpack.c.b16 %v628, %v626
  %v1121 = vpack.c.b16 %v629, %v627
  %v1122 = vpack.c.b16 %v632, %v630
  %v1123 = vpack.c.b16 %v633, %v631
  %v1124 = vpack.c.b16 %v636, %v634
  %v1125 = vpack.c.b16 %v637, %v635
  %v1126 = vpack.c.b16 %v640, %v638
  %v1127 = vpack.c.b16 %v641, %v639
  %v1128 = vpack.c.b16 %v644, %v642
  %v1129 = vpack.c.b16 %v645, %v643
  %v1130 = vpack.c.b16 %v648, %v646
  %v1131 = vpack.c.b16 %v649, %v647
  %v1132 = vpack.c.b16 %v652, %v650
  %v1133 = vpack.c.b16 %v653, %v651
  %v1134 = vpack.c.b16 %v656, %v654
  %v1135 = vpack.c.b16 %v657, %v655
  %v1136 = vpack.c.b16 %v660, %v658
  %v1137 = vpack.c.b16 %v661, %v659
  %v1138 = vpack.c.b16 %v664, %v662
  %v1139 = vpack.c.b16 %v665, %v663
  %v1140 = vpack.c.b16 %v668, %v666
  %v1141 = vpack.c.b16 %v669, %v667
  %v1142 = vpack.c.b16 %v672, %v670
  %v1143 = vpack.c.b16 %v673, %v671
  %v1144 = vpack.c.b16 %v676, %v674
  %v1145 = vpack.c.b16 %v677, %v675
  %v1146 = vpack.c.b16 %v680, %v678
  %v1147 = vpack.c.b16 %v681, %v679
  %v1148 = vpack.c.b16 %v684, %v682
  %v1149 = vpack.c.b16 %v685, %v683
  %v1150 = vpack.c.b16 %v688, %v686
  %v1151 = vpack.c.b16 %v689, %v687
  %v1152 = vpack.c.b16 %v692, %v690
  %v1153 = vpack.c.b16 %v693, %v691
  %v1154 = vpack.c.b16 %v696, %v694
  %v1155 = vpack.c.b16 %v697, %v695
  %v1156 = vpack.c.b16 %v700, %v698
  %v1157 = vpack.c.b16 %v701, %v699
  %v1158 = vpack.c.b16 %v704, %v702
  %v1159 = vpack.c.b16 %v705, %v703
  %v1160 = vpack.c.b16 %v708, %v706
  %v1161 = vpack.c.b16 %v709, %v707
  %v1162 = vpack.c.b16 %v712, %v710
  %v1163 = vpack.c.b16 %v713, %v711
  %v1164 = vpack.c.b16 %v716, %v714
  %v1165 = vpack.c.b16 %v717, %v715
  %v1166 = vpack.c.b16 %v720, %v718
  %v1167 = vpack.c.b16 %v721, %v719
  %v1168 = vpack.c.b16 %v724, %v722
  %v1169 = vpack.c.b16 %v725, %v723
  %v1170 = vpack.c.b16 %v728, %v726
  %v1171 = vpack.c.b16 %v729, %v727
  %v1172 = vpack.c.b16 %v732, %v730
  %v1173 = vpack.c.b16 %v733, %v731
  %v1174 = vpack.c.b16 %v736, %v734
  %v1175 = vpack.c.b16 %v737, %v735
  %v1176 = vpack.c.b16 %v740, %v738
  %v1177 = vpack.c.b16 %v741, %v739
  %v1178 = vpack.c.b16 %v744, %v742
  %v1179 = vpack.c.b16 %v745, %v743
  %v1180 = vpack.c.b16 %v748, %v746
  %v1181 = vpack.c.b16 %v749, %v747
  %v1182 = vpack.c.b16 %v752, %v750
  %v1183 = vpack.c.b16 %v753, %v751
  %v1184 = vpack.c.b16 %v756, %v754
  %v1185 = vpack.c.b16 %v757, %v755
  %v1186 = vpack.c.b16 %v760, %v758
  %v1187 = vpack.c.b16 %v761, %v759
  %v1188 = vpack.c.b16 %v764, %v762
  %v1189 = vpack.c.b16 %v765, %v763
  %v1190 = vpack.c.b16 %v768, %v766
  %v1191 = vpack.c.b16 %v769, %v767
  %v1192 = vpack.c.b16 %v772, %v770
  %v1193 = vpack.c.b16 %v773, %v771
  %v1194 = vpack.c.b16 %v776, %v774
  %v1195 = vpack.c.b16 %v777, %v775
  %v1196 = vpack.c.b16 %v780, %v778
  %v1197 = vpack.c.b16 %v781, %v779
  %v1198 = vpack.c.b16 %v784, %v782
  %v1199 = vpack.c.b16 %v785, %v783
  %v1200 = vpack.c.b16 %v788, %v786
  %v1201 = vpack.c.b16 %v789, %v787
  %v1202 = vpack.c.b16 %v792, %v790
  %v1203 = vpack.c.b16 %v793, %v791
  %v1204 = vpack.c.b16 %v796, %v794
  %v1205 = vpack.c.b16 %v797, %v795
  %v1206 = vpack.c.b16 %v800, %v798
  %v1207 = vpack.c.b16 %v801, %v799
  %v1208 = vpack.c.b16 %v804, %v802
  %v1209 = vpack.c.b16 %v805, %v803
  %v1210 = vpack.c.b16 %v808, %v806
  %v1211 = vpack.c.b16 %v809, %v807
  %v1212 = vpack.c.b16 %v812, %v810
  %v1213 = vpack.c.b16 %v813, %v811
  %v1214 = vpack.c.b16 %v816, %v814
  %v1215 = vpack.c.b16 %v817, %v815
  %v1216 = vpack.c.b16 %v820, %v818
  %v1217 = vpack.c.b16 %v821, %v819
  %v1218 = vpack.c.b16 %v824, %v822
  %v1219 = vpack.c.b16 %v825, %v823
  %v1220 = vpack.c.b16 %v828, %v826
  %v1221 = vpack.c.b16 %v829, %v827
  %v1222 = vpack.c.b16 %v832, %v830
  %v1223 = vpack.c.b16 %v833, %v831
  %v1224 = vpack.c.b16 %v836, %v834
  %v1225 = vpack.c.b16 %v837, %v835
  %v1226 = vpack.c.b16 %v840, %v838
  %v1227 = vpack.c.b16 %v841, %v839
  %v1228 = vpack.c.b16 %v844, %v842
  %v1229 = vpack.c.b16 %v845, %v843
  %v1230 = vpack.c.b16 %v848, %v846
  %v1231 = vpack.c.b16 %v849, %v847
  %v1232 = vpack.c.b16 %v852, %v850
  %v1233 = vpack.c.b16 %v853, %v851
  %v1234 = vpack.c.b16 %v856, %v854
  %v1235 = vpack.c.b16 %v857, %v855
  %v1236 = vpack.c.b16 %v860, %v858
  %v1237 = vpack.c.b16 %v861, %v859
  %v1238 = vpack.c.b16 %v864, %v862
  %v1239 = vpack.c.b16 %v865, %v863
  %v1240 = vpack.c.b16 %v868, %v866
  %v1241 = vpack.c.b16 %v869, %v867
  %v1242 = vpack.c.b16 %v872, %v870
  %v1243 = vpack.c.b16 %v873, %v871
  %v1244 = vpack.c.b16 %v876, %v874
  %v1245 = vpack.c.b16 %v877, %v875
  %v1246 = vpack.c.b16 %v880, %v878
  %v1247 = vpack.c.b16 %v881, %v879
  %v1248 = vpack.c.b16 %v884, %v882
  %v1249 = vpack.c.b16 %v885, %v883
  %v1250 = vpack.c.b16 %v888, %v886
  %v1251 = vpack.c.b16 %v889, %v887
  %v1252 = vpack.c.b16 %v892, %v890
  %v1253 = vpack.c.b16 %v893, %v891
  %v1254 = vpack.c.b16 %v896, %v894
  %v1255 = vpack.c.b16 %v897, %v895
  %v1256 = vpack.c.b16 %v900, %v898
  %v1257 = vpack.c.b16 %v901, %v899
  %v1258 = vpack.c.b16 %v904, %v902
  %v1259 = vpack.c.b16 %v905, %v903
  %v1260 = vpack.c.b16 %v908, %v906
  %v1261 = vpack.c.b16 %v909, %v907
  %v1262 = vpack.c.b16 %v912, %v910
  %v1263 = vpack.c.b16 %v913, %v911
  %v1264 = vpack.c.b16 %v916, %v914
  %v1265 = vpack.c.b16 %v917, %v915
  %v1266 = vpack.c.b16 %v920, %v918
  %v1267 = vpack.c.b16 %v921, %v919
  %v1268 = vpack.c.b16 %v924, %v922
  %v1269 = vpack.c.b16 %v925, %v923
  %v1270 = vpack.c.b16 %v928, %v926
  %v1271 = vpack.c.b16 %v929, %v927
  %v1272 = vpack.c.b16 %v932, %v930
  %v1273 = vpack.c.b16 %v933, %v931
  %v1274 = vpack.c.b16 %v936, %v934
  %v1275 = vpack.c.b16 %v937, %v935
  %v1276 = vpack.c.b16 %v940, %v938
  %v1277 = vpack.c.b16 %v941, %v939
  %v1278 = vpack.c.b16 %v944, %v942
  %v1279 = vpack.c.b16 %v945, %v943
  %v1280 = vpack.c.b16 %v948, %v946
  %v1281 = vpack.c.b16 %v949, %v947
  %v1282 = vpack.c.b16 %v952, %v950
  %v1283 = vpack.c.b16 %v953, %v951
  %v1284 = vpack.c.b16 %v956, %v954
  %v1285 = vpack.c.b16 %v957, %v955
  %v1286 = vpack.c.b16 %v960, %v958
  %v1287 = vpack.c.b16 %v961, %v959
  %v1288 = vpack.c.b16 %v964, %v962
  %v1289 = vpack.c.b16 %v965, %v963
  %v1290 = vpack.c.b16 %v968, %v966
  %v1291 = vpack.c.b16 %v969, %v967
  %v1292 = vpack.c.b16 %v972, %v970
  %v1293 = vpack.c.b16 %v973, %v971
  %v1294 = vpack.c.b16 %v976, %v974
  %v1295 = vpack.c.b16 %v977, %v975
  %v1296 = vpack.c.b16 %v980, %v978
  %v1297 = vpack.c.b16 %v981, %v979
  %v1298 = vpack.c.b16 %v984, %v982
  %v1299 = vpack.c.b16 %v985, %v983
  %v1300 = vpack.c.b16 %v988, %v986
  %v1301 = vpack.c.b16 %v989, %v987
  %v1302 = vpack.c.b16 %v992, %v990
  %v1303 = vpack.c.b16 %v993, %v991
  %v1304 = vpack.c.b16 %v996, %v994
  %v1305 = vpack.c.b16 %v997, %v995
  %v1306 = vpack.c.b16 %v1000, %v998
  %v1307 = vpack.c.b16 %v1001, %v999
  %v1308 = vpack.c.b16 %v1004, %v1002
  %v1309 = vpack.c.b16 %v1005, %v1003
  %v1310 = vpack.c.b16 %v1008, %v1006
  %v1311 = vpack.c.b16 %v1009, %v1007
  %v1312 = vpack.c.b16 %v1012, %v1010
  %v1313 = vpack.c.b16 %v1013, %v1011
  %v1314 = vpack.c.b16 %v1016, %v1014
  %v1315 = vpack.c.b16 %v1017, %v1015
  %v1316 = vpack.c.b16 %v1020, %v1018
  %v1317 = vpack.c.b16 %v1021, %v1019
  %v1318 = vpack.c.b16 %v1024, %v1022
  %v1319 = vpack.c.b16 %v1025, %v1023
  %v1320 = vpack.c.b16 %v1028, %v1026
  %v1321 = vpack.c.b16 %v1029, %v1027
  %v1322 = vpack.c.b16 %v1032, %v1030
  %v1323 = vpack.c.b16 %v1033, %v1031
  %v1324 = vpack.c.b16 %v1036, %v1034
  %v1325 = vpack.c.b16 %v1037, %v1035
  %v1326 = vpack.c.b16 %v1040, %v1038
  %v1327 = vpack.c.b16 %v1041, %v1039
  %v1328 = vpack.c.b16 %v1044, %v1042
  %v1329 = vpack.c.b16 %v1045, %v1043
  %v1330 = vpack.c.b16 %v1048, %v1046
  %v1331 = vpack.c.b16 %v1049, %v1047
  %v1332 = vpack.c.b16 %v1052, %v1050
  %v1333 = vpack.c.b16 %v1053, %v1051
  %v1334 = vpack.c.b16 %v1056, %v1054
  %v1335 = vpack.c.b16 %v1057, %v1055
  %v1336 = vpack.c.b16 %v1060, %v1058
  %v1337 = vpack.c.b16 %v1061, %v1059
  %v1338 = vpack.c.b16 %v1064, %v1062
  %v1339 = vpack.c.b16 %v1065, %v1063
  %v1340 = vpack.c.b16 %v1068, %v1066
  %v1341 = vpack.c.b16 %v1069, %v1067
  %v1342 = vpack.c.b16 %v1072, %v1070
  %v1343 = vpack.c.b16 %v1073, %v1071
  %v1344 = vpack.c.b16 %v1076, %v1074
  %v1345 = vpack.c.b16 %v1077, %v1075
  %v1346 = vpack.c.b16 %v1080, %v1078
  %v1347 = vpack.c.b16 %v1081, %v1079
  %v1348 = vpack.c.b16 %v1084, %v1082
  %v1349 = vpack.c.b16 %v1085, %v1083
  %v1350 = vpack.c.b16 %v1088, %v1086
  %v1351 = vpack.c.b16 %v1089, %v1087
  %v1352 = vpack.c.b16 %v1092, %v1090
  %v1353 = vpack.c.b16 %v1093, %v1091
  %v1354 = vpack.c.b16 %v1096, %v1094
  %v1355 = vpack.c.b16 %v1097, %v1095
  %v1356 = vpack.c.b16 %v1100, %v1098
  %v1357 = vpack.c.b16 %v1101, %v1099
  %1614 = vmatprep.subr.bf16.mxu0 %v1103
  %1615 = vmatpush1.bf16.msra.mxu0 %v1102
  %1616 = vmatprep.subr.bf16.mxu0 %v1105
  %1617 = vmatpush1.bf16.msra.mxu0 %v1104
  %1618 = vmatprep.subr.bf16.mxu0 %v1107
  %1619 = vmatpush1.bf16.msra.mxu0 %v1106
  %1620 = vmatprep.subr.bf16.mxu0 %v1109
  %1621 = vmatpush1.bf16.msra.mxu0 %v1108
  %1622 = vmatprep.subr.bf16.mxu0 %v1111
  %1623 = vmatpush1.bf16.msra.mxu0 %v1110
  %1624 = vmatprep.subr.bf16.mxu0 %v1113
  %1625 = vmatpush1.bf16.msra.mxu0 %v1112
  %1626 = vmatprep.subr.bf16.mxu0 %v1115
  %1627 = vmatpush1.bf16.msra.mxu0 %v1114
  %1628 = vmatprep.subr.bf16.mxu0 %v1117
  %1629 = vmatpush1.bf16.msra.mxu0 %v1116
  %1630 = vmatprep.subr.bf16.mxu0 %v1119
  %1631 = vmatpush1.bf16.msra.mxu0 %v1118
  %1632 = vmatprep.subr.bf16.mxu0 %v1121
  %1633 = vmatpush1.bf16.msra.mxu0 %v1120
  %1634 = vmatprep.subr.bf16.mxu0 %v1123
  %1635 = vmatpush1.bf16.msra.mxu0 %v1122
  %1636 = vmatprep.subr.bf16.mxu0 %v1125
  %1637 = vmatpush1.bf16.msra.mxu0 %v1124
  %1638 = vmatprep.subr.bf16.mxu0 %v1127
  %1639 = vmatpush1.bf16.msra.mxu0 %v1126
  %1640 = vmatprep.subr.bf16.mxu0 %v1129
  %1641 = vmatpush1.bf16.msra.mxu0 %v1128
  %1642 = vmatprep.subr.bf16.mxu0 %v1131
  %1643 = vmatpush1.bf16.msra.mxu0 %v1130
  %1644 = vmatprep.subr.bf16.mxu0 %v1133
  %1645 = vmatpush1.bf16.msra.mxu0 %v1132
  %1646 = vmatprep.mubr.bf16.mxu0 %v303
  %1647 = vmatmul.mubr.bf16.gmra.mrb[0].mxu0 %v302
  %v1648 = vpop.f32.mrb[0].mxu0
  %v1649 = vadd.f32 0.0, %v1648
  %v1650 = vpop.f32.mrb[0].mxu0
  %v1651 = vadd.f32 0.0, %v1650
  %v1652 = vpop.f32.mrb[0].mxu0
  %v1653 = vpop.f32.mrb[0].mxu0
  %1654 = vdwg.mxu0
  %1655 = vmatprep.subr.bf16.mxu0 %v1135
  %1656 = vmatpush1.bf16.msra.mxu0 %v1134
  %1657 = vmatprep.subr.bf16.mxu0 %v1137
  %1658 = vmatpush1.bf16.msra.mxu0 %v1136
  %1659 = vmatprep.subr.bf16.mxu0 %v1139
  %1660 = vmatpush1.bf16.msra.mxu0 %v1138
  %1661 = vmatprep.subr.bf16.mxu0 %v1141
  %1662 = vmatpush1.bf16.msra.mxu0 %v1140
  %1663 = vmatprep.subr.bf16.mxu0 %v1143
  %1664 = vmatpush1.bf16.msra.mxu0 %v1142
  %1665 = vmatprep.subr.bf16.mxu0 %v1145
  %1666 = vmatpush1.bf16.msra.mxu0 %v1144
  %1667 = vmatprep.subr.bf16.mxu0 %v1147
  %1668 = vmatpush1.bf16.msra.mxu0 %v1146
  %1669 = vmatprep.subr.bf16.mxu0 %v1149
  %1670 = vmatpush1.bf16.msra.mxu0 %v1148
  %1671 = vmatprep.subr.bf16.mxu0 %v1151
  %1672 = vmatpush1.bf16.msra.mxu0 %v1150
  %1673 = vmatprep.subr.bf16.mxu0 %v1153
  %1674 = vmatpush1.bf16.msra.mxu0 %v1152
  %1675 = vmatprep.subr.bf16.mxu0 %v1155
  %1676 = vmatpush1.bf16.msra.mxu0 %v1154
  %1677 = vmatprep.subr.bf16.mxu0 %v1157
  %1678 = vmatpush1.bf16.msra.mxu0 %v1156
  %1679 = vmatprep.subr.bf16.mxu0 %v1159
  %1680 = vmatpush1.bf16.msra.mxu0 %v1158
  %1681 = vmatprep.subr.bf16.mxu0 %v1161
  %1682 = vmatpush1.bf16.msra.mxu0 %v1160
  %1683 = vmatprep.subr.bf16.mxu0 %v1163
  %1684 = vmatpush1.bf16.msra.mxu0 %v1162
  %1685 = vmatprep.subr.bf16.mxu0 %v1165
  %1686 = vmatpush1.bf16.msra.mxu0 %v1164
  %1687 = vmatprep.mubr.bf16.mxu0 %v305
  %1688 = vmatmul.mubr.bf16.gmra.mrb[0].mxu0 %v304
  %v1689 = vpop.f32.mrb[0].mxu0
  %v1690 = vadd.f32 %v1649, %v1689
  %v1691 = vpop.f32.mrb[0].mxu0
  %v1692 = vadd.f32 %v1651, %v1691
  %v1693 = vpop.f32.mrb[0].mxu0
  %v1694 = vpop.f32.mrb[0].mxu0
  %1695 = vdwg.mxu0
  %1696 = vmatprep.subr.bf16.mxu0 %v1167
  %1697 = vmatpush1.bf16.msra.mxu0 %v1166
  %1698 = vmatprep.subr.bf16.mxu0 %v1169
  %1699 = vmatpush1.bf16.msra.mxu0 %v1168
  %1700 = vmatprep.subr.bf16.mxu0 %v1171
  %1701 = vmatpush1.bf16.msra.mxu0 %v1170
  %1702 = vmatprep.subr.bf16.mxu0 %v1173
  %1703 = vmatpush1.bf16.msra.mxu0 %v1172
  %1704 = vmatprep.subr.bf16.mxu0 %v1175
  %1705 = vmatpush1.bf16.msra.mxu0 %v1174
  %1706 = vmatprep.subr.bf16.mxu0 %v1177
  %1707 = vmatpush1.bf16.msra.mxu0 %v1176
  %1708 = vmatprep.subr.bf16.mxu0 %v1179
  %1709 = vmatpush1.bf16.msra.mxu0 %v1178
  %1710 = vmatprep.subr.bf16.mxu0 %v1181
  %1711 = vmatpush1.bf16.msra.mxu0 %v1180
  %1712 = vmatprep.subr.bf16.mxu0 %v1183
  %1713 = vmatpush1.bf16.msra.mxu0 %v1182
  %1714 = vmatprep.subr.bf16.mxu0 %v1185
  %1715 = vmatpush1.bf16.msra.mxu0 %v1184
  %1716 = vmatprep.subr.bf16.mxu0 %v1187
  %1717 = vmatpush1.bf16.msra.mxu0 %v1186
  %1718 = vmatprep.subr.bf16.mxu0 %v1189
  %1719 = vmatpush1.bf16.msra.mxu0 %v1188
  %1720 = vmatprep.subr.bf16.mxu0 %v1191
  %1721 = vmatpush1.bf16.msra.mxu0 %v1190
  %1722 = vmatprep.subr.bf16.mxu0 %v1193
  %1723 = vmatpush1.bf16.msra.mxu0 %v1192
  %1724 = vmatprep.subr.bf16.mxu0 %v1195
  %1725 = vmatpush1.bf16.msra.mxu0 %v1194
  %1726 = vmatprep.subr.bf16.mxu0 %v1197
  %1727 = vmatpush1.bf16.msra.mxu0 %v1196
  %1728 = vmatprep.mubr.bf16.mxu0 %v307
  %1729 = vmatmul.mubr.bf16.gmra.mrb[0].mxu0 %v306
  %v1730 = vpop.f32.mrb[0].mxu0
  %v1731 = vadd.f32 %v1690, %v1730
  %v1732 = vpop.f32.mrb[0].mxu0
  %v1733 = vadd.f32 %v1692, %v1732
  %v1734 = vpop.f32.mrb[0].mxu0
  %v1735 = vpop.f32.mrb[0].mxu0
  %1736 = vdwg.mxu0
  %1737 = vmatprep.subr.bf16.mxu0 %v1199
  %1738 = vmatpush1.bf16.msra.mxu0 %v1198
  %1739 = vmatprep.subr.bf16.mxu0 %v1201
  %1740 = vmatpush1.bf16.msra.mxu0 %v1200
  %1741 = vmatprep.subr.bf16.mxu0 %v1203
  %1742 = vmatpush1.bf16.msra.mxu0 %v1202
  %1743 = vmatprep.subr.bf16.mxu0 %v1205
  %1744 = vmatpush1.bf16.msra.mxu0 %v1204
  %1745 = vmatprep.subr.bf16.mxu0 %v1207
  %1746 = vmatpush1.bf16.msra.mxu0 %v1206
  %1747 = vmatprep.subr.bf16.mxu0 %v1209
  %1748 = vmatpush1.bf16.msra.mxu0 %v1208
  %1749 = vmatprep.subr.bf16.mxu0 %v1211
  %1750 = vmatpush1.bf16.msra.mxu0 %v1210
  %1751 = vmatprep.subr.bf16.mxu0 %v1213
  %1752 = vmatpush1.bf16.msra.mxu0 %v1212
  %1753 = vmatprep.subr.bf16.mxu0 %v1215
  %1754 = vmatpush1.bf16.msra.mxu0 %v1214
  %1755 = vmatprep.subr.bf16.mxu0 %v1217
  %1756 = vmatpush1.bf16.msra.mxu0 %v1216
  %1757 = vmatprep.subr.bf16.mxu0 %v1219
  %1758 = vmatpush1.bf16.msra.mxu0 %v1218
  %1759 = vmatprep.subr.bf16.mxu0 %v1221
  %1760 = vmatpush1.bf16.msra.mxu0 %v1220
  %1761 = vmatprep.subr.bf16.mxu0 %v1223
  %1762 = vmatpush1.bf16.msra.mxu0 %v1222
  %1763 = vmatprep.subr.bf16.mxu0 %v1225
  %1764 = vmatpush1.bf16.msra.mxu0 %v1224
  %1765 = vmatprep.subr.bf16.mxu0 %v1227
  %1766 = vmatpush1.bf16.msra.mxu0 %v1226
  %1767 = vmatprep.subr.bf16.mxu0 %v1229
  %1768 = vmatpush1.bf16.msra.mxu0 %v1228
  %1769 = vmatprep.mubr.bf16.mxu0 %v309
  %1770 = vmatmul.mubr.bf16.gmra.mrb[0].mxu0 %v308
  %v1771 = vpop.f32.mrb[0].mxu0
  %v1772 = vadd.f32 %v1731, %v1771
  %v1773 = vpop.f32.mrb[0].mxu0
  %v1774 = vadd.f32 %v1733, %v1773
  %v1775 = vpop.f32.mrb[0].mxu0
  %v1776 = vpop.f32.mrb[0].mxu0
  %1777 = vdwg.mxu0
  %1778 = vmatprep.subr.bf16.mxu0 %v1231
  %1779 = vmatpush1.bf16.msra.mxu0 %v1230
  %1780 = vmatprep.subr.bf16.mxu0 %v1233
  %1781 = vmatpush1.bf16.msra.mxu0 %v1232
  %1782 = vmatprep.subr.bf16.mxu0 %v1235
  %1783 = vmatpush1.bf16.msra.mxu0 %v1234
  %1784 = vmatprep.subr.bf16.mxu0 %v1237
  %1785 = vmatpush1.bf16.msra.mxu0 %v1236
  %1786 = vmatprep.subr.bf16.mxu0 %v1239
  %1787 = vmatpush1.bf16.msra.mxu0 %v1238
  %1788 = vmatprep.subr.bf16.mxu0 %v1241
  %1789 = vmatpush1.bf16.msra.mxu0 %v1240
  %1790 = vmatprep.subr.bf16.mxu0 %v1243
  %1791 = vmatpush1.bf16.msra.mxu0 %v1242
  %1792 = vmatprep.subr.bf16.mxu0 %v1245
  %1793 = vmatpush1.bf16.msra.mxu0 %v1244
  %1794 = vmatprep.subr.bf16.mxu0 %v1247
  %1795 = vmatpush1.bf16.msra.mxu0 %v1246
  %1796 = vmatprep.subr.bf16.mxu0 %v1249
  %1797 = vmatpush1.bf16.msra.mxu0 %v1248
  %1798 = vmatprep.subr.bf16.mxu0 %v1251
  %1799 = vmatpush1.bf16.msra.mxu0 %v1250
  %1800 = vmatprep.subr.bf16.mxu0 %v1253
  %1801 = vmatpush1.bf16.msra.mxu0 %v1252
  %1802 = vmatprep.subr.bf16.mxu0 %v1255
  %1803 = vmatpush1.bf16.msra.mxu0 %v1254
  %1804 = vmatprep.subr.bf16.mxu0 %v1257
  %1805 = vmatpush1.bf16.msra.mxu0 %v1256
  %1806 = vmatprep.subr.bf16.mxu0 %v1259
  %1807 = vmatpush1.bf16.msra.mxu0 %v1258
  %1808 = vmatprep.subr.bf16.mxu0 %v1261
  %1809 = vmatpush1.bf16.msra.mxu0 %v1260
  %1810 = vmatprep.mubr.bf16.mxu0 %v311
  %1811 = vmatmul.mubr.bf16.gmra.mrb[0].mxu0 %v310
  %v1812 = vpop.f32.mrb[0].mxu0
  %v1813 = vadd.f32 %v1772, %v1812
  %v1814 = vpop.f32.mrb[0].mxu0
  %v1815 = vadd.f32 %v1774, %v1814
  %v1816 = vpop.f32.mrb[0].mxu0
  %v1817 = vpop.f32.mrb[0].mxu0
  %1818 = vdwg.mxu0
  %1819 = vmatprep.subr.bf16.mxu0 %v1263
  %1820 = vmatpush1.bf16.msra.mxu0 %v1262
  %1821 = vmatprep.subr.bf16.mxu0 %v1265
  %1822 = vmatpush1.bf16.msra.mxu0 %v1264
  %1823 = vmatprep.subr.bf16.mxu0 %v1267
  %1824 = vmatpush1.bf16.msra.mxu0 %v1266
  %1825 = vmatprep.subr.bf16.mxu0 %v1269
  %1826 = vmatpush1.bf16.msra.mxu0 %v1268
  %1827 = vmatprep.subr.bf16.mxu0 %v1271
  %1828 = vmatpush1.bf16.msra.mxu0 %v1270
  %1829 = vmatprep.subr.bf16.mxu0 %v1273
  %1830 = vmatpush1.bf16.msra.mxu0 %v1272
  %1831 = vmatprep.subr.bf16.mxu0 %v1275
  %1832 = vmatpush1.bf16.msra.mxu0 %v1274
  %1833 = vmatprep.subr.bf16.mxu0 %v1277
  %1834 = vmatpush1.bf16.msra.mxu0 %v1276
  %1835 = vmatprep.subr.bf16.mxu0 %v1279
  %1836 = vmatpush1.bf16.msra.mxu0 %v1278
  %1837 = vmatprep.subr.bf16.mxu0 %v1281
  %1838 = vmatpush1.bf16.msra.mxu0 %v1280
  %1839 = vmatprep.subr.bf16.mxu0 %v1283
  %1840 = vmatpush1.bf16.msra.mxu0 %v1282
  %1841 = vmatprep.subr.bf16.mxu0 %v1285
  %1842 = vmatpush1.bf16.msra.mxu0 %v1284
  %1843 = vmatprep.subr.bf16.mxu0 %v1287
  %1844 = vmatpush1.bf16.msra.mxu0 %v1286
  %1845 = vmatprep.subr.bf16.mxu0 %v1289
  %1846 = vmatpush1.bf16.msra.mxu0 %v1288
  %1847 = vmatprep.subr.bf16.mxu0 %v1291
  %1848 = vmatpush1.bf16.msra.mxu0 %v1290
  %1849 = vmatprep.subr.bf16.mxu0 %v1293
  %1850 = vmatpush1.bf16.msra.mxu0 %v1292
  %1851 = vmatprep.mubr.bf16.mxu0 %v313
  %1852 = vmatmul.mubr.bf16.gmra.mrb[0].mxu0 %v312
  %v1853 = vpop.f32.mrb[0].mxu0
  %v1854 = vadd.f32 %v1813, %v1853
  %v1855 = vpop.f32.mrb[0].mxu0
  %v1856 = vadd.f32 %v1815, %v1855
  %v1857 = vpop.f32.mrb[0].mxu0
  %v1858 = vpop.f32.mrb[0].mxu0
  %1859 = vdwg.mxu0
  %1860 = vmatprep.subr.bf16.mxu0 %v1295
  %1861 = vmatpush1.bf16.msra.mxu0 %v1294
  %1862 = vmatprep.subr.bf16.mxu0 %v1297
  %1863 = vmatpush1.bf16.msra.mxu0 %v1296
  %1864 = vmatprep.subr.bf16.mxu0 %v1299
  %1865 = vmatpush1.bf16.msra.mxu0 %v1298
  %1866 = vmatprep.subr.bf16.mxu0 %v1301
  %1867 = vmatpush1.bf16.msra.mxu0 %v1300
  %1868 = vmatprep.subr.bf16.mxu0 %v1303
  %1869 = vmatpush1.bf16.msra.mxu0 %v1302
  %1870 = vmatprep.subr.bf16.mxu0 %v1305
  %1871 = vmatpush1.bf16.msra.mxu0 %v1304
  %1872 = vmatprep.subr.bf16.mxu0 %v1307
  %1873 = vmatpush1.bf16.msra.mxu0 %v1306
  %1874 = vmatprep.subr.bf16.mxu0 %v1309
  %1875 = vmatpush1.bf16.msra.mxu0 %v1308
  %1876 = vmatprep.subr.bf16.mxu0 %v1311
  %1877 = vmatpush1.bf16.msra.mxu0 %v1310
  %1878 = vmatprep.subr.bf16.mxu0 %v1313
  %1879 = vmatpush1.bf16.msra.mxu0 %v1312
  %1880 = vmatprep.subr.bf16.mxu0 %v1315
  %1881 = vmatpush1.bf16.msra.mxu0 %v1314
  %1882 = vmatprep.subr.bf16.mxu0 %v1317
  %1883 = vmatpush1.bf16.msra.mxu0 %v1316
  %1884 = vmatprep.subr.bf16.mxu0 %v1319
  %1885 = vmatpush1.bf16.msra.mxu0 %v1318
  %1886 = vmatprep.subr.bf16.mxu0 %v1321
  %1887 = vmatpush1.bf16.msra.mxu0 %v1320
  %1888 = vmatprep.subr.bf16.mxu0 %v1323
  %1889 = vmatpush1.bf16.msra.mxu0 %v1322
  %1890 = vmatprep.subr.bf16.mxu0 %v1325
  %1891 = vmatpush1.bf16.msra.mxu0 %v1324
  %1892 = vmatprep.mubr.bf16.mxu0 %v315
  %1893 = vmatmul.mubr.bf16.gmra.mrb[0].mxu0 %v314
  %v1894 = vpop.f32.mrb[0].mxu0
  %v1895 = vadd.f32 %v1854, %v1894
  %v1896 = vpop.f32.mrb[0].mxu0
  %v1897 = vadd.f32 %v1856, %v1896
  %v1898 = vpop.f32.mrb[0].mxu0
  %v1899 = vpop.f32.mrb[0].mxu0
  %1900 = vdwg.mxu0
  %1901 = vmatprep.subr.bf16.mxu0 %v1327
  %1902 = vmatpush1.bf16.msra.mxu0 %v1326
  %1903 = vmatprep.subr.bf16.mxu0 %v1329
  %1904 = vmatpush1.bf16.msra.mxu0 %v1328
  %1905 = vmatprep.subr.bf16.mxu0 %v1331
  %1906 = vmatpush1.bf16.msra.mxu0 %v1330
  %1907 = vmatprep.subr.bf16.mxu0 %v1333
  %1908 = vmatpush1.bf16.msra.mxu0 %v1332
  %1909 = vmatprep.subr.bf16.mxu0 %v1335
  %1910 = vmatpush1.bf16.msra.mxu0 %v1334
  %1911 = vmatprep.subr.bf16.mxu0 %v1337
  %1912 = vmatpush1.bf16.msra.mxu0 %v1336
  %1913 = vmatprep.subr.bf16.mxu0 %v1339
  %1914 = vmatpush1.bf16.msra.mxu0 %v1338
  %1915 = vmatprep.subr.bf16.mxu0 %v1341
  %1916 = vmatpush1.bf16.msra.mxu0 %v1340
  %1917 = vmatprep.subr.bf16.mxu0 %v1343
  %1918 = vmatpush1.bf16.msra.mxu0 %v1342
  %1919 = vmatprep.subr.bf16.mxu0 %v1345
  %1920 = vmatpush1.bf16.msra.mxu0 %v1344
  %1921 = vmatprep.subr.bf16.mxu0 %v1347
  %1922 = vmatpush1.bf16.msra.mxu0 %v1346
  %1923 = vmatprep.subr.bf16.mxu0 %v1349
  %1924 = vmatpush1.bf16.msra.mxu0 %v1348
  %1925 = vmatprep.subr.bf16.mxu0 %v1351
  %1926 = vmatpush1.bf16.msra.mxu0 %v1350
  %1927 = vmatprep.subr.bf16.mxu0 %v1353
  %1928 = vmatpush1.bf16.msra.mxu0 %v1352
  %1929 = vmatprep.subr.bf16.mxu0 %v1355
  %1930 = vmatpush1.bf16.msra.mxu0 %v1354
  %1931 = vmatprep.subr.bf16.mxu0 %v1357
  %1932 = vmatpush1.bf16.msra.mxu0 %v1356
  %1933 = vmatprep.mubr.bf16.mxu0 %v317
  %1934 = vmatmul.mubr.bf16.gmra.mrb[0].mxu0 %v316
  %v1935 = vpop.f32.mrb[0].mxu0
  %v1936 = vadd.f32 %v1895, %v1935
  %v1937 = vpop.f32.mrb[0].mxu0
  %v1938 = vadd.f32 %v1897, %v1937
  %v1939 = vpop.f32.mrb[0].mxu0
  %v1940 = vpop.f32.mrb[0].mxu0
  %1941 = vdwg.mxu0
  %v1942 = vpack.c.bf16 %v1936, %v1936
  %v1943 = vpack.c.bf16 %v1938, %v1938
  %v1946 = vunpack.c.l.b16 %v1942
  %v1947 = vunpack.c.l.b16 %v1943
  %v1948 = vpack.c.b16 %v1947, %v1946
  %1950 = vst [vmem:[%s2] sm:$0xff] %v1948
  %v1951 = vrot.slane %v1936, 4
  %v1952 = vadd.f32 %v1936, %v1951
  %v1953 = vrot.slane %v1952, 2
  %v1954 = vadd.f32 %v1952, %v1953
  %v1955 = vrot.slane %v1954, 1
  %v1956 = vadd.f32 %v1954, %v1955
  %v1957 = vrot.slane %v1938, 4
  %v1958 = vadd.f32 %v1938, %v1957
  %v1959 = vrot.slane %v1958, 2
  %v1960 = vadd.f32 %v1958, %v1959
  %v1961 = vrot.slane %v1960, 1
  %v1962 = vadd.f32 %v1960, %v1961
  %v1963 = vmul.f32 %v1936, %v1936
  %v1964 = vmul.f32 %v1938, %v1938
  %v1965 = vrot.slane %v1963, 4
  %v1966 = vadd.f32 %v1963, %v1965
  %v1967 = vrot.slane %v1966, 2
  %v1968 = vadd.f32 %v1966, %v1967
  %v1969 = vrot.slane %v1968, 1
  %v1970 = vadd.f32 %v1968, %v1969
  %v1971 = vrot.slane %v1964, 4
  %v1972 = vadd.f32 %v1964, %v1971
  %v1973 = vrot.slane %v1972, 2
  %v1974 = vadd.f32 %v1972, %v1973
  %v1975 = vrot.slane %v1974, 1
  %v1976 = vadd.f32 %v1974, %v1975
  %v1979 = vcombine.low %v1956, %v1962
  %v1981 = vunpack.c.l.s4 1966171168
  %v1982 = vunpack.c.0.s8 %v1981
  %v1983 = vlaneseq
  %v1984 = vshrl.u32 %v1983, 7
  %v1985 = vsub.s32 %v1982, %v1984
  %v1986 = vrot.slane %v1979, %v1985
  %v1988 = vunpack.c.l.s4 1966171168
  %v1989 = vunpack.c.0.s8 %v1988
  %v1990 = vlaneseq
  %v1991 = vshrl.u32 %v1990, 7
  %v1992 = vsub.s32 %v1989, %v1991
  %v1993 = vrot.slane %v1986, %v1992
  %v1995 = vlaneseq
  %vm1996 = vcmp.ge.s32.totalorder %v1995, 0
  %vm1997 = vcmp.lt.s32.totalorder %v1995, 256
  %vm1998 = vmand %vm1996, %vm1997
  %1999 = vst.msk [vmem:[%s3] sm:$0x3] %vm1998, %v1993
  %v2002 = vcombine.low %v1970, %v1976
  %v2004 = vunpack.c.l.s4 1966171168
  %v2005 = vunpack.c.0.s8 %v2004
  %v2006 = vlaneseq
  %v2007 = vshrl.u32 %v2006, 7
  %v2008 = vsub.s32 %v2005, %v2007
  %v2009 = vrot.slane %v2002, %v2008
  %v2011 = vunpack.c.l.s4 1966171168
  %v2012 = vunpack.c.0.s8 %v2011
  %v2013 = vlaneseq
  %v2014 = vshrl.u32 %v2013, 7
  %v2015 = vsub.s32 %v2012, %v2014
  %v2016 = vrot.slane %v2009, %v2015
  %2018 = vst.msk [vmem:[%s4] sm:$0x3] %vm1998, %v2016
  // Predicated region
  $region10: #{ocean_vae_forward.21} parent=0 // pred_check
    _
  $region11: #{ocean_vae_forward.21} parent=0 // pred_check_branch
    %2020 = sbr.rel (0) target = $region13
  $region12: #{ocean_vae_forward.21} parent=0 // pred_region
    _
  $region13: #{ocean_vae_forward.21} parent=0 // pred_fallthru
    _
  // Predicated region
  $region14: #{ocean_vae_forward.21} parent=0 // pred_check
    _
  $region15: #{ocean_vae_forward.21} parent=0 // pred_check_branch
    %2022 = sbr.rel (0) target = $region17
  $region16: #{ocean_vae_forward.21} parent=0 // pred_region
    _
  $region17: #{ocean_vae_forward.21} parent=0 // pred_fallthru
    _
  // Predicated region
  $region18: #{ocean_vae_forward.21} parent=0 // pred_check
    _
  $region19: #{ocean_vae_forward.21} parent=0 // pred_check_branch
    %2024 = sbr.rel (0) target = $region21
  $region20: #{ocean_vae_forward.21} parent=0 // pred_region
    _
  $region21: #{ocean_vae_forward.21} parent=0 // pred_fallthru
    _
  // Predicated region
  $region22: #{ocean_vae_forward.21} parent=0 // pred_check
    _
  $region23: #{ocean_vae_forward.21} parent=0 // pred_check_branch
    %2026 = sbr.rel (0) target = $region25
  $region24: #{ocean_vae_forward.21} parent=0 // pred_region
    _
  $region25: #{ocean_vae_forward.21} parent=0 // pred_fallthru
    _
  // Predicated region
  $region26: #{ocean_vae_forward.21} parent=0 // pred_check
    _
  $region27: #{ocean_vae_forward.21} parent=0 // pred_check_branch
    %2028 = sbr.rel (0) target = $region29
  $region28: #{ocean_vae_forward.21} parent=0 // pred_region
    _
  $region29: #{ocean_vae_forward.21} parent=0 // pred_fallthru
    _
  // Predicated region
  $region30: #{ocean_vae_forward.21} parent=0 // pred_check
    _
  $region31: #{ocean_vae_forward.21} parent=0 // pred_check_branch
    %2030 = sbr.rel (0) target = $region33
  $region32: #{ocean_vae_forward.21} parent=0 // pred_region
    _
  $region33: #{ocean_vae_forward.21} parent=0 // pred_fallthru
    _

// kernel: ocean_vae_forward.23
$region0: #{ocean_vae_forward.23}
  #allocation0 [shape = 'u32[]', space=smem, size = 0x4, offset = 0x4, fixed_abs, tag = 'smem constant byte address 0x4 - core index']
  #allocation1 [shape = 'u32[144,128]{1,0:T(1,128)}', space=vmem, size = 0x12000, scoped, tag = 'internal scratch']
  %s0 = inlined_call_operand.vmem [shape: bf16[8,256], index: 0, kind: input, shape index: {}]
  %s1 = inlined_call_operand.vmem [shape: bf16[256,128], index: 1, kind: input, shape index: {}]
  %s2 = inlined_call_operand.vmem [shape: f32[1,128], index: 2, kind: input, shape index: {}]
  %s3 = inlined_call_operand.vmem [shape: f32[8,128], index: 3, kind: output, shape index: {}]
  %s4 = sld [smem:[#allocation0]]
  $region22: #{ocean_vae_forward.23} parent=0
    _
  %s6 = ssub.s32 1, %s4
  %s7 = scalar_select 0, %s6, %s4
  // Predicated region
  $region2: #{ocean_vae_forward.23} parent=0 // pred_check
    _
  $region3: #{ocean_vae_forward.23} parent=0 // pred_check_branch
    %9 = sbr.rel (0) target = $region5
  $region4: #{ocean_vae_forward.23} parent=0 // pred_region
    _
  $region5: #{ocean_vae_forward.23} parent=0 // pred_fallthru
    _
  // Predicated region
  $region6: #{ocean_vae_forward.23} parent=0 // pred_check
    _
  $region7: #{ocean_vae_forward.23} parent=0 // pred_check_branch
    %11 = sbr.rel (0) target = $region9
  $region8: #{ocean_vae_forward.23} parent=0 // pred_region
    _
  $region9: #{ocean_vae_forward.23} parent=0 // pred_fallthru
    _
  // Predicated region
  $region10: #{ocean_vae_forward.23} parent=0 // pred_check
    _
  $region11: #{ocean_vae_forward.23} parent=0 // pred_check_branch
    %13 = sbr.rel (0) target = $region13
  $region12: #{ocean_vae_forward.23} parent=0 // pred_region
    _
  $region13: #{ocean_vae_forward.23} parent=0 // pred_fallthru
    _
  %v15 = vld [vmem:[%s0] sm:$0xff]
  %v16 = vld [vmem:[%s1] sm:$0xf]
  %v17 = vld [vmem:[%s1 + $0x4] sm:$0xf]
  %v18 = vld [vmem:[%s1 + $0x8] sm:$0xf]
  %v19 = vld [vmem:[%s1 + $0xc] sm:$0xf]
  %v20 = vld [vmem:[%s1 + $0x10] sm:$0xf]
  %v21 = vld [vmem:[%s1 + $0x14] sm:$0xf]
  %v22 = vld [vmem:[%s1 + $0x18] sm:$0xf]
  %v23 = vld [vmem:[%s1 + $0x1c] sm:$0xf]
  %v24 = vld [vmem:[%s1 + $0x20] sm:$0xf]
  %v25 = vld [vmem:[%s1 + $0x24] sm:$0xf]
  %v26 = vld [vmem:[%s1 + $0x28] sm:$0xf]
  %v27 = vld [vmem:[%s1 + $0x2c] sm:$0xf]
  %v28 = vld [vmem:[%s1 + $0x30] sm:$0xf]
  %v29 = vld [vmem:[%s1 + $0x34] sm:$0xf]
  %v30 = vld [vmem:[%s1 + $0x38] sm:$0xf]
  %v31 = vld [vmem:[%s1 + $0x3c] sm:$0xf]
  %v32 = vld [vmem:[%s1 + $0x40] sm:$0xf]
  %v33 = vld [vmem:[%s1 + $0x44] sm:$0xf]
  %v34 = vld [vmem:[%s1 + $0x48] sm:$0xf]
  %v35 = vld [vmem:[%s1 + $0x4c] sm:$0xf]
  %v36 = vld [vmem:[%s1 + $0x50] sm:$0xf]
  %v37 = vld [vmem:[%s1 + $0x54] sm:$0xf]
  %v38 = vld [vmem:[%s1 + $0x58] sm:$0xf]
  %v39 = vld [vmem:[%s1 + $0x5c] sm:$0xf]
  %v40 = vld [vmem:[%s1 + $0x60] sm:$0xf]
  %v41 = vld [vmem:[%s1 + $0x64] sm:$0xf]
  %v42 = vld [vmem:[%s1 + $0x68] sm:$0xf]
  %v43 = vld [vmem:[%s1 + $0x6c] sm:$0xf]
  %v44 = vld [vmem:[%s1 + $0x70] sm:$0xf]
  %v45 = vld [vmem:[%s1 + $0x74] sm:$0xf]
  %v46 = vld [vmem:[%s1 + $0x78] sm:$0xf]
  %v47 = vld [vmem:[%s1 + $0x7c] sm:$0xf]
  %v48 = vld [vmem:[%s2] sm:$0x1]
  %v50 = vlaneseq
  %v51 = vshrl.u32 %v50, 7
  %v52 = vsub.s32 0, %v51
  %v53 = vrot.slane %v48, %v52
  %v56 = vunpack.c.l.b16 %v15
  %v57 = vunpack.c.h.b16 %v15
  %v58 = vpack.c.b16 %v56, %v56
  %v59 = vpack.c.b16 %v57, %v57
  %v94 = vunpack.c.l.b16 %v16
  %v95 = vunpack.c.l.b16 %v17
  %v96 = vunpack.c.l.b16 %v18
  %v97 = vunpack.c.l.b16 %v19
  %v98 = vunpack.c.l.b16 %v20
  %v99 = vunpack.c.l.b16 %v21
  %v100 = vunpack.c.l.b16 %v22
  %v101 = vunpack.c.l.b16 %v23
  %v102 = vunpack.c.l.b16 %v24
  %v103 = vunpack.c.l.b16 %v25
  %v104 = vunpack.c.l.b16 %v26
  %v105 = vunpack.c.l.b16 %v27
  %v106 = vunpack.c.l.b16 %v28
  %v107 = vunpack.c.l.b16 %v29
  %v108 = vunpack.c.l.b16 %v30
  %v109 = vunpack.c.l.b16 %v31
  %v110 = vunpack.c.l.b16 %v32
  %v111 = vunpack.c.l.b16 %v33
  %v112 = vunpack.c.l.b16 %v34
  %v113 = vunpack.c.l.b16 %v35
  %v114 = vunpack.c.l.b16 %v36
  %v115 = vunpack.c.l.b16 %v37
  %v116 = vunpack.c.l.b16 %v38
  %v117 = vunpack.c.l.b16 %v39
  %v118 = vunpack.c.l.b16 %v40
  %v119 = vunpack.c.l.b16 %v41
  %v120 = vunpack.c.l.b16 %v42
  %v121 = vunpack.c.l.b16 %v43
  %v122 = vunpack.c.l.b16 %v44
  %v123 = vunpack.c.l.b16 %v45
  %v124 = vunpack.c.l.b16 %v46
  %v125 = vunpack.c.l.b16 %v47
  %v126 = vpack.c.b16 %v95, %v94
  %v127 = vpack.c.b16 %v97, %v96
  %v128 = vpack.c.b16 %v99, %v98
  %v129 = vpack.c.b16 %v101, %v100
  %v130 = vpack.c.b16 %v103, %v102
  %v131 = vpack.c.b16 %v105, %v104
  %v132 = vpack.c.b16 %v107, %v106
  %v133 = vpack.c.b16 %v109, %v108
  %v134 = vpack.c.b16 %v111, %v110
  %v135 = vpack.c.b16 %v113, %v112
  %v136 = vpack.c.b16 %v115, %v114
  %v137 = vpack.c.b16 %v117, %v116
  %v138 = vpack.c.b16 %v119, %v118
  %v139 = vpack.c.b16 %v121, %v120
  %v140 = vpack.c.b16 %v123, %v122
  %v141 = vpack.c.b16 %v125, %v124
  %158 = vmatprep.subr.bf16.mxu0 0
  %159 = vmatpush1.bf16.msra.mxu0 %v126
  %160 = vmatprep.subr.bf16.mxu0 0
  %161 = vmatpush1.bf16.msra.mxu0 %v127
  %162 = vmatprep.subr.bf16.mxu0 0
  %163 = vmatpush1.bf16.msra.mxu0 %v128
  %164 = vmatprep.subr.bf16.mxu0 0
  %165 = vmatpush1.bf16.msra.mxu0 %v129
  %166 = vmatprep.subr.bf16.mxu0 0
  %167 = vmatpush1.bf16.msra.mxu0 %v130
  %168 = vmatprep.subr.bf16.mxu0 0
  %169 = vmatpush1.bf16.msra.mxu0 %v131
  %170 = vmatprep.subr.bf16.mxu0 0
  %171 = vmatpush1.bf16.msra.mxu0 %v132
  %172 = vmatprep.subr.bf16.mxu0 0
  %173 = vmatpush1.bf16.msra.mxu0 %v133
  %174 = vmatprep.subr.bf16.mxu0 0
  %175 = vmatpush1.bf16.msra.mxu0 %v134
  %176 = vmatprep.subr.bf16.mxu0 0
  %177 = vmatpush1.bf16.msra.mxu0 %v135
  %178 = vmatprep.subr.bf16.mxu0 0
  %179 = vmatpush1.bf16.msra.mxu0 %v136
  %180 = vmatprep.subr.bf16.mxu0 0
  %181 = vmatpush1.bf16.msra.mxu0 %v137
  %182 = vmatprep.subr.bf16.mxu0 0
  %183 = vmatpush1.bf16.msra.mxu0 %v138
  %184 = vmatprep.subr.bf16.mxu0 0
  %185 = vmatpush1.bf16.msra.mxu0 %v139
  %186 = vmatprep.subr.bf16.mxu0 0
  %187 = vmatpush1.bf16.msra.mxu0 %v140
  %188 = vmatprep.subr.bf16.mxu0 0
  %189 = vmatpush1.bf16.msra.mxu0 %v141
  %190 = vmatprep.mubr.bf16.mxu0 %v59
  %191 = vmatmul.mubr.bf16.gmra.mrb[0].mxu0 %v58
  %v192 = vpop.f32.mrb[0].mxu0
  %v193 = vadd.f32 %v53, %v192
  %v194 = vpop.f32.mrb[0].mxu0
  %v195 = vpop.f32.mrb[0].mxu0
  %v196 = vpop.f32.mrb[0].mxu0
  %197 = vdwg.mxu0
  %v198 = vlaneseq
  %v199 = vand.u32 %v198, 127
  %vm200 = vcmp.ge.s32.totalorder %v199, 8
  %v201 = vmax.f32 %v193, -10.0
  %v202 = vmin.f32 %v201, 10.0
  %v203 = vsel %vm200, %v202, %v193
  %204 = vst [vmem:[%s3] sm:$0xff] %v203
  // Predicated region
  $region14: #{ocean_vae_forward.23} parent=0 // pred_check
    _
  $region15: #{ocean_vae_forward.23} parent=0 // pred_check_branch
    %206 = sbr.rel (0) target = $region17
  $region16: #{ocean_vae_forward.23} parent=0 // pred_region
    _
  $region17: #{ocean_vae_forward.23} parent=0 // pred_fallthru
    _
  // Predicated region
  $region18: #{ocean_vae_forward.23} parent=0 // pred_check
    _
  $region19: #{ocean_vae_forward.23} parent=0 // pred_check_branch
    %208 = sbr.rel (0) target = $region21
  $region20: #{ocean_vae_forward.23} parent=0 // pred_region
    _
  $region21: #{ocean_vae_forward.23} parent=0 // pred_fallthru
    _

// kernel: ocean_vae_forward.24
$region0: #{ocean_vae_forward.24}
  #allocation0 [shape = 'u32[]', space=smem, size = 0x4, offset = 0x4, fixed_abs, tag = 'smem constant byte address 0x4 - core index']
  #allocation1 [shape = 'u32[144,128]{1,0:T(1,128)}', space=vmem, size = 0x12000, scoped, tag = 'internal scratch']
  %s0 = inlined_call_operand.vmem [shape: f32[8,8], index: 0, kind: input, shape index: {}]
  %s1 = inlined_call_operand.vmem [shape: f32[8,8], index: 1, kind: input, shape index: {}]
  %s2 = inlined_call_operand.vmem [shape: f32[8,8], index: 2, kind: input, shape index: {}]
  %s3 = inlined_call_operand.vmem [shape: f32[8,8], index: 3, kind: output, shape index: {}]
  %s4 = sld [smem:[#allocation0]]
  $region22: #{ocean_vae_forward.24} parent=0
    _
  %s6 = ssub.s32 1, %s4
  %s7 = scalar_select 0, %s6, %s4
  // Predicated region
  $region2: #{ocean_vae_forward.24} parent=0 // pred_check
    _
  $region3: #{ocean_vae_forward.24} parent=0 // pred_check_branch
    %9 = sbr.rel (0) target = $region5
  $region4: #{ocean_vae_forward.24} parent=0 // pred_region
    _
  $region5: #{ocean_vae_forward.24} parent=0 // pred_fallthru
    _
  // Predicated region
  $region6: #{ocean_vae_forward.24} parent=0 // pred_check
    _
  $region7: #{ocean_vae_forward.24} parent=0 // pred_check_branch
    %11 = sbr.rel (0) target = $region9
  $region8: #{ocean_vae_forward.24} parent=0 // pred_region
    _
  $region9: #{ocean_vae_forward.24} parent=0 // pred_fallthru
    _
  // Predicated region
  $region10: #{ocean_vae_forward.24} parent=0 // pred_check
    _
  $region11: #{ocean_vae_forward.24} parent=0 // pred_check_branch
    %13 = sbr.rel (0) target = $region13
  $region12: #{ocean_vae_forward.24} parent=0 // pred_region
    _
  $region13: #{ocean_vae_forward.24} parent=0 // pred_fallthru
    _
  %v14 = vld [vmem:[%s0] sm:$0xff]
  %v15 = vld [vmem:[%s2] sm:$0xff]
  %v16 = vld [vmem:[%s1] sm:$0xff]
  %v17 = vmul.f32 %v16, 0.5
  %v18 = vmul.f32 %v17, 1.442695
  %v19 = vpow.pop %v18
  %v20 = vmul.f32 %v15, %v19
  %v21 = vadd.f32 %v14, %v20
  %vm22 = vcmask 64512
  %23 = vst.msk [vmem:[%s3] sm:$0xff] %vm22, %v21
  // Predicated region
  $region14: #{ocean_vae_forward.24} parent=0 // pred_check
    _
  $region15: #{ocean_vae_forward.24} parent=0 // pred_check_branch
    %25 = sbr.rel (0) target = $region17
  $region16: #{ocean_vae_forward.24} parent=0 // pred_region
    _
  $region17: #{ocean_vae_forward.24} parent=0 // pred_fallthru
    _
  // Predicated region
  $region18: #{ocean_vae_forward.24} parent=0 // pred_check
    _
  $region19: #{ocean_vae_forward.24} parent=0 // pred_check_branch
    %27 = sbr.rel (0) target = $region21
  $region20: #{ocean_vae_forward.24} parent=0 // pred_region
    _
  $region21: #{ocean_vae_forward.24} parent=0 // pred_fallthru
    _

// kernel: ocean_vae_forward.25
$region0: #{ocean_vae_forward.25}
  #allocation0 [shape = 'u32[]', space=smem, size = 0x4, offset = 0x4, fixed_abs, tag = 'smem constant byte address 0x4 - core index']
  #allocation1 [shape = 'u32[144,128]{1,0:T(1,128)}', space=vmem, size = 0x12000, scoped, tag = 'internal scratch']
  %s0 = inlined_call_operand.vmem [shape: bf16[8,8], index: 0, kind: input, shape index: {}]
  %s1 = inlined_call_operand.vmem [shape: bf16[8,256], index: 1, kind: input, shape index: {}]
  %s2 = inlined_call_operand.vmem [shape: bf16[8,256], index: 2, kind: output, shape index: {0}]
  %s3 = inlined_call_operand.vmem [shape: f32[1,1,256], index: 3, kind: output, shape index: {1}]
  %s4 = inlined_call_operand.vmem [shape: f32[1,1,256], index: 4, kind: output, shape index: {2}]
  %5 = xla_tuple %s2, %s3, %s4
  %s6 = sld [smem:[#allocation0]]
  $region34: #{ocean_vae_forward.25} parent=0
    _
  %s8 = ssub.s32 1, %s6
  %s9 = scalar_select 0, %s8, %s6
  // Predicated region
  $region2: #{ocean_vae_forward.25} parent=0 // pred_check
    _
  $region3: #{ocean_vae_forward.25} parent=0 // pred_check_branch
    %11 = sbr.rel (0) target = $region5
  $region4: #{ocean_vae_forward.25} parent=0 // pred_region
    _
  $region5: #{ocean_vae_forward.25} parent=0 // pred_fallthru
    _
  // Predicated region
  $region6: #{ocean_vae_forward.25} parent=0 // pred_check
    _
  $region7: #{ocean_vae_forward.25} parent=0 // pred_check_branch
    %13 = sbr.rel (0) target = $region9
  $region8: #{ocean_vae_forward.25} parent=0 // pred_region
    _
  $region9: #{ocean_vae_forward.25} parent=0 // pred_fallthru
    _
  %v15 = vld [vmem:[%s0] sm:$0xf]
  %v16 = vld [vmem:[%s1] sm:$0xff]
  %v18 = vunpack.c.l.b16 %v16
  %v19 = vunpack.c.h.b16 %v16
  %v20 = vpack.c.b16 %v18, %v18
  %v21 = vpack.c.b16 %v19, %v19
  %vm22 = vcmask 64512
  %v24 = vsel %vm22, %v15, 0
  %vm26 = vcmask 1043456
  %v28 = vsel %vm26, %v20, 0
  %v31 = vsel %vm26, %v21, 0
  %33 = vmatprep.subr.bf16.mxu0 %v31
  %34 = vmatpush1.bf16.msra.mxu0 %v28
  %35 = vmatprep.subr.bf16.mxu0 0
  %36 = vmatpush1.bf16.msra.mxu0 0
  %37 = vmatprep.subr.bf16.mxu0 0
  %38 = vmatpush1.bf16.msra.mxu0 0
  %39 = vmatprep.subr.bf16.mxu0 0
  %40 = vmatpush1.bf16.msra.mxu0 0
  %41 = vmatprep.subr.bf16.mxu0 0
  %42 = vmatpush1.bf16.msra.mxu0 0
  %43 = vmatprep.subr.bf16.mxu0 0
  %44 = vmatpush1.bf16.msra.mxu0 0
  %45 = vmatprep.subr.bf16.mxu0 0
  %46 = vmatpush1.bf16.msra.mxu0 0
  %47 = vmatprep.subr.bf16.mxu0 0
  %48 = vmatpush1.bf16.msra.mxu0 0
  %49 = vmatprep.subr.bf16.mxu0 0
  %50 = vmatpush1.bf16.msra.mxu0 0
  %51 = vmatprep.subr.bf16.mxu0 0
  %52 = vmatpush1.bf16.msra.mxu0 0
  %53 = vmatprep.subr.bf16.mxu0 0
  %54 = vmatpush1.bf16.msra.mxu0 0
  %55 = vmatprep.subr.bf16.mxu0 0
  %56 = vmatpush1.bf16.msra.mxu0 0
  %57 = vmatprep.subr.bf16.mxu0 0
  %58 = vmatpush1.bf16.msra.mxu0 0
  %59 = vmatprep.subr.bf16.mxu0 0
  %60 = vmatpush1.bf16.msra.mxu0 0
  %61 = vmatprep.subr.bf16.mxu0 0
  %62 = vmatpush1.bf16.msra.mxu0 0
  %63 = vmatprep.subr.bf16.mxu0 0
  %64 = vmatpush1.bf16.msra.mxu0 0
  %65 = vmatprep.mubr.bf16.mxu0 0
  %66 = vmatmul.mubr.bf16.gmra.mrb[0].mxu0 %v24
  %v67 = vpop.f32.mrb[0].mxu0
  %v68 = vadd.f32 0.0, %v67
  %v69 = vpop.f32.mrb[0].mxu0
  %v70 = vadd.f32 0.0, %v69
  %v71 = vpop.f32.mrb[0].mxu0
  %v72 = vpop.f32.mrb[0].mxu0
  %73 = vdwg.mxu0
  %v74 = vpack.c.bf16 %v68, %v68
  %v75 = vpack.c.bf16 %v70, %v70
  %v78 = vunpack.c.l.b16 %v74
  %v79 = vunpack.c.l.b16 %v75
  %v80 = vpack.c.b16 %v79, %v78
  %82 = vst [vmem:[%s2] sm:$0xff] %v80
  %v83 = vrot.slane %v68, 4
  %v84 = vadd.f32 %v68, %v83
  %v85 = vrot.slane %v84, 2
  %v86 = vadd.f32 %v84, %v85
  %v87 = vrot.slane %v86, 1
  %v88 = vadd.f32 %v86, %v87
  %v89 = vrot.slane %v70, 4
  %v90 = vadd.f32 %v70, %v89
  %v91 = vrot.slane %v90, 2
  %v92 = vadd.f32 %v90, %v91
  %v93 = vrot.slane %v92, 1
  %v94 = vadd.f32 %v92, %v93
  %v95 = vmul.f32 %v68, %v68
  %v96 = vmul.f32 %v70, %v70
  %v97 = vrot.slane %v95, 4
  %v98 = vadd.f32 %v95, %v97
  %v99 = vrot.slane %v98, 2
  %v100 = vadd.f32 %v98, %v99
  %v101 = vrot.slane %v100, 1
  %v102 = vadd.f32 %v100, %v101
  %v103 = vrot.slane %v96, 4
  %v104 = vadd.f32 %v96, %v103
  %v105 = vrot.slane %v104, 2
  %v106 = vadd.f32 %v104, %v105
  %v107 = vrot.slane %v106, 1
  %v108 = vadd.f32 %v106, %v107
  %v111 = vcombine.low %v88, %v94
  %v113 = vunpack.c.l.s4 1966171168
  %v114 = vunpack.c.0.s8 %v113
  %v115 = vlaneseq
  %v116 = vshrl.u32 %v115, 7
  %v117 = vsub.s32 %v114, %v116
  %v118 = vrot.slane %v111, %v117
  %v120 = vunpack.c.l.s4 1966171168
  %v121 = vunpack.c.0.s8 %v120
  %v122 = vlaneseq
  %v123 = vshrl.u32 %v122, 7
  %v124 = vsub.s32 %v121, %v123
  %v125 = vrot.slane %v118, %v124
  %v127 = vlaneseq
  %vm128 = vcmp.ge.s32.totalorder %v127, 0
  %vm129 = vcmp.lt.s32.totalorder %v127, 256
  %vm130 = vmand %vm128, %vm129
  %131 = vst.msk [vmem:[%s3] sm:$0x3] %vm130, %v125
  %v134 = vcombine.low %v102, %v108
  %v136 = vunpack.c.l.s4 1966171168
  %v137 = vunpack.c.0.s8 %v136
  %v138 = vlaneseq
  %v139 = vshrl.u32 %v138, 7
  %v140 = vsub.s32 %v137, %v139
  %v141 = vrot.slane %v134, %v140
  %v143 = vunpack.c.l.s4 1966171168
  %v144 = vunpack.c.0.s8 %v143
  %v145 = vlaneseq
  %v146 = vshrl.u32 %v145, 7
  %v147 = vsub.s32 %v144, %v146
  %v148 = vrot.slane %v141, %v147
  %150 = vst.msk [vmem:[%s4] sm:$0x3] %vm130, %v148
  // Predicated region
  $region10: #{ocean_vae_forward.25} parent=0 // pred_check
    _
  $region11: #{ocean_vae_forward.25} parent=0 // pred_check_branch
    %152 = sbr.rel (0) target = $region13
  $region12: #{ocean_vae_forward.25} parent=0 // pred_region
    _
  $region13: #{ocean_vae_forward.25} parent=0 // pred_fallthru
    _
  // Predicated region
  $region14: #{ocean_vae_forward.25} parent=0 // pred_check
    _
  $region15: #{ocean_vae_forward.25} parent=0 // pred_check_branch
    %154 = sbr.rel (0) target = $region17
  $region16: #{ocean_vae_forward.25} parent=0 // pred_region
    _
  $region17: #{ocean_vae_forward.25} parent=0 // pred_fallthru
    _
  // Predicated region
  $region18: #{ocean_vae_forward.25} parent=0 // pred_check
    _
  $region19: #{ocean_vae_forward.25} parent=0 // pred_check_branch
    %156 = sbr.rel (0) target = $region21
  $region20: #{ocean_vae_forward.25} parent=0 // pred_region
    _
  $region21: #{ocean_vae_forward.25} parent=0 // pred_fallthru
    _
  // Predicated region
  $region22: #{ocean_vae_forward.25} parent=0 // pred_check
    _
  $region23: #{ocean_vae_forward.25} parent=0 // pred_check_branch
    %158 = sbr.rel (0) target = $region25
  $region24: #{ocean_vae_forward.25} parent=0 // pred_region
    _
  $region25: #{ocean_vae_forward.25} parent=0 // pred_fallthru
    _
  // Predicated region
  $region26: #{ocean_vae_forward.25} parent=0 // pred_check
    _
  $region27: #{ocean_vae_forward.25} parent=0 // pred_check_branch
    %160 = sbr.rel (0) target = $region29
  $region28: #{ocean_vae_forward.25} parent=0 // pred_region
    _
  $region29: #{ocean_vae_forward.25} parent=0 // pred_fallthru
    _
  // Predicated region
  $region30: #{ocean_vae_forward.25} parent=0 // pred_check
    _
  $region31: #{ocean_vae_forward.25} parent=0 // pred_check_branch
    %162 = sbr.rel (0) target = $region33
  $region32: #{ocean_vae_forward.25} parent=0 // pred_region
    _
  $region33: #{ocean_vae_forward.25} parent=0 // pred_fallthru
    _

// kernel: tile.28
$region0: #{tile.28}
  #allocation0 [shape = 's32[1]{0}', space=sflag, size = 0x4, scoped, tag = 'scoped memory for tile.28']
  %s0 = inlined_call_operand.vmem [shape: f32[128], index: 0, kind: input, shape index: {}]
  %s1 = inlined_call_operand.vmem [shape: f32[4,128], index: 1, kind: output, shape index: {}]
  // Predicated region
  $region2: #{tile.28} parent=0 // pred_check
    _
  $region3: #{tile.28} parent=0 // pred_check_branch
    %3 = sbr.rel (0) target = $region5
  $region4: #{tile.28} parent=0 // pred_region
    _
  $region5: #{tile.28} parent=0 // pred_fallthru
    _
  %v4 = vld [vmem:[%s0] ss:$0 sm:$0xff]
  %5 = vst [vmem:[%s1] sm:$0xf] %v4

// kernel: ocean_vae_forward.28
$region0: #{ocean_vae_forward.28}
  #allocation0 [shape = 'u32[]', space=smem, size = 0x4, offset = 0x4, fixed_abs, tag = 'smem constant byte address 0x4 - core index']
  #allocation1 [shape = 'u32[144,128]{1,0:T(1,128)}', space=vmem, size = 0x12000, scoped, tag = 'internal scratch']
  %s0 = inlined_call_operand.vmem [shape: bf16[8,512], index: 0, kind: input, shape index: {}]
  %s1 = inlined_call_operand.vmem [shape: f32[1,512], index: 1, kind: input, shape index: {}]
  %s2 = inlined_call_operand.vmem [shape: f32[1,512], index: 2, kind: input, shape index: {}]
  %s3 = inlined_call_operand.vmem [shape: bf16[8,512], index: 3, kind: output, shape index: {}]
  %s4 = sld [smem:[#allocation0]]
  $region22: #{ocean_vae_forward.28} parent=0
    _
  %s6 = ssub.s32 1, %s4
  %s7 = scalar_select 0, %s6, %s4
  // Predicated region
  $region2: #{ocean_vae_forward.28} parent=0 // pred_check
    _
  $region3: #{ocean_vae_forward.28} parent=0 // pred_check_branch
    %9 = sbr.rel (0) target = $region5
  $region4: #{ocean_vae_forward.28} parent=0 // pred_region
    _
  $region5: #{ocean_vae_forward.28} parent=0 // pred_fallthru
    _
  // Predicated region
  $region6: #{ocean_vae_forward.28} parent=0 // pred_check
    _
  $region7: #{ocean_vae_forward.28} parent=0 // pred_check_branch
    %11 = sbr.rel (0) target = $region9
  $region8: #{ocean_vae_forward.28} parent=0 // pred_region
    _
  $region9: #{ocean_vae_forward.28} parent=0 // pred_fallthru
    _
  // Predicated region
  $region10: #{ocean_vae_forward.28} parent=0 // pred_check
    _
  $region11: #{ocean_vae_forward.28} parent=0 // pred_check_branch
    %13 = sbr.rel (0) target = $region13
  $region12: #{ocean_vae_forward.28} parent=0 // pred_region
    _
  $region13: #{ocean_vae_forward.28} parent=0 // pred_fallthru
    _
  %v14 = vld [vmem:[%s0] sm:$0xff]
  %v15 = vld [vmem:[%s0 + $0x8] sm:$0xff]
  %v16 = vunpack.c.l.bf16 %v14
  %v17 = vunpack.c.h.bf16 %v14
  %v18 = vunpack.c.l.bf16 %v15
  %v19 = vunpack.c.h.bf16 %v15
  %v20 = vld [vmem:[%s1] sm:$0xf]
  %v22 = vlaneseq
  %v23 = vshrl.u32 %v22, 7
  %v24 = vsub.s32 0, %v23
  %v25 = vrot.slane %v20, %v24
  %v26 = vlaneseq
  %v27 = vshrl.u32 %v26, 7
  %v28 = vsub.s32 1, %v27
  %v29 = vrot.slane %v20, %v28
  %v30 = vlaneseq
  %v31 = vshrl.u32 %v30, 7
  %v32 = vsub.s32 2, %v31
  %v33 = vrot.slane %v20, %v32
  %v34 = vlaneseq
  %v35 = vshrl.u32 %v34, 7
  %v36 = vsub.s32 3, %v35
  %v37 = vrot.slane %v20, %v36
  %v42 = vmul.f32 %v16, %v25
  %v43 = vmul.f32 %v17, %v29
  %v44 = vmul.f32 %v18, %v33
  %v45 = vmul.f32 %v19, %v37
  %v46 = vld [vmem:[%s2] sm:$0xf]
  %v48 = vlaneseq
  %v49 = vshrl.u32 %v48, 7
  %v50 = vsub.s32 0, %v49
  %v51 = vrot.slane %v46, %v50
  %v52 = vlaneseq
  %v53 = vshrl.u32 %v52, 7
  %v54 = vsub.s32 1, %v53
  %v55 = vrot.slane %v46, %v54
  %v56 = vlaneseq
  %v57 = vshrl.u32 %v56, 7
  %v58 = vsub.s32 2, %v57
  %v59 = vrot.slane %v46, %v58
  %v60 = vlaneseq
  %v61 = vshrl.u32 %v60, 7
  %v62 = vsub.s32 3, %v61
  %v63 = vrot.slane %v46, %v62
  %v68 = vadd.f32 %v42, %v51
  %v69 = vadd.f32 %v43, %v55
  %v70 = vadd.f32 %v44, %v59
  %v71 = vadd.f32 %v45, %v63
  %v72 = vmul.f32 %v68, 0.2
  %v73 = vmul.f32 %v69, 0.2
  %v74 = vmul.f32 %v70, 0.2
  %v75 = vmul.f32 %v71, 0.2
  %v76 = vmax.f32 %v68, %v72
  %v77 = vmax.f32 %v69, %v73
  %v78 = vmax.f32 %v70, %v74
  %v79 = vmax.f32 %v71, %v75
  %v80 = vpack.c.bf16 %v76, %v76
  %v81 = vpack.c.bf16 %v77, %v77
  %v82 = vpack.c.bf16 %v78, %v78
  %v83 = vpack.c.bf16 %v79, %v79
  %v88 = vunpack.c.l.b16 %v80
  %v89 = vunpack.c.l.b16 %v81
  %v90 = vunpack.c.l.b16 %v82
  %v91 = vunpack.c.l.b16 %v83
  %v92 = vpack.c.b16 %v89, %v88
  %v93 = vpack.c.b16 %v91, %v90
  %96 = vst [vmem:[%s3] sm:$0xff] %v92
  %97 = vst [vmem:[%s3 + $0x8] sm:$0xff] %v93
  // Predicated region
  $region14: #{ocean_vae_forward.28} parent=0 // pred_check
    _
  $region15: #{ocean_vae_forward.28} parent=0 // pred_check_branch
    %99 = sbr.rel (0) target = $region17
  $region16: #{ocean_vae_forward.28} parent=0 // pred_region
    _
  $region17: #{ocean_vae_forward.28} parent=0 // pred_fallthru
    _
  // Predicated region
  $region18: #{ocean_vae_forward.28} parent=0 // pred_check
    _
  $region19: #{ocean_vae_forward.28} parent=0 // pred_check_branch
    %101 = sbr.rel (0) target = $region21
  $region20: #{ocean_vae_forward.28} parent=0 // pred_region
    _
  $region21: #{ocean_vae_forward.28} parent=0 // pred_fallthru
    _

// kernel: tile.38
$region0: #{tile.38}
  #allocation0 [shape = 's32[1]{0}', space=sflag, size = 0x4, scoped, tag = 'scoped memory for tile.38']
  %s0 = inlined_call_operand.vmem [shape: f32[64], index: 0, kind: input, shape index: {}]
  %s1 = inlined_call_operand.vmem [shape: f32[4,64], index: 1, kind: output, shape index: {}]
  // Predicated region
  $region2: #{tile.38} parent=0 // pred_check
    _
  $region3: #{tile.38} parent=0 // pred_check_branch
    %3 = sbr.rel (0) target = $region5
  $region4: #{tile.38} parent=0 // pred_region
    _
  $region5: #{tile.38} parent=0 // pred_fallthru
    _
  %v4 = vld [vmem:[%s0] ss:$0 sm:$0xff]
  %5 = vst [vmem:[%s1] sm:$0xf] %v4

// kernel: tile.43
$region0: #{tile.43}
  %s0 = inlined_call_operand.vmem [shape: f32[4,64], index: 0, kind: input, shape index: {}]
  %s1 = inlined_call_operand.vmem [shape: f32[1,256], index: 1, kind: output, shape index: {}]
  $region1: #{tile.43} parent=0
    #allocation0 [shape = 'u8[8192]{0}', space=vmem, size = 0x2000, scoped, tag = 'scoped mem for output reshape']
    #allocation1 [shape = 'u8[4096]{0}', space=vmem, size = 0x1000, scoped, tag = 'scoped mem for input reshape']
    %s3 = sshllo.u32 0, 4
    %v4 = vld [vmem:[%s0] sm:%s3]
    %5 = vst [vmem:[#allocation1] sm:%s3] %v4
    %s6 = smov 3
    %v7 = vld [vmem:[#allocation1] ss:$2 sm:%s6]
    %vm8 = vcmask 523264
    %9 = vst.msk [vmem:[#allocation0] ss:$8 sm:$0x3] %vm8, %v7
    %s10 = scalar_lea.vmem [#allocation1], 1
    %s11 = smov 3
    %v12 = vld [vmem:[%s10] ss:$2 sm:%s11]
    %13 = vrot.lane.b32.xlu0 %v12, 64
    %v14 = vpop.permute.xlu0 %13
    %vm15 = vcmask 1048064
    %16 = vst.msk [vmem:[#allocation0] ss:$8 sm:$0x3] %vm15, %v14
    %s18 = sshllo.u32 0, 1
    %v20 = vld [vmem:[#allocation0] sm:%s18]
    %s21 = sshllo.u32 0, 1
    %22 = vst [vmem:[%s1] sm:%s21] %v20
    %s23 = scalar_lea.vmem [#allocation0], 8
    %v24 = vld [vmem:[%s23] sm:%s18]
    %s25 = sshllo.u32 0, 1
    %s26 = scalar_lea.vmem %s1, 1
    %27 = vst [vmem:[%s26] sm:%s25] %v24

// kernel: ocean_vae_forward.30
$region0: #{ocean_vae_forward.30}
  #allocation0 [shape = 'u32[]', space=smem, size = 0x4, offset = 0x4, fixed_abs, tag = 'smem constant byte address 0x4 - core index']
  #allocation1 [shape = 'u32[144,128]{1,0:T(1,128)}', space=vmem, size = 0x12000, scoped, tag = 'internal scratch']
  %s0 = inlined_call_operand.vmem [shape: bf16[32,256], index: 0, kind: input, shape index: {}]
  %s1 = inlined_call_operand.vmem [shape: f32[1,256], index: 1, kind: input, shape index: {}]
  %s2 = inlined_call_operand.vmem [shape: f32[1,256], index: 2, kind: input, shape index: {}]
  %s3 = inlined_call_operand.vmem [shape: bf16[32,256], index: 3, kind: output, shape index: {}]
  %s4 = sld [smem:[#allocation0]]
  $region22: #{ocean_vae_forward.30} parent=0
    _
  %s6 = ssub.s32 1, %s4
  %s7 = scalar_select 0, %s6, %s4
  // Predicated region
  $region2: #{ocean_vae_forward.30} parent=0 // pred_check
    _
  $region3: #{ocean_vae_forward.30} parent=0 // pred_check_branch
    %9 = sbr.rel (0) target = $region5
  $region4: #{ocean_vae_forward.30} parent=0 // pred_region
    _
  $region5: #{ocean_vae_forward.30} parent=0 // pred_fallthru
    _
  // Predicated region
  $region6: #{ocean_vae_forward.30} parent=0 // pred_check
    _
  $region7: #{ocean_vae_forward.30} parent=0 // pred_check_branch
    %11 = sbr.rel (0) target = $region9
  $region8: #{ocean_vae_forward.30} parent=0 // pred_region
    _
  $region9: #{ocean_vae_forward.30} parent=0 // pred_fallthru
    _
  // Predicated region
  $region10: #{ocean_vae_forward.30} parent=0 // pred_check
    _
  $region11: #{ocean_vae_forward.30} parent=0 // pred_check_branch
    %13 = sbr.rel (0) target = $region13
  $region12: #{ocean_vae_forward.30} parent=0 // pred_region
    _
  $region13: #{ocean_vae_forward.30} parent=0 // pred_fallthru
    _
  %v14 = vld [vmem:[%s0] sm:$0xff]
  %v15 = vld [vmem:[%s0 + $0x8] sm:$0xff]
  %v16 = vld [vmem:[%s0 + $0x10] sm:$0xff]
  %v17 = vld [vmem:[%s0 + $0x18] sm:$0xff]
  %v18 = vunpack.c.l.bf16 %v14
  %v19 = vunpack.c.h.bf16 %v14
  %v20 = vunpack.c.l.bf16 %v15
  %v21 = vunpack.c.h.bf16 %v15
  %v22 = vunpack.c.l.bf16 %v16
  %v23 = vunpack.c.h.bf16 %v16
  %v24 = vunpack.c.l.bf16 %v17
  %v25 = vunpack.c.h.bf16 %v17
  %v26 = vld [vmem:[%s1] sm:$0x3]
  %v28 = vlaneseq
  %v29 = vshrl.u32 %v28, 7
  %v30 = vsub.s32 0, %v29
  %v31 = vrot.slane %v26, %v30
  %v32 = vlaneseq
  %v33 = vshrl.u32 %v32, 7
  %v34 = vsub.s32 1, %v33
  %v35 = vrot.slane %v26, %v34
  %v38 = vmul.f32 %v18, %v31
  %v39 = vmul.f32 %v19, %v35
  %v40 = vmul.f32 %v20, %v31
  %v41 = vmul.f32 %v21, %v35
  %v42 = vmul.f32 %v22, %v31
  %v43 = vmul.f32 %v23, %v35
  %v44 = vmul.f32 %v24, %v31
  %v45 = vmul.f32 %v25, %v35
  %v46 = vld [vmem:[%s2] sm:$0x3]
  %v48 = vlaneseq
  %v49 = vshrl.u32 %v48, 7
  %v50 = vsub.s32 0, %v49
  %v51 = vrot.slane %v46, %v50
  %v52 = vlaneseq
  %v53 = vshrl.u32 %v52, 7
  %v54 = vsub.s32 1, %v53
  %v55 = vrot.slane %v46, %v54
  %v58 = vadd.f32 %v38, %v51
  %v59 = vadd.f32 %v39, %v55
  %v60 = vadd.f32 %v40, %v51
  %v61 = vadd.f32 %v41, %v55
  %v62 = vadd.f32 %v42, %v51
  %v63 = vadd.f32 %v43, %v55
  %v64 = vadd.f32 %v44, %v51
  %v65 = vadd.f32 %v45, %v55
  %v66 = vmul.f32 %v58, 0.2
  %v67 = vmul.f32 %v59, 0.2
  %v68 = vmul.f32 %v60, 0.2
  %v69 = vmul.f32 %v61, 0.2
  %v70 = vmul.f32 %v62, 0.2
  %v71 = vmul.f32 %v63, 0.2
  %v72 = vmul.f32 %v64, 0.2
  %v73 = vmul.f32 %v65, 0.2
  %v74 = vmax.f32 %v58, %v66
  %v75 = vmax.f32 %v59, %v67
  %v76 = vmax.f32 %v60, %v68
  %v77 = vmax.f32 %v61, %v69
  %v78 = vmax.f32 %v62, %v70
  %v79 = vmax.f32 %v63, %v71
  %v80 = vmax.f32 %v64, %v72
  %v81 = vmax.f32 %v65, %v73
  %v82 = vpack.c.bf16 %v76, %v74
  %v83 = vpack.c.bf16 %v77, %v75
  %v84 = vpack.c.bf16 %v80, %v78
  %v85 = vpack.c.bf16 %v81, %v79
  %v90 = vunpack.c.l.b16 %v82
  %v91 = vunpack.c.l.b16 %v83
  %v92 = vunpack.c.h.b16 %v82
  %v93 = vunpack.c.h.b16 %v83
  %v94 = vunpack.c.l.b16 %v84
  %v95 = vunpack.c.l.b16 %v85
  %v96 = vunpack.c.h.b16 %v84
  %v97 = vunpack.c.h.b16 %v85
  %v98 = vpack.c.b16 %v91, %v90
  %v99 = vpack.c.b16 %v93, %v92
  %v100 = vpack.c.b16 %v95, %v94
  %v101 = vpack.c.b16 %v97, %v96
  %106 = vst [vmem:[%s3] sm:$0xff] %v98
  %107 = vst [vmem:[%s3 + $0x8] sm:$0xff] %v99
  %108 = vst [vmem:[%s3 + $0x10] sm:$0xff] %v100
  %109 = vst [vmem:[%s3 + $0x18] sm:$0xff] %v101
  // Predicated region
  $region14: #{ocean_vae_forward.30} parent=0 // pred_check
    _
  $region15: #{ocean_vae_forward.30} parent=0 // pred_check_branch
    %111 = sbr.rel (0) target = $region17
  $region16: #{ocean_vae_forward.30} parent=0 // pred_region
    _
  $region17: #{ocean_vae_forward.30} parent=0 // pred_fallthru
    _
  // Predicated region
  $region18: #{ocean_vae_forward.30} parent=0 // pred_check
    _
  $region19: #{ocean_vae_forward.30} parent=0 // pred_check_branch
    %113 = sbr.rel (0) target = $region21
  $region20: #{ocean_vae_forward.30} parent=0 // pred_region
    _
  $region21: #{ocean_vae_forward.30} parent=0 // pred_fallthru
    _

// kernel: ocean_vae_forward.27
$region0: #{ocean_vae_forward.27}
  #allocation0 [shape = 'u32[]', space=smem, size = 0x4, offset = 0x4, fixed_abs, tag = 'smem constant byte address 0x4 - core index']
  #allocation1 [shape = 'u32[144,128]{1,0:T(1,128)}', space=vmem, size = 0x12000, scoped, tag = 'internal scratch']
  %s0 = inlined_call_operand.vmem [shape: bf16[8,2304], index: 0, kind: input, shape index: {}]
  %s1 = inlined_call_operand.vmem [shape: bf16[2304,512], index: 1, kind: input, shape index: {}]
  %s2 = inlined_call_operand.vmem [shape: bf16[8,512], index: 2, kind: output, shape index: {0}]
  %s3 = inlined_call_operand.vmem [shape: f32[1,1,512], index: 3, kind: output, shape index: {1}]
  %s4 = inlined_call_operand.vmem [shape: f32[1,1,512], index: 4, kind: output, shape index: {2}]
  %5 = xla_tuple %s2, %s3, %s4
  %s6 = sld [smem:[#allocation0]]
  $region34: #{ocean_vae_forward.27} parent=0
    _
  %s8 = ssub.s32 1, %s6
  %s9 = scalar_select 0, %s8, %s6
  // Predicated region
  $region2: #{ocean_vae_forward.27} parent=0 // pred_check
    _
  $region3: #{ocean_vae_forward.27} parent=0 // pred_check_branch
    %11 = sbr.rel (0) target = $region5
  $region4: #{ocean_vae_forward.27} parent=0 // pred_region
    _
  $region5: #{ocean_vae_forward.27} parent=0 // pred_fallthru
    _
  // Predicated region
  $region6: #{ocean_vae_forward.27} parent=0 // pred_check
    _
  $region7: #{ocean_vae_forward.27} parent=0 // pred_check_branch
    %13 = sbr.rel (0) target = $region9
  $region8: #{ocean_vae_forward.27} parent=0 // pred_region
    _
  $region9: #{ocean_vae_forward.27} parent=0 // pred_fallthru
    _
  %v14 = vld [vmem:[%s0] sm:$0xff]
  %v15 = vld [vmem:[%s0 + $0x8] sm:$0xff]
  %v16 = vld [vmem:[%s0 + $0x10] sm:$0xff]
  %v17 = vld [vmem:[%s0 + $0x18] sm:$0xff]
  %v18 = vld [vmem:[%s0 + $0x20] sm:$0xff]
  %v19 = vld [vmem:[%s0 + $0x28] sm:$0xff]
  %v20 = vld [vmem:[%s0 + $0x30] sm:$0xff]
  %v21 = vld [vmem:[%s0 + $0x38] sm:$0xff]
  %v22 = vld [vmem:[%s0 + $0x40] sm:$0xff]
  %v23 = vld [vmem:[%s1] sm:$0xff]
  %v24 = vld [vmem:[%s1 + $0x8] sm:$0xff]
  %v25 = vld [vmem:[%s1 + $0x10] sm:$0xff]
  %v26 = vld [vmem:[%s1 + $0x18] sm:$0xff]
  %v27 = vld [vmem:[%s1 + $0x20] sm:$0xff]
  %v28 = vld [vmem:[%s1 + $0x28] sm:$0xff]
  %v29 = vld [vmem:[%s1 + $0x30] sm:$0xff]
  %v30 = vld [vmem:[%s1 + $0x38] sm:$0xff]
  %v31 = vld [vmem:[%s1 + $0x40] sm:$0xff]
  %v32 = vld [vmem:[%s1 + $0x48] sm:$0xff]
  %v33 = vld [vmem:[%s1 + $0x50] sm:$0xff]
  %v34 = vld [vmem:[%s1 + $0x58] sm:$0xff]
  %v35 = vld [vmem:[%s1 + $0x60] sm:$0xff]
  %v36 = vld [vmem:[%s1 + $0x68] sm:$0xff]
  %v37 = vld [vmem:[%s1 + $0x70] sm:$0xff]
  %v38 = vld [vmem:[%s1 + $0x78] sm:$0xff]
  %v39 = vld [vmem:[%s1 + $0x80] sm:$0xff]
  %v40 = vld [vmem:[%s1 + $0x88] sm:$0xff]
  %v41 = vld [vmem:[%s1 + $0x90] sm:$0xff]
  %v42 = vld [vmem:[%s1 + $0x98] sm:$0xff]
  %v43 = vld [vmem:[%s1 + $0xa0] sm:$0xff]
  %v44 = vld [vmem:[%s1 + $0xa8] sm:$0xff]
  %v45 = vld [vmem:[%s1 + $0xb0] sm:$0xff]
  %v46 = vld [vmem:[%s1 + $0xb8] sm:$0xff]
  %v47 = vld [vmem:[%s1 + $0xc0] sm:$0xff]
  %v48 = vld [vmem:[%s1 + $0xc8] sm:$0xff]
  %v49 = vld [vmem:[%s1 + $0xd0] sm:$0xff]
  %v50 = vld [vmem:[%s1 + $0xd8] sm:$0xff]
  %v51 = vld [vmem:[%s1 + $0xe0] sm:$0xff]
  %v52 = vld [vmem:[%s1 + $0xe8] sm:$0xff]
  %v53 = vld [vmem:[%s1 + $0xf0] sm:$0xff]
  %v54 = vld [vmem:[%s1 + $0xf8] sm:$0xff]
  %v55 = vld [vmem:[%s1 + $0x100] sm:$0xff]
  %v56 = vld [vmem:[%s1 + $0x108] sm:$0xff]
  %v57 = vld [vmem:[%s1 + $0x110] sm:$0xff]
  %v58 = vld [vmem:[%s1 + $0x118] sm:$0xff]
  %v59 = vld [vmem:[%s1 + $0x120] sm:$0xff]
  %v60 = vld [vmem:[%s1 + $0x128] sm:$0xff]
  %v61 = vld [vmem:[%s1 + $0x130] sm:$0xff]
  %v62 = vld [vmem:[%s1 + $0x138] sm:$0xff]
  %v63 = vld [vmem:[%s1 + $0x140] sm:$0xff]
  %v64 = vld [vmem:[%s1 + $0x148] sm:$0xff]
  %v65 = vld [vmem:[%s1 + $0x150] sm:$0xff]
  %v66 = vld [vmem:[%s1 + $0x158] sm:$0xff]
  %v67 = vld [vmem:[%s1 + $0x160] sm:$0xff]
  %v68 = vld [vmem:[%s1 + $0x168] sm:$0xff]
  %v69 = vld [vmem:[%s1 + $0x170] sm:$0xff]
  %v70 = vld [vmem:[%s1 + $0x178] sm:$0xff]
  %v71 = vld [vmem:[%s1 + $0x180] sm:$0xff]
  %v72 = vld [vmem:[%s1 + $0x188] sm:$0xff]
  %v73 = vld [vmem:[%s1 + $0x190] sm:$0xff]
  %v74 = vld [vmem:[%s1 + $0x198] sm:$0xff]
  %v75 = vld [vmem:[%s1 + $0x1a0] sm:$0xff]
  %v76 = vld [vmem:[%s1 + $0x1a8] sm:$0xff]
  %v77 = vld [vmem:[%s1 + $0x1b0] sm:$0xff]
  %v78 = vld [vmem:[%s1 + $0x1b8] sm:$0xff]
  %v79 = vld [vmem:[%s1 + $0x1c0] sm:$0xff]
  %v80 = vld [vmem:[%s1 + $0x1c8] sm:$0xff]
  %v81 = vld [vmem:[%s1 + $0x1d0] sm:$0xff]
  %v82 = vld [vmem:[%s1 + $0x1d8] sm:$0xff]
  %v83 = vld [vmem:[%s1 + $0x1e0] sm:$0xff]
  %v84 = vld [vmem:[%s1 + $0x1e8] sm:$0xff]
  %v85 = vld [vmem:[%s1 + $0x1f0] sm:$0xff]
  %v86 = vld [vmem:[%s1 + $0x1f8] sm:$0xff]
  %v87 = vld [vmem:[%s1 + $0x200] sm:$0xff]
  %v88 = vld [vmem:[%s1 + $0x208] sm:$0xff]
  %v89 = vld [vmem:[%s1 + $0x210] sm:$0xff]
  %v90 = vld [vmem:[%s1 + $0x218] sm:$0xff]
  %v91 = vld [vmem:[%s1 + $0x220] sm:$0xff]
  %v92 = vld [vmem:[%s1 + $0x228] sm:$0xff]
  %v93 = vld [vmem:[%s1 + $0x230] sm:$0xff]
  %v94 = vld [vmem:[%s1 + $0x238] sm:$0xff]
  %v95 = vld [vmem:[%s1 + $0x240] sm:$0xff]
  %v96 = vld [vmem:[%s1 + $0x248] sm:$0xff]
  %v97 = vld [vmem:[%s1 + $0x250] sm:$0xff]
  %v98 = vld [vmem:[%s1 + $0x258] sm:$0xff]
  %v99 = vld [vmem:[%s1 + $0x260] sm:$0xff]
  %v100 = vld [vmem:[%s1 + $0x268] sm:$0xff]
  %v101 = vld [vmem:[%s1 + $0x270] sm:$0xff]
  %v102 = vld [vmem:[%s1 + $0x278] sm:$0xff]
  %v103 = vld [vmem:[%s1 + $0x280] sm:$0xff]
  %v104 = vld [vmem:[%s1 + $0x288] sm:$0xff]
  %v105 = vld [vmem:[%s1 + $0x290] sm:$0xff]
  %v106 = vld [vmem:[%s1 + $0x298] sm:$0xff]
  %v107 = vld [vmem:[%s1 + $0x2a0] sm:$0xff]
  %v108 = vld [vmem:[%s1 + $0x2a8] sm:$0xff]
  %v109 = vld [vmem:[%s1 + $0x2b0] sm:$0xff]
  %v110 = vld [vmem:[%s1 + $0x2b8] sm:$0xff]
  %v111 = vld [vmem:[%s1 + $0x2c0] sm:$0xff]
  %v112 = vld [vmem:[%s1 + $0x2c8] sm:$0xff]
  %v113 = vld [vmem:[%s1 + $0x2d0] sm:$0xff]
  %v114 = vld [vmem:[%s1 + $0x2d8] sm:$0xff]
  %v115 = vld [vmem:[%s1 + $0x2e0] sm:$0xff]
  %v116 = vld [vmem:[%s1 + $0x2e8] sm:$0xff]
  %v117 = vld [vmem:[%s1 + $0x2f0] sm:$0xff]
  %v118 = vld [vmem:[%s1 + $0x2f8] sm:$0xff]
  %v119 = vld [vmem:[%s1 + $0x300] sm:$0xff]
  %v120 = vld [vmem:[%s1 + $0x308] sm:$0xff]
  %v121 = vld [vmem:[%s1 + $0x310] sm:$0xff]
  %v122 = vld [vmem:[%s1 + $0x318] sm:$0xff]
  %v123 = vld [vmem:[%s1 + $0x320] sm:$0xff]
  %v124 = vld [vmem:[%s1 + $0x328] sm:$0xff]
  %v125 = vld [vmem:[%s1 + $0x330] sm:$0xff]
  %v126 = vld [vmem:[%s1 + $0x338] sm:$0xff]
  %v127 = vld [vmem:[%s1 + $0x340] sm:$0xff]
  %v128 = vld [vmem:[%s1 + $0x348] sm:$0xff]
  %v129 = vld [vmem:[%s1 + $0x350] sm:$0xff]
  %v130 = vld [vmem:[%s1 + $0x358] sm:$0xff]
  %v131 = vld [vmem:[%s1 + $0x360] sm:$0xff]
  %v132 = vld [vmem:[%s1 + $0x368] sm:$0xff]
  %v133 = vld [vmem:[%s1 + $0x370] sm:$0xff]
  %v134 = vld [vmem:[%s1 + $0x378] sm:$0xff]
  %v135 = vld [vmem:[%s1 + $0x380] sm:$0xff]
  %v136 = vld [vmem:[%s1 + $0x388] sm:$0xff]
  %v137 = vld [vmem:[%s1 + $0x390] sm:$0xff]
  %v138 = vld [vmem:[%s1 + $0x398] sm:$0xff]
  %v139 = vld [vmem:[%s1 + $0x3a0] sm:$0xff]
  %v140 = vld [vmem:[%s1 + $0x3a8] sm:$0xff]
  %v141 = vld [vmem:[%s1 + $0x3b0] sm:$0xff]
  %v142 = vld [vmem:[%s1 + $0x3b8] sm:$0xff]
  %v143 = vld [vmem:[%s1 + $0x3c0] sm:$0xff]
  %v144 = vld [vmem:[%s1 + $0x3c8] sm:$0xff]
  %v145 = vld [vmem:[%s1 + $0x3d0] sm:$0xff]
  %v146 = vld [vmem:[%s1 + $0x3d8] sm:$0xff]
  %v147 = vld [vmem:[%s1 + $0x3e0] sm:$0xff]
  %v148 = vld [vmem:[%s1 + $0x3e8] sm:$0xff]
  %v149 = vld [vmem:[%s1 + $0x3f0] sm:$0xff]
  %v150 = vld [vmem:[%s1 + $0x3f8] sm:$0xff]
  %v151 = vld [vmem:[%s1 + $0x400] sm:$0xff]
  %v152 = vld [vmem:[%s1 + $0x408] sm:$0xff]
  %v153 = vld [vmem:[%s1 + $0x410] sm:$0xff]
  %v154 = vld [vmem:[%s1 + $0x418] sm:$0xff]
  %v155 = vld [vmem:[%s1 + $0x420] sm:$0xff]
  %v156 = vld [vmem:[%s1 + $0x428] sm:$0xff]
  %v157 = vld [vmem:[%s1 + $0x430] sm:$0xff]
  %v158 = vld [vmem:[%s1 + $0x438] sm:$0xff]
  %v159 = vld [vmem:[%s1 + $0x440] sm:$0xff]
  %v160 = vld [vmem:[%s1 + $0x448] sm:$0xff]
  %v161 = vld [vmem:[%s1 + $0x450] sm:$0xff]
  %v162 = vld [vmem:[%s1 + $0x458] sm:$0xff]
  %v163 = vld [vmem:[%s1 + $0x460] sm:$0xff]
  %v164 = vld [vmem:[%s1 + $0x468] sm:$0xff]
  %v165 = vld [vmem:[%s1 + $0x470] sm:$0xff]
  %v166 = vld [vmem:[%s1 + $0x478] sm:$0xff]
  %v167 = vld [vmem:[%s1 + $0x480] sm:$0xff]
  %v168 = vld [vmem:[%s1 + $0x488] sm:$0xff]
  %v169 = vld [vmem:[%s1 + $0x490] sm:$0xff]
  %v170 = vld [vmem:[%s1 + $0x498] sm:$0xff]
  %v171 = vld [vmem:[%s1 + $0x4a0] sm:$0xff]
  %v172 = vld [vmem:[%s1 + $0x4a8] sm:$0xff]
  %v173 = vld [vmem:[%s1 + $0x4b0] sm:$0xff]
  %v174 = vld [vmem:[%s1 + $0x4b8] sm:$0xff]
  %v175 = vld [vmem:[%s1 + $0x4c0] sm:$0xff]
  %v176 = vld [vmem:[%s1 + $0x4c8] sm:$0xff]
  %v177 = vld [vmem:[%s1 + $0x4d0] sm:$0xff]
  %v178 = vld [vmem:[%s1 + $0x4d8] sm:$0xff]
  %v179 = vld [vmem:[%s1 + $0x4e0] sm:$0xff]
  %v180 = vld [vmem:[%s1 + $0x4e8] sm:$0xff]
  %v181 = vld [vmem:[%s1 + $0x4f0] sm:$0xff]
  %v182 = vld [vmem:[%s1 + $0x4f8] sm:$0xff]
  %v183 = vld [vmem:[%s1 + $0x500] sm:$0xff]
  %v184 = vld [vmem:[%s1 + $0x508] sm:$0xff]
  %v185 = vld [vmem:[%s1 + $0x510] sm:$0xff]
  %v186 = vld [vmem:[%s1 + $0x518] sm:$0xff]
  %v187 = vld [vmem:[%s1 + $0x520] sm:$0xff]
  %v188 = vld [vmem:[%s1 + $0x528] sm:$0xff]
  %v189 = vld [vmem:[%s1 + $0x530] sm:$0xff]
  %v190 = vld [vmem:[%s1 + $0x538] sm:$0xff]
  %v191 = vld [vmem:[%s1 + $0x540] sm:$0xff]
  %v192 = vld [vmem:[%s1 + $0x548] sm:$0xff]
  %v193 = vld [vmem:[%s1 + $0x550] sm:$0xff]
  %v194 = vld [vmem:[%s1 + $0x558] sm:$0xff]
  %v195 = vld [vmem:[%s1 + $0x560] sm:$0xff]
  %v196 = vld [vmem:[%s1 + $0x568] sm:$0xff]
  %v197 = vld [vmem:[%s1 + $0x570] sm:$0xff]
  %v198 = vld [vmem:[%s1 + $0x578] sm:$0xff]
  %v199 = vld [vmem:[%s1 + $0x580] sm:$0xff]
  %v200 = vld [vmem:[%s1 + $0x588] sm:$0xff]
  %v201 = vld [vmem:[%s1 + $0x590] sm:$0xff]
  %v202 = vld [vmem:[%s1 + $0x598] sm:$0xff]
  %v203 = vld [vmem:[%s1 + $0x5a0] sm:$0xff]
  %v204 = vld [vmem:[%s1 + $0x5a8] sm:$0xff]
  %v205 = vld [vmem:[%s1 + $0x5b0] sm:$0xff]
  %v206 = vld [vmem:[%s1 + $0x5b8] sm:$0xff]
  %v207 = vld [vmem:[%s1 + $0x5c0] sm:$0xff]
  %v208 = vld [vmem:[%s1 + $0x5c8] sm:$0xff]
  %v209 = vld [vmem:[%s1 + $0x5d0] sm:$0xff]
  %v210 = vld [vmem:[%s1 + $0x5d8] sm:$0xff]
  %v211 = vld [vmem:[%s1 + $0x5e0] sm:$0xff]
  %v212 = vld [vmem:[%s1 + $0x5e8] sm:$0xff]
  %v213 = vld [vmem:[%s1 + $0x5f0] sm:$0xff]
  %v214 = vld [vmem:[%s1 + $0x5f8] sm:$0xff]
  %v215 = vld [vmem:[%s1 + $0x600] sm:$0xff]
  %v216 = vld [vmem:[%s1 + $0x608] sm:$0xff]
  %v217 = vld [vmem:[%s1 + $0x610] sm:$0xff]
  %v218 = vld [vmem:[%s1 + $0x618] sm:$0xff]
  %v219 = vld [vmem:[%s1 + $0x620] sm:$0xff]
  %v220 = vld [vmem:[%s1 + $0x628] sm:$0xff]
  %v221 = vld [vmem:[%s1 + $0x630] sm:$0xff]
  %v222 = vld [vmem:[%s1 + $0x638] sm:$0xff]
  %v223 = vld [vmem:[%s1 + $0x640] sm:$0xff]
  %v224 = vld [vmem:[%s1 + $0x648] sm:$0xff]
  %v225 = vld [vmem:[%s1 + $0x650] sm:$0xff]
  %v226 = vld [vmem:[%s1 + $0x658] sm:$0xff]
  %v227 = vld [vmem:[%s1 + $0x660] sm:$0xff]
  %v228 = vld [vmem:[%s1 + $0x668] sm:$0xff]
  %v229 = vld [vmem:[%s1 + $0x670] sm:$0xff]
  %v230 = vld [vmem:[%s1 + $0x678] sm:$0xff]
  %v231 = vld [vmem:[%s1 + $0x680] sm:$0xff]
  %v232 = vld [vmem:[%s1 + $0x688] sm:$0xff]
  %v233 = vld [vmem:[%s1 + $0x690] sm:$0xff]
  %v234 = vld [vmem:[%s1 + $0x698] sm:$0xff]
  %v235 = vld [vmem:[%s1 + $0x6a0] sm:$0xff]
  %v236 = vld [vmem:[%s1 + $0x6a8] sm:$0xff]
  %v237 = vld [vmem:[%s1 + $0x6b0] sm:$0xff]
  %v238 = vld [vmem:[%s1 + $0x6b8] sm:$0xff]
  %v239 = vld [vmem:[%s1 + $0x6c0] sm:$0xff]
  %v240 = vld [vmem:[%s1 + $0x6c8] sm:$0xff]
  %v241 = vld [vmem:[%s1 + $0x6d0] sm:$0xff]
  %v242 = vld [vmem:[%s1 + $0x6d8] sm:$0xff]
  %v243 = vld [vmem:[%s1 + $0x6e0] sm:$0xff]
  %v244 = vld [vmem:[%s1 + $0x6e8] sm:$0xff]
  %v245 = vld [vmem:[%s1 + $0x6f0] sm:$0xff]
  %v246 = vld [vmem:[%s1 + $0x6f8] sm:$0xff]
  %v247 = vld [vmem:[%s1 + $0x700] sm:$0xff]
  %v248 = vld [vmem:[%s1 + $0x708] sm:$0xff]
  %v249 = vld [vmem:[%s1 + $0x710] sm:$0xff]
  %v250 = vld [vmem:[%s1 + $0x718] sm:$0xff]
  %v251 = vld [vmem:[%s1 + $0x720] sm:$0xff]
  %v252 = vld [vmem:[%s1 + $0x728] sm:$0xff]
  %v253 = vld [vmem:[%s1 + $0x730] sm:$0xff]
  %v254 = vld [vmem:[%s1 + $0x738] sm:$0xff]
  %v255 = vld [vmem:[%s1 + $0x740] sm:$0xff]
  %v256 = vld [vmem:[%s1 + $0x748] sm:$0xff]
  %v257 = vld [vmem:[%s1 + $0x750] sm:$0xff]
  %v258 = vld [vmem:[%s1 + $0x758] sm:$0xff]
  %v259 = vld [vmem:[%s1 + $0x760] sm:$0xff]
  %v260 = vld [vmem:[%s1 + $0x768] sm:$0xff]
  %v261 = vld [vmem:[%s1 + $0x770] sm:$0xff]
  %v262 = vld [vmem:[%s1 + $0x778] sm:$0xff]
  %v263 = vld [vmem:[%s1 + $0x780] sm:$0xff]
  %v264 = vld [vmem:[%s1 + $0x788] sm:$0xff]
  %v265 = vld [vmem:[%s1 + $0x790] sm:$0xff]
  %v266 = vld [vmem:[%s1 + $0x798] sm:$0xff]
  %v267 = vld [vmem:[%s1 + $0x7a0] sm:$0xff]
  %v268 = vld [vmem:[%s1 + $0x7a8] sm:$0xff]
  %v269 = vld [vmem:[%s1 + $0x7b0] sm:$0xff]
  %v270 = vld [vmem:[%s1 + $0x7b8] sm:$0xff]
  %v271 = vld [vmem:[%s1 + $0x7c0] sm:$0xff]
  %v272 = vld [vmem:[%s1 + $0x7c8] sm:$0xff]
  %v273 = vld [vmem:[%s1 + $0x7d0] sm:$0xff]
  %v274 = vld [vmem:[%s1 + $0x7d8] sm:$0xff]
  %v275 = vld [vmem:[%s1 + $0x7e0] sm:$0xff]
  %v276 = vld [vmem:[%s1 + $0x7e8] sm:$0xff]
  %v277 = vld [vmem:[%s1 + $0x7f0] sm:$0xff]
  %v278 = vld [vmem:[%s1 + $0x7f8] sm:$0xff]
  %v279 = vld [vmem:[%s1 + $0x800] sm:$0xff]
  %v280 = vld [vmem:[%s1 + $0x808] sm:$0xff]
  %v281 = vld [vmem:[%s1 + $0x810] sm:$0xff]
  %v282 = vld [vmem:[%s1 + $0x818] sm:$0xff]
  %v283 = vld [vmem:[%s1 + $0x820] sm:$0xff]
  %v284 = vld [vmem:[%s1 + $0x828] sm:$0xff]
  %v285 = vld [vmem:[%s1 + $0x830] sm:$0xff]
  %v286 = vld [vmem:[%s1 + $0x838] sm:$0xff]
  %v287 = vld [vmem:[%s1 + $0x840] sm:$0xff]
  %v288 = vld [vmem:[%s1 + $0x848] sm:$0xff]
  %v289 = vld [vmem:[%s1 + $0x850] sm:$0xff]
  %v290 = vld [vmem:[%s1 + $0x858] sm:$0xff]
  %v291 = vld [vmem:[%s1 + $0x860] sm:$0xff]
  %v292 = vld [vmem:[%s1 + $0x868] sm:$0xff]
  %v293 = vld [vmem:[%s1 + $0x870] sm:$0xff]
  %v294 = vld [vmem:[%s1 + $0x878] sm:$0xff]
  %v295 = vld [vmem:[%s1 + $0x880] sm:$0xff]
  %v296 = vld [vmem:[%s1 + $0x888] sm:$0xff]
  %v297 = vld [vmem:[%s1 + $0x890] sm:$0xff]
  %v298 = vld [vmem:[%s1 + $0x898] sm:$0xff]
  %v299 = vld [vmem:[%s1 + $0x8a0] sm:$0xff]
  %v300 = vld [vmem:[%s1 + $0x8a8] sm:$0xff]
  %v301 = vld [vmem:[%s1 + $0x8b0] sm:$0xff]
  %v302 = vld [vmem:[%s1 + $0x8b8] sm:$0xff]
  %v303 = vld [vmem:[%s1 + $0x8c0] sm:$0xff]
  %v304 = vld [vmem:[%s1 + $0x8c8] sm:$0xff]
  %v305 = vld [vmem:[%s1 + $0x8d0] sm:$0xff]
  %v306 = vld [vmem:[%s1 + $0x8d8] sm:$0xff]
  %v307 = vld [vmem:[%s1 + $0x8e0] sm:$0xff]
  %v308 = vld [vmem:[%s1 + $0x8e8] sm:$0xff]
  %v309 = vld [vmem:[%s1 + $0x8f0] sm:$0xff]
  %v310 = vld [vmem:[%s1 + $0x8f8] sm:$0xff]
  %v311 = vld [vmem:[%s1 + $0x900] sm:$0xff]
  %v312 = vld [vmem:[%s1 + $0x908] sm:$0xff]
  %v313 = vld [vmem:[%s1 + $0x910] sm:$0xff]
  %v314 = vld [vmem:[%s1 + $0x918] sm:$0xff]
  %v315 = vld [vmem:[%s1 + $0x920] sm:$0xff]
  %v316 = vld [vmem:[%s1 + $0x928] sm:$0xff]
  %v317 = vld [vmem:[%s1 + $0x930] sm:$0xff]
  %v318 = vld [vmem:[%s1 + $0x938] sm:$0xff]
  %v319 = vld [vmem:[%s1 + $0x940] sm:$0xff]
  %v320 = vld [vmem:[%s1 + $0x948] sm:$0xff]
  %v321 = vld [vmem:[%s1 + $0x950] sm:$0xff]
  %v322 = vld [vmem:[%s1 + $0x958] sm:$0xff]
  %v323 = vld [vmem:[%s1 + $0x960] sm:$0xff]
  %v324 = vld [vmem:[%s1 + $0x968] sm:$0xff]
  %v325 = vld [vmem:[%s1 + $0x970] sm:$0xff]
  %v326 = vld [vmem:[%s1 + $0x978] sm:$0xff]
  %v327 = vld [vmem:[%s1 + $0x980] sm:$0xff]
  %v328 = vld [vmem:[%s1 + $0x988] sm:$0xff]
  %v329 = vld [vmem:[%s1 + $0x990] sm:$0xff]
  %v330 = vld [vmem:[%s1 + $0x998] sm:$0xff]
  %v331 = vld [vmem:[%s1 + $0x9a0] sm:$0xff]
  %v332 = vld [vmem:[%s1 + $0x9a8] sm:$0xff]
  %v333 = vld [vmem:[%s1 + $0x9b0] sm:$0xff]
  %v334 = vld [vmem:[%s1 + $0x9b8] sm:$0xff]
  %v335 = vld [vmem:[%s1 + $0x9c0] sm:$0xff]
  %v336 = vld [vmem:[%s1 + $0x9c8] sm:$0xff]
  %v337 = vld [vmem:[%s1 + $0x9d0] sm:$0xff]
  %v338 = vld [vmem:[%s1 + $0x9d8] sm:$0xff]
  %v339 = vld [vmem:[%s1 + $0x9e0] sm:$0xff]
  %v340 = vld [vmem:[%s1 + $0x9e8] sm:$0xff]
  %v341 = vld [vmem:[%s1 + $0x9f0] sm:$0xff]
  %v342 = vld [vmem:[%s1 + $0x9f8] sm:$0xff]
  %v343 = vld [vmem:[%s1 + $0xa00] sm:$0xff]
  %v344 = vld [vmem:[%s1 + $0xa08] sm:$0xff]
  %v345 = vld [vmem:[%s1 + $0xa10] sm:$0xff]
  %v346 = vld [vmem:[%s1 + $0xa18] sm:$0xff]
  %v347 = vld [vmem:[%s1 + $0xa20] sm:$0xff]
  %v348 = vld [vmem:[%s1 + $0xa28] sm:$0xff]
  %v349 = vld [vmem:[%s1 + $0xa30] sm:$0xff]
  %v350 = vld [vmem:[%s1 + $0xa38] sm:$0xff]
  %v351 = vld [vmem:[%s1 + $0xa40] sm:$0xff]
  %v352 = vld [vmem:[%s1 + $0xa48] sm:$0xff]
  %v353 = vld [vmem:[%s1 + $0xa50] sm:$0xff]
  %v354 = vld [vmem:[%s1 + $0xa58] sm:$0xff]
  %v355 = vld [vmem:[%s1 + $0xa60] sm:$0xff]
  %v356 = vld [vmem:[%s1 + $0xa68] sm:$0xff]
  %v357 = vld [vmem:[%s1 + $0xa70] sm:$0xff]
  %v358 = vld [vmem:[%s1 + $0xa78] sm:$0xff]
  %v359 = vld [vmem:[%s1 + $0xa80] sm:$0xff]
  %v360 = vld [vmem:[%s1 + $0xa88] sm:$0xff]
  %v361 = vld [vmem:[%s1 + $0xa90] sm:$0xff]
  %v362 = vld [vmem:[%s1 + $0xa98] sm:$0xff]
  %v363 = vld [vmem:[%s1 + $0xaa0] sm:$0xff]
  %v364 = vld [vmem:[%s1 + $0xaa8] sm:$0xff]
  %v365 = vld [vmem:[%s1 + $0xab0] sm:$0xff]
  %v366 = vld [vmem:[%s1 + $0xab8] sm:$0xff]
  %v367 = vld [vmem:[%s1 + $0xac0] sm:$0xff]
  %v368 = vld [vmem:[%s1 + $0xac8] sm:$0xff]
  %v369 = vld [vmem:[%s1 + $0xad0] sm:$0xff]
  %v370 = vld [vmem:[%s1 + $0xad8] sm:$0xff]
  %v371 = vld [vmem:[%s1 + $0xae0] sm:$0xff]
  %v372 = vld [vmem:[%s1 + $0xae8] sm:$0xff]
  %v373 = vld [vmem:[%s1 + $0xaf0] sm:$0xff]
  %v374 = vld [vmem:[%s1 + $0xaf8] sm:$0xff]
  %v375 = vld [vmem:[%s1 + $0xb00] sm:$0xff]
  %v376 = vld [vmem:[%s1 + $0xb08] sm:$0xff]
  %v377 = vld [vmem:[%s1 + $0xb10] sm:$0xff]
  %v378 = vld [vmem:[%s1 + $0xb18] sm:$0xff]
  %v379 = vld [vmem:[%s1 + $0xb20] sm:$0xff]
  %v380 = vld [vmem:[%s1 + $0xb28] sm:$0xff]
  %v381 = vld [vmem:[%s1 + $0xb30] sm:$0xff]
  %v382 = vld [vmem:[%s1 + $0xb38] sm:$0xff]
  %v383 = vld [vmem:[%s1 + $0xb40] sm:$0xff]
  %v384 = vld [vmem:[%s1 + $0xb48] sm:$0xff]
  %v385 = vld [vmem:[%s1 + $0xb50] sm:$0xff]
  %v386 = vld [vmem:[%s1 + $0xb58] sm:$0xff]
  %v387 = vld [vmem:[%s1 + $0xb60] sm:$0xff]
  %v388 = vld [vmem:[%s1 + $0xb68] sm:$0xff]
  %v389 = vld [vmem:[%s1 + $0xb70] sm:$0xff]
  %v390 = vld [vmem:[%s1 + $0xb78] sm:$0xff]
  %v391 = vld [vmem:[%s1 + $0xb80] sm:$0xff]
  %v392 = vld [vmem:[%s1 + $0xb88] sm:$0xff]
  %v393 = vld [vmem:[%s1 + $0xb90] sm:$0xff]
  %v394 = vld [vmem:[%s1 + $0xb98] sm:$0xff]
  %v395 = vld [vmem:[%s1 + $0xba0] sm:$0xff]
  %v396 = vld [vmem:[%s1 + $0xba8] sm:$0xff]
  %v397 = vld [vmem:[%s1 + $0xbb0] sm:$0xff]
  %v398 = vld [vmem:[%s1 + $0xbb8] sm:$0xff]
  %v399 = vld [vmem:[%s1 + $0xbc0] sm:$0xff]
  %v400 = vld [vmem:[%s1 + $0xbc8] sm:$0xff]
  %v401 = vld [vmem:[%s1 + $0xbd0] sm:$0xff]
  %v402 = vld [vmem:[%s1 + $0xbd8] sm:$0xff]
  %v403 = vld [vmem:[%s1 + $0xbe0] sm:$0xff]
  %v404 = vld [vmem:[%s1 + $0xbe8] sm:$0xff]
  %v405 = vld [vmem:[%s1 + $0xbf0] sm:$0xff]
  %v406 = vld [vmem:[%s1 + $0xbf8] sm:$0xff]
  %v407 = vld [vmem:[%s1 + $0xc00] sm:$0xff]
  %v408 = vld [vmem:[%s1 + $0xc08] sm:$0xff]
  %v409 = vld [vmem:[%s1 + $0xc10] sm:$0xff]
  %v410 = vld [vmem:[%s1 + $0xc18] sm:$0xff]
  %v411 = vld [vmem:[%s1 + $0xc20] sm:$0xff]
  %v412 = vld [vmem:[%s1 + $0xc28] sm:$0xff]
  %v413 = vld [vmem:[%s1 + $0xc30] sm:$0xff]
  %v414 = vld [vmem:[%s1 + $0xc38] sm:$0xff]
  %v415 = vld [vmem:[%s1 + $0xc40] sm:$0xff]
  %v416 = vld [vmem:[%s1 + $0xc48] sm:$0xff]
  %v417 = vld [vmem:[%s1 + $0xc50] sm:$0xff]
  %v418 = vld [vmem:[%s1 + $0xc58] sm:$0xff]
  %v419 = vld [vmem:[%s1 + $0xc60] sm:$0xff]
  %v420 = vld [vmem:[%s1 + $0xc68] sm:$0xff]
  %v421 = vld [vmem:[%s1 + $0xc70] sm:$0xff]
  %v422 = vld [vmem:[%s1 + $0xc78] sm:$0xff]
  %v423 = vld [vmem:[%s1 + $0xc80] sm:$0xff]
  %v424 = vld [vmem:[%s1 + $0xc88] sm:$0xff]
  %v425 = vld [vmem:[%s1 + $0xc90] sm:$0xff]
  %v426 = vld [vmem:[%s1 + $0xc98] sm:$0xff]
  %v427 = vld [vmem:[%s1 + $0xca0] sm:$0xff]
  %v428 = vld [vmem:[%s1 + $0xca8] sm:$0xff]
  %v429 = vld [vmem:[%s1 + $0xcb0] sm:$0xff]
  %v430 = vld [vmem:[%s1 + $0xcb8] sm:$0xff]
  %v431 = vld [vmem:[%s1 + $0xcc0] sm:$0xff]
  %v432 = vld [vmem:[%s1 + $0xcc8] sm:$0xff]
  %v433 = vld [vmem:[%s1 + $0xcd0] sm:$0xff]
  %v434 = vld [vmem:[%s1 + $0xcd8] sm:$0xff]
  %v435 = vld [vmem:[%s1 + $0xce0] sm:$0xff]
  %v436 = vld [vmem:[%s1 + $0xce8] sm:$0xff]
  %v437 = vld [vmem:[%s1 + $0xcf0] sm:$0xff]
  %v438 = vld [vmem:[%s1 + $0xcf8] sm:$0xff]
  %v439 = vld [vmem:[%s1 + $0xd00] sm:$0xff]
  %v440 = vld [vmem:[%s1 + $0xd08] sm:$0xff]
  %v441 = vld [vmem:[%s1 + $0xd10] sm:$0xff]
  %v442 = vld [vmem:[%s1 + $0xd18] sm:$0xff]
  %v443 = vld [vmem:[%s1 + $0xd20] sm:$0xff]
  %v444 = vld [vmem:[%s1 + $0xd28] sm:$0xff]
  %v445 = vld [vmem:[%s1 + $0xd30] sm:$0xff]
  %v446 = vld [vmem:[%s1 + $0xd38] sm:$0xff]
  %v447 = vld [vmem:[%s1 + $0xd40] sm:$0xff]
  %v448 = vld [vmem:[%s1 + $0xd48] sm:$0xff]
  %v449 = vld [vmem:[%s1 + $0xd50] sm:$0xff]
  %v450 = vld [vmem:[%s1 + $0xd58] sm:$0xff]
  %v451 = vld [vmem:[%s1 + $0xd60] sm:$0xff]
  %v452 = vld [vmem:[%s1 + $0xd68] sm:$0xff]
  %v453 = vld [vmem:[%s1 + $0xd70] sm:$0xff]
  %v454 = vld [vmem:[%s1 + $0xd78] sm:$0xff]
  %v455 = vld [vmem:[%s1 + $0xd80] sm:$0xff]
  %v456 = vld [vmem:[%s1 + $0xd88] sm:$0xff]
  %v457 = vld [vmem:[%s1 + $0xd90] sm:$0xff]
  %v458 = vld [vmem:[%s1 + $0xd98] sm:$0xff]
  %v459 = vld [vmem:[%s1 + $0xda0] sm:$0xff]
  %v460 = vld [vmem:[%s1 + $0xda8] sm:$0xff]
  %v461 = vld [vmem:[%s1 + $0xdb0] sm:$0xff]
  %v462 = vld [vmem:[%s1 + $0xdb8] sm:$0xff]
  %v463 = vld [vmem:[%s1 + $0xdc0] sm:$0xff]
  %v464 = vld [vmem:[%s1 + $0xdc8] sm:$0xff]
  %v465 = vld [vmem:[%s1 + $0xdd0] sm:$0xff]
  %v466 = vld [vmem:[%s1 + $0xdd8] sm:$0xff]
  %v467 = vld [vmem:[%s1 + $0xde0] sm:$0xff]
  %v468 = vld [vmem:[%s1 + $0xde8] sm:$0xff]
  %v469 = vld [vmem:[%s1 + $0xdf0] sm:$0xff]
  %v470 = vld [vmem:[%s1 + $0xdf8] sm:$0xff]
  %v471 = vld [vmem:[%s1 + $0xe00] sm:$0xff]
  %v472 = vld [vmem:[%s1 + $0xe08] sm:$0xff]
  %v473 = vld [vmem:[%s1 + $0xe10] sm:$0xff]
  %v474 = vld [vmem:[%s1 + $0xe18] sm:$0xff]
  %v475 = vld [vmem:[%s1 + $0xe20] sm:$0xff]
  %v476 = vld [vmem:[%s1 + $0xe28] sm:$0xff]
  %v477 = vld [vmem:[%s1 + $0xe30] sm:$0xff]
  %v478 = vld [vmem:[%s1 + $0xe38] sm:$0xff]
  %v479 = vld [vmem:[%s1 + $0xe40] sm:$0xff]
  %v480 = vld [vmem:[%s1 + $0xe48] sm:$0xff]
  %v481 = vld [vmem:[%s1 + $0xe50] sm:$0xff]
  %v482 = vld [vmem:[%s1 + $0xe58] sm:$0xff]
  %v483 = vld [vmem:[%s1 + $0xe60] sm:$0xff]
  %v484 = vld [vmem:[%s1 + $0xe68] sm:$0xff]
  %v485 = vld [vmem:[%s1 + $0xe70] sm:$0xff]
  %v486 = vld [vmem:[%s1 + $0xe78] sm:$0xff]
  %v487 = vld [vmem:[%s1 + $0xe80] sm:$0xff]
  %v488 = vld [vmem:[%s1 + $0xe88] sm:$0xff]
  %v489 = vld [vmem:[%s1 + $0xe90] sm:$0xff]
  %v490 = vld [vmem:[%s1 + $0xe98] sm:$0xff]
  %v491 = vld [vmem:[%s1 + $0xea0] sm:$0xff]
  %v492 = vld [vmem:[%s1 + $0xea8] sm:$0xff]
  %v493 = vld [vmem:[%s1 + $0xeb0] sm:$0xff]
  %v494 = vld [vmem:[%s1 + $0xeb8] sm:$0xff]
  %v495 = vld [vmem:[%s1 + $0xec0] sm:$0xff]
  %v496 = vld [vmem:[%s1 + $0xec8] sm:$0xff]
  %v497 = vld [vmem:[%s1 + $0xed0] sm:$0xff]
  %v498 = vld [vmem:[%s1 + $0xed8] sm:$0xff]
  %v499 = vld [vmem:[%s1 + $0xee0] sm:$0xff]
  %v500 = vld [vmem:[%s1 + $0xee8] sm:$0xff]
  %v501 = vld [vmem:[%s1 + $0xef0] sm:$0xff]
  %v502 = vld [vmem:[%s1 + $0xef8] sm:$0xff]
  %v503 = vld [vmem:[%s1 + $0xf00] sm:$0xff]
  %v504 = vld [vmem:[%s1 + $0xf08] sm:$0xff]
  %v505 = vld [vmem:[%s1 + $0xf10] sm:$0xff]
  %v506 = vld [vmem:[%s1 + $0xf18] sm:$0xff]
  %v507 = vld [vmem:[%s1 + $0xf20] sm:$0xff]
  %v508 = vld [vmem:[%s1 + $0xf28] sm:$0xff]
  %v509 = vld [vmem:[%s1 + $0xf30] sm:$0xff]
  %v510 = vld [vmem:[%s1 + $0xf38] sm:$0xff]
  %v511 = vld [vmem:[%s1 + $0xf40] sm:$0xff]
  %v512 = vld [vmem:[%s1 + $0xf48] sm:$0xff]
  %v513 = vld [vmem:[%s1 + $0xf50] sm:$0xff]
  %v514 = vld [vmem:[%s1 + $0xf58] sm:$0xff]
  %v515 = vld [vmem:[%s1 + $0xf60] sm:$0xff]
  %v516 = vld [vmem:[%s1 + $0xf68] sm:$0xff]
  %v517 = vld [vmem:[%s1 + $0xf70] sm:$0xff]
  %v518 = vld [vmem:[%s1 + $0xf78] sm:$0xff]
  %v519 = vld [vmem:[%s1 + $0xf80] sm:$0xff]
  %v520 = vld [vmem:[%s1 + $0xf88] sm:$0xff]
  %v521 = vld [vmem:[%s1 + $0xf90] sm:$0xff]
  %v522 = vld [vmem:[%s1 + $0xf98] sm:$0xff]
  %v523 = vld [vmem:[%s1 + $0xfa0] sm:$0xff]
  %v524 = vld [vmem:[%s1 + $0xfa8] sm:$0xff]
  %v525 = vld [vmem:[%s1 + $0xfb0] sm:$0xff]
  %v526 = vld [vmem:[%s1 + $0xfb8] sm:$0xff]
  %v527 = vld [vmem:[%s1 + $0xfc0] sm:$0xff]
  %v528 = vld [vmem:[%s1 + $0xfc8] sm:$0xff]
  %v529 = vld [vmem:[%s1 + $0xfd0] sm:$0xff]
  %v530 = vld [vmem:[%s1 + $0xfd8] sm:$0xff]
  %v531 = vld [vmem:[%s1 + $0xfe0] sm:$0xff]
  %v532 = vld [vmem:[%s1 + $0xfe8] sm:$0xff]
  %v533 = vld [vmem:[%s1 + $0xff0] sm:$0xff]
  %v534 = vld [vmem:[%s1 + $0xff8] sm:$0xff]
  %v535 = vld [vmem:[%s1 + $0x1000] sm:$0xff]
  %v536 = vld [vmem:[%s1 + $0x1008] sm:$0xff]
  %v537 = vld [vmem:[%s1 + $0x1010] sm:$0xff]
  %v538 = vld [vmem:[%s1 + $0x1018] sm:$0xff]
  %v539 = vld [vmem:[%s1 + $0x1020] sm:$0xff]
  %v540 = vld [vmem:[%s1 + $0x1028] sm:$0xff]
  %v541 = vld [vmem:[%s1 + $0x1030] sm:$0xff]
  %v542 = vld [vmem:[%s1 + $0x1038] sm:$0xff]
  %v543 = vld [vmem:[%s1 + $0x1040] sm:$0xff]
  %v544 = vld [vmem:[%s1 + $0x1048] sm:$0xff]
  %v545 = vld [vmem:[%s1 + $0x1050] sm:$0xff]
  %v546 = vld [vmem:[%s1 + $0x1058] sm:$0xff]
  %v547 = vld [vmem:[%s1 + $0x1060] sm:$0xff]
  %v548 = vld [vmem:[%s1 + $0x1068] sm:$0xff]
  %v549 = vld [vmem:[%s1 + $0x1070] sm:$0xff]
  %v550 = vld [vmem:[%s1 + $0x1078] sm:$0xff]
  %v551 = vld [vmem:[%s1 + $0x1080] sm:$0xff]
  %v552 = vld [vmem:[%s1 + $0x1088] sm:$0xff]
  %v553 = vld [vmem:[%s1 + $0x1090] sm:$0xff]
  %v554 = vld [vmem:[%s1 + $0x1098] sm:$0xff]
  %v555 = vld [vmem:[%s1 + $0x10a0] sm:$0xff]
  %v556 = vld [vmem:[%s1 + $0x10a8] sm:$0xff]
  %v557 = vld [vmem:[%s1 + $0x10b0] sm:$0xff]
  %v558 = vld [vmem:[%s1 + $0x10b8] sm:$0xff]
  %v559 = vld [vmem:[%s1 + $0x10c0] sm:$0xff]
  %v560 = vld [vmem:[%s1 + $0x10c8] sm:$0xff]
  %v561 = vld [vmem:[%s1 + $0x10d0] sm:$0xff]
  %v562 = vld [vmem:[%s1 + $0x10d8] sm:$0xff]
  %v563 = vld [vmem:[%s1 + $0x10e0] sm:$0xff]
  %v564 = vld [vmem:[%s1 + $0x10e8] sm:$0xff]
  %v565 = vld [vmem:[%s1 + $0x10f0] sm:$0xff]
  %v566 = vld [vmem:[%s1 + $0x10f8] sm:$0xff]
  %v567 = vld [vmem:[%s1 + $0x1100] sm:$0xff]
  %v568 = vld [vmem:[%s1 + $0x1108] sm:$0xff]
  %v569 = vld [vmem:[%s1 + $0x1110] sm:$0xff]
  %v570 = vld [vmem:[%s1 + $0x1118] sm:$0xff]
  %v571 = vld [vmem:[%s1 + $0x1120] sm:$0xff]
  %v572 = vld [vmem:[%s1 + $0x1128] sm:$0xff]
  %v573 = vld [vmem:[%s1 + $0x1130] sm:$0xff]
  %v574 = vld [vmem:[%s1 + $0x1138] sm:$0xff]
  %v575 = vld [vmem:[%s1 + $0x1140] sm:$0xff]
  %v576 = vld [vmem:[%s1 + $0x1148] sm:$0xff]
  %v577 = vld [vmem:[%s1 + $0x1150] sm:$0xff]
  %v578 = vld [vmem:[%s1 + $0x1158] sm:$0xff]
  %v579 = vld [vmem:[%s1 + $0x1160] sm:$0xff]
  %v580 = vld [vmem:[%s1 + $0x1168] sm:$0xff]
  %v581 = vld [vmem:[%s1 + $0x1170] sm:$0xff]
  %v582 = vld [vmem:[%s1 + $0x1178] sm:$0xff]
  %v583 = vld [vmem:[%s1 + $0x1180] sm:$0xff]
  %v584 = vld [vmem:[%s1 + $0x1188] sm:$0xff]
  %v585 = vld [vmem:[%s1 + $0x1190] sm:$0xff]
  %v586 = vld [vmem:[%s1 + $0x1198] sm:$0xff]
  %v587 = vld [vmem:[%s1 + $0x11a0] sm:$0xff]
  %v588 = vld [vmem:[%s1 + $0x11a8] sm:$0xff]
  %v589 = vld [vmem:[%s1 + $0x11b0] sm:$0xff]
  %v590 = vld [vmem:[%s1 + $0x11b8] sm:$0xff]
  %v591 = vld [vmem:[%s1 + $0x11c0] sm:$0xff]
  %v592 = vld [vmem:[%s1 + $0x11c8] sm:$0xff]
  %v593 = vld [vmem:[%s1 + $0x11d0] sm:$0xff]
  %v594 = vld [vmem:[%s1 + $0x11d8] sm:$0xff]
  %v595 = vld [vmem:[%s1 + $0x11e0] sm:$0xff]
  %v596 = vld [vmem:[%s1 + $0x11e8] sm:$0xff]
  %v597 = vld [vmem:[%s1 + $0x11f0] sm:$0xff]
  %v598 = vld [vmem:[%s1 + $0x11f8] sm:$0xff]
  %v608 = vunpack.c.l.b16 %v14
  %v609 = vunpack.c.h.b16 %v14
  %v610 = vunpack.c.l.b16 %v15
  %v611 = vunpack.c.h.b16 %v15
  %v612 = vunpack.c.l.b16 %v16
  %v613 = vunpack.c.h.b16 %v16
  %v614 = vunpack.c.l.b16 %v17
  %v615 = vunpack.c.h.b16 %v17
  %v616 = vunpack.c.l.b16 %v18
  %v617 = vunpack.c.h.b16 %v18
  %v618 = vunpack.c.l.b16 %v19
  %v619 = vunpack.c.h.b16 %v19
  %v620 = vunpack.c.l.b16 %v20
  %v621 = vunpack.c.h.b16 %v20
  %v622 = vunpack.c.l.b16 %v21
  %v623 = vunpack.c.h.b16 %v21
  %v624 = vunpack.c.l.b16 %v22
  %v625 = vunpack.c.h.b16 %v22
  %v626 = vpack.c.b16 %v608, %v608
  %v627 = vpack.c.b16 %v609, %v609
  %v628 = vpack.c.b16 %v610, %v610
  %v629 = vpack.c.b16 %v611, %v611
  %v630 = vpack.c.b16 %v612, %v612
  %v631 = vpack.c.b16 %v613, %v613
  %v632 = vpack.c.b16 %v614, %v614
  %v633 = vpack.c.b16 %v615, %v615
  %v634 = vpack.c.b16 %v616, %v616
  %v635 = vpack.c.b16 %v617, %v617
  %v636 = vpack.c.b16 %v618, %v618
  %v637 = vpack.c.b16 %v619, %v619
  %v638 = vpack.c.b16 %v620, %v620
  %v639 = vpack.c.b16 %v621, %v621
  %v640 = vpack.c.b16 %v622, %v622
  %v641 = vpack.c.b16 %v623, %v623
  %v642 = vpack.c.b16 %v624, %v624
  %v643 = vpack.c.b16 %v625, %v625
  %v1238 = vunpack.c.l.b16 %v23
  %v1239 = vunpack.c.h.b16 %v23
  %v1240 = vunpack.c.l.b16 %v24
  %v1241 = vunpack.c.h.b16 %v24
  %v1242 = vunpack.c.l.b16 %v25
  %v1243 = vunpack.c.h.b16 %v25
  %v1244 = vunpack.c.l.b16 %v26
  %v1245 = vunpack.c.h.b16 %v26
  %v1246 = vunpack.c.l.b16 %v27
  %v1247 = vunpack.c.h.b16 %v27
  %v1248 = vunpack.c.l.b16 %v28
  %v1249 = vunpack.c.h.b16 %v28
  %v1250 = vunpack.c.l.b16 %v29
  %v1251 = vunpack.c.h.b16 %v29
  %v1252 = vunpack.c.l.b16 %v30
  %v1253 = vunpack.c.h.b16 %v30
  %v1254 = vunpack.c.l.b16 %v31
  %v1255 = vunpack.c.h.b16 %v31
  %v1256 = vunpack.c.l.b16 %v32
  %v1257 = vunpack.c.h.b16 %v32
  %v1258 = vunpack.c.l.b16 %v33
  %v1259 = vunpack.c.h.b16 %v33
  %v1260 = vunpack.c.l.b16 %v34
  %v1261 = vunpack.c.h.b16 %v34
  %v1262 = vunpack.c.l.b16 %v35
  %v1263 = vunpack.c.h.b16 %v35
  %v1264 = vunpack.c.l.b16 %v36
  %v1265 = vunpack.c.h.b16 %v36
  %v1266 = vunpack.c.l.b16 %v37
  %v1267 = vunpack.c.h.b16 %v37
  %v1268 = vunpack.c.l.b16 %v38
  %v1269 = vunpack.c.h.b16 %v38
  %v1270 = vunpack.c.l.b16 %v39
  %v1271 = vunpack.c.h.b16 %v39
  %v1272 = vunpack.c.l.b16 %v40
  %v1273 = vunpack.c.h.b16 %v40
  %v1274 = vunpack.c.l.b16 %v41
  %v1275 = vunpack.c.h.b16 %v41
  %v1276 = vunpack.c.l.b16 %v42
  %v1277 = vunpack.c.h.b16 %v42
  %v1278 = vunpack.c.l.b16 %v43
  %v1279 = vunpack.c.h.b16 %v43
  %v1280 = vunpack.c.l.b16 %v44
  %v1281 = vunpack.c.h.b16 %v44
  %v1282 = vunpack.c.l.b16 %v45
  %v1283 = vunpack.c.h.b16 %v45
  %v1284 = vunpack.c.l.b16 %v46
  %v1285 = vunpack.c.h.b16 %v46
  %v1286 = vunpack.c.l.b16 %v47
  %v1287 = vunpack.c.h.b16 %v47
  %v1288 = vunpack.c.l.b16 %v48
  %v1289 = vunpack.c.h.b16 %v48
  %v1290 = vunpack.c.l.b16 %v49
  %v1291 = vunpack.c.h.b16 %v49
  %v1292 = vunpack.c.l.b16 %v50
  %v1293 = vunpack.c.h.b16 %v50
  %v1294 = vunpack.c.l.b16 %v51
  %v1295 = vunpack.c.h.b16 %v51
  %v1296 = vunpack.c.l.b16 %v52
  %v1297 = vunpack.c.h.b16 %v52
  %v1298 = vunpack.c.l.b16 %v53
  %v1299 = vunpack.c.h.b16 %v53
  %v1300 = vunpack.c.l.b16 %v54
  %v1301 = vunpack.c.h.b16 %v54
  %v1302 = vunpack.c.l.b16 %v55
  %v1303 = vunpack.c.h.b16 %v55
  %v1304 = vunpack.c.l.b16 %v56
  %v1305 = vunpack.c.h.b16 %v56
  %v1306 = vunpack.c.l.b16 %v57
  %v1307 = vunpack.c.h.b16 %v57
  %v1308 = vunpack.c.l.b16 %v58
  %v1309 = vunpack.c.h.b16 %v58
  %v1310 = vunpack.c.l.b16 %v59
  %v1311 = vunpack.c.h.b16 %v59
  %v1312 = vunpack.c.l.b16 %v60
  %v1313 = vunpack.c.h.b16 %v60
  %v1314 = vunpack.c.l.b16 %v61
  %v1315 = vunpack.c.h.b16 %v61
  %v1316 = vunpack.c.l.b16 %v62
  %v1317 = vunpack.c.h.b16 %v62
  %v1318 = vunpack.c.l.b16 %v63
  %v1319 = vunpack.c.h.b16 %v63
  %v1320 = vunpack.c.l.b16 %v64
  %v1321 = vunpack.c.h.b16 %v64
  %v1322 = vunpack.c.l.b16 %v65
  %v1323 = vunpack.c.h.b16 %v65
  %v1324 = vunpack.c.l.b16 %v66
  %v1325 = vunpack.c.h.b16 %v66
  %v1326 = vunpack.c.l.b16 %v67
  %v1327 = vunpack.c.h.b16 %v67
  %v1328 = vunpack.c.l.b16 %v68
  %v1329 = vunpack.c.h.b16 %v68
  %v1330 = vunpack.c.l.b16 %v69
  %v1331 = vunpack.c.h.b16 %v69
  %v1332 = vunpack.c.l.b16 %v70
  %v1333 = vunpack.c.h.b16 %v70
  %v1334 = vunpack.c.l.b16 %v71
  %v1335 = vunpack.c.h.b16 %v71
  %v1336 = vunpack.c.l.b16 %v72
  %v1337 = vunpack.c.h.b16 %v72
  %v1338 = vunpack.c.l.b16 %v73
  %v1339 = vunpack.c.h.b16 %v73
  %v1340 = vunpack.c.l.b16 %v74
  %v1341 = vunpack.c.h.b16 %v74
  %v1342 = vunpack.c.l.b16 %v75
  %v1343 = vunpack.c.h.b16 %v75
  %v1344 = vunpack.c.l.b16 %v76
  %v1345 = vunpack.c.h.b16 %v76
  %v1346 = vunpack.c.l.b16 %v77
  %v1347 = vunpack.c.h.b16 %v77
  %v1348 = vunpack.c.l.b16 %v78
  %v1349 = vunpack.c.h.b16 %v78
  %v1350 = vunpack.c.l.b16 %v79
  %v1351 = vunpack.c.h.b16 %v79
  %v1352 = vunpack.c.l.b16 %v80
  %v1353 = vunpack.c.h.b16 %v80
  %v1354 = vunpack.c.l.b16 %v81
  %v1355 = vunpack.c.h.b16 %v81
  %v1356 = vunpack.c.l.b16 %v82
  %v1357 = vunpack.c.h.b16 %v82
  %v1358 = vunpack.c.l.b16 %v83
  %v1359 = vunpack.c.h.b16 %v83
  %v1360 = vunpack.c.l.b16 %v84
  %v1361 = vunpack.c.h.b16 %v84
  %v1362 = vunpack.c.l.b16 %v85
  %v1363 = vunpack.c.h.b16 %v85
  %v1364 = vunpack.c.l.b16 %v86
  %v1365 = vunpack.c.h.b16 %v86
  %v1366 = vunpack.c.l.b16 %v87
  %v1367 = vunpack.c.h.b16 %v87
  %v1368 = vunpack.c.l.b16 %v88
  %v1369 = vunpack.c.h.b16 %v88
  %v1370 = vunpack.c.l.b16 %v89
  %v1371 = vunpack.c.h.b16 %v89
  %v1372 = vunpack.c.l.b16 %v90
  %v1373 = vunpack.c.h.b16 %v90
  %v1374 = vunpack.c.l.b16 %v91
  %v1375 = vunpack.c.h.b16 %v91
  %v1376 = vunpack.c.l.b16 %v92
  %v1377 = vunpack.c.h.b16 %v92
  %v1378 = vunpack.c.l.b16 %v93
  %v1379 = vunpack.c.h.b16 %v93
  %v1380 = vunpack.c.l.b16 %v94
  %v1381 = vunpack.c.h.b16 %v94
  %v1382 = vunpack.c.l.b16 %v95
  %v1383 = vunpack.c.h.b16 %v95
  %v1384 = vunpack.c.l.b16 %v96
  %v1385 = vunpack.c.h.b16 %v96
  %v1386 = vunpack.c.l.b16 %v97
  %v1387 = vunpack.c.h.b16 %v97
  %v1388 = vunpack.c.l.b16 %v98
  %v1389 = vunpack.c.h.b16 %v98
  %v1390 = vunpack.c.l.b16 %v99
  %v1391 = vunpack.c.h.b16 %v99
  %v1392 = vunpack.c.l.b16 %v100
  %v1393 = vunpack.c.h.b16 %v100
  %v1394 = vunpack.c.l.b16 %v101
  %v1395 = vunpack.c.h.b16 %v101
  %v1396 = vunpack.c.l.b16 %v102
  %v1397 = vunpack.c.h.b16 %v102
  %v1398 = vunpack.c.l.b16 %v103
  %v1399 = vunpack.c.h.b16 %v103
  %v1400 = vunpack.c.l.b16 %v104
  %v1401 = vunpack.c.h.b16 %v104
  %v1402 = vunpack.c.l.b16 %v105
  %v1403 = vunpack.c.h.b16 %v105
  %v1404 = vunpack.c.l.b16 %v106
  %v1405 = vunpack.c.h.b16 %v106
  %v1406 = vunpack.c.l.b16 %v107
  %v1407 = vunpack.c.h.b16 %v107
  %v1408 = vunpack.c.l.b16 %v108
  %v1409 = vunpack.c.h.b16 %v108
  %v1410 = vunpack.c.l.b16 %v109
  %v1411 = vunpack.c.h.b16 %v109
  %v1412 = vunpack.c.l.b16 %v110
  %v1413 = vunpack.c.h.b16 %v110
  %v1414 = vunpack.c.l.b16 %v111
  %v1415 = vunpack.c.h.b16 %v111
  %v1416 = vunpack.c.l.b16 %v112
  %v1417 = vunpack.c.h.b16 %v112
  %v1418 = vunpack.c.l.b16 %v113
  %v1419 = vunpack.c.h.b16 %v113
  %v1420 = vunpack.c.l.b16 %v114
  %v1421 = vunpack.c.h.b16 %v114
  %v1422 = vunpack.c.l.b16 %v115
  %v1423 = vunpack.c.h.b16 %v115
  %v1424 = vunpack.c.l.b16 %v116
  %v1425 = vunpack.c.h.b16 %v116
  %v1426 = vunpack.c.l.b16 %v117
  %v1427 = vunpack.c.h.b16 %v117
  %v1428 = vunpack.c.l.b16 %v118
  %v1429 = vunpack.c.h.b16 %v118
  %v1430 = vunpack.c.l.b16 %v119
  %v1431 = vunpack.c.h.b16 %v119
  %v1432 = vunpack.c.l.b16 %v120
  %v1433 = vunpack.c.h.b16 %v120
  %v1434 = vunpack.c.l.b16 %v121
  %v1435 = vunpack.c.h.b16 %v121
  %v1436 = vunpack.c.l.b16 %v122
  %v1437 = vunpack.c.h.b16 %v122
  %v1438 = vunpack.c.l.b16 %v123
  %v1439 = vunpack.c.h.b16 %v123
  %v1440 = vunpack.c.l.b16 %v124
  %v1441 = vunpack.c.h.b16 %v124
  %v1442 = vunpack.c.l.b16 %v125
  %v1443 = vunpack.c.h.b16 %v125
  %v1444 = vunpack.c.l.b16 %v126
  %v1445 = vunpack.c.h.b16 %v126
  %v1446 = vunpack.c.l.b16 %v127
  %v1447 = vunpack.c.h.b16 %v127
  %v1448 = vunpack.c.l.b16 %v128
  %v1449 = vunpack.c.h.b16 %v128
  %v1450 = vunpack.c.l.b16 %v129
  %v1451 = vunpack.c.h.b16 %v129
  %v1452 = vunpack.c.l.b16 %v130
  %v1453 = vunpack.c.h.b16 %v130
  %v1454 = vunpack.c.l.b16 %v131
  %v1455 = vunpack.c.h.b16 %v131
  %v1456 = vunpack.c.l.b16 %v132
  %v1457 = vunpack.c.h.b16 %v132
  %v1458 = vunpack.c.l.b16 %v133
  %v1459 = vunpack.c.h.b16 %v133
  %v1460 = vunpack.c.l.b16 %v134
  %v1461 = vunpack.c.h.b16 %v134
  %v1462 = vunpack.c.l.b16 %v135
  %v1463 = vunpack.c.h.b16 %v135
  %v1464 = vunpack.c.l.b16 %v136
  %v1465 = vunpack.c.h.b16 %v136
  %v1466 = vunpack.c.l.b16 %v137
  %v1467 = vunpack.c.h.b16 %v137
  %v1468 = vunpack.c.l.b16 %v138
  %v1469 = vunpack.c.h.b16 %v138
  %v1470 = vunpack.c.l.b16 %v139
  %v1471 = vunpack.c.h.b16 %v139
  %v1472 = vunpack.c.l.b16 %v140
  %v1473 = vunpack.c.h.b16 %v140
  %v1474 = vunpack.c.l.b16 %v141
  %v1475 = vunpack.c.h.b16 %v141
  %v1476 = vunpack.c.l.b16 %v142
  %v1477 = vunpack.c.h.b16 %v142
  %v1478 = vunpack.c.l.b16 %v143
  %v1479 = vunpack.c.h.b16 %v143
  %v1480 = vunpack.c.l.b16 %v144
  %v1481 = vunpack.c.h.b16 %v144
  %v1482 = vunpack.c.l.b16 %v145
  %v1483 = vunpack.c.h.b16 %v145
  %v1484 = vunpack.c.l.b16 %v146
  %v1485 = vunpack.c.h.b16 %v146
  %v1486 = vunpack.c.l.b16 %v147
  %v1487 = vunpack.c.h.b16 %v147
  %v1488 = vunpack.c.l.b16 %v148
  %v1489 = vunpack.c.h.b16 %v148
  %v1490 = vunpack.c.l.b16 %v149
  %v1491 = vunpack.c.h.b16 %v149
  %v1492 = vunpack.c.l.b16 %v150
  %v1493 = vunpack.c.h.b16 %v150
  %v1494 = vunpack.c.l.b16 %v151
  %v1495 = vunpack.c.h.b16 %v151
  %v1496 = vunpack.c.l.b16 %v152
  %v1497 = vunpack.c.h.b16 %v152
  %v1498 = vunpack.c.l.b16 %v153
  %v1499 = vunpack.c.h.b16 %v153
  %v1500 = vunpack.c.l.b16 %v154
  %v1501 = vunpack.c.h.b16 %v154
  %v1502 = vunpack.c.l.b16 %v155
  %v1503 = vunpack.c.h.b16 %v155
  %v1504 = vunpack.c.l.b16 %v156
  %v1505 = vunpack.c.h.b16 %v156
  %v1506 = vunpack.c.l.b16 %v157
  %v1507 = vunpack.c.h.b16 %v157
  %v1508 = vunpack.c.l.b16 %v158
  %v1509 = vunpack.c.h.b16 %v158
  %v1510 = vunpack.c.l.b16 %v159
  %v1511 = vunpack.c.h.b16 %v159
  %v1512 = vunpack.c.l.b16 %v160
  %v1513 = vunpack.c.h.b16 %v160
  %v1514 = vunpack.c.l.b16 %v161
  %v1515 = vunpack.c.h.b16 %v161
  %v1516 = vunpack.c.l.b16 %v162
  %v1517 = vunpack.c.h.b16 %v162
  %v1518 = vunpack.c.l.b16 %v163
  %v1519 = vunpack.c.h.b16 %v163
  %v1520 = vunpack.c.l.b16 %v164
  %v1521 = vunpack.c.h.b16 %v164
  %v1522 = vunpack.c.l.b16 %v165
  %v1523 = vunpack.c.h.b16 %v165
  %v1524 = vunpack.c.l.b16 %v166
  %v1525 = vunpack.c.h.b16 %v166
  %v1526 = vunpack.c.l.b16 %v167
  %v1527 = vunpack.c.h.b16 %v167
  %v1528 = vunpack.c.l.b16 %v168
  %v1529 = vunpack.c.h.b16 %v168
  %v1530 = vunpack.c.l.b16 %v169
  %v1531 = vunpack.c.h.b16 %v169
  %v1532 = vunpack.c.l.b16 %v170
  %v1533 = vunpack.c.h.b16 %v170
  %v1534 = vunpack.c.l.b16 %v171
  %v1535 = vunpack.c.h.b16 %v171
  %v1536 = vunpack.c.l.b16 %v172
  %v1537 = vunpack.c.h.b16 %v172
  %v1538 = vunpack.c.l.b16 %v173
  %v1539 = vunpack.c.h.b16 %v173
  %v1540 = vunpack.c.l.b16 %v174
  %v1541 = vunpack.c.h.b16 %v174
  %v1542 = vunpack.c.l.b16 %v175
  %v1543 = vunpack.c.h.b16 %v175
  %v1544 = vunpack.c.l.b16 %v176
  %v1545 = vunpack.c.h.b16 %v176
  %v1546 = vunpack.c.l.b16 %v177
  %v1547 = vunpack.c.h.b16 %v177
  %v1548 = vunpack.c.l.b16 %v178
  %v1549 = vunpack.c.h.b16 %v178
  %v1550 = vunpack.c.l.b16 %v179
  %v1551 = vunpack.c.h.b16 %v179
  %v1552 = vunpack.c.l.b16 %v180
  %v1553 = vunpack.c.h.b16 %v180
  %v1554 = vunpack.c.l.b16 %v181
  %v1555 = vunpack.c.h.b16 %v181
  %v1556 = vunpack.c.l.b16 %v182
  %v1557 = vunpack.c.h.b16 %v182
  %v1558 = vunpack.c.l.b16 %v183
  %v1559 = vunpack.c.h.b16 %v183
  %v1560 = vunpack.c.l.b16 %v184
  %v1561 = vunpack.c.h.b16 %v184
  %v1562 = vunpack.c.l.b16 %v185
  %v1563 = vunpack.c.h.b16 %v185
  %v1564 = vunpack.c.l.b16 %v186
  %v1565 = vunpack.c.h.b16 %v186
  %v1566 = vunpack.c.l.b16 %v187
  %v1567 = vunpack.c.h.b16 %v187
  %v1568 = vunpack.c.l.b16 %v188
  %v1569 = vunpack.c.h.b16 %v188
  %v1570 = vunpack.c.l.b16 %v189
  %v1571 = vunpack.c.h.b16 %v189
  %v1572 = vunpack.c.l.b16 %v190
  %v1573 = vunpack.c.h.b16 %v190
  %v1574 = vunpack.c.l.b16 %v191
  %v1575 = vunpack.c.h.b16 %v191
  %v1576 = vunpack.c.l.b16 %v192
  %v1577 = vunpack.c.h.b16 %v192
  %v1578 = vunpack.c.l.b16 %v193
  %v1579 = vunpack.c.h.b16 %v193
  %v1580 = vunpack.c.l.b16 %v194
  %v1581 = vunpack.c.h.b16 %v194
  %v1582 = vunpack.c.l.b16 %v195
  %v1583 = vunpack.c.h.b16 %v195
  %v1584 = vunpack.c.l.b16 %v196
  %v1585 = vunpack.c.h.b16 %v196
  %v1586 = vunpack.c.l.b16 %v197
  %v1587 = vunpack.c.h.b16 %v197
  %v1588 = vunpack.c.l.b16 %v198
  %v1589 = vunpack.c.h.b16 %v198
  %v1590 = vunpack.c.l.b16 %v199
  %v1591 = vunpack.c.h.b16 %v199
  %v1592 = vunpack.c.l.b16 %v200
  %v1593 = vunpack.c.h.b16 %v200
  %v1594 = vunpack.c.l.b16 %v201
  %v1595 = vunpack.c.h.b16 %v201
  %v1596 = vunpack.c.l.b16 %v202
  %v1597 = vunpack.c.h.b16 %v202
  %v1598 = vunpack.c.l.b16 %v203
  %v1599 = vunpack.c.h.b16 %v203
  %v1600 = vunpack.c.l.b16 %v204
  %v1601 = vunpack.c.h.b16 %v204
  %v1602 = vunpack.c.l.b16 %v205
  %v1603 = vunpack.c.h.b16 %v205
  %v1604 = vunpack.c.l.b16 %v206
  %v1605 = vunpack.c.h.b16 %v206
  %v1606 = vunpack.c.l.b16 %v207
  %v1607 = vunpack.c.h.b16 %v207
  %v1608 = vunpack.c.l.b16 %v208
  %v1609 = vunpack.c.h.b16 %v208
  %v1610 = vunpack.c.l.b16 %v209
  %v1611 = vunpack.c.h.b16 %v209
  %v1612 = vunpack.c.l.b16 %v210
  %v1613 = vunpack.c.h.b16 %v210
  %v1614 = vunpack.c.l.b16 %v211
  %v1615 = vunpack.c.h.b16 %v211
  %v1616 = vunpack.c.l.b16 %v212
  %v1617 = vunpack.c.h.b16 %v212
  %v1618 = vunpack.c.l.b16 %v213
  %v1619 = vunpack.c.h.b16 %v213
  %v1620 = vunpack.c.l.b16 %v214
  %v1621 = vunpack.c.h.b16 %v214
  %v1622 = vunpack.c.l.b16 %v215
  %v1623 = vunpack.c.h.b16 %v215
  %v1624 = vunpack.c.l.b16 %v216
  %v1625 = vunpack.c.h.b16 %v216
  %v1626 = vunpack.c.l.b16 %v217
  %v1627 = vunpack.c.h.b16 %v217
  %v1628 = vunpack.c.l.b16 %v218
  %v1629 = vunpack.c.h.b16 %v218
  %v1630 = vunpack.c.l.b16 %v219
  %v1631 = vunpack.c.h.b16 %v219
  %v1632 = vunpack.c.l.b16 %v220
  %v1633 = vunpack.c.h.b16 %v220
  %v1634 = vunpack.c.l.b16 %v221
  %v1635 = vunpack.c.h.b16 %v221
  %v1636 = vunpack.c.l.b16 %v222
  %v1637 = vunpack.c.h.b16 %v222
  %v1638 = vunpack.c.l.b16 %v223
  %v1639 = vunpack.c.h.b16 %v223
  %v1640 = vunpack.c.l.b16 %v224
  %v1641 = vunpack.c.h.b16 %v224
  %v1642 = vunpack.c.l.b16 %v225
  %v1643 = vunpack.c.h.b16 %v225
  %v1644 = vunpack.c.l.b16 %v226
  %v1645 = vunpack.c.h.b16 %v226
  %v1646 = vunpack.c.l.b16 %v227
  %v1647 = vunpack.c.h.b16 %v227
  %v1648 = vunpack.c.l.b16 %v228
  %v1649 = vunpack.c.h.b16 %v228
  %v1650 = vunpack.c.l.b16 %v229
  %v1651 = vunpack.c.h.b16 %v229
  %v1652 = vunpack.c.l.b16 %v230
  %v1653 = vunpack.c.h.b16 %v230
  %v1654 = vunpack.c.l.b16 %v231
  %v1655 = vunpack.c.h.b16 %v231
  %v1656 = vunpack.c.l.b16 %v232
  %v1657 = vunpack.c.h.b16 %v232
  %v1658 = vunpack.c.l.b16 %v233
  %v1659 = vunpack.c.h.b16 %v233
  %v1660 = vunpack.c.l.b16 %v234
  %v1661 = vunpack.c.h.b16 %v234
  %v1662 = vunpack.c.l.b16 %v235
  %v1663 = vunpack.c.h.b16 %v235
  %v1664 = vunpack.c.l.b16 %v236
  %v1665 = vunpack.c.h.b16 %v236
  %v1666 = vunpack.c.l.b16 %v237
  %v1667 = vunpack.c.h.b16 %v237
  %v1668 = vunpack.c.l.b16 %v238
  %v1669 = vunpack.c.h.b16 %v238
  %v1670 = vunpack.c.l.b16 %v239
  %v1671 = vunpack.c.h.b16 %v239
  %v1672 = vunpack.c.l.b16 %v240
  %v1673 = vunpack.c.h.b16 %v240
  %v1674 = vunpack.c.l.b16 %v241
  %v1675 = vunpack.c.h.b16 %v241
  %v1676 = vunpack.c.l.b16 %v242
  %v1677 = vunpack.c.h.b16 %v242
  %v1678 = vunpack.c.l.b16 %v243
  %v1679 = vunpack.c.h.b16 %v243
  %v1680 = vunpack.c.l.b16 %v244
  %v1681 = vunpack.c.h.b16 %v244
  %v1682 = vunpack.c.l.b16 %v245
  %v1683 = vunpack.c.h.b16 %v245
  %v1684 = vunpack.c.l.b16 %v246
  %v1685 = vunpack.c.h.b16 %v246
  %v1686 = vunpack.c.l.b16 %v247
  %v1687 = vunpack.c.h.b16 %v247
  %v1688 = vunpack.c.l.b16 %v248
  %v1689 = vunpack.c.h.b16 %v248
  %v1690 = vunpack.c.l.b16 %v249
  %v1691 = vunpack.c.h.b16 %v249
  %v1692 = vunpack.c.l.b16 %v250
  %v1693 = vunpack.c.h.b16 %v250
  %v1694 = vunpack.c.l.b16 %v251
  %v1695 = vunpack.c.h.b16 %v251
  %v1696 = vunpack.c.l.b16 %v252
  %v1697 = vunpack.c.h.b16 %v252
  %v1698 = vunpack.c.l.b16 %v253
  %v1699 = vunpack.c.h.b16 %v253
  %v1700 = vunpack.c.l.b16 %v254
  %v1701 = vunpack.c.h.b16 %v254
  %v1702 = vunpack.c.l.b16 %v255
  %v1703 = vunpack.c.h.b16 %v255
  %v1704 = vunpack.c.l.b16 %v256
  %v1705 = vunpack.c.h.b16 %v256
  %v1706 = vunpack.c.l.b16 %v257
  %v1707 = vunpack.c.h.b16 %v257
  %v1708 = vunpack.c.l.b16 %v258
  %v1709 = vunpack.c.h.b16 %v258
  %v1710 = vunpack.c.l.b16 %v259
  %v1711 = vunpack.c.h.b16 %v259
  %v1712 = vunpack.c.l.b16 %v260
  %v1713 = vunpack.c.h.b16 %v260
  %v1714 = vunpack.c.l.b16 %v261
  %v1715 = vunpack.c.h.b16 %v261
  %v1716 = vunpack.c.l.b16 %v262
  %v1717 = vunpack.c.h.b16 %v262
  %v1718 = vunpack.c.l.b16 %v263
  %v1719 = vunpack.c.h.b16 %v263
  %v1720 = vunpack.c.l.b16 %v264
  %v1721 = vunpack.c.h.b16 %v264
  %v1722 = vunpack.c.l.b16 %v265
  %v1723 = vunpack.c.h.b16 %v265
  %v1724 = vunpack.c.l.b16 %v266
  %v1725 = vunpack.c.h.b16 %v266
  %v1726 = vunpack.c.l.b16 %v267
  %v1727 = vunpack.c.h.b16 %v267
  %v1728 = vunpack.c.l.b16 %v268
  %v1729 = vunpack.c.h.b16 %v268
  %v1730 = vunpack.c.l.b16 %v269
  %v1731 = vunpack.c.h.b16 %v269
  %v1732 = vunpack.c.l.b16 %v270
  %v1733 = vunpack.c.h.b16 %v270
  %v1734 = vunpack.c.l.b16 %v271
  %v1735 = vunpack.c.h.b16 %v271
  %v1736 = vunpack.c.l.b16 %v272
  %v1737 = vunpack.c.h.b16 %v272
  %v1738 = vunpack.c.l.b16 %v273
  %v1739 = vunpack.c.h.b16 %v273
  %v1740 = vunpack.c.l.b16 %v274
  %v1741 = vunpack.c.h.b16 %v274
  %v1742 = vunpack.c.l.b16 %v275
  %v1743 = vunpack.c.h.b16 %v275
  %v1744 = vunpack.c.l.b16 %v276
  %v1745 = vunpack.c.h.b16 %v276
  %v1746 = vunpack.c.l.b16 %v277
  %v1747 = vunpack.c.h.b16 %v277
  %v1748 = vunpack.c.l.b16 %v278
  %v1749 = vunpack.c.h.b16 %v278
  %v1750 = vunpack.c.l.b16 %v279
  %v1751 = vunpack.c.h.b16 %v279
  %v1752 = vunpack.c.l.b16 %v280
  %v1753 = vunpack.c.h.b16 %v280
  %v1754 = vunpack.c.l.b16 %v281
  %v1755 = vunpack.c.h.b16 %v281
  %v1756 = vunpack.c.l.b16 %v282
  %v1757 = vunpack.c.h.b16 %v282
  %v1758 = vunpack.c.l.b16 %v283
  %v1759 = vunpack.c.h.b16 %v283
  %v1760 = vunpack.c.l.b16 %v284
  %v1761 = vunpack.c.h.b16 %v284
  %v1762 = vunpack.c.l.b16 %v285
  %v1763 = vunpack.c.h.b16 %v285
  %v1764 = vunpack.c.l.b16 %v286
  %v1765 = vunpack.c.h.b16 %v286
  %v1766 = vunpack.c.l.b16 %v287
  %v1767 = vunpack.c.h.b16 %v287
  %v1768 = vunpack.c.l.b16 %v288
  %v1769 = vunpack.c.h.b16 %v288
  %v1770 = vunpack.c.l.b16 %v289
  %v1771 = vunpack.c.h.b16 %v289
  %v1772 = vunpack.c.l.b16 %v290
  %v1773 = vunpack.c.h.b16 %v290
  %v1774 = vunpack.c.l.b16 %v291
  %v1775 = vunpack.c.h.b16 %v291
  %v1776 = vunpack.c.l.b16 %v292
  %v1777 = vunpack.c.h.b16 %v292
  %v1778 = vunpack.c.l.b16 %v293
  %v1779 = vunpack.c.h.b16 %v293
  %v1780 = vunpack.c.l.b16 %v294
  %v1781 = vunpack.c.h.b16 %v294
  %v1782 = vunpack.c.l.b16 %v295
  %v1783 = vunpack.c.h.b16 %v295
  %v1784 = vunpack.c.l.b16 %v296
  %v1785 = vunpack.c.h.b16 %v296
  %v1786 = vunpack.c.l.b16 %v297
  %v1787 = vunpack.c.h.b16 %v297
  %v1788 = vunpack.c.l.b16 %v298
  %v1789 = vunpack.c.h.b16 %v298
  %v1790 = vunpack.c.l.b16 %v299
  %v1791 = vunpack.c.h.b16 %v299
  %v1792 = vunpack.c.l.b16 %v300
  %v1793 = vunpack.c.h.b16 %v300
  %v1794 = vunpack.c.l.b16 %v301
  %v1795 = vunpack.c.h.b16 %v301
  %v1796 = vunpack.c.l.b16 %v302
  %v1797 = vunpack.c.h.b16 %v302
  %v1798 = vunpack.c.l.b16 %v303
  %v1799 = vunpack.c.h.b16 %v303
  %v1800 = vunpack.c.l.b16 %v304
  %v1801 = vunpack.c.h.b16 %v304
  %v1802 = vunpack.c.l.b16 %v305
  %v1803 = vunpack.c.h.b16 %v305
  %v1804 = vunpack.c.l.b16 %v306
  %v1805 = vunpack.c.h.b16 %v306
  %v1806 = vunpack.c.l.b16 %v307
  %v1807 = vunpack.c.h.b16 %v307
  %v1808 = vunpack.c.l.b16 %v308
  %v1809 = vunpack.c.h.b16 %v308
  %v1810 = vunpack.c.l.b16 %v309
  %v1811 = vunpack.c.h.b16 %v309
  %v1812 = vunpack.c.l.b16 %v310
  %v1813 = vunpack.c.h.b16 %v310
  %v1814 = vunpack.c.l.b16 %v311
  %v1815 = vunpack.c.h.b16 %v311
  %v1816 = vunpack.c.l.b16 %v312
  %v1817 = vunpack.c.h.b16 %v312
  %v1818 = vunpack.c.l.b16 %v313
  %v1819 = vunpack.c.h.b16 %v313
  %v1820 = vunpack.c.l.b16 %v314
  %v1821 = vunpack.c.h.b16 %v314
  %v1822 = vunpack.c.l.b16 %v315
  %v1823 = vunpack.c.h.b16 %v315
  %v1824 = vunpack.c.l.b16 %v316
  %v1825 = vunpack.c.h.b16 %v316
  %v1826 = vunpack.c.l.b16 %v317
  %v1827 = vunpack.c.h.b16 %v317
  %v1828 = vunpack.c.l.b16 %v318
  %v1829 = vunpack.c.h.b16 %v318
  %v1830 = vunpack.c.l.b16 %v319
  %v1831 = vunpack.c.h.b16 %v319
  %v1832 = vunpack.c.l.b16 %v320
  %v1833 = vunpack.c.h.b16 %v320
  %v1834 = vunpack.c.l.b16 %v321
  %v1835 = vunpack.c.h.b16 %v321
  %v1836 = vunpack.c.l.b16 %v322
  %v1837 = vunpack.c.h.b16 %v322
  %v1838 = vunpack.c.l.b16 %v323
  %v1839 = vunpack.c.h.b16 %v323
  %v1840 = vunpack.c.l.b16 %v324
  %v1841 = vunpack.c.h.b16 %v324
  %v1842 = vunpack.c.l.b16 %v325
  %v1843 = vunpack.c.h.b16 %v325
  %v1844 = vunpack.c.l.b16 %v326
  %v1845 = vunpack.c.h.b16 %v326
  %v1846 = vunpack.c.l.b16 %v327
  %v1847 = vunpack.c.h.b16 %v327
  %v1848 = vunpack.c.l.b16 %v328
  %v1849 = vunpack.c.h.b16 %v328
  %v1850 = vunpack.c.l.b16 %v329
  %v1851 = vunpack.c.h.b16 %v329
  %v1852 = vunpack.c.l.b16 %v330
  %v1853 = vunpack.c.h.b16 %v330
  %v1854 = vunpack.c.l.b16 %v331
  %v1855 = vunpack.c.h.b16 %v331
  %v1856 = vunpack.c.l.b16 %v332
  %v1857 = vunpack.c.h.b16 %v332
  %v1858 = vunpack.c.l.b16 %v333
  %v1859 = vunpack.c.h.b16 %v333
  %v1860 = vunpack.c.l.b16 %v334
  %v1861 = vunpack.c.h.b16 %v334
  %v1862 = vunpack.c.l.b16 %v335
  %v1863 = vunpack.c.h.b16 %v335
  %v1864 = vunpack.c.l.b16 %v336
  %v1865 = vunpack.c.h.b16 %v336
  %v1866 = vunpack.c.l.b16 %v337
  %v1867 = vunpack.c.h.b16 %v337
  %v1868 = vunpack.c.l.b16 %v338
  %v1869 = vunpack.c.h.b16 %v338
  %v1870 = vunpack.c.l.b16 %v339
  %v1871 = vunpack.c.h.b16 %v339
  %v1872 = vunpack.c.l.b16 %v340
  %v1873 = vunpack.c.h.b16 %v340
  %v1874 = vunpack.c.l.b16 %v341
  %v1875 = vunpack.c.h.b16 %v341
  %v1876 = vunpack.c.l.b16 %v342
  %v1877 = vunpack.c.h.b16 %v342
  %v1878 = vunpack.c.l.b16 %v343
  %v1879 = vunpack.c.h.b16 %v343
  %v1880 = vunpack.c.l.b16 %v344
  %v1881 = vunpack.c.h.b16 %v344
  %v1882 = vunpack.c.l.b16 %v345
  %v1883 = vunpack.c.h.b16 %v345
  %v1884 = vunpack.c.l.b16 %v346
  %v1885 = vunpack.c.h.b16 %v346
  %v1886 = vunpack.c.l.b16 %v347
  %v1887 = vunpack.c.h.b16 %v347
  %v1888 = vunpack.c.l.b16 %v348
  %v1889 = vunpack.c.h.b16 %v348
  %v1890 = vunpack.c.l.b16 %v349
  %v1891 = vunpack.c.h.b16 %v349
  %v1892 = vunpack.c.l.b16 %v350
  %v1893 = vunpack.c.h.b16 %v350
  %v1894 = vunpack.c.l.b16 %v351
  %v1895 = vunpack.c.h.b16 %v351
  %v1896 = vunpack.c.l.b16 %v352
  %v1897 = vunpack.c.h.b16 %v352
  %v1898 = vunpack.c.l.b16 %v353
  %v1899 = vunpack.c.h.b16 %v353
  %v1900 = vunpack.c.l.b16 %v354
  %v1901 = vunpack.c.h.b16 %v354
  %v1902 = vunpack.c.l.b16 %v355
  %v1903 = vunpack.c.h.b16 %v355
  %v1904 = vunpack.c.l.b16 %v356
  %v1905 = vunpack.c.h.b16 %v356
  %v1906 = vunpack.c.l.b16 %v357
  %v1907 = vunpack.c.h.b16 %v357
  %v1908 = vunpack.c.l.b16 %v358
  %v1909 = vunpack.c.h.b16 %v358
  %v1910 = vunpack.c.l.b16 %v359
  %v1911 = vunpack.c.h.b16 %v359
  %v1912 = vunpack.c.l.b16 %v360
  %v1913 = vunpack.c.h.b16 %v360
  %v1914 = vunpack.c.l.b16 %v361
  %v1915 = vunpack.c.h.b16 %v361
  %v1916 = vunpack.c.l.b16 %v362
  %v1917 = vunpack.c.h.b16 %v362
  %v1918 = vunpack.c.l.b16 %v363
  %v1919 = vunpack.c.h.b16 %v363
  %v1920 = vunpack.c.l.b16 %v364
  %v1921 = vunpack.c.h.b16 %v364
  %v1922 = vunpack.c.l.b16 %v365
  %v1923 = vunpack.c.h.b16 %v365
  %v1924 = vunpack.c.l.b16 %v366
  %v1925 = vunpack.c.h.b16 %v366
  %v1926 = vunpack.c.l.b16 %v367
  %v1927 = vunpack.c.h.b16 %v367
  %v1928 = vunpack.c.l.b16 %v368
  %v1929 = vunpack.c.h.b16 %v368
  %v1930 = vunpack.c.l.b16 %v369
  %v1931 = vunpack.c.h.b16 %v369
  %v1932 = vunpack.c.l.b16 %v370
  %v1933 = vunpack.c.h.b16 %v370
  %v1934 = vunpack.c.l.b16 %v371
  %v1935 = vunpack.c.h.b16 %v371
  %v1936 = vunpack.c.l.b16 %v372
  %v1937 = vunpack.c.h.b16 %v372
  %v1938 = vunpack.c.l.b16 %v373
  %v1939 = vunpack.c.h.b16 %v373
  %v1940 = vunpack.c.l.b16 %v374
  %v1941 = vunpack.c.h.b16 %v374
  %v1942 = vunpack.c.l.b16 %v375
  %v1943 = vunpack.c.h.b16 %v375
  %v1944 = vunpack.c.l.b16 %v376
  %v1945 = vunpack.c.h.b16 %v376
  %v1946 = vunpack.c.l.b16 %v377
  %v1947 = vunpack.c.h.b16 %v377
  %v1948 = vunpack.c.l.b16 %v378
  %v1949 = vunpack.c.h.b16 %v378
  %v1950 = vunpack.c.l.b16 %v379
  %v1951 = vunpack.c.h.b16 %v379
  %v1952 = vunpack.c.l.b16 %v380
  %v1953 = vunpack.c.h.b16 %v380
  %v1954 = vunpack.c.l.b16 %v381
  %v1955 = vunpack.c.h.b16 %v381
  %v1956 = vunpack.c.l.b16 %v382
  %v1957 = vunpack.c.h.b16 %v382
  %v1958 = vunpack.c.l.b16 %v383
  %v1959 = vunpack.c.h.b16 %v383
  %v1960 = vunpack.c.l.b16 %v384
  %v1961 = vunpack.c.h.b16 %v384
  %v1962 = vunpack.c.l.b16 %v385
  %v1963 = vunpack.c.h.b16 %v385
  %v1964 = vunpack.c.l.b16 %v386
  %v1965 = vunpack.c.h.b16 %v386
  %v1966 = vunpack.c.l.b16 %v387
  %v1967 = vunpack.c.h.b16 %v387
  %v1968 = vunpack.c.l.b16 %v388
  %v1969 = vunpack.c.h.b16 %v388
  %v1970 = vunpack.c.l.b16 %v389
  %v1971 = vunpack.c.h.b16 %v389
  %v1972 = vunpack.c.l.b16 %v390
  %v1973 = vunpack.c.h.b16 %v390
  %v1974 = vunpack.c.l.b16 %v391
  %v1975 = vunpack.c.h.b16 %v391
  %v1976 = vunpack.c.l.b16 %v392
  %v1977 = vunpack.c.h.b16 %v392
  %v1978 = vunpack.c.l.b16 %v393
  %v1979 = vunpack.c.h.b16 %v393
  %v1980 = vunpack.c.l.b16 %v394
  %v1981 = vunpack.c.h.b16 %v394
  %v1982 = vunpack.c.l.b16 %v395
  %v1983 = vunpack.c.h.b16 %v395
  %v1984 = vunpack.c.l.b16 %v396
  %v1985 = vunpack.c.h.b16 %v396
  %v1986 = vunpack.c.l.b16 %v397
  %v1987 = vunpack.c.h.b16 %v397
  %v1988 = vunpack.c.l.b16 %v398
  %v1989 = vunpack.c.h.b16 %v398
  %v1990 = vunpack.c.l.b16 %v399
  %v1991 = vunpack.c.h.b16 %v399
  %v1992 = vunpack.c.l.b16 %v400
  %v1993 = vunpack.c.h.b16 %v400
  %v1994 = vunpack.c.l.b16 %v401
  %v1995 = vunpack.c.h.b16 %v401
  %v1996 = vunpack.c.l.b16 %v402
  %v1997 = vunpack.c.h.b16 %v402
  %v1998 = vunpack.c.l.b16 %v403
  %v1999 = vunpack.c.h.b16 %v403
  %v2000 = vunpack.c.l.b16 %v404
  %v2001 = vunpack.c.h.b16 %v404
  %v2002 = vunpack.c.l.b16 %v405
  %v2003 = vunpack.c.h.b16 %v405
  %v2004 = vunpack.c.l.b16 %v406
  %v2005 = vunpack.c.h.b16 %v406
  %v2006 = vunpack.c.l.b16 %v407
  %v2007 = vunpack.c.h.b16 %v407
  %v2008 = vunpack.c.l.b16 %v408
  %v2009 = vunpack.c.h.b16 %v408
  %v2010 = vunpack.c.l.b16 %v409
  %v2011 = vunpack.c.h.b16 %v409
  %v2012 = vunpack.c.l.b16 %v410
  %v2013 = vunpack.c.h.b16 %v410
  %v2014 = vunpack.c.l.b16 %v411
  %v2015 = vunpack.c.h.b16 %v411
  %v2016 = vunpack.c.l.b16 %v412
  %v2017 = vunpack.c.h.b16 %v412
  %v2018 = vunpack.c.l.b16 %v413
  %v2019 = vunpack.c.h.b16 %v413
  %v2020 = vunpack.c.l.b16 %v414
  %v2021 = vunpack.c.h.b16 %v414
  %v2022 = vunpack.c.l.b16 %v415
  %v2023 = vunpack.c.h.b16 %v415
  %v2024 = vunpack.c.l.b16 %v416
  %v2025 = vunpack.c.h.b16 %v416
  %v2026 = vunpack.c.l.b16 %v417
  %v2027 = vunpack.c.h.b16 %v417
  %v2028 = vunpack.c.l.b16 %v418
  %v2029 = vunpack.c.h.b16 %v418
  %v2030 = vunpack.c.l.b16 %v419
  %v2031 = vunpack.c.h.b16 %v419
  %v2032 = vunpack.c.l.b16 %v420
  %v2033 = vunpack.c.h.b16 %v420
  %v2034 = vunpack.c.l.b16 %v421
  %v2035 = vunpack.c.h.b16 %v421
  %v2036 = vunpack.c.l.b16 %v422
  %v2037 = vunpack.c.h.b16 %v422
  %v2038 = vunpack.c.l.b16 %v423
  %v2039 = vunpack.c.h.b16 %v423
  %v2040 = vunpack.c.l.b16 %v424
  %v2041 = vunpack.c.h.b16 %v424
  %v2042 = vunpack.c.l.b16 %v425
  %v2043 = vunpack.c.h.b16 %v425
  %v2044 = vunpack.c.l.b16 %v426
  %v2045 = vunpack.c.h.b16 %v426
  %v2046 = vunpack.c.l.b16 %v427
  %v2047 = vunpack.c.h.b16 %v427
  %v2048 = vunpack.c.l.b16 %v428
  %v2049 = vunpack.c.h.b16 %v428
  %v2050 = vunpack.c.l.b16 %v429
  %v2051 = vunpack.c.h.b16 %v429
  %v2052 = vunpack.c.l.b16 %v430
  %v2053 = vunpack.c.h.b16 %v430
  %v2054 = vunpack.c.l.b16 %v431
  %v2055 = vunpack.c.h.b16 %v431
  %v2056 = vunpack.c.l.b16 %v432
  %v2057 = vunpack.c.h.b16 %v432
  %v2058 = vunpack.c.l.b16 %v433
  %v2059 = vunpack.c.h.b16 %v433
  %v2060 = vunpack.c.l.b16 %v434
  %v2061 = vunpack.c.h.b16 %v434
  %v2062 = vunpack.c.l.b16 %v435
  %v2063 = vunpack.c.h.b16 %v435
  %v2064 = vunpack.c.l.b16 %v436
  %v2065 = vunpack.c.h.b16 %v436
  %v2066 = vunpack.c.l.b16 %v437
  %v2067 = vunpack.c.h.b16 %v437
  %v2068 = vunpack.c.l.b16 %v438
  %v2069 = vunpack.c.h.b16 %v438
  %v2070 = vunpack.c.l.b16 %v439
  %v2071 = vunpack.c.h.b16 %v439
  %v2072 = vunpack.c.l.b16 %v440
  %v2073 = vunpack.c.h.b16 %v440
  %v2074 = vunpack.c.l.b16 %v441
  %v2075 = vunpack.c.h.b16 %v441
  %v2076 = vunpack.c.l.b16 %v442
  %v2077 = vunpack.c.h.b16 %v442
  %v2078 = vunpack.c.l.b16 %v443
  %v2079 = vunpack.c.h.b16 %v443
  %v2080 = vunpack.c.l.b16 %v444
  %v2081 = vunpack.c.h.b16 %v444
  %v2082 = vunpack.c.l.b16 %v445
  %v2083 = vunpack.c.h.b16 %v445
  %v2084 = vunpack.c.l.b16 %v446
  %v2085 = vunpack.c.h.b16 %v446
  %v2086 = vunpack.c.l.b16 %v447
  %v2087 = vunpack.c.h.b16 %v447
  %v2088 = vunpack.c.l.b16 %v448
  %v2089 = vunpack.c.h.b16 %v448
  %v2090 = vunpack.c.l.b16 %v449
  %v2091 = vunpack.c.h.b16 %v449
  %v2092 = vunpack.c.l.b16 %v450
  %v2093 = vunpack.c.h.b16 %v450
  %v2094 = vunpack.c.l.b16 %v451
  %v2095 = vunpack.c.h.b16 %v451
  %v2096 = vunpack.c.l.b16 %v452
  %v2097 = vunpack.c.h.b16 %v452
  %v2098 = vunpack.c.l.b16 %v453
  %v2099 = vunpack.c.h.b16 %v453
  %v2100 = vunpack.c.l.b16 %v454
  %v2101 = vunpack.c.h.b16 %v454
  %v2102 = vunpack.c.l.b16 %v455
  %v2103 = vunpack.c.h.b16 %v455
  %v2104 = vunpack.c.l.b16 %v456
  %v2105 = vunpack.c.h.b16 %v456
  %v2106 = vunpack.c.l.b16 %v457
  %v2107 = vunpack.c.h.b16 %v457
  %v2108 = vunpack.c.l.b16 %v458
  %v2109 = vunpack.c.h.b16 %v458
  %v2110 = vunpack.c.l.b16 %v459
  %v2111 = vunpack.c.h.b16 %v459
  %v2112 = vunpack.c.l.b16 %v460
  %v2113 = vunpack.c.h.b16 %v460
  %v2114 = vunpack.c.l.b16 %v461
  %v2115 = vunpack.c.h.b16 %v461
  %v2116 = vunpack.c.l.b16 %v462
  %v2117 = vunpack.c.h.b16 %v462
  %v2118 = vunpack.c.l.b16 %v463
  %v2119 = vunpack.c.h.b16 %v463
  %v2120 = vunpack.c.l.b16 %v464
  %v2121 = vunpack.c.h.b16 %v464
  %v2122 = vunpack.c.l.b16 %v465
  %v2123 = vunpack.c.h.b16 %v465
  %v2124 = vunpack.c.l.b16 %v466
  %v2125 = vunpack.c.h.b16 %v466
  %v2126 = vunpack.c.l.b16 %v467
  %v2127 = vunpack.c.h.b16 %v467
  %v2128 = vunpack.c.l.b16 %v468
  %v2129 = vunpack.c.h.b16 %v468
  %v2130 = vunpack.c.l.b16 %v469
  %v2131 = vunpack.c.h.b16 %v469
  %v2132 = vunpack.c.l.b16 %v470
  %v2133 = vunpack.c.h.b16 %v470
  %v2134 = vunpack.c.l.b16 %v471
  %v2135 = vunpack.c.h.b16 %v471
  %v2136 = vunpack.c.l.b16 %v472
  %v2137 = vunpack.c.h.b16 %v472
  %v2138 = vunpack.c.l.b16 %v473
  %v2139 = vunpack.c.h.b16 %v473
  %v2140 = vunpack.c.l.b16 %v474
  %v2141 = vunpack.c.h.b16 %v474
  %v2142 = vunpack.c.l.b16 %v475
  %v2143 = vunpack.c.h.b16 %v475
  %v2144 = vunpack.c.l.b16 %v476
  %v2145 = vunpack.c.h.b16 %v476
  %v2146 = vunpack.c.l.b16 %v477
  %v2147 = vunpack.c.h.b16 %v477
  %v2148 = vunpack.c.l.b16 %v478
  %v2149 = vunpack.c.h.b16 %v478
  %v2150 = vunpack.c.l.b16 %v479
  %v2151 = vunpack.c.h.b16 %v479
  %v2152 = vunpack.c.l.b16 %v480
  %v2153 = vunpack.c.h.b16 %v480
  %v2154 = vunpack.c.l.b16 %v481
  %v2155 = vunpack.c.h.b16 %v481
  %v2156 = vunpack.c.l.b16 %v482
  %v2157 = vunpack.c.h.b16 %v482
  %v2158 = vunpack.c.l.b16 %v483
  %v2159 = vunpack.c.h.b16 %v483
  %v2160 = vunpack.c.l.b16 %v484
  %v2161 = vunpack.c.h.b16 %v484
  %v2162 = vunpack.c.l.b16 %v485
  %v2163 = vunpack.c.h.b16 %v485
  %v2164 = vunpack.c.l.b16 %v486
  %v2165 = vunpack.c.h.b16 %v486
  %v2166 = vunpack.c.l.b16 %v487
  %v2167 = vunpack.c.h.b16 %v487
  %v2168 = vunpack.c.l.b16 %v488
  %v2169 = vunpack.c.h.b16 %v488
  %v2170 = vunpack.c.l.b16 %v489
  %v2171 = vunpack.c.h.b16 %v489
  %v2172 = vunpack.c.l.b16 %v490
  %v2173 = vunpack.c.h.b16 %v490
  %v2174 = vunpack.c.l.b16 %v491
  %v2175 = vunpack.c.h.b16 %v491
  %v2176 = vunpack.c.l.b16 %v492
  %v2177 = vunpack.c.h.b16 %v492
  %v2178 = vunpack.c.l.b16 %v493
  %v2179 = vunpack.c.h.b16 %v493
  %v2180 = vunpack.c.l.b16 %v494
  %v2181 = vunpack.c.h.b16 %v494
  %v2182 = vunpack.c.l.b16 %v495
  %v2183 = vunpack.c.h.b16 %v495
  %v2184 = vunpack.c.l.b16 %v496
  %v2185 = vunpack.c.h.b16 %v496
  %v2186 = vunpack.c.l.b16 %v497
  %v2187 = vunpack.c.h.b16 %v497
  %v2188 = vunpack.c.l.b16 %v498
  %v2189 = vunpack.c.h.b16 %v498
  %v2190 = vunpack.c.l.b16 %v499
  %v2191 = vunpack.c.h.b16 %v499
  %v2192 = vunpack.c.l.b16 %v500
  %v2193 = vunpack.c.h.b16 %v500
  %v2194 = vunpack.c.l.b16 %v501
  %v2195 = vunpack.c.h.b16 %v501
  %v2196 = vunpack.c.l.b16 %v502
  %v2197 = vunpack.c.h.b16 %v502
  %v2198 = vunpack.c.l.b16 %v503
  %v2199 = vunpack.c.h.b16 %v503
  %v2200 = vunpack.c.l.b16 %v504
  %v2201 = vunpack.c.h.b16 %v504
  %v2202 = vunpack.c.l.b16 %v505
  %v2203 = vunpack.c.h.b16 %v505
  %v2204 = vunpack.c.l.b16 %v506
  %v2205 = vunpack.c.h.b16 %v506
  %v2206 = vunpack.c.l.b16 %v507
  %v2207 = vunpack.c.h.b16 %v507
  %v2208 = vunpack.c.l.b16 %v508
  %v2209 = vunpack.c.h.b16 %v508
  %v2210 = vunpack.c.l.b16 %v509
  %v2211 = vunpack.c.h.b16 %v509
  %v2212 = vunpack.c.l.b16 %v510
  %v2213 = vunpack.c.h.b16 %v510
  %v2214 = vunpack.c.l.b16 %v511
  %v2215 = vunpack.c.h.b16 %v511
  %v2216 = vunpack.c.l.b16 %v512
  %v2217 = vunpack.c.h.b16 %v512
  %v2218 = vunpack.c.l.b16 %v513
  %v2219 = vunpack.c.h.b16 %v513
  %v2220 = vunpack.c.l.b16 %v514
  %v2221 = vunpack.c.h.b16 %v514
  %v2222 = vunpack.c.l.b16 %v515
  %v2223 = vunpack.c.h.b16 %v515
  %v2224 = vunpack.c.l.b16 %v516
  %v2225 = vunpack.c.h.b16 %v516
  %v2226 = vunpack.c.l.b16 %v517
  %v2227 = vunpack.c.h.b16 %v517
  %v2228 = vunpack.c.l.b16 %v518
  %v2229 = vunpack.c.h.b16 %v518
  %v2230 = vunpack.c.l.b16 %v519
  %v2231 = vunpack.c.h.b16 %v519
  %v2232 = vunpack.c.l.b16 %v520
  %v2233 = vunpack.c.h.b16 %v520
  %v2234 = vunpack.c.l.b16 %v521
  %v2235 = vunpack.c.h.b16 %v521
  %v2236 = vunpack.c.l.b16 %v522
  %v2237 = vunpack.c.h.b16 %v522
  %v2238 = vunpack.c.l.b16 %v523
  %v2239 = vunpack.c.h.b16 %v523
  %v2240 = vunpack.c.l.b16 %v524
  %v2241 = vunpack.c.h.b16 %v524
  %v2242 = vunpack.c.l.b16 %v525
  %v2243 = vunpack.c.h.b16 %v525
  %v2244 = vunpack.c.l.b16 %v526
  %v2245 = vunpack.c.h.b16 %v526
  %v2246 = vunpack.c.l.b16 %v527
  %v2247 = vunpack.c.h.b16 %v527
  %v2248 = vunpack.c.l.b16 %v528
  %v2249 = vunpack.c.h.b16 %v528
  %v2250 = vunpack.c.l.b16 %v529
  %v2251 = vunpack.c.h.b16 %v529
  %v2252 = vunpack.c.l.b16 %v530
  %v2253 = vunpack.c.h.b16 %v530
  %v2254 = vunpack.c.l.b16 %v531
  %v2255 = vunpack.c.h.b16 %v531
  %v2256 = vunpack.c.l.b16 %v532
  %v2257 = vunpack.c.h.b16 %v532
  %v2258 = vunpack.c.l.b16 %v533
  %v2259 = vunpack.c.h.b16 %v533
  %v2260 = vunpack.c.l.b16 %v534
  %v2261 = vunpack.c.h.b16 %v534
  %v2262 = vunpack.c.l.b16 %v535
  %v2263 = vunpack.c.h.b16 %v535
  %v2264 = vunpack.c.l.b16 %v536
  %v2265 = vunpack.c.h.b16 %v536
  %v2266 = vunpack.c.l.b16 %v537
  %v2267 = vunpack.c.h.b16 %v537
  %v2268 = vunpack.c.l.b16 %v538
  %v2269 = vunpack.c.h.b16 %v538
  %v2270 = vunpack.c.l.b16 %v539
  %v2271 = vunpack.c.h.b16 %v539
  %v2272 = vunpack.c.l.b16 %v540
  %v2273 = vunpack.c.h.b16 %v540
  %v2274 = vunpack.c.l.b16 %v541
  %v2275 = vunpack.c.h.b16 %v541
  %v2276 = vunpack.c.l.b16 %v542
  %v2277 = vunpack.c.h.b16 %v542
  %v2278 = vunpack.c.l.b16 %v543
  %v2279 = vunpack.c.h.b16 %v543
  %v2280 = vunpack.c.l.b16 %v544
  %v2281 = vunpack.c.h.b16 %v544
  %v2282 = vunpack.c.l.b16 %v545
  %v2283 = vunpack.c.h.b16 %v545
  %v2284 = vunpack.c.l.b16 %v546
  %v2285 = vunpack.c.h.b16 %v546
  %v2286 = vunpack.c.l.b16 %v547
  %v2287 = vunpack.c.h.b16 %v547
  %v2288 = vunpack.c.l.b16 %v548
  %v2289 = vunpack.c.h.b16 %v548
  %v2290 = vunpack.c.l.b16 %v549
  %v2291 = vunpack.c.h.b16 %v549
  %v2292 = vunpack.c.l.b16 %v550
  %v2293 = vunpack.c.h.b16 %v550
  %v2294 = vunpack.c.l.b16 %v551
  %v2295 = vunpack.c.h.b16 %v551
  %v2296 = vunpack.c.l.b16 %v552
  %v2297 = vunpack.c.h.b16 %v552
  %v2298 = vunpack.c.l.b16 %v553
  %v2299 = vunpack.c.h.b16 %v553
  %v2300 = vunpack.c.l.b16 %v554
  %v2301 = vunpack.c.h.b16 %v554
  %v2302 = vunpack.c.l.b16 %v555
  %v2303 = vunpack.c.h.b16 %v555
  %v2304 = vunpack.c.l.b16 %v556
  %v2305 = vunpack.c.h.b16 %v556
  %v2306 = vunpack.c.l.b16 %v557
  %v2307 = vunpack.c.h.b16 %v557
  %v2308 = vunpack.c.l.b16 %v558
  %v2309 = vunpack.c.h.b16 %v558
  %v2310 = vunpack.c.l.b16 %v559
  %v2311 = vunpack.c.h.b16 %v559
  %v2312 = vunpack.c.l.b16 %v560
  %v2313 = vunpack.c.h.b16 %v560
  %v2314 = vunpack.c.l.b16 %v561
  %v2315 = vunpack.c.h.b16 %v561
  %v2316 = vunpack.c.l.b16 %v562
  %v2317 = vunpack.c.h.b16 %v562
  %v2318 = vunpack.c.l.b16 %v563
  %v2319 = vunpack.c.h.b16 %v563
  %v2320 = vunpack.c.l.b16 %v564
  %v2321 = vunpack.c.h.b16 %v564
  %v2322 = vunpack.c.l.b16 %v565
  %v2323 = vunpack.c.h.b16 %v565
  %v2324 = vunpack.c.l.b16 %v566
  %v2325 = vunpack.c.h.b16 %v566
  %v2326 = vunpack.c.l.b16 %v567
  %v2327 = vunpack.c.h.b16 %v567
  %v2328 = vunpack.c.l.b16 %v568
  %v2329 = vunpack.c.h.b16 %v568
  %v2330 = vunpack.c.l.b16 %v569
  %v2331 = vunpack.c.h.b16 %v569
  %v2332 = vunpack.c.l.b16 %v570
  %v2333 = vunpack.c.h.b16 %v570
  %v2334 = vunpack.c.l.b16 %v571
  %v2335 = vunpack.c.h.b16 %v571
  %v2336 = vunpack.c.l.b16 %v572
  %v2337 = vunpack.c.h.b16 %v572
  %v2338 = vunpack.c.l.b16 %v573
  %v2339 = vunpack.c.h.b16 %v573
  %v2340 = vunpack.c.l.b16 %v574
  %v2341 = vunpack.c.h.b16 %v574
  %v2342 = vunpack.c.l.b16 %v575
  %v2343 = vunpack.c.h.b16 %v575
  %v2344 = vunpack.c.l.b16 %v576
  %v2345 = vunpack.c.h.b16 %v576
  %v2346 = vunpack.c.l.b16 %v577
  %v2347 = vunpack.c.h.b16 %v577
  %v2348 = vunpack.c.l.b16 %v578
  %v2349 = vunpack.c.h.b16 %v578
  %v2350 = vunpack.c.l.b16 %v579
  %v2351 = vunpack.c.h.b16 %v579
  %v2352 = vunpack.c.l.b16 %v580
  %v2353 = vunpack.c.h.b16 %v580
  %v2354 = vunpack.c.l.b16 %v581
  %v2355 = vunpack.c.h.b16 %v581
  %v2356 = vunpack.c.l.b16 %v582
  %v2357 = vunpack.c.h.b16 %v582
  %v2358 = vunpack.c.l.b16 %v583
  %v2359 = vunpack.c.h.b16 %v583
  %v2360 = vunpack.c.l.b16 %v584
  %v2361 = vunpack.c.h.b16 %v584
  %v2362 = vunpack.c.l.b16 %v585
  %v2363 = vunpack.c.h.b16 %v585
  %v2364 = vunpack.c.l.b16 %v586
  %v2365 = vunpack.c.h.b16 %v586
  %v2366 = vunpack.c.l.b16 %v587
  %v2367 = vunpack.c.h.b16 %v587
  %v2368 = vunpack.c.l.b16 %v588
  %v2369 = vunpack.c.h.b16 %v588
  %v2370 = vunpack.c.l.b16 %v589
  %v2371 = vunpack.c.h.b16 %v589
  %v2372 = vunpack.c.l.b16 %v590
  %v2373 = vunpack.c.h.b16 %v590
  %v2374 = vunpack.c.l.b16 %v591
  %v2375 = vunpack.c.h.b16 %v591
  %v2376 = vunpack.c.l.b16 %v592
  %v2377 = vunpack.c.h.b16 %v592
  %v2378 = vunpack.c.l.b16 %v593
  %v2379 = vunpack.c.h.b16 %v593
  %v2380 = vunpack.c.l.b16 %v594
  %v2381 = vunpack.c.h.b16 %v594
  %v2382 = vunpack.c.l.b16 %v595
  %v2383 = vunpack.c.h.b16 %v595
  %v2384 = vunpack.c.l.b16 %v596
  %v2385 = vunpack.c.h.b16 %v596
  %v2386 = vunpack.c.l.b16 %v597
  %v2387 = vunpack.c.h.b16 %v597
  %v2388 = vunpack.c.l.b16 %v598
  %v2389 = vunpack.c.h.b16 %v598
  %v2390 = vpack.c.b16 %v1242, %v1238
  %v2391 = vpack.c.b16 %v1243, %v1239
  %v2392 = vpack.c.b16 %v1244, %v1240
  %v2393 = vpack.c.b16 %v1245, %v1241
  %v2394 = vpack.c.b16 %v1250, %v1246
  %v2395 = vpack.c.b16 %v1251, %v1247
  %v2396 = vpack.c.b16 %v1252, %v1248
  %v2397 = vpack.c.b16 %v1253, %v1249
  %v2398 = vpack.c.b16 %v1258, %v1254
  %v2399 = vpack.c.b16 %v1259, %v1255
  %v2400 = vpack.c.b16 %v1260, %v1256
  %v2401 = vpack.c.b16 %v1261, %v1257
  %v2402 = vpack.c.b16 %v1266, %v1262
  %v2403 = vpack.c.b16 %v1267, %v1263
  %v2404 = vpack.c.b16 %v1268, %v1264
  %v2405 = vpack.c.b16 %v1269, %v1265
  %v2406 = vpack.c.b16 %v1274, %v1270
  %v2407 = vpack.c.b16 %v1275, %v1271
  %v2408 = vpack.c.b16 %v1276, %v1272
  %v2409 = vpack.c.b16 %v1277, %v1273
  %v2410 = vpack.c.b16 %v1282, %v1278
  %v2411 = vpack.c.b16 %v1283, %v1279
  %v2412 = vpack.c.b16 %v1284, %v1280
  %v2413 = vpack.c.b16 %v1285, %v1281
  %v2414 = vpack.c.b16 %v1290, %v1286
  %v2415 = vpack.c.b16 %v1291, %v1287
  %v2416 = vpack.c.b16 %v1292, %v1288
  %v2417 = vpack.c.b16 %v1293, %v1289
  %v2418 = vpack.c.b16 %v1298, %v1294
  %v2419 = vpack.c.b16 %v1299, %v1295
  %v2420 = vpack.c.b16 %v1300, %v1296
  %v2421 = vpack.c.b16 %v1301, %v1297
  %v2422 = vpack.c.b16 %v1306, %v1302
  %v2423 = vpack.c.b16 %v1307, %v1303
  %v2424 = vpack.c.b16 %v1308, %v1304
  %v2425 = vpack.c.b16 %v1309, %v1305
  %v2426 = vpack.c.b16 %v1314, %v1310
  %v2427 = vpack.c.b16 %v1315, %v1311
  %v2428 = vpack.c.b16 %v1316, %v1312
  %v2429 = vpack.c.b16 %v1317, %v1313
  %v2430 = vpack.c.b16 %v1322, %v1318
  %v2431 = vpack.c.b16 %v1323, %v1319
  %v2432 = vpack.c.b16 %v1324, %v1320
  %v2433 = vpack.c.b16 %v1325, %v1321
  %v2434 = vpack.c.b16 %v1330, %v1326
  %v2435 = vpack.c.b16 %v1331, %v1327
  %v2436 = vpack.c.b16 %v1332, %v1328
  %v2437 = vpack.c.b16 %v1333, %v1329
  %v2438 = vpack.c.b16 %v1338, %v1334
  %v2439 = vpack.c.b16 %v1339, %v1335
  %v2440 = vpack.c.b16 %v1340, %v1336
  %v2441 = vpack.c.b16 %v1341, %v1337
  %v2442 = vpack.c.b16 %v1346, %v1342
  %v2443 = vpack.c.b16 %v1347, %v1343
  %v2444 = vpack.c.b16 %v1348, %v1344
  %v2445 = vpack.c.b16 %v1349, %v1345
  %v2446 = vpack.c.b16 %v1354, %v1350
  %v2447 = vpack.c.b16 %v1355, %v1351
  %v2448 = vpack.c.b16 %v1356, %v1352
  %v2449 = vpack.c.b16 %v1357, %v1353
  %v2450 = vpack.c.b16 %v1362, %v1358
  %v2451 = vpack.c.b16 %v1363, %v1359
  %v2452 = vpack.c.b16 %v1364, %v1360
  %v2453 = vpack.c.b16 %v1365, %v1361
  %v2454 = vpack.c.b16 %v1370, %v1366
  %v2455 = vpack.c.b16 %v1371, %v1367
  %v2456 = vpack.c.b16 %v1372, %v1368
  %v2457 = vpack.c.b16 %v1373, %v1369
  %v2458 = vpack.c.b16 %v1378, %v1374
  %v2459 = vpack.c.b16 %v1379, %v1375
  %v2460 = vpack.c.b16 %v1380, %v1376
  %v2461 = vpack.c.b16 %v1381, %v1377
  %v2462 = vpack.c.b16 %v1386, %v1382
  %v2463 = vpack.c.b16 %v1387, %v1383
  %v2464 = vpack.c.b16 %v1388, %v1384
  %v2465 = vpack.c.b16 %v1389, %v1385
  %v2466 = vpack.c.b16 %v1394, %v1390
  %v2467 = vpack.c.b16 %v1395, %v1391
  %v2468 = vpack.c.b16 %v1396, %v1392
  %v2469 = vpack.c.b16 %v1397, %v1393
  %v2470 = vpack.c.b16 %v1402, %v1398
  %v2471 = vpack.c.b16 %v1403, %v1399
  %v2472 = vpack.c.b16 %v1404, %v1400
  %v2473 = vpack.c.b16 %v1405, %v1401
  %v2474 = vpack.c.b16 %v1410, %v1406
  %v2475 = vpack.c.b16 %v1411, %v1407
  %v2476 = vpack.c.b16 %v1412, %v1408
  %v2477 = vpack.c.b16 %v1413, %v1409
  %v2478 = vpack.c.b16 %v1418, %v1414
  %v2479 = vpack.c.b16 %v1419, %v1415
  %v2480 = vpack.c.b16 %v1420, %v1416
  %v2481 = vpack.c.b16 %v1421, %v1417
  %v2482 = vpack.c.b16 %v1426, %v1422
  %v2483 = vpack.c.b16 %v1427, %v1423
  %v2484 = vpack.c.b16 %v1428, %v1424
  %v2485 = vpack.c.b16 %v1429, %v1425
  %v2486 = vpack.c.b16 %v1434, %v1430
  %v2487 = vpack.c.b16 %v1435, %v1431
  %v2488 = vpack.c.b16 %v1436, %v1432
  %v2489 = vpack.c.b16 %v1437, %v1433
  %v2490 = vpack.c.b16 %v1442, %v1438
  %v2491 = vpack.c.b16 %v1443, %v1439
  %v2492 = vpack.c.b16 %v1444, %v1440
  %v2493 = vpack.c.b16 %v1445, %v1441
  %v2494 = vpack.c.b16 %v1450, %v1446
  %v2495 = vpack.c.b16 %v1451, %v1447
  %v2496 = vpack.c.b16 %v1452, %v1448
  %v2497 = vpack.c.b16 %v1453, %v1449
  %v2498 = vpack.c.b16 %v1458, %v1454
  %v2499 = vpack.c.b16 %v1459, %v1455
  %v2500 = vpack.c.b16 %v1460, %v1456
  %v2501 = vpack.c.b16 %v1461, %v1457
  %v2502 = vpack.c.b16 %v1466, %v1462
  %v2503 = vpack.c.b16 %v1467, %v1463
  %v2504 = vpack.c.b16 %v1468, %v1464
  %v2505 = vpack.c.b16 %v1469, %v1465
  %v2506 = vpack.c.b16 %v1474, %v1470
  %v2507 = vpack.c.b16 %v1475, %v1471
  %v2508 = vpack.c.b16 %v1476, %v1472
  %v2509 = vpack.c.b16 %v1477, %v1473
  %v2510 = vpack.c.b16 %v1482, %v1478
  %v2511 = vpack.c.b16 %v1483, %v1479
  %v2512 = vpack.c.b16 %v1484, %v1480
  %v2513 = vpack.c.b16 %v1485, %v1481
  %v2514 = vpack.c.b16 %v1490, %v1486
  %v2515 = vpack.c.b16 %v1491, %v1487
  %v2516 = vpack.c.b16 %v1492, %v1488
  %v2517 = vpack.c.b16 %v1493, %v1489
  %v2518 = vpack.c.b16 %v1498, %v1494
  %v2519 = vpack.c.b16 %v1499, %v1495
  %v2520 = vpack.c.b16 %v1500, %v1496
  %v2521 = vpack.c.b16 %v1501, %v1497
  %v2522 = vpack.c.b16 %v1506, %v1502
  %v2523 = vpack.c.b16 %v1507, %v1503
  %v2524 = vpack.c.b16 %v1508, %v1504
  %v2525 = vpack.c.b16 %v1509, %v1505
  %v2526 = vpack.c.b16 %v1514, %v1510
  %v2527 = vpack.c.b16 %v1515, %v1511
  %v2528 = vpack.c.b16 %v1516, %v1512
  %v2529 = vpack.c.b16 %v1517, %v1513
  %v2530 = vpack.c.b16 %v1522, %v1518
  %v2531 = vpack.c.b16 %v1523, %v1519
  %v2532 = vpack.c.b16 %v1524, %v1520
  %v2533 = vpack.c.b16 %v1525, %v1521
  %v2534 = vpack.c.b16 %v1530, %v1526
  %v2535 = vpack.c.b16 %v1531, %v1527
  %v2536 = vpack.c.b16 %v1532, %v1528
  %v2537 = vpack.c.b16 %v1533, %v1529
  %v2538 = vpack.c.b16 %v1538, %v1534
  %v2539 = vpack.c.b16 %v1539, %v1535
  %v2540 = vpack.c.b16 %v1540, %v1536
  %v2541 = vpack.c.b16 %v1541, %v1537
  %v2542 = vpack.c.b16 %v1546, %v1542
  %v2543 = vpack.c.b16 %v1547, %v1543
  %v2544 = vpack.c.b16 %v1548, %v1544
  %v2545 = vpack.c.b16 %v1549, %v1545
  %v2546 = vpack.c.b16 %v1554, %v1550
  %v2547 = vpack.c.b16 %v1555, %v1551
  %v2548 = vpack.c.b16 %v1556, %v1552
  %v2549 = vpack.c.b16 %v1557, %v1553
  %v2550 = vpack.c.b16 %v1562, %v1558
  %v2551 = vpack.c.b16 %v1563, %v1559
  %v2552 = vpack.c.b16 %v1564, %v1560
  %v2553 = vpack.c.b16 %v1565, %v1561
  %v2554 = vpack.c.b16 %v1570, %v1566
  %v2555 = vpack.c.b16 %v1571, %v1567
  %v2556 = vpack.c.b16 %v1572, %v1568
  %v2557 = vpack.c.b16 %v1573, %v1569
  %v2558 = vpack.c.b16 %v1578, %v1574
  %v2559 = vpack.c.b16 %v1579, %v1575
  %v2560 = vpack.c.b16 %v1580, %v1576
  %v2561 = vpack.c.b16 %v1581, %v1577
  %v2562 = vpack.c.b16 %v1586, %v1582
  %v2563 = vpack.c.b16 %v1587, %v1583
  %v2564 = vpack.c.b16 %v1588, %v1584
  %v2565 = vpack.c.b16 %v1589, %v1585
  %v2566 = vpack.c.b16 %v1594, %v1590
  %v2567 = vpack.c.b16 %v1595, %v1591
  %v2568 = vpack.c.b16 %v1596, %v1592
  %v2569 = vpack.c.b16 %v1597, %v1593
  %v2570 = vpack.c.b16 %v1602, %v1598
  %v2571 = vpack.c.b16 %v1603, %v1599
  %v2572 = vpack.c.b16 %v1604, %v1600
  %v2573 = vpack.c.b16 %v1605, %v1601
  %v2574 = vpack.c.b16 %v1610, %v1606
  %v2575 = vpack.c.b16 %v1611, %v1607
  %v2576 = vpack.c.b16 %v1612, %v1608
  %v2577 = vpack.c.b16 %v1613, %v1609
  %v2578 = vpack.c.b16 %v1618, %v1614
  %v2579 = vpack.c.b16 %v1619, %v1615
  %v2580 = vpack.c.b16 %v1620, %v1616
  %v2581 = vpack.c.b16 %v1621, %v1617
  %v2582 = vpack.c.b16 %v1626, %v1622
  %v2583 = vpack.c.b16 %v1627, %v1623
  %v2584 = vpack.c.b16 %v1628, %v1624
  %v2585 = vpack.c.b16 %v1629, %v1625
  %v2586 = vpack.c.b16 %v1634, %v1630
  %v2587 = vpack.c.b16 %v1635, %v1631
  %v2588 = vpack.c.b16 %v1636, %v1632
  %v2589 = vpack.c.b16 %v1637, %v1633
  %v2590 = vpack.c.b16 %v1642, %v1638
  %v2591 = vpack.c.b16 %v1643, %v1639
  %v2592 = vpack.c.b16 %v1644, %v1640
  %v2593 = vpack.c.b16 %v1645, %v1641
  %v2594 = vpack.c.b16 %v1650, %v1646
  %v2595 = vpack.c.b16 %v1651, %v1647
  %v2596 = vpack.c.b16 %v1652, %v1648
  %v2597 = vpack.c.b16 %v1653, %v1649
  %v2598 = vpack.c.b16 %v1658, %v1654
  %v2599 = vpack.c.b16 %v1659, %v1655
  %v2600 = vpack.c.b16 %v1660, %v1656
  %v2601 = vpack.c.b16 %v1661, %v1657
  %v2602 = vpack.c.b16 %v1666, %v1662
  %v2603 = vpack.c.b16 %v1667, %v1663
  %v2604 = vpack.c.b16 %v1668, %v1664
  %v2605 = vpack.c.b16 %v1669, %v1665
  %v2606 = vpack.c.b16 %v1674, %v1670
  %v2607 = vpack.c.b16 %v1675, %v1671
  %v2608 = vpack.c.b16 %v1676, %v1672
  %v2609 = vpack.c.b16 %v1677, %v1673
  %v2610 = vpack.c.b16 %v1682, %v1678
  %v2611 = vpack.c.b16 %v1683, %v1679
  %v2612 = vpack.c.b16 %v1684, %v1680
  %v2613 = vpack.c.b16 %v1685, %v1681
  %v2614 = vpack.c.b16 %v1690, %v1686
  %v2615 = vpack.c.b16 %v1691, %v1687
  %v2616 = vpack.c.b16 %v1692, %v1688
  %v2617 = vpack.c.b16 %v1693, %v1689
  %v2618 = vpack.c.b16 %v1698, %v1694
  %v2619 = vpack.c.b16 %v1699, %v1695
  %v2620 = vpack.c.b16 %v1700, %v1696
  %v2621 = vpack.c.b16 %v1701, %v1697
  %v2622 = vpack.c.b16 %v1706, %v1702
  %v2623 = vpack.c.b16 %v1707, %v1703
  %v2624 = vpack.c.b16 %v1708, %v1704
  %v2625 = vpack.c.b16 %v1709, %v1705
  %v2626 = vpack.c.b16 %v1714, %v1710
  %v2627 = vpack.c.b16 %v1715, %v1711
  %v2628 = vpack.c.b16 %v1716, %v1712
  %v2629 = vpack.c.b16 %v1717, %v1713
  %v2630 = vpack.c.b16 %v1722, %v1718
  %v2631 = vpack.c.b16 %v1723, %v1719
  %v2632 = vpack.c.b16 %v1724, %v1720
  %v2633 = vpack.c.b16 %v1725, %v1721
  %v2634 = vpack.c.b16 %v1730, %v1726
  %v2635 = vpack.c.b16 %v1731, %v1727
  %v2636 = vpack.c.b16 %v1732, %v1728
  %v2637 = vpack.c.b16 %v1733, %v1729
  %v2638 = vpack.c.b16 %v1738, %v1734
  %v2639 = vpack.c.b16 %v1739, %v1735
  %v2640 = vpack.c.b16 %v1740, %v1736
  %v2641 = vpack.c.b16 %v1741, %v1737
  %v2642 = vpack.c.b16 %v1746, %v1742
  %v2643 = vpack.c.b16 %v1747, %v1743
  %v2644 = vpack.c.b16 %v1748, %v1744
  %v2645 = vpack.c.b16 %v1749, %v1745
  %v2646 = vpack.c.b16 %v1754, %v1750
  %v2647 = vpack.c.b16 %v1755, %v1751
  %v2648 = vpack.c.b16 %v1756, %v1752
  %v2649 = vpack.c.b16 %v1757, %v1753
  %v2650 = vpack.c.b16 %v1762, %v1758
  %v2651 = vpack.c.b16 %v1763, %v1759
  %v2652 = vpack.c.b16 %v1764, %v1760
  %v2653 = vpack.c.b16 %v1765, %v1761
  %v2654 = vpack.c.b16 %v1770, %v1766
  %v2655 = vpack.c.b16 %v1771, %v1767
  %v2656 = vpack.c.b16 %v1772, %v1768
  %v2657 = vpack.c.b16 %v1773, %v1769
  %v2658 = vpack.c.b16 %v1778, %v1774
  %v2659 = vpack.c.b16 %v1779, %v1775
  %v2660 = vpack.c.b16 %v1780, %v1776
  %v2661 = vpack.c.b16 %v1781, %v1777
  %v2662 = vpack.c.b16 %v1786, %v1782
  %v2663 = vpack.c.b16 %v1787, %v1783
  %v2664 = vpack.c.b16 %v1788, %v1784
  %v2665 = vpack.c.b16 %v1789, %v1785
  %v2666 = vpack.c.b16 %v1794, %v1790
  %v2667 = vpack.c.b16 %v1795, %v1791
  %v2668 = vpack.c.b16 %v1796, %v1792
  %v2669 = vpack.c.b16 %v1797, %v1793
  %v2670 = vpack.c.b16 %v1802, %v1798
  %v2671 = vpack.c.b16 %v1803, %v1799
  %v2672 = vpack.c.b16 %v1804, %v1800
  %v2673 = vpack.c.b16 %v1805, %v1801
  %v2674 = vpack.c.b16 %v1810, %v1806
  %v2675 = vpack.c.b16 %v1811, %v1807
  %v2676 = vpack.c.b16 %v1812, %v1808
  %v2677 = vpack.c.b16 %v1813, %v1809
  %v2678 = vpack.c.b16 %v1818, %v1814
  %v2679 = vpack.c.b16 %v1819, %v1815
  %v2680 = vpack.c.b16 %v1820, %v1816
  %v2681 = vpack.c.b16 %v1821, %v1817
  %v2682 = vpack.c.b16 %v1826, %v1822
  %v2683 = vpack.c.b16 %v1827, %v1823
  %v2684 = vpack.c.b16 %v1828, %v1824
  %v2685 = vpack.c.b16 %v1829, %v1825
  %v2686 = vpack.c.b16 %v1834, %v1830
  %v2687 = vpack.c.b16 %v1835, %v1831
  %v2688 = vpack.c.b16 %v1836, %v1832
  %v2689 = vpack.c.b16 %v1837, %v1833
  %v2690 = vpack.c.b16 %v1842, %v1838
  %v2691 = vpack.c.b16 %v1843, %v1839
  %v2692 = vpack.c.b16 %v1844, %v1840
  %v2693 = vpack.c.b16 %v1845, %v1841
  %v2694 = vpack.c.b16 %v1850, %v1846
  %v2695 = vpack.c.b16 %v1851, %v1847
  %v2696 = vpack.c.b16 %v1852, %v1848
  %v2697 = vpack.c.b16 %v1853, %v1849
  %v2698 = vpack.c.b16 %v1858, %v1854
  %v2699 = vpack.c.b16 %v1859, %v1855
  %v2700 = vpack.c.b16 %v1860, %v1856
  %v2701 = vpack.c.b16 %v1861, %v1857
  %v2702 = vpack.c.b16 %v1866, %v1862
  %v2703 = vpack.c.b16 %v1867, %v1863
  %v2704 = vpack.c.b16 %v1868, %v1864
  %v2705 = vpack.c.b16 %v1869, %v1865
  %v2706 = vpack.c.b16 %v1874, %v1870
  %v2707 = vpack.c.b16 %v1875, %v1871
  %v2708 = vpack.c.b16 %v1876, %v1872
  %v2709 = vpack.c.b16 %v1877, %v1873
  %v2710 = vpack.c.b16 %v1882, %v1878
  %v2711 = vpack.c.b16 %v1883, %v1879
  %v2712 = vpack.c.b16 %v1884, %v1880
  %v2713 = vpack.c.b16 %v1885, %v1881
  %v2714 = vpack.c.b16 %v1890, %v1886
  %v2715 = vpack.c.b16 %v1891, %v1887
  %v2716 = vpack.c.b16 %v1892, %v1888
  %v2717 = vpack.c.b16 %v1893, %v1889
  %v2718 = vpack.c.b16 %v1898, %v1894
  %v2719 = vpack.c.b16 %v1899, %v1895
  %v2720 = vpack.c.b16 %v1900, %v1896
  %v2721 = vpack.c.b16 %v1901, %v1897
  %v2722 = vpack.c.b16 %v1906, %v1902
  %v2723 = vpack.c.b16 %v1907, %v1903
  %v2724 = vpack.c.b16 %v1908, %v1904
  %v2725 = vpack.c.b16 %v1909, %v1905
  %v2726 = vpack.c.b16 %v1914, %v1910
  %v2727 = vpack.c.b16 %v1915, %v1911
  %v2728 = vpack.c.b16 %v1916, %v1912
  %v2729 = vpack.c.b16 %v1917, %v1913
  %v2730 = vpack.c.b16 %v1922, %v1918
  %v2731 = vpack.c.b16 %v1923, %v1919
  %v2732 = vpack.c.b16 %v1924, %v1920
  %v2733 = vpack.c.b16 %v1925, %v1921
  %v2734 = vpack.c.b16 %v1930, %v1926
  %v2735 = vpack.c.b16 %v1931, %v1927
  %v2736 = vpack.c.b16 %v1932, %v1928
  %v2737 = vpack.c.b16 %v1933, %v1929
  %v2738 = vpack.c.b16 %v1938, %v1934
  %v2739 = vpack.c.b16 %v1939, %v1935
  %v2740 = vpack.c.b16 %v1940, %v1936
  %v2741 = vpack.c.b16 %v1941, %v1937
  %v2742 = vpack.c.b16 %v1946, %v1942
  %v2743 = vpack.c.b16 %v1947, %v1943
  %v2744 = vpack.c.b16 %v1948, %v1944
  %v2745 = vpack.c.b16 %v1949, %v1945
  %v2746 = vpack.c.b16 %v1954, %v1950
  %v2747 = vpack.c.b16 %v1955, %v1951
  %v2748 = vpack.c.b16 %v1956, %v1952
  %v2749 = vpack.c.b16 %v1957, %v1953
  %v2750 = vpack.c.b16 %v1962, %v1958
  %v2751 = vpack.c.b16 %v1963, %v1959
  %v2752 = vpack.c.b16 %v1964, %v1960
  %v2753 = vpack.c.b16 %v1965, %v1961
  %v2754 = vpack.c.b16 %v1970, %v1966
  %v2755 = vpack.c.b16 %v1971, %v1967
  %v2756 = vpack.c.b16 %v1972, %v1968
  %v2757 = vpack.c.b16 %v1973, %v1969
  %v2758 = vpack.c.b16 %v1978, %v1974
  %v2759 = vpack.c.b16 %v1979, %v1975
  %v2760 = vpack.c.b16 %v1980, %v1976
  %v2761 = vpack.c.b16 %v1981, %v1977
  %v2762 = vpack.c.b16 %v1986, %v1982
  %v2763 = vpack.c.b16 %v1987, %v1983
  %v2764 = vpack.c.b16 %v1988, %v1984
  %v2765 = vpack.c.b16 %v1989, %v1985
  %v2766 = vpack.c.b16 %v1994, %v1990
  %v2767 = vpack.c.b16 %v1995, %v1991
  %v2768 = vpack.c.b16 %v1996, %v1992
  %v2769 = vpack.c.b16 %v1997, %v1993
  %v2770 = vpack.c.b16 %v2002, %v1998
  %v2771 = vpack.c.b16 %v2003, %v1999
  %v2772 = vpack.c.b16 %v2004, %v2000
  %v2773 = vpack.c.b16 %v2005, %v2001
  %v2774 = vpack.c.b16 %v2010, %v2006
  %v2775 = vpack.c.b16 %v2011, %v2007
  %v2776 = vpack.c.b16 %v2012, %v2008
  %v2777 = vpack.c.b16 %v2013, %v2009
  %v2778 = vpack.c.b16 %v2018, %v2014
  %v2779 = vpack.c.b16 %v2019, %v2015
  %v2780 = vpack.c.b16 %v2020, %v2016
  %v2781 = vpack.c.b16 %v2021, %v2017
  %v2782 = vpack.c.b16 %v2026, %v2022
  %v2783 = vpack.c.b16 %v2027, %v2023
  %v2784 = vpack.c.b16 %v2028, %v2024
  %v2785 = vpack.c.b16 %v2029, %v2025
  %v2786 = vpack.c.b16 %v2034, %v2030
  %v2787 = vpack.c.b16 %v2035, %v2031
  %v2788 = vpack.c.b16 %v2036, %v2032
  %v2789 = vpack.c.b16 %v2037, %v2033
  %v2790 = vpack.c.b16 %v2042, %v2038
  %v2791 = vpack.c.b16 %v2043, %v2039
  %v2792 = vpack.c.b16 %v2044, %v2040
  %v2793 = vpack.c.b16 %v2045, %v2041
  %v2794 = vpack.c.b16 %v2050, %v2046
  %v2795 = vpack.c.b16 %v2051, %v2047
  %v2796 = vpack.c.b16 %v2052, %v2048
  %v2797 = vpack.c.b16 %v2053, %v2049
  %v2798 = vpack.c.b16 %v2058, %v2054
  %v2799 = vpack.c.b16 %v2059, %v2055
  %v2800 = vpack.c.b16 %v2060, %v2056
  %v2801 = vpack.c.b16 %v2061, %v2057
  %v2802 = vpack.c.b16 %v2066, %v2062
  %v2803 = vpack.c.b16 %v2067, %v2063
  %v2804 = vpack.c.b16 %v2068, %v2064
  %v2805 = vpack.c.b16 %v2069, %v2065
  %v2806 = vpack.c.b16 %v2074, %v2070
  %v2807 = vpack.c.b16 %v2075, %v2071
  %v2808 = vpack.c.b16 %v2076, %v2072
  %v2809 = vpack.c.b16 %v2077, %v2073
  %v2810 = vpack.c.b16 %v2082, %v2078
  %v2811 = vpack.c.b16 %v2083, %v2079
  %v2812 = vpack.c.b16 %v2084, %v2080
  %v2813 = vpack.c.b16 %v2085, %v2081
  %v2814 = vpack.c.b16 %v2090, %v2086
  %v2815 = vpack.c.b16 %v2091, %v2087
  %v2816 = vpack.c.b16 %v2092, %v2088
  %v2817 = vpack.c.b16 %v2093, %v2089
  %v2818 = vpack.c.b16 %v2098, %v2094
  %v2819 = vpack.c.b16 %v2099, %v2095
  %v2820 = vpack.c.b16 %v2100, %v2096
  %v2821 = vpack.c.b16 %v2101, %v2097
  %v2822 = vpack.c.b16 %v2106, %v2102
  %v2823 = vpack.c.b16 %v2107, %v2103
  %v2824 = vpack.c.b16 %v2108, %v2104
  %v2825 = vpack.c.b16 %v2109, %v2105
  %v2826 = vpack.c.b16 %v2114, %v2110
  %v2827 = vpack.c.b16 %v2115, %v2111
  %v2828 = vpack.c.b16 %v2116, %v2112
  %v2829 = vpack.c.b16 %v2117, %v2113
  %v2830 = vpack.c.b16 %v2122, %v2118
  %v2831 = vpack.c.b16 %v2123, %v2119
  %v2832 = vpack.c.b16 %v2124, %v2120
  %v2833 = vpack.c.b16 %v2125, %v2121
  %v2834 = vpack.c.b16 %v2130, %v2126
  %v2835 = vpack.c.b16 %v2131, %v2127
  %v2836 = vpack.c.b16 %v2132, %v2128
  %v2837 = vpack.c.b16 %v2133, %v2129
  %v2838 = vpack.c.b16 %v2138, %v2134
  %v2839 = vpack.c.b16 %v2139, %v2135
  %v2840 = vpack.c.b16 %v2140, %v2136
  %v2841 = vpack.c.b16 %v2141, %v2137
  %v2842 = vpack.c.b16 %v2146, %v2142
  %v2843 = vpack.c.b16 %v2147, %v2143
  %v2844 = vpack.c.b16 %v2148, %v2144
  %v2845 = vpack.c.b16 %v2149, %v2145
  %v2846 = vpack.c.b16 %v2154, %v2150
  %v2847 = vpack.c.b16 %v2155, %v2151
  %v2848 = vpack.c.b16 %v2156, %v2152
  %v2849 = vpack.c.b16 %v2157, %v2153
  %v2850 = vpack.c.b16 %v2162, %v2158
  %v2851 = vpack.c.b16 %v2163, %v2159
  %v2852 = vpack.c.b16 %v2164, %v2160
  %v2853 = vpack.c.b16 %v2165, %v2161
  %v2854 = vpack.c.b16 %v2170, %v2166
  %v2855 = vpack.c.b16 %v2171, %v2167
  %v2856 = vpack.c.b16 %v2172, %v2168
  %v2857 = vpack.c.b16 %v2173, %v2169
  %v2858 = vpack.c.b16 %v2178, %v2174
  %v2859 = vpack.c.b16 %v2179, %v2175
  %v2860 = vpack.c.b16 %v2180, %v2176
  %v2861 = vpack.c.b16 %v2181, %v2177
  %v2862 = vpack.c.b16 %v2186, %v2182
  %v2863 = vpack.c.b16 %v2187, %v2183
  %v2864 = vpack.c.b16 %v2188, %v2184
  %v2865 = vpack.c.b16 %v2189, %v2185
  %v2866 = vpack.c.b16 %v2194, %v2190
  %v2867 = vpack.c.b16 %v2195, %v2191
  %v2868 = vpack.c.b16 %v2196, %v2192
  %v2869 = vpack.c.b16 %v2197, %v2193
  %v2870 = vpack.c.b16 %v2202, %v2198
  %v2871 = vpack.c.b16 %v2203, %v2199
  %v2872 = vpack.c.b16 %v2204, %v2200
  %v2873 = vpack.c.b16 %v2205, %v2201
  %v2874 = vpack.c.b16 %v2210, %v2206
  %v2875 = vpack.c.b16 %v2211, %v2207
  %v2876 = vpack.c.b16 %v2212, %v2208
  %v2877 = vpack.c.b16 %v2213, %v2209
  %v2878 = vpack.c.b16 %v2218, %v2214
  %v2879 = vpack.c.b16 %v2219, %v2215
  %v2880 = vpack.c.b16 %v2220, %v2216
  %v2881 = vpack.c.b16 %v2221, %v2217
  %v2882 = vpack.c.b16 %v2226, %v2222
  %v2883 = vpack.c.b16 %v2227, %v2223
  %v2884 = vpack.c.b16 %v2228, %v2224
  %v2885 = vpack.c.b16 %v2229, %v2225
  %v2886 = vpack.c.b16 %v2234, %v2230
  %v2887 = vpack.c.b16 %v2235, %v2231
  %v2888 = vpack.c.b16 %v2236, %v2232
  %v2889 = vpack.c.b16 %v2237, %v2233
  %v2890 = vpack.c.b16 %v2242, %v2238
  %v2891 = vpack.c.b16 %v2243, %v2239
  %v2892 = vpack.c.b16 %v2244, %v2240
  %v2893 = vpack.c.b16 %v2245, %v2241
  %v2894 = vpack.c.b16 %v2250, %v2246
  %v2895 = vpack.c.b16 %v2251, %v2247
  %v2896 = vpack.c.b16 %v2252, %v2248
  %v2897 = vpack.c.b16 %v2253, %v2249
  %v2898 = vpack.c.b16 %v2258, %v2254
  %v2899 = vpack.c.b16 %v2259, %v2255
  %v2900 = vpack.c.b16 %v2260, %v2256
  %v2901 = vpack.c.b16 %v2261, %v2257
  %v2902 = vpack.c.b16 %v2266, %v2262
  %v2903 = vpack.c.b16 %v2267, %v2263
  %v2904 = vpack.c.b16 %v2268, %v2264
  %v2905 = vpack.c.b16 %v2269, %v2265
  %v2906 = vpack.c.b16 %v2274, %v2270
  %v2907 = vpack.c.b16 %v2275, %v2271
  %v2908 = vpack.c.b16 %v2276, %v2272
  %v2909 = vpack.c.b16 %v2277, %v2273
  %v2910 = vpack.c.b16 %v2282, %v2278
  %v2911 = vpack.c.b16 %v2283, %v2279
  %v2912 = vpack.c.b16 %v2284, %v2280
  %v2913 = vpack.c.b16 %v2285, %v2281
  %v2914 = vpack.c.b16 %v2290, %v2286
  %v2915 = vpack.c.b16 %v2291, %v2287
  %v2916 = vpack.c.b16 %v2292, %v2288
  %v2917 = vpack.c.b16 %v2293, %v2289
  %v2918 = vpack.c.b16 %v2298, %v2294
  %v2919 = vpack.c.b16 %v2299, %v2295
  %v2920 = vpack.c.b16 %v2300, %v2296
  %v2921 = vpack.c.b16 %v2301, %v2297
  %v2922 = vpack.c.b16 %v2306, %v2302
  %v2923 = vpack.c.b16 %v2307, %v2303
  %v2924 = vpack.c.b16 %v2308, %v2304
  %v2925 = vpack.c.b16 %v2309, %v2305
  %v2926 = vpack.c.b16 %v2314, %v2310
  %v2927 = vpack.c.b16 %v2315, %v2311
  %v2928 = vpack.c.b16 %v2316, %v2312
  %v2929 = vpack.c.b16 %v2317, %v2313
  %v2930 = vpack.c.b16 %v2322, %v2318
  %v2931 = vpack.c.b16 %v2323, %v2319
  %v2932 = vpack.c.b16 %v2324, %v2320
  %v2933 = vpack.c.b16 %v2325, %v2321
  %v2934 = vpack.c.b16 %v2330, %v2326
  %v2935 = vpack.c.b16 %v2331, %v2327
  %v2936 = vpack.c.b16 %v2332, %v2328
  %v2937 = vpack.c.b16 %v2333, %v2329
  %v2938 = vpack.c.b16 %v2338, %v2334
  %v2939 = vpack.c.b16 %v2339, %v2335
  %v2940 = vpack.c.b16 %v2340, %v2336
  %v2941 = vpack.c.b16 %v2341, %v2337
  %v2942 = vpack.c.b16 %v2346, %v2342
  %v2943 = vpack.c.b16 %v2347, %v2343
  %v2944 = vpack.c.b16 %v2348, %v2344
  %v2945 = vpack.c.b16 %v2349, %v2345
  %v2946 = vpack.c.b16 %v2354, %v2350
  %v2947 = vpack.c.b16 %v2355, %v2351
  %v2948 = vpack.c.b16 %v2356, %v2352
  %v2949 = vpack.c.b16 %v2357, %v2353
  %v2950 = vpack.c.b16 %v2362, %v2358
  %v2951 = vpack.c.b16 %v2363, %v2359
  %v2952 = vpack.c.b16 %v2364, %v2360
  %v2953 = vpack.c.b16 %v2365, %v2361
  %v2954 = vpack.c.b16 %v2370, %v2366
  %v2955 = vpack.c.b16 %v2371, %v2367
  %v2956 = vpack.c.b16 %v2372, %v2368
  %v2957 = vpack.c.b16 %v2373, %v2369
  %v2958 = vpack.c.b16 %v2378, %v2374
  %v2959 = vpack.c.b16 %v2379, %v2375
  %v2960 = vpack.c.b16 %v2380, %v2376
  %v2961 = vpack.c.b16 %v2381, %v2377
  %v2962 = vpack.c.b16 %v2386, %v2382
  %v2963 = vpack.c.b16 %v2387, %v2383
  %v2964 = vpack.c.b16 %v2388, %v2384
  %v2965 = vpack.c.b16 %v2389, %v2385
  %3542 = vmatprep.subr.bf16.mxu0 %v2391
  %3543 = vmatpush1.bf16.msra.mxu0 %v2390
  %3544 = vmatprep.subr.bf16.mxu0 %v2395
  %3545 = vmatpush1.bf16.msra.mxu0 %v2394
  %3546 = vmatprep.subr.bf16.mxu0 %v2399
  %3547 = vmatpush1.bf16.msra.mxu0 %v2398
  %3548 = vmatprep.subr.bf16.mxu0 %v2403
  %3549 = vmatpush1.bf16.msra.mxu0 %v2402
  %3550 = vmatprep.subr.bf16.mxu0 %v2407
  %3551 = vmatpush1.bf16.msra.mxu0 %v2406
  %3552 = vmatprep.subr.bf16.mxu0 %v2411
  %3553 = vmatpush1.bf16.msra.mxu0 %v2410
  %3554 = vmatprep.subr.bf16.mxu0 %v2415
  %3555 = vmatpush1.bf16.msra.mxu0 %v2414
  %3556 = vmatprep.subr.bf16.mxu0 %v2419
  %3557 = vmatpush1.bf16.msra.mxu0 %v2418
  %3558 = vmatprep.subr.bf16.mxu0 %v2423
  %3559 = vmatpush1.bf16.msra.mxu0 %v2422
  %3560 = vmatprep.subr.bf16.mxu0 %v2427
  %3561 = vmatpush1.bf16.msra.mxu0 %v2426
  %3562 = vmatprep.subr.bf16.mxu0 %v2431
  %3563 = vmatpush1.bf16.msra.mxu0 %v2430
  %3564 = vmatprep.subr.bf16.mxu0 %v2435
  %3565 = vmatpush1.bf16.msra.mxu0 %v2434
  %3566 = vmatprep.subr.bf16.mxu0 %v2439
  %3567 = vmatpush1.bf16.msra.mxu0 %v2438
  %3568 = vmatprep.subr.bf16.mxu0 %v2443
  %3569 = vmatpush1.bf16.msra.mxu0 %v2442
  %3570 = vmatprep.subr.bf16.mxu0 %v2447
  %3571 = vmatpush1.bf16.msra.mxu0 %v2446
  %3572 = vmatprep.subr.bf16.mxu0 %v2451
  %3573 = vmatpush1.bf16.msra.mxu0 %v2450
  %3574 = vmatprep.mubr.bf16.mxu0 %v627
  %3575 = vmatmul.mubr.bf16.gmra.mrb[0].mxu0 %v626
  %v3576 = vpop.f32.mrb[0].mxu0
  %v3577 = vadd.f32 0.0, %v3576
  %v3578 = vpop.f32.mrb[0].mxu0
  %v3579 = vadd.f32 0.0, %v3578
  %v3580 = vpop.f32.mrb[0].mxu0
  %v3581 = vpop.f32.mrb[0].mxu0
  %3582 = vdwg.mxu0
  %3583 = vmatprep.subr.bf16.mxu0 %v2455
  %3584 = vmatpush1.bf16.msra.mxu0 %v2454
  %3585 = vmatprep.subr.bf16.mxu0 %v2459
  %3586 = vmatpush1.bf16.msra.mxu0 %v2458
  %3587 = vmatprep.subr.bf16.mxu0 %v2463
  %3588 = vmatpush1.bf16.msra.mxu0 %v2462
  %3589 = vmatprep.subr.bf16.mxu0 %v2467
  %3590 = vmatpush1.bf16.msra.mxu0 %v2466
  %3591 = vmatprep.subr.bf16.mxu0 %v2471
  %3592 = vmatpush1.bf16.msra.mxu0 %v2470
  %3593 = vmatprep.subr.bf16.mxu0 %v2475
  %3594 = vmatpush1.bf16.msra.mxu0 %v2474
  %3595 = vmatprep.subr.bf16.mxu0 %v2479
  %3596 = vmatpush1.bf16.msra.mxu0 %v2478
  %3597 = vmatprep.subr.bf16.mxu0 %v2483
  %3598 = vmatpush1.bf16.msra.mxu0 %v2482
  %3599 = vmatprep.subr.bf16.mxu0 %v2487
  %3600 = vmatpush1.bf16.msra.mxu0 %v2486
  %3601 = vmatprep.subr.bf16.mxu0 %v2491
  %3602 = vmatpush1.bf16.msra.mxu0 %v2490
  %3603 = vmatprep.subr.bf16.mxu0 %v2495
  %3604 = vmatpush1.bf16.msra.mxu0 %v2494
  %3605 = vmatprep.subr.bf16.mxu0 %v2499
  %3606 = vmatpush1.bf16.msra.mxu0 %v2498
  %3607 = vmatprep.subr.bf16.mxu0 %v2503
  %3608 = vmatpush1.bf16.msra.mxu0 %v2502
  %3609 = vmatprep.subr.bf16.mxu0 %v2507
  %3610 = vmatpush1.bf16.msra.mxu0 %v2506
  %3611 = vmatprep.subr.bf16.mxu0 %v2511
  %3612 = vmatpush1.bf16.msra.mxu0 %v2510
  %3613 = vmatprep.subr.bf16.mxu0 %v2515
  %3614 = vmatpush1.bf16.msra.mxu0 %v2514
  %3615 = vmatprep.mubr.bf16.mxu0 %v629
  %3616 = vmatmul.mubr.bf16.gmra.mrb[0].mxu0 %v628
  %v3617 = vpop.f32.mrb[0].mxu0
  %v3618 = vadd.f32 %v3577, %v3617
  %v3619 = vpop.f32.mrb[0].mxu0
  %v3620 = vadd.f32 %v3579, %v3619
  %v3621 = vpop.f32.mrb[0].mxu0
  %v3622 = vpop.f32.mrb[0].mxu0
  %3623 = vdwg.mxu0
  %3624 = vmatprep.subr.bf16.mxu0 %v2519
  %3625 = vmatpush1.bf16.msra.mxu0 %v2518
  %3626 = vmatprep.subr.bf16.mxu0 %v2523
  %3627 = vmatpush1.bf16.msra.mxu0 %v2522
  %3628 = vmatprep.subr.bf16.mxu0 %v2527
  %3629 = vmatpush1.bf16.msra.mxu0 %v2526
  %3630 = vmatprep.subr.bf16.mxu0 %v2531
  %3631 = vmatpush1.bf16.msra.mxu0 %v2530
  %3632 = vmatprep.subr.bf16.mxu0 %v2535
  %3633 = vmatpush1.bf16.msra.mxu0 %v2534
  %3634 = vmatprep.subr.bf16.mxu0 %v2539
  %3635 = vmatpush1.bf16.msra.mxu0 %v2538
  %3636 = vmatprep.subr.bf16.mxu0 %v2543
  %3637 = vmatpush1.bf16.msra.mxu0 %v2542
  %3638 = vmatprep.subr.bf16.mxu0 %v2547
  %3639 = vmatpush1.bf16.msra.mxu0 %v2546
  %3640 = vmatprep.subr.bf16.mxu0 %v2551
  %3641 = vmatpush1.bf16.msra.mxu0 %v2550
  %3642 = vmatprep.subr.bf16.mxu0 %v2555
  %3643 = vmatpush1.bf16.msra.mxu0 %v2554
  %3644 = vmatprep.subr.bf16.mxu0 %v2559
  %3645 = vmatpush1.bf16.msra.mxu0 %v2558
  %3646 = vmatprep.subr.bf16.mxu0 %v2563
  %3647 = vmatpush1.bf16.msra.mxu0 %v2562
  %3648 = vmatprep.subr.bf16.mxu0 %v2567
  %3649 = vmatpush1.bf16.msra.mxu0 %v2566
  %3650 = vmatprep.subr.bf16.mxu0 %v2571
  %3651 = vmatpush1.bf16.msra.mxu0 %v2570
  %3652 = vmatprep.subr.bf16.mxu0 %v2575
  %3653 = vmatpush1.bf16.msra.mxu0 %v2574
  %3654 = vmatprep.subr.bf16.mxu0 %v2579
  %3655 = vmatpush1.bf16.msra.mxu0 %v2578
  %3656 = vmatprep.mubr.bf16.mxu0 %v631
  %3657 = vmatmul.mubr.bf16.gmra.mrb[0].mxu0 %v630
  %v3658 = vpop.f32.mrb[0].mxu0
  %v3659 = vadd.f32 %v3618, %v3658
  %v3660 = vpop.f32.mrb[0].mxu0
  %v3661 = vadd.f32 %v3620, %v3660
  %v3662 = vpop.f32.mrb[0].mxu0
  %v3663 = vpop.f32.mrb[0].mxu0
  %3664 = vdwg.mxu0
  %3665 = vmatprep.subr.bf16.mxu0 %v2583
  %3666 = vmatpush1.bf16.msra.mxu0 %v2582
  %3667 = vmatprep.subr.bf16.mxu0 %v2587
  %3668 = vmatpush1.bf16.msra.mxu0 %v2586
  %3669 = vmatprep.subr.bf16.mxu0 %v2591
  %3670 = vmatpush1.bf16.msra.mxu0 %v2590
  %3671 = vmatprep.subr.bf16.mxu0 %v2595
  %3672 = vmatpush1.bf16.msra.mxu0 %v2594
  %3673 = vmatprep.subr.bf16.mxu0 %v2599
  %3674 = vmatpush1.bf16.msra.mxu0 %v2598
  %3675 = vmatprep.subr.bf16.mxu0 %v2603
  %3676 = vmatpush1.bf16.msra.mxu0 %v2602
  %3677 = vmatprep.subr.bf16.mxu0 %v2607
  %3678 = vmatpush1.bf16.msra.mxu0 %v2606
  %3679 = vmatprep.subr.bf16.mxu0 %v2611
  %3680 = vmatpush1.bf16.msra.mxu0 %v2610
  %3681 = vmatprep.subr.bf16.mxu0 %v2615
  %3682 = vmatpush1.bf16.msra.mxu0 %v2614
  %3683 = vmatprep.subr.bf16.mxu0 %v2619
  %3684 = vmatpush1.bf16.msra.mxu0 %v2618
  %3685 = vmatprep.subr.bf16.mxu0 %v2623
  %3686 = vmatpush1.bf16.msra.mxu0 %v2622
  %3687 = vmatprep.subr.bf16.mxu0 %v2627
  %3688 = vmatpush1.bf16.msra.mxu0 %v2626
  %3689 = vmatprep.subr.bf16.mxu0 %v2631
  %3690 = vmatpush1.bf16.msra.mxu0 %v2630
  %3691 = vmatprep.subr.bf16.mxu0 %v2635
  %3692 = vmatpush1.bf16.msra.mxu0 %v2634
  %3693 = vmatprep.subr.bf16.mxu0 %v2639
  %3694 = vmatpush1.bf16.msra.mxu0 %v2638
  %3695 = vmatprep.subr.bf16.mxu0 %v2643
  %3696 = vmatpush1.bf16.msra.mxu0 %v2642
  %3697 = vmatprep.mubr.bf16.mxu0 %v633
  %3698 = vmatmul.mubr.bf16.gmra.mrb[0].mxu0 %v632
  %v3699 = vpop.f32.mrb[0].mxu0
  %v3700 = vadd.f32 %v3659, %v3699
  %v3701 = vpop.f32.mrb[0].mxu0
  %v3702 = vadd.f32 %v3661, %v3701
  %v3703 = vpop.f32.mrb[0].mxu0
  %v3704 = vpop.f32.mrb[0].mxu0
  %3705 = vdwg.mxu0
  %3706 = vmatprep.subr.bf16.mxu0 %v2647
  %3707 = vmatpush1.bf16.msra.mxu0 %v2646
  %3708 = vmatprep.subr.bf16.mxu0 %v2651
  %3709 = vmatpush1.bf16.msra.mxu0 %v2650
  %3710 = vmatprep.subr.bf16.mxu0 %v2655
  %3711 = vmatpush1.bf16.msra.mxu0 %v2654
  %3712 = vmatprep.subr.bf16.mxu0 %v2659
  %3713 = vmatpush1.bf16.msra.mxu0 %v2658
  %3714 = vmatprep.subr.bf16.mxu0 %v2663
  %3715 = vmatpush1.bf16.msra.mxu0 %v2662
  %3716 = vmatprep.subr.bf16.mxu0 %v2667
  %3717 = vmatpush1.bf16.msra.mxu0 %v2666
  %3718 = vmatprep.subr.bf16.mxu0 %v2671
  %3719 = vmatpush1.bf16.msra.mxu0 %v2670
  %3720 = vmatprep.subr.bf16.mxu0 %v2675
  %3721 = vmatpush1.bf16.msra.mxu0 %v2674
  %3722 = vmatprep.subr.bf16.mxu0 %v2679
  %3723 = vmatpush1.bf16.msra.mxu0 %v2678
  %3724 = vmatprep.subr.bf16.mxu0 %v2683
  %3725 = vmatpush1.bf16.msra.mxu0 %v2682
  %3726 = vmatprep.subr.bf16.mxu0 %v2687
  %3727 = vmatpush1.bf16.msra.mxu0 %v2686
  %3728 = vmatprep.subr.bf16.mxu0 %v2691
  %3729 = vmatpush1.bf16.msra.mxu0 %v2690
  %3730 = vmatprep.subr.bf16.mxu0 %v2695
  %3731 = vmatpush1.bf16.msra.mxu0 %v2694
  %3732 = vmatprep.subr.bf16.mxu0 %v2699
  %3733 = vmatpush1.bf16.msra.mxu0 %v2698
  %3734 = vmatprep.subr.bf16.mxu0 %v2703
  %3735 = vmatpush1.bf16.msra.mxu0 %v2702
  %3736 = vmatprep.subr.bf16.mxu0 %v2707
  %3737 = vmatpush1.bf16.msra.mxu0 %v2706
  %3738 = vmatprep.mubr.bf16.mxu0 %v635
  %3739 = vmatmul.mubr.bf16.gmra.mrb[0].mxu0 %v634
  %v3740 = vpop.f32.mrb[0].mxu0
  %v3741 = vadd.f32 %v3700, %v3740
  %v3742 = vpop.f32.mrb[0].mxu0
  %v3743 = vadd.f32 %v3702, %v3742
  %v3744 = vpop.f32.mrb[0].mxu0
  %v3745 = vpop.f32.mrb[0].mxu0
  %3746 = vdwg.mxu0
  %3747 = vmatprep.subr.bf16.mxu0 %v2711
  %3748 = vmatpush1.bf16.msra.mxu0 %v2710
  %3749 = vmatprep.subr.bf16.mxu0 %v2715
  %3750 = vmatpush1.bf16.msra.mxu0 %v2714
  %3751 = vmatprep.subr.bf16.mxu0 %v2719
  %3752 = vmatpush1.bf16.msra.mxu0 %v2718
  %3753 = vmatprep.subr.bf16.mxu0 %v2723
  %3754 = vmatpush1.bf16.msra.mxu0 %v2722
  %3755 = vmatprep.subr.bf16.mxu0 %v2727
  %3756 = vmatpush1.bf16.msra.mxu0 %v2726
  %3757 = vmatprep.subr.bf16.mxu0 %v2731
  %3758 = vmatpush1.bf16.msra.mxu0 %v2730
  %3759 = vmatprep.subr.bf16.mxu0 %v2735
  %3760 = vmatpush1.bf16.msra.mxu0 %v2734
  %3761 = vmatprep.subr.bf16.mxu0 %v2739
  %3762 = vmatpush1.bf16.msra.mxu0 %v2738
  %3763 = vmatprep.subr.bf16.mxu0 %v2743
  %3764 = vmatpush1.bf16.msra.mxu0 %v2742
  %3765 = vmatprep.subr.bf16.mxu0 %v2747
  %3766 = vmatpush1.bf16.msra.mxu0 %v2746
  %3767 = vmatprep.subr.bf16.mxu0 %v2751
  %3768 = vmatpush1.bf16.msra.mxu0 %v2750
  %3769 = vmatprep.subr.bf16.mxu0 %v2755
  %3770 = vmatpush1.bf16.msra.mxu0 %v2754
  %3771 = vmatprep.subr.bf16.mxu0 %v2759
  %3772 = vmatpush1.bf16.msra.mxu0 %v2758
  %3773 = vmatprep.subr.bf16.mxu0 %v2763
  %3774 = vmatpush1.bf16.msra.mxu0 %v2762
  %3775 = vmatprep.subr.bf16.mxu0 %v2767
  %3776 = vmatpush1.bf16.msra.mxu0 %v2766
  %3777 = vmatprep.subr.bf16.mxu0 %v2771
  %3778 = vmatpush1.bf16.msra.mxu0 %v2770
  %3779 = vmatprep.mubr.bf16.mxu0 %v637
  %3780 = vmatmul.mubr.bf16.gmra.mrb[0].mxu0 %v636
  %v3781 = vpop.f32.mrb[0].mxu0
  %v3782 = vadd.f32 %v3741, %v3781
  %v3783 = vpop.f32.mrb[0].mxu0
  %v3784 = vadd.f32 %v3743, %v3783
  %v3785 = vpop.f32.mrb[0].mxu0
  %v3786 = vpop.f32.mrb[0].mxu0
  %3787 = vdwg.mxu0
  %3788 = vmatprep.subr.bf16.mxu0 %v2775
  %3789 = vmatpush1.bf16.msra.mxu0 %v2774
  %3790 = vmatprep.subr.bf16.mxu0 %v2779
  %3791 = vmatpush1.bf16.msra.mxu0 %v2778
  %3792 = vmatprep.subr.bf16.mxu0 %v2783
  %3793 = vmatpush1.bf16.msra.mxu0 %v2782
  %3794 = vmatprep.subr.bf16.mxu0 %v2787
  %3795 = vmatpush1.bf16.msra.mxu0 %v2786
  %3796 = vmatprep.subr.bf16.mxu0 %v2791
  %3797 = vmatpush1.bf16.msra.mxu0 %v2790
  %3798 = vmatprep.subr.bf16.mxu0 %v2795
  %3799 = vmatpush1.bf16.msra.mxu0 %v2794
  %3800 = vmatprep.subr.bf16.mxu0 %v2799
  %3801 = vmatpush1.bf16.msra.mxu0 %v2798
  %3802 = vmatprep.subr.bf16.mxu0 %v2803
  %3803 = vmatpush1.bf16.msra.mxu0 %v2802
  %3804 = vmatprep.subr.bf16.mxu0 %v2807
  %3805 = vmatpush1.bf16.msra.mxu0 %v2806
  %3806 = vmatprep.subr.bf16.mxu0 %v2811
  %3807 = vmatpush1.bf16.msra.mxu0 %v2810
  %3808 = vmatprep.subr.bf16.mxu0 %v2815
  %3809 = vmatpush1.bf16.msra.mxu0 %v2814
  %3810 = vmatprep.subr.bf16.mxu0 %v2819
  %3811 = vmatpush1.bf16.msra.mxu0 %v2818
  %3812 = vmatprep.subr.bf16.mxu0 %v2823
  %3813 = vmatpush1.bf16.msra.mxu0 %v2822
  %3814 = vmatprep.subr.bf16.mxu0 %v2827
  %3815 = vmatpush1.bf16.msra.mxu0 %v2826
  %3816 = vmatprep.subr.bf16.mxu0 %v2831
  %3817 = vmatpush1.bf16.msra.mxu0 %v2830
  %3818 = vmatprep.subr.bf16.mxu0 %v2835
  %3819 = vmatpush1.bf16.msra.mxu0 %v2834
  %3820 = vmatprep.mubr.bf16.mxu0 %v639
  %3821 = vmatmul.mubr.bf16.gmra.mrb[0].mxu0 %v638
  %v3822 = vpop.f32.mrb[0].mxu0
  %v3823 = vadd.f32 %v3782, %v3822
  %v3824 = vpop.f32.mrb[0].mxu0
  %v3825 = vadd.f32 %v3784, %v3824
  %v3826 = vpop.f32.mrb[0].mxu0
  %v3827 = vpop.f32.mrb[0].mxu0
  %3828 = vdwg.mxu0
  %3829 = vmatprep.subr.bf16.mxu0 %v2839
  %3830 = vmatpush1.bf16.msra.mxu0 %v2838
  %3831 = vmatprep.subr.bf16.mxu0 %v2843
  %3832 = vmatpush1.bf16.msra.mxu0 %v2842
  %3833 = vmatprep.subr.bf16.mxu0 %v2847
  %3834 = vmatpush1.bf16.msra.mxu0 %v2846
  %3835 = vmatprep.subr.bf16.mxu0 %v2851
  %3836 = vmatpush1.bf16.msra.mxu0 %v2850
  %3837 = vmatprep.subr.bf16.mxu0 %v2855
  %3838 = vmatpush1.bf16.msra.mxu0 %v2854
  %3839 = vmatprep.subr.bf16.mxu0 %v2859
  %3840 = vmatpush1.bf16.msra.mxu0 %v2858
  %3841 = vmatprep.subr.bf16.mxu0 %v2863
  %3842 = vmatpush1.bf16.msra.mxu0 %v2862
  %3843 = vmatprep.subr.bf16.mxu0 %v2867
  %3844 = vmatpush1.bf16.msra.mxu0 %v2866
  %3845 = vmatprep.subr.bf16.mxu0 %v2871
  %3846 = vmatpush1.bf16.msra.mxu0 %v2870
  %3847 = vmatprep.subr.bf16.mxu0 %v2875
  %3848 = vmatpush1.bf16.msra.mxu0 %v2874
  %3849 = vmatprep.subr.bf16.mxu0 %v2879
  %3850 = vmatpush1.bf16.msra.mxu0 %v2878
  %3851 = vmatprep.subr.bf16.mxu0 %v2883
  %3852 = vmatpush1.bf16.msra.mxu0 %v2882
  %3853 = vmatprep.subr.bf16.mxu0 %v2887
  %3854 = vmatpush1.bf16.msra.mxu0 %v2886
  %3855 = vmatprep.subr.bf16.mxu0 %v2891
  %3856 = vmatpush1.bf16.msra.mxu0 %v2890
  %3857 = vmatprep.subr.bf16.mxu0 %v2895
  %3858 = vmatpush1.bf16.msra.mxu0 %v2894
  %3859 = vmatprep.subr.bf16.mxu0 %v2899
  %3860 = vmatpush1.bf16.msra.mxu0 %v2898
  %3861 = vmatprep.mubr.bf16.mxu0 %v641
  %3862 = vmatmul.mubr.bf16.gmra.mrb[0].mxu0 %v640
  %v3863 = vpop.f32.mrb[0].mxu0
  %v3864 = vadd.f32 %v3823, %v3863
  %v3865 = vpop.f32.mrb[0].mxu0
  %v3866 = vadd.f32 %v3825, %v3865
  %v3867 = vpop.f32.mrb[0].mxu0
  %v3868 = vpop.f32.mrb[0].mxu0
  %3869 = vdwg.mxu0
  %3870 = vmatprep.subr.bf16.mxu0 %v2903
  %3871 = vmatpush1.bf16.msra.mxu0 %v2902
  %3872 = vmatprep.subr.bf16.mxu0 %v2907
  %3873 = vmatpush1.bf16.msra.mxu0 %v2906
  %3874 = vmatprep.subr.bf16.mxu0 %v2911
  %3875 = vmatpush1.bf16.msra.mxu0 %v2910
  %3876 = vmatprep.subr.bf16.mxu0 %v2915
  %3877 = vmatpush1.bf16.msra.mxu0 %v2914
  %3878 = vmatprep.subr.bf16.mxu0 %v2919
  %3879 = vmatpush1.bf16.msra.mxu0 %v2918
  %3880 = vmatprep.subr.bf16.mxu0 %v2923
  %3881 = vmatpush1.bf16.msra.mxu0 %v2922
  %3882 = vmatprep.subr.bf16.mxu0 %v2927
  %3883 = vmatpush1.bf16.msra.mxu0 %v2926
  %3884 = vmatprep.subr.bf16.mxu0 %v2931
  %3885 = vmatpush1.bf16.msra.mxu0 %v2930
  %3886 = vmatprep.subr.bf16.mxu0 %v2935
  %3887 = vmatpush1.bf16.msra.mxu0 %v2934
  %3888 = vmatprep.subr.bf16.mxu0 %v2939
  %3889 = vmatpush1.bf16.msra.mxu0 %v2938
  %3890 = vmatprep.subr.bf16.mxu0 %v2943
  %3891 = vmatpush1.bf16.msra.mxu0 %v2942
  %3892 = vmatprep.subr.bf16.mxu0 %v2947
  %3893 = vmatpush1.bf16.msra.mxu0 %v2946
  %3894 = vmatprep.subr.bf16.mxu0 %v2951
  %3895 = vmatpush1.bf16.msra.mxu0 %v2950
  %3896 = vmatprep.subr.bf16.mxu0 %v2955
  %3897 = vmatpush1.bf16.msra.mxu0 %v2954
  %3898 = vmatprep.subr.bf16.mxu0 %v2959
  %3899 = vmatpush1.bf16.msra.mxu0 %v2958
  %3900 = vmatprep.subr.bf16.mxu0 %v2963
  %3901 = vmatpush1.bf16.msra.mxu0 %v2962
  %3902 = vmatprep.mubr.bf16.mxu0 %v643
  %3903 = vmatmul.mubr.bf16.gmra.mrb[0].mxu0 %v642
  %v3904 = vpop.f32.mrb[0].mxu0
  %v3905 = vadd.f32 %v3864, %v3904
  %v3906 = vpop.f32.mrb[0].mxu0
  %v3907 = vadd.f32 %v3866, %v3906
  %v3908 = vpop.f32.mrb[0].mxu0
  %v3909 = vpop.f32.mrb[0].mxu0
  %3910 = vdwg.mxu0
  %3911 = vmatprep.subr.bf16.mxu0 %v2393
  %3912 = vmatpush1.bf16.msra.mxu0 %v2392
  %3913 = vmatprep.subr.bf16.mxu0 %v2397
  %3914 = vmatpush1.bf16.msra.mxu0 %v2396
  %3915 = vmatprep.subr.bf16.mxu0 %v2401
  %3916 = vmatpush1.bf16.msra.mxu0 %v2400
  %3917 = vmatprep.subr.bf16.mxu0 %v2405
  %3918 = vmatpush1.bf16.msra.mxu0 %v2404
  %3919 = vmatprep.subr.bf16.mxu0 %v2409
  %3920 = vmatpush1.bf16.msra.mxu0 %v2408
  %3921 = vmatprep.subr.bf16.mxu0 %v2413
  %3922 = vmatpush1.bf16.msra.mxu0 %v2412
  %3923 = vmatprep.subr.bf16.mxu0 %v2417
  %3924 = vmatpush1.bf16.msra.mxu0 %v2416
  %3925 = vmatprep.subr.bf16.mxu0 %v2421
  %3926 = vmatpush1.bf16.msra.mxu0 %v2420
  %3927 = vmatprep.subr.bf16.mxu0 %v2425
  %3928 = vmatpush1.bf16.msra.mxu0 %v2424
  %3929 = vmatprep.subr.bf16.mxu0 %v2429
  %3930 = vmatpush1.bf16.msra.mxu0 %v2428
  %3931 = vmatprep.subr.bf16.mxu0 %v2433
  %3932 = vmatpush1.bf16.msra.mxu0 %v2432
  %3933 = vmatprep.subr.bf16.mxu0 %v2437
  %3934 = vmatpush1.bf16.msra.mxu0 %v2436
  %3935 = vmatprep.subr.bf16.mxu0 %v2441
  %3936 = vmatpush1.bf16.msra.mxu0 %v2440
  %3937 = vmatprep.subr.bf16.mxu0 %v2445
  %3938 = vmatpush1.bf16.msra.mxu0 %v2444
  %3939 = vmatprep.subr.bf16.mxu0 %v2449
  %3940 = vmatpush1.bf16.msra.mxu0 %v2448
  %3941 = vmatprep.subr.bf16.mxu0 %v2453
  %3942 = vmatpush1.bf16.msra.mxu0 %v2452
  %3943 = vmatprep.mubr.bf16.mxu0 %v627
  %3944 = vmatmul.mubr.bf16.gmra.mrb[0].mxu0 %v626
  %v3945 = vpop.f32.mrb[0].mxu0
  %v3946 = vadd.f32 0.0, %v3945
  %v3947 = vpop.f32.mrb[0].mxu0
  %v3948 = vadd.f32 0.0, %v3947
  %v3949 = vpop.f32.mrb[0].mxu0
  %v3950 = vpop.f32.mrb[0].mxu0
  %3951 = vdwg.mxu0
  %3952 = vmatprep.subr.bf16.mxu0 %v2457
  %3953 = vmatpush1.bf16.msra.mxu0 %v2456
  %3954 = vmatprep.subr.bf16.mxu0 %v2461
  %3955 = vmatpush1.bf16.msra.mxu0 %v2460
  %3956 = vmatprep.subr.bf16.mxu0 %v2465
  %3957 = vmatpush1.bf16.msra.mxu0 %v2464
  %3958 = vmatprep.subr.bf16.mxu0 %v2469
  %3959 = vmatpush1.bf16.msra.mxu0 %v2468
  %3960 = vmatprep.subr.bf16.mxu0 %v2473
  %3961 = vmatpush1.bf16.msra.mxu0 %v2472
  %3962 = vmatprep.subr.bf16.mxu0 %v2477
  %3963 = vmatpush1.bf16.msra.mxu0 %v2476
  %3964 = vmatprep.subr.bf16.mxu0 %v2481
  %3965 = vmatpush1.bf16.msra.mxu0 %v2480
  %3966 = vmatprep.subr.bf16.mxu0 %v2485
  %3967 = vmatpush1.bf16.msra.mxu0 %v2484
  %3968 = vmatprep.subr.bf16.mxu0 %v2489
  %3969 = vmatpush1.bf16.msra.mxu0 %v2488
  %3970 = vmatprep.subr.bf16.mxu0 %v2493
  %3971 = vmatpush1.bf16.msra.mxu0 %v2492
  %3972 = vmatprep.subr.bf16.mxu0 %v2497
  %3973 = vmatpush1.bf16.msra.mxu0 %v2496
  %3974 = vmatprep.subr.bf16.mxu0 %v2501
  %3975 = vmatpush1.bf16.msra.mxu0 %v2500
  %3976 = vmatprep.subr.bf16.mxu0 %v2505
  %3977 = vmatpush1.bf16.msra.mxu0 %v2504
  %3978 = vmatprep.subr.bf16.mxu0 %v2509
  %3979 = vmatpush1.bf16.msra.mxu0 %v2508
  %3980 = vmatprep.subr.bf16.mxu0 %v2513
  %3981 = vmatpush1.bf16.msra.mxu0 %v2512
  %3982 = vmatprep.subr.bf16.mxu0 %v2517
  %3983 = vmatpush1.bf16.msra.mxu0 %v2516
  %3984 = vmatprep.mubr.bf16.mxu0 %v629
  %3985 = vmatmul.mubr.bf16.gmra.mrb[0].mxu0 %v628
  %v3986 = vpop.f32.mrb[0].mxu0
  %v3987 = vadd.f32 %v3946, %v3986
  %v3988 = vpop.f32.mrb[0].mxu0
  %v3989 = vadd.f32 %v3948, %v3988
  %v3990 = vpop.f32.mrb[0].mxu0
  %v3991 = vpop.f32.mrb[0].mxu0
  %3992 = vdwg.mxu0
  %3993 = vmatprep.subr.bf16.mxu0 %v2521
  %3994 = vmatpush1.bf16.msra.mxu0 %v2520
  %3995 = vmatprep.subr.bf16.mxu0 %v2525
  %3996 = vmatpush1.bf16.msra.mxu0 %v2524
  %3997 = vmatprep.subr.bf16.mxu0 %v2529
  %3998 = vmatpush1.bf16.msra.mxu0 %v2528
  %3999 = vmatprep.subr.bf16.mxu0 %v2533
  %4000 = vmatpush1.bf16.msra.mxu0 %v2532
  %4001 = vmatprep.subr.bf16.mxu0 %v2537
  %4002 = vmatpush1.bf16.msra.mxu0 %v2536
  %4003 = vmatprep.subr.bf16.mxu0 %v2541
  %4004 = vmatpush1.bf16.msra.mxu0 %v2540
  %4005 = vmatprep.subr.bf16.mxu0 %v2545
  %4006 = vmatpush1.bf16.msra.mxu0 %v2544
  %4007 = vmatprep.subr.bf16.mxu0 %v2549
  %4008 = vmatpush1.bf16.msra.mxu0 %v2548
  %4009 = vmatprep.subr.bf16.mxu0 %v2553
  %4010 = vmatpush1.bf16.msra.mxu0 %v2552
  %4011 = vmatprep.subr.bf16.mxu0 %v2557
  %4012 = vmatpush1.bf16.msra.mxu0 %v2556
  %4013 = vmatprep.subr.bf16.mxu0 %v2561
  %4014 = vmatpush1.bf16.msra.mxu0 %v2560
  %4015 = vmatprep.subr.bf16.mxu0 %v2565
  %4016 = vmatpush1.bf16.msra.mxu0 %v2564
  %4017 = vmatprep.subr.bf16.mxu0 %v2569
  %4018 = vmatpush1.bf16.msra.mxu0 %v2568
  %4019 = vmatprep.subr.bf16.mxu0 %v2573
  %4020 = vmatpush1.bf16.msra.mxu0 %v2572
  %4021 = vmatprep.subr.bf16.mxu0 %v2577
  %4022 = vmatpush1.bf16.msra.mxu0 %v2576
  %4023 = vmatprep.subr.bf16.mxu0 %v2581
  %4024 = vmatpush1.bf16.msra.mxu0 %v2580
  %4025 = vmatprep.mubr.bf16.mxu0 %v631
  %4026 = vmatmul.mubr.bf16.gmra.mrb[0].mxu0 %v630
  %v4027 = vpop.f32.mrb[0].mxu0
  %v4028 = vadd.f32 %v3987, %v4027
  %v4029 = vpop.f32.mrb[0].mxu0
  %v4030 = vadd.f32 %v3989, %v4029
  %v4031 = vpop.f32.mrb[0].mxu0
  %v4032 = vpop.f32.mrb[0].mxu0
  %4033 = vdwg.mxu0
  %4034 = vmatprep.subr.bf16.mxu0 %v2585
  %4035 = vmatpush1.bf16.msra.mxu0 %v2584
  %4036 = vmatprep.subr.bf16.mxu0 %v2589
  %4037 = vmatpush1.bf16.msra.mxu0 %v2588
  %4038 = vmatprep.subr.bf16.mxu0 %v2593
  %4039 = vmatpush1.bf16.msra.mxu0 %v2592
  %4040 = vmatprep.subr.bf16.mxu0 %v2597
  %4041 = vmatpush1.bf16.msra.mxu0 %v2596
  %4042 = vmatprep.subr.bf16.mxu0 %v2601
  %4043 = vmatpush1.bf16.msra.mxu0 %v2600
  %4044 = vmatprep.subr.bf16.mxu0 %v2605
  %4045 = vmatpush1.bf16.msra.mxu0 %v2604
  %4046 = vmatprep.subr.bf16.mxu0 %v2609
  %4047 = vmatpush1.bf16.msra.mxu0 %v2608
  %4048 = vmatprep.subr.bf16.mxu0 %v2613
  %4049 = vmatpush1.bf16.msra.mxu0 %v2612
  %4050 = vmatprep.subr.bf16.mxu0 %v2617
  %4051 = vmatpush1.bf16.msra.mxu0 %v2616
  %4052 = vmatprep.subr.bf16.mxu0 %v2621
  %4053 = vmatpush1.bf16.msra.mxu0 %v2620
  %4054 = vmatprep.subr.bf16.mxu0 %v2625
  %4055 = vmatpush1.bf16.msra.mxu0 %v2624
  %4056 = vmatprep.subr.bf16.mxu0 %v2629
  %4057 = vmatpush1.bf16.msra.mxu0 %v2628
  %4058 = vmatprep.subr.bf16.mxu0 %v2633
  %4059 = vmatpush1.bf16.msra.mxu0 %v2632
  %4060 = vmatprep.subr.bf16.mxu0 %v2637
  %4061 = vmatpush1.bf16.msra.mxu0 %v2636
  %4062 = vmatprep.subr.bf16.mxu0 %v2641
  %4063 = vmatpush1.bf16.msra.mxu0 %v2640
  %4064 = vmatprep.subr.bf16.mxu0 %v2645
  %4065 = vmatpush1.bf16.msra.mxu0 %v2644
  %4066 = vmatprep.mubr.bf16.mxu0 %v633
  %4067 = vmatmul.mubr.bf16.gmra.mrb[0].mxu0 %v632
  %v4068 = vpop.f32.mrb[0].mxu0
  %v4069 = vadd.f32 %v4028, %v4068
  %v4070 = vpop.f32.mrb[0].mxu0
  %v4071 = vadd.f32 %v4030, %v4070
  %v4072 = vpop.f32.mrb[0].mxu0
  %v4073 = vpop.f32.mrb[0].mxu0
  %4074 = vdwg.mxu0
  %4075 = vmatprep.subr.bf16.mxu0 %v2649
  %4076 = vmatpush1.bf16.msra.mxu0 %v2648
  %4077 = vmatprep.subr.bf16.mxu0 %v2653
  %4078 = vmatpush1.bf16.msra.mxu0 %v2652
  %4079 = vmatprep.subr.bf16.mxu0 %v2657
  %4080 = vmatpush1.bf16.msra.mxu0 %v2656
  %4081 = vmatprep.subr.bf16.mxu0 %v2661
  %4082 = vmatpush1.bf16.msra.mxu0 %v2660
  %4083 = vmatprep.subr.bf16.mxu0 %v2665
  %4084 = vmatpush1.bf16.msra.mxu0 %v2664
  %4085 = vmatprep.subr.bf16.mxu0 %v2669
  %4086 = vmatpush1.bf16.msra.mxu0 %v2668
  %4087 = vmatprep.subr.bf16.mxu0 %v2673
  %4088 = vmatpush1.bf16.msra.mxu0 %v2672
  %4089 = vmatprep.subr.bf16.mxu0 %v2677
  %4090 = vmatpush1.bf16.msra.mxu0 %v2676
  %4091 = vmatprep.subr.bf16.mxu0 %v2681
  %4092 = vmatpush1.bf16.msra.mxu0 %v2680
  %4093 = vmatprep.subr.bf16.mxu0 %v2685
  %4094 = vmatpush1.bf16.msra.mxu0 %v2684
  %4095 = vmatprep.subr.bf16.mxu0 %v2689
  %4096 = vmatpush1.bf16.msra.mxu0 %v2688
  %4097 = vmatprep.subr.bf16.mxu0 %v2693
  %4098 = vmatpush1.bf16.msra.mxu0 %v2692
  %4099 = vmatprep.subr.bf16.mxu0 %v2697
  %4100 = vmatpush1.bf16.msra.mxu0 %v2696
  %4101 = vmatprep.subr.bf16.mxu0 %v2701
  %4102 = vmatpush1.bf16.msra.mxu0 %v2700
  %4103 = vmatprep.subr.bf16.mxu0 %v2705
  %4104 = vmatpush1.bf16.msra.mxu0 %v2704
  %4105 = vmatprep.subr.bf16.mxu0 %v2709
  %4106 = vmatpush1.bf16.msra.mxu0 %v2708
  %4107 = vmatprep.mubr.bf16.mxu0 %v635
  %4108 = vmatmul.mubr.bf16.gmra.mrb[0].mxu0 %v634
  %v4109 = vpop.f32.mrb[0].mxu0
  %v4110 = vadd.f32 %v4069, %v4109
  %v4111 = vpop.f32.mrb[0].mxu0
  %v4112 = vadd.f32 %v4071, %v4111
  %v4113 = vpop.f32.mrb[0].mxu0
  %v4114 = vpop.f32.mrb[0].mxu0
  %4115 = vdwg.mxu0
  %4116 = vmatprep.subr.bf16.mxu0 %v2713
  %4117 = vmatpush1.bf16.msra.mxu0 %v2712
  %4118 = vmatprep.subr.bf16.mxu0 %v2717
  %4119 = vmatpush1.bf16.msra.mxu0 %v2716
  %4120 = vmatprep.subr.bf16.mxu0 %v2721
  %4121 = vmatpush1.bf16.msra.mxu0 %v2720
  %4122 = vmatprep.subr.bf16.mxu0 %v2725
  %4123 = vmatpush1.bf16.msra.mxu0 %v2724
  %4124 = vmatprep.subr.bf16.mxu0 %v2729
  %4125 = vmatpush1.bf16.msra.mxu0 %v2728
  %4126 = vmatprep.subr.bf16.mxu0 %v2733
  %4127 = vmatpush1.bf16.msra.mxu0 %v2732
  %4128 = vmatprep.subr.bf16.mxu0 %v2737
  %4129 = vmatpush1.bf16.msra.mxu0 %v2736
  %4130 = vmatprep.subr.bf16.mxu0 %v2741
  %4131 = vmatpush1.bf16.msra.mxu0 %v2740
  %4132 = vmatprep.subr.bf16.mxu0 %v2745
  %4133 = vmatpush1.bf16.msra.mxu0 %v2744
  %4134 = vmatprep.subr.bf16.mxu0 %v2749
  %4135 = vmatpush1.bf16.msra.mxu0 %v2748
  %4136 = vmatprep.subr.bf16.mxu0 %v2753
  %4137 = vmatpush1.bf16.msra.mxu0 %v2752
  %4138 = vmatprep.subr.bf16.mxu0 %v2757
  %4139 = vmatpush1.bf16.msra.mxu0 %v2756
  %4140 = vmatprep.subr.bf16.mxu0 %v2761
  %4141 = vmatpush1.bf16.msra.mxu0 %v2760
  %4142 = vmatprep.subr.bf16.mxu0 %v2765
  %4143 = vmatpush1.bf16.msra.mxu0 %v2764
  %4144 = vmatprep.subr.bf16.mxu0 %v2769
  %4145 = vmatpush1.bf16.msra.mxu0 %v2768
  %4146 = vmatprep.subr.bf16.mxu0 %v2773
  %4147 = vmatpush1.bf16.msra.mxu0 %v2772
  %4148 = vmatprep.mubr.bf16.mxu0 %v637
  %4149 = vmatmul.mubr.bf16.gmra.mrb[0].mxu0 %v636
  %v4150 = vpop.f32.mrb[0].mxu0
  %v4151 = vadd.f32 %v4110, %v4150
  %v4152 = vpop.f32.mrb[0].mxu0
  %v4153 = vadd.f32 %v4112, %v4152
  %v4154 = vpop.f32.mrb[0].mxu0
  %v4155 = vpop.f32.mrb[0].mxu0
  %4156 = vdwg.mxu0
  %4157 = vmatprep.subr.bf16.mxu0 %v2777
  %4158 = vmatpush1.bf16.msra.mxu0 %v2776
  %4159 = vmatprep.subr.bf16.mxu0 %v2781
  %4160 = vmatpush1.bf16.msra.mxu0 %v2780
  %4161 = vmatprep.subr.bf16.mxu0 %v2785
  %4162 = vmatpush1.bf16.msra.mxu0 %v2784
  %4163 = vmatprep.subr.bf16.mxu0 %v2789
  %4164 = vmatpush1.bf16.msra.mxu0 %v2788
  %4165 = vmatprep.subr.bf16.mxu0 %v2793
  %4166 = vmatpush1.bf16.msra.mxu0 %v2792
  %4167 = vmatprep.subr.bf16.mxu0 %v2797
  %4168 = vmatpush1.bf16.msra.mxu0 %v2796
  %4169 = vmatprep.subr.bf16.mxu0 %v2801
  %4170 = vmatpush1.bf16.msra.mxu0 %v2800
  %4171 = vmatprep.subr.bf16.mxu0 %v2805
  %4172 = vmatpush1.bf16.msra.mxu0 %v2804
  %4173 = vmatprep.subr.bf16.mxu0 %v2809
  %4174 = vmatpush1.bf16.msra.mxu0 %v2808
  %4175 = vmatprep.subr.bf16.mxu0 %v2813
  %4176 = vmatpush1.bf16.msra.mxu0 %v2812
  %4177 = vmatprep.subr.bf16.mxu0 %v2817
  %4178 = vmatpush1.bf16.msra.mxu0 %v2816
  %4179 = vmatprep.subr.bf16.mxu0 %v2821
  %4180 = vmatpush1.bf16.msra.mxu0 %v2820
  %4181 = vmatprep.subr.bf16.mxu0 %v2825
  %4182 = vmatpush1.bf16.msra.mxu0 %v2824
  %4183 = vmatprep.subr.bf16.mxu0 %v2829
  %4184 = vmatpush1.bf16.msra.mxu0 %v2828
  %4185 = vmatprep.subr.bf16.mxu0 %v2833
  %4186 = vmatpush1.bf16.msra.mxu0 %v2832
  %4187 = vmatprep.subr.bf16.mxu0 %v2837
  %4188 = vmatpush1.bf16.msra.mxu0 %v2836
  %4189 = vmatprep.mubr.bf16.mxu0 %v639
  %4190 = vmatmul.mubr.bf16.gmra.mrb[0].mxu0 %v638
  %v4191 = vpop.f32.mrb[0].mxu0
  %v4192 = vadd.f32 %v4151, %v4191
  %v4193 = vpop.f32.mrb[0].mxu0
  %v4194 = vadd.f32 %v4153, %v4193
  %v4195 = vpop.f32.mrb[0].mxu0
  %v4196 = vpop.f32.mrb[0].mxu0
  %4197 = vdwg.mxu0
  %4198 = vmatprep.subr.bf16.mxu0 %v2841
  %4199 = vmatpush1.bf16.msra.mxu0 %v2840
  %4200 = vmatprep.subr.bf16.mxu0 %v2845
  %4201 = vmatpush1.bf16.msra.mxu0 %v2844
  %4202 = vmatprep.subr.bf16.mxu0 %v2849
  %4203 = vmatpush1.bf16.msra.mxu0 %v2848
  %4204 = vmatprep.subr.bf16.mxu0 %v2853
  %4205 = vmatpush1.bf16.msra.mxu0 %v2852
  %4206 = vmatprep.subr.bf16.mxu0 %v2857
  %4207 = vmatpush1.bf16.msra.mxu0 %v2856
  %4208 = vmatprep.subr.bf16.mxu0 %v2861
  %4209 = vmatpush1.bf16.msra.mxu0 %v2860
  %4210 = vmatprep.subr.bf16.mxu0 %v2865
  %4211 = vmatpush1.bf16.msra.mxu0 %v2864
  %4212 = vmatprep.subr.bf16.mxu0 %v2869
  %4213 = vmatpush1.bf16.msra.mxu0 %v2868
  %4214 = vmatprep.subr.bf16.mxu0 %v2873
  %4215 = vmatpush1.bf16.msra.mxu0 %v2872
  %4216 = vmatprep.subr.bf16.mxu0 %v2877
  %4217 = vmatpush1.bf16.msra.mxu0 %v2876
  %4218 = vmatprep.subr.bf16.mxu0 %v2881
  %4219 = vmatpush1.bf16.msra.mxu0 %v2880
  %4220 = vmatprep.subr.bf16.mxu0 %v2885
  %4221 = vmatpush1.bf16.msra.mxu0 %v2884
  %4222 = vmatprep.subr.bf16.mxu0 %v2889
  %4223 = vmatpush1.bf16.msra.mxu0 %v2888
  %4224 = vmatprep.subr.bf16.mxu0 %v2893
  %4225 = vmatpush1.bf16.msra.mxu0 %v2892
  %4226 = vmatprep.subr.bf16.mxu0 %v2897
  %4227 = vmatpush1.bf16.msra.mxu0 %v2896
  %4228 = vmatprep.subr.bf16.mxu0 %v2901
  %4229 = vmatpush1.bf16.msra.mxu0 %v2900
  %4230 = vmatprep.mubr.bf16.mxu0 %v641
  %4231 = vmatmul.mubr.bf16.gmra.mrb[0].mxu0 %v640
  %v4232 = vpop.f32.mrb[0].mxu0
  %v4233 = vadd.f32 %v4192, %v4232
  %v4234 = vpop.f32.mrb[0].mxu0
  %v4235 = vadd.f32 %v4194, %v4234
  %v4236 = vpop.f32.mrb[0].mxu0
  %v4237 = vpop.f32.mrb[0].mxu0
  %4238 = vdwg.mxu0
  %4239 = vmatprep.subr.bf16.mxu0 %v2905
  %4240 = vmatpush1.bf16.msra.mxu0 %v2904
  %4241 = vmatprep.subr.bf16.mxu0 %v2909
  %4242 = vmatpush1.bf16.msra.mxu0 %v2908
  %4243 = vmatprep.subr.bf16.mxu0 %v2913
  %4244 = vmatpush1.bf16.msra.mxu0 %v2912
  %4245 = vmatprep.subr.bf16.mxu0 %v2917
  %4246 = vmatpush1.bf16.msra.mxu0 %v2916
  %4247 = vmatprep.subr.bf16.mxu0 %v2921
  %4248 = vmatpush1.bf16.msra.mxu0 %v2920
  %4249 = vmatprep.subr.bf16.mxu0 %v2925
  %4250 = vmatpush1.bf16.msra.mxu0 %v2924
  %4251 = vmatprep.subr.bf16.mxu0 %v2929
  %4252 = vmatpush1.bf16.msra.mxu0 %v2928
  %4253 = vmatprep.subr.bf16.mxu0 %v2933
  %4254 = vmatpush1.bf16.msra.mxu0 %v2932
  %4255 = vmatprep.subr.bf16.mxu0 %v2937
  %4256 = vmatpush1.bf16.msra.mxu0 %v2936
  %4257 = vmatprep.subr.bf16.mxu0 %v2941
  %4258 = vmatpush1.bf16.msra.mxu0 %v2940
  %4259 = vmatprep.subr.bf16.mxu0 %v2945
  %4260 = vmatpush1.bf16.msra.mxu0 %v2944
  %4261 = vmatprep.subr.bf16.mxu0 %v2949
  %4262 = vmatpush1.bf16.msra.mxu0 %v2948
  %4263 = vmatprep.subr.bf16.mxu0 %v2953
  %4264 = vmatpush1.bf16.msra.mxu0 %v2952
  %4265 = vmatprep.subr.bf16.mxu0 %v2957
  %4266 = vmatpush1.bf16.msra.mxu0 %v2956
  %4267 = vmatprep.subr.bf16.mxu0 %v2961
  %4268 = vmatpush1.bf16.msra.mxu0 %v2960
  %4269 = vmatprep.subr.bf16.mxu0 %v2965
  %4270 = vmatpush1.bf16.msra.mxu0 %v2964
  %4271 = vmatprep.mubr.bf16.mxu0 %v643
  %4272 = vmatmul.mubr.bf16.gmra.mrb[0].mxu0 %v642
  %v4273 = vpop.f32.mrb[0].mxu0
  %v4274 = vadd.f32 %v4233, %v4273
  %v4275 = vpop.f32.mrb[0].mxu0
  %v4276 = vadd.f32 %v4235, %v4275
  %v4277 = vpop.f32.mrb[0].mxu0
  %v4278 = vpop.f32.mrb[0].mxu0
  %4279 = vdwg.mxu0
  %v4280 = vpack.c.bf16 %v3905, %v3905
  %v4281 = vpack.c.bf16 %v3907, %v3907
  %v4282 = vpack.c.bf16 %v4274, %v4274
  %v4283 = vpack.c.bf16 %v4276, %v4276
  %v4288 = vunpack.c.l.b16 %v4280
  %v4289 = vunpack.c.l.b16 %v4281
  %v4290 = vunpack.c.l.b16 %v4282
  %v4291 = vunpack.c.l.b16 %v4283
  %v4292 = vpack.c.b16 %v4289, %v4288
  %v4293 = vpack.c.b16 %v4291, %v4290
  %4296 = vst [vmem:[%s2] sm:$0xff] %v4292
  %4297 = vst [vmem:[%s2 + $0x8] sm:$0xff] %v4293
  %v4298 = vrot.slane %v3905, 4
  %v4299 = vadd.f32 %v3905, %v4298
  %v4300 = vrot.slane %v4299, 2
  %v4301 = vadd.f32 %v4299, %v4300
  %v4302 = vrot.slane %v4301, 1
  %v4303 = vadd.f32 %v4301, %v4302
  %v4304 = vrot.slane %v3907, 4
  %v4305 = vadd.f32 %v3907, %v4304
  %v4306 = vrot.slane %v4305, 2
  %v4307 = vadd.f32 %v4305, %v4306
  %v4308 = vrot.slane %v4307, 1
  %v4309 = vadd.f32 %v4307, %v4308
  %v4310 = vrot.slane %v4274, 4
  %v4311 = vadd.f32 %v4274, %v4310
  %v4312 = vrot.slane %v4311, 2
  %v4313 = vadd.f32 %v4311, %v4312
  %v4314 = vrot.slane %v4313, 1
  %v4315 = vadd.f32 %v4313, %v4314
  %v4316 = vrot.slane %v4276, 4
  %v4317 = vadd.f32 %v4276, %v4316
  %v4318 = vrot.slane %v4317, 2
  %v4319 = vadd.f32 %v4317, %v4318
  %v4320 = vrot.slane %v4319, 1
  %v4321 = vadd.f32 %v4319, %v4320
  %v4322 = vmul.f32 %v3905, %v3905
  %v4323 = vmul.f32 %v3907, %v3907
  %v4324 = vmul.f32 %v4274, %v4274
  %v4325 = vmul.f32 %v4276, %v4276
  %v4326 = vrot.slane %v4322, 4
  %v4327 = vadd.f32 %v4322, %v4326
  %v4328 = vrot.slane %v4327, 2
  %v4329 = vadd.f32 %v4327, %v4328
  %v4330 = vrot.slane %v4329, 1
  %v4331 = vadd.f32 %v4329, %v4330
  %v4332 = vrot.slane %v4323, 4
  %v4333 = vadd.f32 %v4323, %v4332
  %v4334 = vrot.slane %v4333, 2
  %v4335 = vadd.f32 %v4333, %v4334
  %v4336 = vrot.slane %v4335, 1
  %v4337 = vadd.f32 %v4335, %v4336
  %v4338 = vrot.slane %v4324, 4
  %v4339 = vadd.f32 %v4324, %v4338
  %v4340 = vrot.slane %v4339, 2
  %v4341 = vadd.f32 %v4339, %v4340
  %v4342 = vrot.slane %v4341, 1
  %v4343 = vadd.f32 %v4341, %v4342
  %v4344 = vrot.slane %v4325, 4
  %v4345 = vadd.f32 %v4325, %v4344
  %v4346 = vrot.slane %v4345, 2
  %v4347 = vadd.f32 %v4345, %v4346
  %v4348 = vrot.slane %v4347, 1
  %v4349 = vadd.f32 %v4347, %v4348
  %v4354 = vcombine.low %v4303, %v4309
  %v4355 = vcombine.low %v4315, %v4321
  %v4357 = vunpack.c.l.s4 1966171168
  %v4358 = vunpack.c.0.s8 %v4357
  %v4359 = vlaneseq
  %v4360 = vshrl.u32 %v4359, 7
  %v4361 = vsub.s32 %v4358, %v4360
  %v4362 = vrot.slane %v4354, %v4361
  %v4364 = vunpack.c.l.s4 1966171168
  %v4365 = vunpack.c.0.s8 %v4364
  %v4366 = vlaneseq
  %v4367 = vshrl.u32 %v4366, 7
  %v4368 = vsub.s32 %v4365, %v4367
  %v4369 = vrot.slane %v4355, %v4368
  %v4370 = vcombine.low %v4362, %v4369
  %v4372 = vunpack.c.l.s4 1966171168
  %v4373 = vunpack.c.0.s8 %v4372
  %v4374 = vlaneseq
  %v4375 = vshrl.u32 %v4374, 7
  %v4376 = vsub.s32 %v4373, %v4375
  %v4377 = vrot.slane %v4370, %v4376
  %v4379 = vlaneseq
  %vm4380 = vcmp.ge.s32.totalorder %v4379, 0
  %vm4381 = vcmp.lt.s32.totalorder %v4379, 512
  %vm4382 = vmand %vm4380, %vm4381
  %4383 = vst.msk [vmem:[%s3] sm:$0xf] %vm4382, %v4377
  %v4388 = vcombine.low %v4331, %v4337
  %v4389 = vcombine.low %v4343, %v4349
  %v4391 = vunpack.c.l.s4 1966171168
  %v4392 = vunpack.c.0.s8 %v4391
  %v4393 = vlaneseq
  %v4394 = vshrl.u32 %v4393, 7
  %v4395 = vsub.s32 %v4392, %v4394
  %v4396 = vrot.slane %v4388, %v4395
  %v4398 = vunpack.c.l.s4 1966171168
  %v4399 = vunpack.c.0.s8 %v4398
  %v4400 = vlaneseq
  %v4401 = vshrl.u32 %v4400, 7
  %v4402 = vsub.s32 %v4399, %v4401
  %v4403 = vrot.slane %v4389, %v4402
  %v4404 = vcombine.low %v4396, %v4403
  %v4406 = vunpack.c.l.s4 1966171168
  %v4407 = vunpack.c.0.s8 %v4406
  %v4408 = vlaneseq
  %v4409 = vshrl.u32 %v4408, 7
  %v4410 = vsub.s32 %v4407, %v4409
  %v4411 = vrot.slane %v4404, %v4410
  %4413 = vst.msk [vmem:[%s4] sm:$0xf] %vm4382, %v4411
  // Predicated region
  $region10: #{ocean_vae_forward.27} parent=0 // pred_check
    _
  $region11: #{ocean_vae_forward.27} parent=0 // pred_check_branch
    %4415 = sbr.rel (0) target = $region13
  $region12: #{ocean_vae_forward.27} parent=0 // pred_region
    _
  $region13: #{ocean_vae_forward.27} parent=0 // pred_fallthru
    _
  // Predicated region
  $region14: #{ocean_vae_forward.27} parent=0 // pred_check
    _
  $region15: #{ocean_vae_forward.27} parent=0 // pred_check_branch
    %4417 = sbr.rel (0) target = $region17
  $region16: #{ocean_vae_forward.27} parent=0 // pred_region
    _
  $region17: #{ocean_vae_forward.27} parent=0 // pred_fallthru
    _
  // Predicated region
  $region18: #{ocean_vae_forward.27} parent=0 // pred_check
    _
  $region19: #{ocean_vae_forward.27} parent=0 // pred_check_branch
    %4419 = sbr.rel (0) target = $region21
  $region20: #{ocean_vae_forward.27} parent=0 // pred_region
    _
  $region21: #{ocean_vae_forward.27} parent=0 // pred_fallthru
    _
  // Predicated region
  $region22: #{ocean_vae_forward.27} parent=0 // pred_check
    _
  $region23: #{ocean_vae_forward.27} parent=0 // pred_check_branch
    %4421 = sbr.rel (0) target = $region25
  $region24: #{ocean_vae_forward.27} parent=0 // pred_region
    _
  $region25: #{ocean_vae_forward.27} parent=0 // pred_fallthru
    _
  // Predicated region
  $region26: #{ocean_vae_forward.27} parent=0 // pred_check
    _
  $region27: #{ocean_vae_forward.27} parent=0 // pred_check_branch
    %4423 = sbr.rel (0) target = $region29
  $region28: #{ocean_vae_forward.27} parent=0 // pred_region
    _
  $region29: #{ocean_vae_forward.27} parent=0 // pred_fallthru
    _
  // Predicated region
  $region30: #{ocean_vae_forward.27} parent=0 // pred_check
    _
  $region31: #{ocean_vae_forward.27} parent=0 // pred_check_branch
    %4425 = sbr.rel (0) target = $region33
  $region32: #{ocean_vae_forward.27} parent=0 // pred_region
    _
  $region33: #{ocean_vae_forward.27} parent=0 // pred_fallthru
    _

// kernel: ocean_vae_forward.29
$region0: #{ocean_vae_forward.29}
  #allocation0 [shape = 'u32[]', space=smem, size = 0x4, offset = 0x4, fixed_abs, tag = 'smem constant byte address 0x4 - core index']
  #allocation1 [shape = 'u32[144,128]{1,0:T(1,128)}', space=vmem, size = 0x12000, scoped, tag = 'internal scratch']
  %s0 = inlined_call_operand.vmem [shape: bf16[32,1152], index: 0, kind: input, shape index: {}]
  %s1 = inlined_call_operand.vmem [shape: bf16[1152,256], index: 1, kind: input, shape index: {}]
  %s2 = inlined_call_operand.vmem [shape: bf16[32,256], index: 2, kind: output, shape index: {0}]
  %s3 = inlined_call_operand.vmem [shape: f32[1,1,256], index: 3, kind: output, shape index: {1}]
  %s4 = inlined_call_operand.vmem [shape: f32[1,1,256], index: 4, kind: output, shape index: {2}]
  %5 = xla_tuple %s2, %s3, %s4
  %s6 = sld [smem:[#allocation0]]
  $region34: #{ocean_vae_forward.29} parent=0
    _
  %s8 = ssub.s32 1, %s6
  %s9 = scalar_select 0, %s8, %s6
  // Predicated region
  $region2: #{ocean_vae_forward.29} parent=0 // pred_check
    _
  $region3: #{ocean_vae_forward.29} parent=0 // pred_check_branch
    %11 = sbr.rel (0) target = $region5
  $region4: #{ocean_vae_forward.29} parent=0 // pred_region
    _
  $region5: #{ocean_vae_forward.29} parent=0 // pred_fallthru
    _
  // Predicated region
  $region6: #{ocean_vae_forward.29} parent=0 // pred_check
    _
  $region7: #{ocean_vae_forward.29} parent=0 // pred_check_branch
    %13 = sbr.rel (0) target = $region9
  $region8: #{ocean_vae_forward.29} parent=0 // pred_region
    _
  $region9: #{ocean_vae_forward.29} parent=0 // pred_fallthru
    _
  %v15 = vld [vmem:[%s0] sm:$0xff]
  %v16 = vld [vmem:[%s0 + $0x8] sm:$0xff]
  %v17 = vld [vmem:[%s0 + $0x10] sm:$0xff]
  %v18 = vld [vmem:[%s0 + $0x18] sm:$0xff]
  %v19 = vld [vmem:[%s0 + $0x20] sm:$0xf]
  %v20 = vld [vmem:[%s0 + $0x24] sm:$0xff]
  %v21 = vld [vmem:[%s0 + $0x2c] sm:$0xff]
  %v22 = vld [vmem:[%s0 + $0x34] sm:$0xff]
  %v23 = vld [vmem:[%s0 + $0x3c] sm:$0xff]
  %v24 = vld [vmem:[%s0 + $0x44] sm:$0xf]
  %v25 = vld [vmem:[%s0 + $0x48] sm:$0xff]
  %v26 = vld [vmem:[%s0 + $0x50] sm:$0xff]
  %v27 = vld [vmem:[%s0 + $0x58] sm:$0xff]
  %v28 = vld [vmem:[%s0 + $0x60] sm:$0xff]
  %v29 = vld [vmem:[%s0 + $0x68] sm:$0xf]
  %v30 = vld [vmem:[%s0 + $0x6c] sm:$0xff]
  %v31 = vld [vmem:[%s0 + $0x74] sm:$0xff]
  %v32 = vld [vmem:[%s0 + $0x7c] sm:$0xff]
  %v33 = vld [vmem:[%s0 + $0x84] sm:$0xff]
  %v34 = vld [vmem:[%s0 + $0x8c] sm:$0xf]
  %v35 = vld [vmem:[%s1] sm:$0xff]
  %v36 = vld [vmem:[%s1 + $0x8] sm:$0xff]
  %v37 = vld [vmem:[%s1 + $0x10] sm:$0xff]
  %v38 = vld [vmem:[%s1 + $0x18] sm:$0xff]
  %v39 = vld [vmem:[%s1 + $0x20] sm:$0xff]
  %v40 = vld [vmem:[%s1 + $0x28] sm:$0xff]
  %v41 = vld [vmem:[%s1 + $0x30] sm:$0xff]
  %v42 = vld [vmem:[%s1 + $0x38] sm:$0xff]
  %v43 = vld [vmem:[%s1 + $0x40] sm:$0xff]
  %v44 = vld [vmem:[%s1 + $0x48] sm:$0xff]
  %v45 = vld [vmem:[%s1 + $0x50] sm:$0xff]
  %v46 = vld [vmem:[%s1 + $0x58] sm:$0xff]
  %v47 = vld [vmem:[%s1 + $0x60] sm:$0xff]
  %v48 = vld [vmem:[%s1 + $0x68] sm:$0xff]
  %v49 = vld [vmem:[%s1 + $0x70] sm:$0xff]
  %v50 = vld [vmem:[%s1 + $0x78] sm:$0xff]
  %v51 = vld [vmem:[%s1 + $0x80] sm:$0xff]
  %v52 = vld [vmem:[%s1 + $0x88] sm:$0xff]
  %v53 = vld [vmem:[%s1 + $0x90] sm:$0xff]
  %v54 = vld [vmem:[%s1 + $0x98] sm:$0xff]
  %v55 = vld [vmem:[%s1 + $0xa0] sm:$0xff]
  %v56 = vld [vmem:[%s1 + $0xa8] sm:$0xff]
  %v57 = vld [vmem:[%s1 + $0xb0] sm:$0xff]
  %v58 = vld [vmem:[%s1 + $0xb8] sm:$0xff]
  %v59 = vld [vmem:[%s1 + $0xc0] sm:$0xff]
  %v60 = vld [vmem:[%s1 + $0xc8] sm:$0xff]
  %v61 = vld [vmem:[%s1 + $0xd0] sm:$0xff]
  %v62 = vld [vmem:[%s1 + $0xd8] sm:$0xff]
  %v63 = vld [vmem:[%s1 + $0xe0] sm:$0xff]
  %v64 = vld [vmem:[%s1 + $0xe8] sm:$0xff]
  %v65 = vld [vmem:[%s1 + $0xf0] sm:$0xff]
  %v66 = vld [vmem:[%s1 + $0xf8] sm:$0xff]
  %v67 = vld [vmem:[%s1 + $0x100] sm:$0xff]
  %v68 = vld [vmem:[%s1 + $0x108] sm:$0xff]
  %v69 = vld [vmem:[%s1 + $0x110] sm:$0xff]
  %v70 = vld [vmem:[%s1 + $0x118] sm:$0xff]
  %v71 = vld [vmem:[%s1 + $0x120] sm:$0xff]
  %v72 = vld [vmem:[%s1 + $0x128] sm:$0xff]
  %v73 = vld [vmem:[%s1 + $0x130] sm:$0xff]
  %v74 = vld [vmem:[%s1 + $0x138] sm:$0xff]
  %v75 = vld [vmem:[%s1 + $0x140] sm:$0xff]
  %v76 = vld [vmem:[%s1 + $0x148] sm:$0xff]
  %v77 = vld [vmem:[%s1 + $0x150] sm:$0xff]
  %v78 = vld [vmem:[%s1 + $0x158] sm:$0xff]
  %v79 = vld [vmem:[%s1 + $0x160] sm:$0xff]
  %v80 = vld [vmem:[%s1 + $0x168] sm:$0xff]
  %v81 = vld [vmem:[%s1 + $0x170] sm:$0xff]
  %v82 = vld [vmem:[%s1 + $0x178] sm:$0xff]
  %v83 = vld [vmem:[%s1 + $0x180] sm:$0xff]
  %v84 = vld [vmem:[%s1 + $0x188] sm:$0xff]
  %v85 = vld [vmem:[%s1 + $0x190] sm:$0xff]
  %v86 = vld [vmem:[%s1 + $0x198] sm:$0xff]
  %v87 = vld [vmem:[%s1 + $0x1a0] sm:$0xff]
  %v88 = vld [vmem:[%s1 + $0x1a8] sm:$0xff]
  %v89 = vld [vmem:[%s1 + $0x1b0] sm:$0xff]
  %v90 = vld [vmem:[%s1 + $0x1b8] sm:$0xff]
  %v91 = vld [vmem:[%s1 + $0x1c0] sm:$0xff]
  %v92 = vld [vmem:[%s1 + $0x1c8] sm:$0xff]
  %v93 = vld [vmem:[%s1 + $0x1d0] sm:$0xff]
  %v94 = vld [vmem:[%s1 + $0x1d8] sm:$0xff]
  %v95 = vld [vmem:[%s1 + $0x1e0] sm:$0xff]
  %v96 = vld [vmem:[%s1 + $0x1e8] sm:$0xff]
  %v97 = vld [vmem:[%s1 + $0x1f0] sm:$0xff]
  %v98 = vld [vmem:[%s1 + $0x1f8] sm:$0xff]
  %v99 = vld [vmem:[%s1 + $0x200] sm:$0xff]
  %v100 = vld [vmem:[%s1 + $0x208] sm:$0xff]
  %v101 = vld [vmem:[%s1 + $0x210] sm:$0xff]
  %v102 = vld [vmem:[%s1 + $0x218] sm:$0xff]
  %v103 = vld [vmem:[%s1 + $0x220] sm:$0xff]
  %v104 = vld [vmem:[%s1 + $0x228] sm:$0xff]
  %v105 = vld [vmem:[%s1 + $0x230] sm:$0xff]
  %v106 = vld [vmem:[%s1 + $0x238] sm:$0xff]
  %v107 = vld [vmem:[%s1 + $0x240] sm:$0xff]
  %v108 = vld [vmem:[%s1 + $0x248] sm:$0xff]
  %v109 = vld [vmem:[%s1 + $0x250] sm:$0xff]
  %v110 = vld [vmem:[%s1 + $0x258] sm:$0xff]
  %v111 = vld [vmem:[%s1 + $0x260] sm:$0xff]
  %v112 = vld [vmem:[%s1 + $0x268] sm:$0xff]
  %v113 = vld [vmem:[%s1 + $0x270] sm:$0xff]
  %v114 = vld [vmem:[%s1 + $0x278] sm:$0xff]
  %v115 = vld [vmem:[%s1 + $0x280] sm:$0xff]
  %v116 = vld [vmem:[%s1 + $0x288] sm:$0xff]
  %v117 = vld [vmem:[%s1 + $0x290] sm:$0xff]
  %v118 = vld [vmem:[%s1 + $0x298] sm:$0xff]
  %v119 = vld [vmem:[%s1 + $0x2a0] sm:$0xff]
  %v120 = vld [vmem:[%s1 + $0x2a8] sm:$0xff]
  %v121 = vld [vmem:[%s1 + $0x2b0] sm:$0xff]
  %v122 = vld [vmem:[%s1 + $0x2b8] sm:$0xff]
  %v123 = vld [vmem:[%s1 + $0x2c0] sm:$0xff]
  %v124 = vld [vmem:[%s1 + $0x2c8] sm:$0xff]
  %v125 = vld [vmem:[%s1 + $0x2d0] sm:$0xff]
  %v126 = vld [vmem:[%s1 + $0x2d8] sm:$0xff]
  %v127 = vld [vmem:[%s1 + $0x2e0] sm:$0xff]
  %v128 = vld [vmem:[%s1 + $0x2e8] sm:$0xff]
  %v129 = vld [vmem:[%s1 + $0x2f0] sm:$0xff]
  %v130 = vld [vmem:[%s1 + $0x2f8] sm:$0xff]
  %v131 = vld [vmem:[%s1 + $0x300] sm:$0xff]
  %v132 = vld [vmem:[%s1 + $0x308] sm:$0xff]
  %v133 = vld [vmem:[%s1 + $0x310] sm:$0xff]
  %v134 = vld [vmem:[%s1 + $0x318] sm:$0xff]
  %v135 = vld [vmem:[%s1 + $0x320] sm:$0xff]
  %v136 = vld [vmem:[%s1 + $0x328] sm:$0xff]
  %v137 = vld [vmem:[%s1 + $0x330] sm:$0xff]
  %v138 = vld [vmem:[%s1 + $0x338] sm:$0xff]
  %v139 = vld [vmem:[%s1 + $0x340] sm:$0xff]
  %v140 = vld [vmem:[%s1 + $0x348] sm:$0xff]
  %v141 = vld [vmem:[%s1 + $0x350] sm:$0xff]
  %v142 = vld [vmem:[%s1 + $0x358] sm:$0xff]
  %v143 = vld [vmem:[%s1 + $0x360] sm:$0xff]
  %v144 = vld [vmem:[%s1 + $0x368] sm:$0xff]
  %v145 = vld [vmem:[%s1 + $0x370] sm:$0xff]
  %v146 = vld [vmem:[%s1 + $0x378] sm:$0xff]
  %v147 = vld [vmem:[%s1 + $0x380] sm:$0xff]
  %v148 = vld [vmem:[%s1 + $0x388] sm:$0xff]
  %v149 = vld [vmem:[%s1 + $0x390] sm:$0xff]
  %v150 = vld [vmem:[%s1 + $0x398] sm:$0xff]
  %v151 = vld [vmem:[%s1 + $0x3a0] sm:$0xff]
  %v152 = vld [vmem:[%s1 + $0x3a8] sm:$0xff]
  %v153 = vld [vmem:[%s1 + $0x3b0] sm:$0xff]
  %v154 = vld [vmem:[%s1 + $0x3b8] sm:$0xff]
  %v155 = vld [vmem:[%s1 + $0x3c0] sm:$0xff]
  %v156 = vld [vmem:[%s1 + $0x3c8] sm:$0xff]
  %v157 = vld [vmem:[%s1 + $0x3d0] sm:$0xff]
  %v158 = vld [vmem:[%s1 + $0x3d8] sm:$0xff]
  %v159 = vld [vmem:[%s1 + $0x3e0] sm:$0xff]
  %v160 = vld [vmem:[%s1 + $0x3e8] sm:$0xff]
  %v161 = vld [vmem:[%s1 + $0x3f0] sm:$0xff]
  %v162 = vld [vmem:[%s1 + $0x3f8] sm:$0xff]
  %v163 = vld [vmem:[%s1 + $0x400] sm:$0xff]
  %v164 = vld [vmem:[%s1 + $0x408] sm:$0xff]
  %v165 = vld [vmem:[%s1 + $0x410] sm:$0xff]
  %v166 = vld [vmem:[%s1 + $0x418] sm:$0xff]
  %v167 = vld [vmem:[%s1 + $0x420] sm:$0xff]
  %v168 = vld [vmem:[%s1 + $0x428] sm:$0xff]
  %v169 = vld [vmem:[%s1 + $0x430] sm:$0xff]
  %v170 = vld [vmem:[%s1 + $0x438] sm:$0xff]
  %v171 = vld [vmem:[%s1 + $0x440] sm:$0xff]
  %v172 = vld [vmem:[%s1 + $0x448] sm:$0xff]
  %v173 = vld [vmem:[%s1 + $0x450] sm:$0xff]
  %v174 = vld [vmem:[%s1 + $0x458] sm:$0xff]
  %v175 = vld [vmem:[%s1 + $0x460] sm:$0xff]
  %v176 = vld [vmem:[%s1 + $0x468] sm:$0xff]
  %v177 = vld [vmem:[%s1 + $0x470] sm:$0xff]
  %v178 = vld [vmem:[%s1 + $0x478] sm:$0xff]
  %v199 = vunpack.c.l.b16 %v15
  %v200 = vunpack.c.h.b16 %v15
  %v201 = vunpack.c.l.b16 %v16
  %v202 = vunpack.c.h.b16 %v16
  %v203 = vunpack.c.l.b16 %v17
  %v204 = vunpack.c.h.b16 %v17
  %v205 = vunpack.c.l.b16 %v18
  %v206 = vunpack.c.h.b16 %v18
  %v207 = vunpack.c.l.b16 %v19
  %v208 = vunpack.c.l.b16 %v20
  %v209 = vunpack.c.h.b16 %v20
  %v210 = vunpack.c.l.b16 %v21
  %v211 = vunpack.c.h.b16 %v21
  %v212 = vunpack.c.l.b16 %v22
  %v213 = vunpack.c.h.b16 %v22
  %v214 = vunpack.c.l.b16 %v23
  %v215 = vunpack.c.h.b16 %v23
  %v216 = vunpack.c.l.b16 %v24
  %v217 = vunpack.c.l.b16 %v25
  %v218 = vunpack.c.h.b16 %v25
  %v219 = vunpack.c.l.b16 %v26
  %v220 = vunpack.c.h.b16 %v26
  %v221 = vunpack.c.l.b16 %v27
  %v222 = vunpack.c.h.b16 %v27
  %v223 = vunpack.c.l.b16 %v28
  %v224 = vunpack.c.h.b16 %v28
  %v225 = vunpack.c.l.b16 %v29
  %v226 = vunpack.c.l.b16 %v30
  %v227 = vunpack.c.h.b16 %v30
  %v228 = vunpack.c.l.b16 %v31
  %v229 = vunpack.c.h.b16 %v31
  %v230 = vunpack.c.l.b16 %v32
  %v231 = vunpack.c.h.b16 %v32
  %v232 = vunpack.c.l.b16 %v33
  %v233 = vunpack.c.h.b16 %v33
  %v234 = vunpack.c.l.b16 %v34
  %v235 = vpack.c.b16 %v208, %v199
  %v236 = vpack.c.b16 %v209, %v200
  %v237 = vpack.c.b16 %v210, %v201
  %v238 = vpack.c.b16 %v211, %v202
  %v239 = vpack.c.b16 %v212, %v203
  %v240 = vpack.c.b16 %v213, %v204
  %v241 = vpack.c.b16 %v214, %v205
  %v242 = vpack.c.b16 %v215, %v206
  %v243 = vpack.c.b16 %v216, %v207
  %v244 = vpack.c.b16 %v226, %v217
  %v245 = vpack.c.b16 %v227, %v218
  %v246 = vpack.c.b16 %v228, %v219
  %v247 = vpack.c.b16 %v229, %v220
  %v248 = vpack.c.b16 %v230, %v221
  %v249 = vpack.c.b16 %v231, %v222
  %v250 = vpack.c.b16 %v232, %v223
  %v251 = vpack.c.b16 %v233, %v224
  %v252 = vpack.c.b16 %v234, %v225
  %v415 = vunpack.c.l.b16 %v35
  %v416 = vunpack.c.h.b16 %v35
  %v417 = vunpack.c.l.b16 %v36
  %v418 = vunpack.c.h.b16 %v36
  %v419 = vunpack.c.l.b16 %v37
  %v420 = vunpack.c.h.b16 %v37
  %v421 = vunpack.c.l.b16 %v38
  %v422 = vunpack.c.h.b16 %v38
  %v423 = vunpack.c.l.b16 %v39
  %v424 = vunpack.c.h.b16 %v39
  %v425 = vunpack.c.l.b16 %v40
  %v426 = vunpack.c.h.b16 %v40
  %v427 = vunpack.c.l.b16 %v41
  %v428 = vunpack.c.h.b16 %v41
  %v429 = vunpack.c.l.b16 %v42
  %v430 = vunpack.c.h.b16 %v42
  %v431 = vunpack.c.l.b16 %v43
  %v432 = vunpack.c.h.b16 %v43
  %v433 = vunpack.c.l.b16 %v44
  %v434 = vunpack.c.h.b16 %v44
  %v435 = vunpack.c.l.b16 %v45
  %v436 = vunpack.c.h.b16 %v45
  %v437 = vunpack.c.l.b16 %v46
  %v438 = vunpack.c.h.b16 %v46
  %v439 = vunpack.c.l.b16 %v47
  %v440 = vunpack.c.h.b16 %v47
  %v441 = vunpack.c.l.b16 %v48
  %v442 = vunpack.c.h.b16 %v48
  %v443 = vunpack.c.l.b16 %v49
  %v444 = vunpack.c.h.b16 %v49
  %v445 = vunpack.c.l.b16 %v50
  %v446 = vunpack.c.h.b16 %v50
  %v447 = vunpack.c.l.b16 %v51
  %v448 = vunpack.c.h.b16 %v51
  %v449 = vunpack.c.l.b16 %v52
  %v450 = vunpack.c.h.b16 %v52
  %v451 = vunpack.c.l.b16 %v53
  %v452 = vunpack.c.h.b16 %v53
  %v453 = vunpack.c.l.b16 %v54
  %v454 = vunpack.c.h.b16 %v54
  %v455 = vunpack.c.l.b16 %v55
  %v456 = vunpack.c.h.b16 %v55
  %v457 = vunpack.c.l.b16 %v56
  %v458 = vunpack.c.h.b16 %v56
  %v459 = vunpack.c.l.b16 %v57
  %v460 = vunpack.c.h.b16 %v57
  %v461 = vunpack.c.l.b16 %v58
  %v462 = vunpack.c.h.b16 %v58
  %v463 = vunpack.c.l.b16 %v59
  %v464 = vunpack.c.h.b16 %v59
  %v465 = vunpack.c.l.b16 %v60
  %v466 = vunpack.c.h.b16 %v60
  %v467 = vunpack.c.l.b16 %v61
  %v468 = vunpack.c.h.b16 %v61
  %v469 = vunpack.c.l.b16 %v62
  %v470 = vunpack.c.h.b16 %v62
  %v471 = vunpack.c.l.b16 %v63
  %v472 = vunpack.c.h.b16 %v63
  %v473 = vunpack.c.l.b16 %v64
  %v474 = vunpack.c.h.b16 %v64
  %v475 = vunpack.c.l.b16 %v65
  %v476 = vunpack.c.h.b16 %v65
  %v477 = vunpack.c.l.b16 %v66
  %v478 = vunpack.c.h.b16 %v66
  %v479 = vunpack.c.l.b16 %v67
  %v480 = vunpack.c.h.b16 %v67
  %v481 = vunpack.c.l.b16 %v68
  %v482 = vunpack.c.h.b16 %v68
  %v483 = vunpack.c.l.b16 %v69
  %v484 = vunpack.c.h.b16 %v69
  %v485 = vunpack.c.l.b16 %v70
  %v486 = vunpack.c.h.b16 %v70
  %v487 = vunpack.c.l.b16 %v71
  %v488 = vunpack.c.h.b16 %v71
  %v489 = vunpack.c.l.b16 %v72
  %v490 = vunpack.c.h.b16 %v72
  %v491 = vunpack.c.l.b16 %v73
  %v492 = vunpack.c.h.b16 %v73
  %v493 = vunpack.c.l.b16 %v74
  %v494 = vunpack.c.h.b16 %v74
  %v495 = vunpack.c.l.b16 %v75
  %v496 = vunpack.c.h.b16 %v75
  %v497 = vunpack.c.l.b16 %v76
  %v498 = vunpack.c.h.b16 %v76
  %v499 = vunpack.c.l.b16 %v77
  %v500 = vunpack.c.h.b16 %v77
  %v501 = vunpack.c.l.b16 %v78
  %v502 = vunpack.c.h.b16 %v78
  %v503 = vunpack.c.l.b16 %v79
  %v504 = vunpack.c.h.b16 %v79
  %v505 = vunpack.c.l.b16 %v80
  %v506 = vunpack.c.h.b16 %v80
  %v507 = vunpack.c.l.b16 %v81
  %v508 = vunpack.c.h.b16 %v81
  %v509 = vunpack.c.l.b16 %v82
  %v510 = vunpack.c.h.b16 %v82
  %v511 = vunpack.c.l.b16 %v83
  %v512 = vunpack.c.h.b16 %v83
  %v513 = vunpack.c.l.b16 %v84
  %v514 = vunpack.c.h.b16 %v84
  %v515 = vunpack.c.l.b16 %v85
  %v516 = vunpack.c.h.b16 %v85
  %v517 = vunpack.c.l.b16 %v86
  %v518 = vunpack.c.h.b16 %v86
  %v519 = vunpack.c.l.b16 %v87
  %v520 = vunpack.c.h.b16 %v87
  %v521 = vunpack.c.l.b16 %v88
  %v522 = vunpack.c.h.b16 %v88
  %v523 = vunpack.c.l.b16 %v89
  %v524 = vunpack.c.h.b16 %v89
  %v525 = vunpack.c.l.b16 %v90
  %v526 = vunpack.c.h.b16 %v90
  %v527 = vunpack.c.l.b16 %v91
  %v528 = vunpack.c.h.b16 %v91
  %v529 = vunpack.c.l.b16 %v92
  %v530 = vunpack.c.h.b16 %v92
  %v531 = vunpack.c.l.b16 %v93
  %v532 = vunpack.c.h.b16 %v93
  %v533 = vunpack.c.l.b16 %v94
  %v534 = vunpack.c.h.b16 %v94
  %v535 = vunpack.c.l.b16 %v95
  %v536 = vunpack.c.h.b16 %v95
  %v537 = vunpack.c.l.b16 %v96
  %v538 = vunpack.c.h.b16 %v96
  %v539 = vunpack.c.l.b16 %v97
  %v540 = vunpack.c.h.b16 %v97
  %v541 = vunpack.c.l.b16 %v98
  %v542 = vunpack.c.h.b16 %v98
  %v543 = vunpack.c.l.b16 %v99
  %v544 = vunpack.c.h.b16 %v99
  %v545 = vunpack.c.l.b16 %v100
  %v546 = vunpack.c.h.b16 %v100
  %v547 = vunpack.c.l.b16 %v101
  %v548 = vunpack.c.h.b16 %v101
  %v549 = vunpack.c.l.b16 %v102
  %v550 = vunpack.c.h.b16 %v102
  %v551 = vunpack.c.l.b16 %v103
  %v552 = vunpack.c.h.b16 %v103
  %v553 = vunpack.c.l.b16 %v104
  %v554 = vunpack.c.h.b16 %v104
  %v555 = vunpack.c.l.b16 %v105
  %v556 = vunpack.c.h.b16 %v105
  %v557 = vunpack.c.l.b16 %v106
  %v558 = vunpack.c.h.b16 %v106
  %v559 = vunpack.c.l.b16 %v107
  %v560 = vunpack.c.h.b16 %v107
  %v561 = vunpack.c.l.b16 %v108
  %v562 = vunpack.c.h.b16 %v108
  %v563 = vunpack.c.l.b16 %v109
  %v564 = vunpack.c.h.b16 %v109
  %v565 = vunpack.c.l.b16 %v110
  %v566 = vunpack.c.h.b16 %v110
  %v567 = vunpack.c.l.b16 %v111
  %v568 = vunpack.c.h.b16 %v111
  %v569 = vunpack.c.l.b16 %v112
  %v570 = vunpack.c.h.b16 %v112
  %v571 = vunpack.c.l.b16 %v113
  %v572 = vunpack.c.h.b16 %v113
  %v573 = vunpack.c.l.b16 %v114
  %v574 = vunpack.c.h.b16 %v114
  %v575 = vunpack.c.l.b16 %v115
  %v576 = vunpack.c.h.b16 %v115
  %v577 = vunpack.c.l.b16 %v116
  %v578 = vunpack.c.h.b16 %v116
  %v579 = vunpack.c.l.b16 %v117
  %v580 = vunpack.c.h.b16 %v117
  %v581 = vunpack.c.l.b16 %v118
  %v582 = vunpack.c.h.b16 %v118
  %v583 = vunpack.c.l.b16 %v119
  %v584 = vunpack.c.h.b16 %v119
  %v585 = vunpack.c.l.b16 %v120
  %v586 = vunpack.c.h.b16 %v120
  %v587 = vunpack.c.l.b16 %v121
  %v588 = vunpack.c.h.b16 %v121
  %v589 = vunpack.c.l.b16 %v122
  %v590 = vunpack.c.h.b16 %v122
  %v591 = vunpack.c.l.b16 %v123
  %v592 = vunpack.c.h.b16 %v123
  %v593 = vunpack.c.l.b16 %v124
  %v594 = vunpack.c.h.b16 %v124
  %v595 = vunpack.c.l.b16 %v125
  %v596 = vunpack.c.h.b16 %v125
  %v597 = vunpack.c.l.b16 %v126
  %v598 = vunpack.c.h.b16 %v126
  %v599 = vunpack.c.l.b16 %v127
  %v600 = vunpack.c.h.b16 %v127
  %v601 = vunpack.c.l.b16 %v128
  %v602 = vunpack.c.h.b16 %v128
  %v603 = vunpack.c.l.b16 %v129
  %v604 = vunpack.c.h.b16 %v129
  %v605 = vunpack.c.l.b16 %v130
  %v606 = vunpack.c.h.b16 %v130
  %v607 = vunpack.c.l.b16 %v131
  %v608 = vunpack.c.h.b16 %v131
  %v609 = vunpack.c.l.b16 %v132
  %v610 = vunpack.c.h.b16 %v132
  %v611 = vunpack.c.l.b16 %v133
  %v612 = vunpack.c.h.b16 %v133
  %v613 = vunpack.c.l.b16 %v134
  %v614 = vunpack.c.h.b16 %v134
  %v615 = vunpack.c.l.b16 %v135
  %v616 = vunpack.c.h.b16 %v135
  %v617 = vunpack.c.l.b16 %v136
  %v618 = vunpack.c.h.b16 %v136
  %v619 = vunpack.c.l.b16 %v137
  %v620 = vunpack.c.h.b16 %v137
  %v621 = vunpack.c.l.b16 %v138
  %v622 = vunpack.c.h.b16 %v138
  %v623 = vunpack.c.l.b16 %v139
  %v624 = vunpack.c.h.b16 %v139
  %v625 = vunpack.c.l.b16 %v140
  %v626 = vunpack.c.h.b16 %v140
  %v627 = vunpack.c.l.b16 %v141
  %v628 = vunpack.c.h.b16 %v141
  %v629 = vunpack.c.l.b16 %v142
  %v630 = vunpack.c.h.b16 %v142
  %v631 = vunpack.c.l.b16 %v143
  %v632 = vunpack.c.h.b16 %v143
  %v633 = vunpack.c.l.b16 %v144
  %v634 = vunpack.c.h.b16 %v144
  %v635 = vunpack.c.l.b16 %v145
  %v636 = vunpack.c.h.b16 %v145
  %v637 = vunpack.c.l.b16 %v146
  %v638 = vunpack.c.h.b16 %v146
  %v639 = vunpack.c.l.b16 %v147
  %v640 = vunpack.c.h.b16 %v147
  %v641 = vunpack.c.l.b16 %v148
  %v642 = vunpack.c.h.b16 %v148
  %v643 = vunpack.c.l.b16 %v149
  %v644 = vunpack.c.h.b16 %v149
  %v645 = vunpack.c.l.b16 %v150
  %v646 = vunpack.c.h.b16 %v150
  %v647 = vunpack.c.l.b16 %v151
  %v648 = vunpack.c.h.b16 %v151
  %v649 = vunpack.c.l.b16 %v152
  %v650 = vunpack.c.h.b16 %v152
  %v651 = vunpack.c.l.b16 %v153
  %v652 = vunpack.c.h.b16 %v153
  %v653 = vunpack.c.l.b16 %v154
  %v654 = vunpack.c.h.b16 %v154
  %v655 = vunpack.c.l.b16 %v155
  %v656 = vunpack.c.h.b16 %v155
  %v657 = vunpack.c.l.b16 %v156
  %v658 = vunpack.c.h.b16 %v156
  %v659 = vunpack.c.l.b16 %v157
  %v660 = vunpack.c.h.b16 %v157
  %v661 = vunpack.c.l.b16 %v158
  %v662 = vunpack.c.h.b16 %v158
  %v663 = vunpack.c.l.b16 %v159
  %v664 = vunpack.c.h.b16 %v159
  %v665 = vunpack.c.l.b16 %v160
  %v666 = vunpack.c.h.b16 %v160
  %v667 = vunpack.c.l.b16 %v161
  %v668 = vunpack.c.h.b16 %v161
  %v669 = vunpack.c.l.b16 %v162
  %v670 = vunpack.c.h.b16 %v162
  %v671 = vunpack.c.l.b16 %v163
  %v672 = vunpack.c.h.b16 %v163
  %v673 = vunpack.c.l.b16 %v164
  %v674 = vunpack.c.h.b16 %v164
  %v675 = vunpack.c.l.b16 %v165
  %v676 = vunpack.c.h.b16 %v165
  %v677 = vunpack.c.l.b16 %v166
  %v678 = vunpack.c.h.b16 %v166
  %v679 = vunpack.c.l.b16 %v167
  %v680 = vunpack.c.h.b16 %v167
  %v681 = vunpack.c.l.b16 %v168
  %v682 = vunpack.c.h.b16 %v168
  %v683 = vunpack.c.l.b16 %v169
  %v684 = vunpack.c.h.b16 %v169
  %v685 = vunpack.c.l.b16 %v170
  %v686 = vunpack.c.h.b16 %v170
  %v687 = vunpack.c.l.b16 %v171
  %v688 = vunpack.c.h.b16 %v171
  %v689 = vunpack.c.l.b16 %v172
  %v690 = vunpack.c.h.b16 %v172
  %v691 = vunpack.c.l.b16 %v173
  %v692 = vunpack.c.h.b16 %v173
  %v693 = vunpack.c.l.b16 %v174
  %v694 = vunpack.c.h.b16 %v174
  %v695 = vunpack.c.l.b16 %v175
  %v696 = vunpack.c.h.b16 %v175
  %v697 = vunpack.c.l.b16 %v176
  %v698 = vunpack.c.h.b16 %v176
  %v699 = vunpack.c.l.b16 %v177
  %v700 = vunpack.c.h.b16 %v177
  %v701 = vunpack.c.l.b16 %v178
  %v702 = vunpack.c.h.b16 %v178
  %v703 = vpack.c.b16 %v417, %v415
  %v704 = vpack.c.b16 %v418, %v416
  %v705 = vpack.c.b16 %v421, %v419
  %v706 = vpack.c.b16 %v422, %v420
  %v707 = vpack.c.b16 %v425, %v423
  %v708 = vpack.c.b16 %v426, %v424
  %v709 = vpack.c.b16 %v429, %v427
  %v710 = vpack.c.b16 %v430, %v428
  %v711 = vpack.c.b16 %v433, %v431
  %v712 = vpack.c.b16 %v434, %v432
  %v713 = vpack.c.b16 %v437, %v435
  %v714 = vpack.c.b16 %v438, %v436
  %v715 = vpack.c.b16 %v441, %v439
  %v716 = vpack.c.b16 %v442, %v440
  %v717 = vpack.c.b16 %v445, %v443
  %v718 = vpack.c.b16 %v446, %v444
  %v719 = vpack.c.b16 %v449, %v447
  %v720 = vpack.c.b16 %v450, %v448
  %v721 = vpack.c.b16 %v453, %v451
  %v722 = vpack.c.b16 %v454, %v452
  %v723 = vpack.c.b16 %v457, %v455
  %v724 = vpack.c.b16 %v458, %v456
  %v725 = vpack.c.b16 %v461, %v459
  %v726 = vpack.c.b16 %v462, %v460
  %v727 = vpack.c.b16 %v465, %v463
  %v728 = vpack.c.b16 %v466, %v464
  %v729 = vpack.c.b16 %v469, %v467
  %v730 = vpack.c.b16 %v470, %v468
  %v731 = vpack.c.b16 %v473, %v471
  %v732 = vpack.c.b16 %v474, %v472
  %v733 = vpack.c.b16 %v477, %v475
  %v734 = vpack.c.b16 %v478, %v476
  %v735 = vpack.c.b16 %v481, %v479
  %v736 = vpack.c.b16 %v482, %v480
  %v737 = vpack.c.b16 %v485, %v483
  %v738 = vpack.c.b16 %v486, %v484
  %v739 = vpack.c.b16 %v489, %v487
  %v740 = vpack.c.b16 %v490, %v488
  %v741 = vpack.c.b16 %v493, %v491
  %v742 = vpack.c.b16 %v494, %v492
  %v743 = vpack.c.b16 %v497, %v495
  %v744 = vpack.c.b16 %v498, %v496
  %v745 = vpack.c.b16 %v501, %v499
  %v746 = vpack.c.b16 %v502, %v500
  %v747 = vpack.c.b16 %v505, %v503
  %v748 = vpack.c.b16 %v506, %v504
  %v749 = vpack.c.b16 %v509, %v507
  %v750 = vpack.c.b16 %v510, %v508
  %v751 = vpack.c.b16 %v513, %v511
  %v752 = vpack.c.b16 %v514, %v512
  %v753 = vpack.c.b16 %v517, %v515
  %v754 = vpack.c.b16 %v518, %v516
  %v755 = vpack.c.b16 %v521, %v519
  %v756 = vpack.c.b16 %v522, %v520
  %v757 = vpack.c.b16 %v525, %v523
  %v758 = vpack.c.b16 %v526, %v524
  %v759 = vpack.c.b16 %v529, %v527
  %v760 = vpack.c.b16 %v530, %v528
  %v761 = vpack.c.b16 %v533, %v531
  %v762 = vpack.c.b16 %v534, %v532
  %v763 = vpack.c.b16 %v537, %v535
  %v764 = vpack.c.b16 %v538, %v536
  %v765 = vpack.c.b16 %v541, %v539
  %v766 = vpack.c.b16 %v542, %v540
  %v767 = vpack.c.b16 %v545, %v543
  %v768 = vpack.c.b16 %v546, %v544
  %v769 = vpack.c.b16 %v549, %v547
  %v770 = vpack.c.b16 %v550, %v548
  %v771 = vpack.c.b16 %v553, %v551
  %v772 = vpack.c.b16 %v554, %v552
  %v773 = vpack.c.b16 %v557, %v555
  %v774 = vpack.c.b16 %v558, %v556
  %v775 = vpack.c.b16 %v561, %v559
  %v776 = vpack.c.b16 %v562, %v560
  %v777 = vpack.c.b16 %v565, %v563
  %v778 = vpack.c.b16 %v566, %v564
  %v779 = vpack.c.b16 %v569, %v567
  %v780 = vpack.c.b16 %v570, %v568
  %v781 = vpack.c.b16 %v573, %v571
  %v782 = vpack.c.b16 %v574, %v572
  %v783 = vpack.c.b16 %v577, %v575
  %v784 = vpack.c.b16 %v578, %v576
  %v785 = vpack.c.b16 %v581, %v579
  %v786 = vpack.c.b16 %v582, %v580
  %v787 = vpack.c.b16 %v585, %v583
  %v788 = vpack.c.b16 %v586, %v584
  %v789 = vpack.c.b16 %v589, %v587
  %v790 = vpack.c.b16 %v590, %v588
  %v791 = vpack.c.b16 %v593, %v591
  %v792 = vpack.c.b16 %v594, %v592
  %v793 = vpack.c.b16 %v597, %v595
  %v794 = vpack.c.b16 %v598, %v596
  %v795 = vpack.c.b16 %v601, %v599
  %v796 = vpack.c.b16 %v602, %v600
  %v797 = vpack.c.b16 %v605, %v603
  %v798 = vpack.c.b16 %v606, %v604
  %v799 = vpack.c.b16 %v609, %v607
  %v800 = vpack.c.b16 %v610, %v608
  %v801 = vpack.c.b16 %v613, %v611
  %v802 = vpack.c.b16 %v614, %v612
  %v803 = vpack.c.b16 %v617, %v615
  %v804 = vpack.c.b16 %v618, %v616
  %v805 = vpack.c.b16 %v621, %v619
  %v806 = vpack.c.b16 %v622, %v620
  %v807 = vpack.c.b16 %v625, %v623
  %v808 = vpack.c.b16 %v626, %v624
  %v809 = vpack.c.b16 %v629, %v627
  %v810 = vpack.c.b16 %v630, %v628
  %v811 = vpack.c.b16 %v633, %v631
  %v812 = vpack.c.b16 %v634, %v632
  %v813 = vpack.c.b16 %v637, %v635
  %v814 = vpack.c.b16 %v638, %v636
  %v815 = vpack.c.b16 %v641, %v639
  %v816 = vpack.c.b16 %v642, %v640
  %v817 = vpack.c.b16 %v645, %v643
  %v818 = vpack.c.b16 %v646, %v644
  %v819 = vpack.c.b16 %v649, %v647
  %v820 = vpack.c.b16 %v650, %v648
  %v821 = vpack.c.b16 %v653, %v651
  %v822 = vpack.c.b16 %v654, %v652
  %v823 = vpack.c.b16 %v657, %v655
  %v824 = vpack.c.b16 %v658, %v656
  %v825 = vpack.c.b16 %v661, %v659
  %v826 = vpack.c.b16 %v662, %v660
  %v827 = vpack.c.b16 %v665, %v663
  %v828 = vpack.c.b16 %v666, %v664
  %v829 = vpack.c.b16 %v669, %v667
  %v830 = vpack.c.b16 %v670, %v668
  %v831 = vpack.c.b16 %v673, %v671
  %v832 = vpack.c.b16 %v674, %v672
  %v833 = vpack.c.b16 %v677, %v675
  %v834 = vpack.c.b16 %v678, %v676
  %v835 = vpack.c.b16 %v681, %v679
  %v836 = vpack.c.b16 %v682, %v680
  %v837 = vpack.c.b16 %v685, %v683
  %v838 = vpack.c.b16 %v686, %v684
  %v839 = vpack.c.b16 %v689, %v687
  %v840 = vpack.c.b16 %v690, %v688
  %v841 = vpack.c.b16 %v693, %v691
  %v842 = vpack.c.b16 %v694, %v692
  %v843 = vpack.c.b16 %v697, %v695
  %v844 = vpack.c.b16 %v698, %v696
  %v845 = vpack.c.b16 %v701, %v699
  %v846 = vpack.c.b16 %v702, %v700
  %991 = vmatprep.subr.bf16.mxu0 %v704
  %992 = vmatpush1.bf16.msra.mxu0 %v703
  %993 = vmatprep.subr.bf16.mxu0 %v706
  %994 = vmatpush1.bf16.msra.mxu0 %v705
  %995 = vmatprep.subr.bf16.mxu0 %v708
  %996 = vmatpush1.bf16.msra.mxu0 %v707
  %997 = vmatprep.subr.bf16.mxu0 %v710
  %998 = vmatpush1.bf16.msra.mxu0 %v709
  %999 = vmatprep.subr.bf16.mxu0 %v712
  %1000 = vmatpush1.bf16.msra.mxu0 %v711
  %1001 = vmatprep.subr.bf16.mxu0 %v714
  %1002 = vmatpush1.bf16.msra.mxu0 %v713
  %1003 = vmatprep.subr.bf16.mxu0 %v716
  %1004 = vmatpush1.bf16.msra.mxu0 %v715
  %1005 = vmatprep.subr.bf16.mxu0 %v718
  %1006 = vmatpush1.bf16.msra.mxu0 %v717
  %1007 = vmatprep.subr.bf16.mxu0 %v720
  %1008 = vmatpush1.bf16.msra.mxu0 %v719
  %1009 = vmatprep.subr.bf16.mxu0 %v722
  %1010 = vmatpush1.bf16.msra.mxu0 %v721
  %1011 = vmatprep.subr.bf16.mxu0 %v724
  %1012 = vmatpush1.bf16.msra.mxu0 %v723
  %1013 = vmatprep.subr.bf16.mxu0 %v726
  %1014 = vmatpush1.bf16.msra.mxu0 %v725
  %1015 = vmatprep.subr.bf16.mxu0 %v728
  %1016 = vmatpush1.bf16.msra.mxu0 %v727
  %1017 = vmatprep.subr.bf16.mxu0 %v730
  %1018 = vmatpush1.bf16.msra.mxu0 %v729
  %1019 = vmatprep.subr.bf16.mxu0 %v732
  %1020 = vmatpush1.bf16.msra.mxu0 %v731
  %1021 = vmatprep.subr.bf16.mxu0 %v734
  %1022 = vmatpush1.bf16.msra.mxu0 %v733
  %1023 = vmatprep.mubr.bf16.mxu0 %v236
  %1024 = vmatmul.mubr.bf16.gmra.mrb[0].mxu0 %v235
  %v1025 = vpop.f32.mrb[0].mxu0
  %v1026 = vadd.f32 0.0, %v1025
  %v1027 = vpop.f32.mrb[0].mxu0
  %v1028 = vadd.f32 0.0, %v1027
  %v1029 = vpop.f32.mrb[0].mxu0
  %v1030 = vadd.f32 0.0, %v1029
  %v1031 = vpop.f32.mrb[0].mxu0
  %v1032 = vadd.f32 0.0, %v1031
  %1033 = vmatprep.mubr.bf16.mxu0 %v245
  %1034 = vmatmul.mubr.bf16.gmra.mrb[0].mxu0 %v244
  %v1035 = vpop.f32.mrb[0].mxu0
  %v1036 = vadd.f32 0.0, %v1035
  %v1037 = vpop.f32.mrb[0].mxu0
  %v1038 = vadd.f32 0.0, %v1037
  %v1039 = vpop.f32.mrb[0].mxu0
  %v1040 = vadd.f32 0.0, %v1039
  %v1041 = vpop.f32.mrb[0].mxu0
  %v1042 = vadd.f32 0.0, %v1041
  %1043 = vdwg.mxu0
  %1044 = vmatprep.subr.bf16.mxu0 %v736
  %1045 = vmatpush1.bf16.msra.mxu0 %v735
  %1046 = vmatprep.subr.bf16.mxu0 %v738
  %1047 = vmatpush1.bf16.msra.mxu0 %v737
  %1048 = vmatprep.subr.bf16.mxu0 %v740
  %1049 = vmatpush1.bf16.msra.mxu0 %v739
  %1050 = vmatprep.subr.bf16.mxu0 %v742
  %1051 = vmatpush1.bf16.msra.mxu0 %v741
  %1052 = vmatprep.subr.bf16.mxu0 %v744
  %1053 = vmatpush1.bf16.msra.mxu0 %v743
  %1054 = vmatprep.subr.bf16.mxu0 %v746
  %1055 = vmatpush1.bf16.msra.mxu0 %v745
  %1056 = vmatprep.subr.bf16.mxu0 %v748
  %1057 = vmatpush1.bf16.msra.mxu0 %v747
  %1058 = vmatprep.subr.bf16.mxu0 %v750
  %1059 = vmatpush1.bf16.msra.mxu0 %v749
  %1060 = vmatprep.subr.bf16.mxu0 %v752
  %1061 = vmatpush1.bf16.msra.mxu0 %v751
  %1062 = vmatprep.subr.bf16.mxu0 %v754
  %1063 = vmatpush1.bf16.msra.mxu0 %v753
  %1064 = vmatprep.subr.bf16.mxu0 %v756
  %1065 = vmatpush1.bf16.msra.mxu0 %v755
  %1066 = vmatprep.subr.bf16.mxu0 %v758
  %1067 = vmatpush1.bf16.msra.mxu0 %v757
  %1068 = vmatprep.subr.bf16.mxu0 %v760
  %1069 = vmatpush1.bf16.msra.mxu0 %v759
  %1070 = vmatprep.subr.bf16.mxu0 %v762
  %1071 = vmatpush1.bf16.msra.mxu0 %v761
  %1072 = vmatprep.subr.bf16.mxu0 %v764
  %1073 = vmatpush1.bf16.msra.mxu0 %v763
  %1074 = vmatprep.subr.bf16.mxu0 %v766
  %1075 = vmatpush1.bf16.msra.mxu0 %v765
  %1076 = vmatprep.mubr.bf16.mxu0 %v238
  %1077 = vmatmul.mubr.bf16.gmra.mrb[0].mxu0 %v237
  %v1078 = vpop.f32.mrb[0].mxu0
  %v1079 = vadd.f32 %v1026, %v1078
  %v1080 = vpop.f32.mrb[0].mxu0
  %v1081 = vadd.f32 %v1028, %v1080
  %v1082 = vpop.f32.mrb[0].mxu0
  %v1083 = vadd.f32 %v1030, %v1082
  %v1084 = vpop.f32.mrb[0].mxu0
  %v1085 = vadd.f32 %v1032, %v1084
  %1086 = vmatprep.mubr.bf16.mxu0 %v247
  %1087 = vmatmul.mubr.bf16.gmra.mrb[0].mxu0 %v246
  %v1088 = vpop.f32.mrb[0].mxu0
  %v1089 = vadd.f32 %v1036, %v1088
  %v1090 = vpop.f32.mrb[0].mxu0
  %v1091 = vadd.f32 %v1038, %v1090
  %v1092 = vpop.f32.mrb[0].mxu0
  %v1093 = vadd.f32 %v1040, %v1092
  %v1094 = vpop.f32.mrb[0].mxu0
  %v1095 = vadd.f32 %v1042, %v1094
  %1096 = vdwg.mxu0
  %1097 = vmatprep.subr.bf16.mxu0 %v768
  %1098 = vmatpush1.bf16.msra.mxu0 %v767
  %1099 = vmatprep.subr.bf16.mxu0 %v770
  %1100 = vmatpush1.bf16.msra.mxu0 %v769
  %1101 = vmatprep.subr.bf16.mxu0 %v772
  %1102 = vmatpush1.bf16.msra.mxu0 %v771
  %1103 = vmatprep.subr.bf16.mxu0 %v774
  %1104 = vmatpush1.bf16.msra.mxu0 %v773
  %1105 = vmatprep.subr.bf16.mxu0 %v776
  %1106 = vmatpush1.bf16.msra.mxu0 %v775
  %1107 = vmatprep.subr.bf16.mxu0 %v778
  %1108 = vmatpush1.bf16.msra.mxu0 %v777
  %1109 = vmatprep.subr.bf16.mxu0 %v780
  %1110 = vmatpush1.bf16.msra.mxu0 %v779
  %1111 = vmatprep.subr.bf16.mxu0 %v782
  %1112 = vmatpush1.bf16.msra.mxu0 %v781
  %1113 = vmatprep.subr.bf16.mxu0 %v784
  %1114 = vmatpush1.bf16.msra.mxu0 %v783
  %1115 = vmatprep.subr.bf16.mxu0 %v786
  %1116 = vmatpush1.bf16.msra.mxu0 %v785
  %1117 = vmatprep.subr.bf16.mxu0 %v788
  %1118 = vmatpush1.bf16.msra.mxu0 %v787
  %1119 = vmatprep.subr.bf16.mxu0 %v790
  %1120 = vmatpush1.bf16.msra.mxu0 %v789
  %1121 = vmatprep.subr.bf16.mxu0 %v792
  %1122 = vmatpush1.bf16.msra.mxu0 %v791
  %1123 = vmatprep.subr.bf16.mxu0 %v794
  %1124 = vmatpush1.bf16.msra.mxu0 %v793
  %1125 = vmatprep.subr.bf16.mxu0 %v796
  %1126 = vmatpush1.bf16.msra.mxu0 %v795
  %1127 = vmatprep.subr.bf16.mxu0 %v798
  %1128 = vmatpush1.bf16.msra.mxu0 %v797
  %1129 = vmatprep.mubr.bf16.mxu0 %v240
  %1130 = vmatmul.mubr.bf16.gmra.mrb[0].mxu0 %v239
  %v1131 = vpop.f32.mrb[0].mxu0
  %v1132 = vadd.f32 %v1079, %v1131
  %v1133 = vpop.f32.mrb[0].mxu0
  %v1134 = vadd.f32 %v1081, %v1133
  %v1135 = vpop.f32.mrb[0].mxu0
  %v1136 = vadd.f32 %v1083, %v1135
  %v1137 = vpop.f32.mrb[0].mxu0
  %v1138 = vadd.f32 %v1085, %v1137
  %1139 = vmatprep.mubr.bf16.mxu0 %v249
  %1140 = vmatmul.mubr.bf16.gmra.mrb[0].mxu0 %v248
  %v1141 = vpop.f32.mrb[0].mxu0
  %v1142 = vadd.f32 %v1089, %v1141
  %v1143 = vpop.f32.mrb[0].mxu0
  %v1144 = vadd.f32 %v1091, %v1143
  %v1145 = vpop.f32.mrb[0].mxu0
  %v1146 = vadd.f32 %v1093, %v1145
  %v1147 = vpop.f32.mrb[0].mxu0
  %v1148 = vadd.f32 %v1095, %v1147
  %1149 = vdwg.mxu0
  %1150 = vmatprep.subr.bf16.mxu0 %v800
  %1151 = vmatpush1.bf16.msra.mxu0 %v799
  %1152 = vmatprep.subr.bf16.mxu0 %v802
  %1153 = vmatpush1.bf16.msra.mxu0 %v801
  %1154 = vmatprep.subr.bf16.mxu0 %v804
  %1155 = vmatpush1.bf16.msra.mxu0 %v803
  %1156 = vmatprep.subr.bf16.mxu0 %v806
  %1157 = vmatpush1.bf16.msra.mxu0 %v805
  %1158 = vmatprep.subr.bf16.mxu0 %v808
  %1159 = vmatpush1.bf16.msra.mxu0 %v807
  %1160 = vmatprep.subr.bf16.mxu0 %v810
  %1161 = vmatpush1.bf16.msra.mxu0 %v809
  %1162 = vmatprep.subr.bf16.mxu0 %v812
  %1163 = vmatpush1.bf16.msra.mxu0 %v811
  %1164 = vmatprep.subr.bf16.mxu0 %v814
  %1165 = vmatpush1.bf16.msra.mxu0 %v813
  %1166 = vmatprep.subr.bf16.mxu0 %v816
  %1167 = vmatpush1.bf16.msra.mxu0 %v815
  %1168 = vmatprep.subr.bf16.mxu0 %v818
  %1169 = vmatpush1.bf16.msra.mxu0 %v817
  %1170 = vmatprep.subr.bf16.mxu0 %v820
  %1171 = vmatpush1.bf16.msra.mxu0 %v819
  %1172 = vmatprep.subr.bf16.mxu0 %v822
  %1173 = vmatpush1.bf16.msra.mxu0 %v821
  %1174 = vmatprep.subr.bf16.mxu0 %v824
  %1175 = vmatpush1.bf16.msra.mxu0 %v823
  %1176 = vmatprep.subr.bf16.mxu0 %v826
  %1177 = vmatpush1.bf16.msra.mxu0 %v825
  %1178 = vmatprep.subr.bf16.mxu0 %v828
  %1179 = vmatpush1.bf16.msra.mxu0 %v827
  %1180 = vmatprep.subr.bf16.mxu0 %v830
  %1181 = vmatpush1.bf16.msra.mxu0 %v829
  %1182 = vmatprep.mubr.bf16.mxu0 %v242
  %1183 = vmatmul.mubr.bf16.gmra.mrb[0].mxu0 %v241
  %v1184 = vpop.f32.mrb[0].mxu0
  %v1185 = vadd.f32 %v1132, %v1184
  %v1186 = vpop.f32.mrb[0].mxu0
  %v1187 = vadd.f32 %v1134, %v1186
  %v1188 = vpop.f32.mrb[0].mxu0
  %v1189 = vadd.f32 %v1136, %v1188
  %v1190 = vpop.f32.mrb[0].mxu0
  %v1191 = vadd.f32 %v1138, %v1190
  %1192 = vmatprep.mubr.bf16.mxu0 %v251
  %1193 = vmatmul.mubr.bf16.gmra.mrb[0].mxu0 %v250
  %v1194 = vpop.f32.mrb[0].mxu0
  %v1195 = vadd.f32 %v1142, %v1194
  %v1196 = vpop.f32.mrb[0].mxu0
  %v1197 = vadd.f32 %v1144, %v1196
  %v1198 = vpop.f32.mrb[0].mxu0
  %v1199 = vadd.f32 %v1146, %v1198
  %v1200 = vpop.f32.mrb[0].mxu0
  %v1201 = vadd.f32 %v1148, %v1200
  %1202 = vdwg.mxu0
  %1203 = vmatprep.subr.bf16.mxu0 %v832
  %1204 = vmatpush1.bf16.msra.mxu0 %v831
  %1205 = vmatprep.subr.bf16.mxu0 %v834
  %1206 = vmatpush1.bf16.msra.mxu0 %v833
  %1207 = vmatprep.subr.bf16.mxu0 %v836
  %1208 = vmatpush1.bf16.msra.mxu0 %v835
  %1209 = vmatprep.subr.bf16.mxu0 %v838
  %1210 = vmatpush1.bf16.msra.mxu0 %v837
  %1211 = vmatprep.subr.bf16.mxu0 %v840
  %1212 = vmatpush1.bf16.msra.mxu0 %v839
  %1213 = vmatprep.subr.bf16.mxu0 %v842
  %1214 = vmatpush1.bf16.msra.mxu0 %v841
  %1215 = vmatprep.subr.bf16.mxu0 %v844
  %1216 = vmatpush1.bf16.msra.mxu0 %v843
  %1217 = vmatprep.subr.bf16.mxu0 %v846
  %1218 = vmatpush1.bf16.msra.mxu0 %v845
  %1219 = vmatprep.subr.bf16.mxu0 0
  %1220 = vmatpush1.bf16.msra.mxu0 0
  %1221 = vmatprep.subr.bf16.mxu0 0
  %1222 = vmatpush1.bf16.msra.mxu0 0
  %1223 = vmatprep.subr.bf16.mxu0 0
  %1224 = vmatpush1.bf16.msra.mxu0 0
  %1225 = vmatprep.subr.bf16.mxu0 0
  %1226 = vmatpush1.bf16.msra.mxu0 0
  %1227 = vmatprep.subr.bf16.mxu0 0
  %1228 = vmatpush1.bf16.msra.mxu0 0
  %1229 = vmatprep.subr.bf16.mxu0 0
  %1230 = vmatpush1.bf16.msra.mxu0 0
  %1231 = vmatprep.subr.bf16.mxu0 0
  %1232 = vmatpush1.bf16.msra.mxu0 0
  %1233 = vmatprep.subr.bf16.mxu0 0
  %1234 = vmatpush1.bf16.msra.mxu0 0
  %1235 = vmatprep.mubr.bf16.mxu0 0
  %1236 = vmatmul.mubr.bf16.gmra.mrb[0].mxu0 %v243
  %v1237 = vpop.f32.mrb[0].mxu0
  %v1238 = vadd.f32 %v1185, %v1237
  %v1239 = vpop.f32.mrb[0].mxu0
  %v1240 = vadd.f32 %v1187, %v1239
  %v1241 = vpop.f32.mrb[0].mxu0
  %v1242 = vadd.f32 %v1189, %v1241
  %v1243 = vpop.f32.mrb[0].mxu0
  %v1244 = vadd.f32 %v1191, %v1243
  %1245 = vmatprep.mubr.bf16.mxu0 0
  %1246 = vmatmul.mubr.bf16.gmra.mrb[0].mxu0 %v252
  %v1247 = vpop.f32.mrb[0].mxu0
  %v1248 = vadd.f32 %v1195, %v1247
  %v1249 = vpop.f32.mrb[0].mxu0
  %v1250 = vadd.f32 %v1197, %v1249
  %v1251 = vpop.f32.mrb[0].mxu0
  %v1252 = vadd.f32 %v1199, %v1251
  %v1253 = vpop.f32.mrb[0].mxu0
  %v1254 = vadd.f32 %v1201, %v1253
  %1255 = vdwg.mxu0
  %v1256 = vpack.c.bf16 %v1242, %v1238
  %v1257 = vpack.c.bf16 %v1244, %v1240
  %v1258 = vpack.c.bf16 %v1252, %v1248
  %v1259 = vpack.c.bf16 %v1254, %v1250
  %v1264 = vunpack.c.l.b16 %v1256
  %v1265 = vunpack.c.l.b16 %v1257
  %v1266 = vunpack.c.h.b16 %v1256
  %v1267 = vunpack.c.h.b16 %v1257
  %v1268 = vunpack.c.l.b16 %v1258
  %v1269 = vunpack.c.l.b16 %v1259
  %v1270 = vunpack.c.h.b16 %v1258
  %v1271 = vunpack.c.h.b16 %v1259
  %v1272 = vpack.c.b16 %v1265, %v1264
  %v1273 = vpack.c.b16 %v1267, %v1266
  %v1274 = vpack.c.b16 %v1269, %v1268
  %v1275 = vpack.c.b16 %v1271, %v1270
  %1280 = vst [vmem:[%s2] sm:$0xff] %v1272
  %1281 = vst [vmem:[%s2 + $0x8] sm:$0xff] %v1273
  %1282 = vst [vmem:[%s2 + $0x10] sm:$0xff] %v1274
  %1283 = vst [vmem:[%s2 + $0x18] sm:$0xff] %v1275
  %v1284 = vadd.f32 %v1238, %v1242
  %v1285 = vadd.f32 %v1284, %v1248
  %v1286 = vadd.f32 %v1285, %v1252
  %v1287 = vrot.slane %v1286, 4
  %v1288 = vadd.f32 %v1286, %v1287
  %v1289 = vrot.slane %v1288, 2
  %v1290 = vadd.f32 %v1288, %v1289
  %v1291 = vrot.slane %v1290, 1
  %v1292 = vadd.f32 %v1290, %v1291
  %v1293 = vadd.f32 %v1240, %v1244
  %v1294 = vadd.f32 %v1293, %v1250
  %v1295 = vadd.f32 %v1294, %v1254
  %v1296 = vrot.slane %v1295, 4
  %v1297 = vadd.f32 %v1295, %v1296
  %v1298 = vrot.slane %v1297, 2
  %v1299 = vadd.f32 %v1297, %v1298
  %v1300 = vrot.slane %v1299, 1
  %v1301 = vadd.f32 %v1299, %v1300
  %v1302 = vmul.f32 %v1238, %v1238
  %v1303 = vmul.f32 %v1240, %v1240
  %v1304 = vmul.f32 %v1242, %v1242
  %v1305 = vmul.f32 %v1244, %v1244
  %v1306 = vmul.f32 %v1248, %v1248
  %v1307 = vmul.f32 %v1250, %v1250
  %v1308 = vmul.f32 %v1252, %v1252
  %v1309 = vmul.f32 %v1254, %v1254
  %v1310 = vadd.f32 %v1302, %v1304
  %v1311 = vadd.f32 %v1310, %v1306
  %v1312 = vadd.f32 %v1311, %v1308
  %v1313 = vrot.slane %v1312, 4
  %v1314 = vadd.f32 %v1312, %v1313
  %v1315 = vrot.slane %v1314, 2
  %v1316 = vadd.f32 %v1314, %v1315
  %v1317 = vrot.slane %v1316, 1
  %v1318 = vadd.f32 %v1316, %v1317
  %v1319 = vadd.f32 %v1303, %v1305
  %v1320 = vadd.f32 %v1319, %v1307
  %v1321 = vadd.f32 %v1320, %v1309
  %v1322 = vrot.slane %v1321, 4
  %v1323 = vadd.f32 %v1321, %v1322
  %v1324 = vrot.slane %v1323, 2
  %v1325 = vadd.f32 %v1323, %v1324
  %v1326 = vrot.slane %v1325, 1
  %v1327 = vadd.f32 %v1325, %v1326
  %v1330 = vcombine.low %v1292, %v1301
  %v1332 = vunpack.c.l.s4 1966171168
  %v1333 = vunpack.c.0.s8 %v1332
  %v1334 = vlaneseq
  %v1335 = vshrl.u32 %v1334, 7
  %v1336 = vsub.s32 %v1333, %v1335
  %v1337 = vrot.slane %v1330, %v1336
  %v1339 = vunpack.c.l.s4 1966171168
  %v1340 = vunpack.c.0.s8 %v1339
  %v1341 = vlaneseq
  %v1342 = vshrl.u32 %v1341, 7
  %v1343 = vsub.s32 %v1340, %v1342
  %v1344 = vrot.slane %v1337, %v1343
  %v1346 = vlaneseq
  %vm1347 = vcmp.ge.s32.totalorder %v1346, 0
  %vm1348 = vcmp.lt.s32.totalorder %v1346, 256
  %vm1349 = vmand %vm1347, %vm1348
  %1350 = vst.msk [vmem:[%s3] sm:$0x3] %vm1349, %v1344
  %v1353 = vcombine.low %v1318, %v1327
  %v1355 = vunpack.c.l.s4 1966171168
  %v1356 = vunpack.c.0.s8 %v1355
  %v1357 = vlaneseq
  %v1358 = vshrl.u32 %v1357, 7
  %v1359 = vsub.s32 %v1356, %v1358
  %v1360 = vrot.slane %v1353, %v1359
  %v1362 = vunpack.c.l.s4 1966171168
  %v1363 = vunpack.c.0.s8 %v1362
  %v1364 = vlaneseq
  %v1365 = vshrl.u32 %v1364, 7
  %v1366 = vsub.s32 %v1363, %v1365
  %v1367 = vrot.slane %v1360, %v1366
  %1369 = vst.msk [vmem:[%s4] sm:$0x3] %vm1349, %v1367
  // Predicated region
  $region10: #{ocean_vae_forward.29} parent=0 // pred_check
    _
  $region11: #{ocean_vae_forward.29} parent=0 // pred_check_branch
    %1371 = sbr.rel (0) target = $region13
  $region12: #{ocean_vae_forward.29} parent=0 // pred_region
    _
  $region13: #{ocean_vae_forward.29} parent=0 // pred_fallthru
    _
  // Predicated region
  $region14: #{ocean_vae_forward.29} parent=0 // pred_check
    _
  $region15: #{ocean_vae_forward.29} parent=0 // pred_check_branch
    %1373 = sbr.rel (0) target = $region17
  $region16: #{ocean_vae_forward.29} parent=0 // pred_region
    _
  $region17: #{ocean_vae_forward.29} parent=0 // pred_fallthru
    _
  // Predicated region
  $region18: #{ocean_vae_forward.29} parent=0 // pred_check
    _
  $region19: #{ocean_vae_forward.29} parent=0 // pred_check_branch
    %1375 = sbr.rel (0) target = $region21
  $region20: #{ocean_vae_forward.29} parent=0 // pred_region
    _
  $region21: #{ocean_vae_forward.29} parent=0 // pred_fallthru
    _
  // Predicated region
  $region22: #{ocean_vae_forward.29} parent=0 // pred_check
    _
  $region23: #{ocean_vae_forward.29} parent=0 // pred_check_branch
    %1377 = sbr.rel (0) target = $region25
  $region24: #{ocean_vae_forward.29} parent=0 // pred_region
    _
  $region25: #{ocean_vae_forward.29} parent=0 // pred_fallthru
    _
  // Predicated region
  $region26: #{ocean_vae_forward.29} parent=0 // pred_check
    _
  $region27: #{ocean_vae_forward.29} parent=0 // pred_check_branch
    %1379 = sbr.rel (0) target = $region29
  $region28: #{ocean_vae_forward.29} parent=0 // pred_region
    _
  $region29: #{ocean_vae_forward.29} parent=0 // pred_fallthru
    _
  // Predicated region
  $region30: #{ocean_vae_forward.29} parent=0 // pred_check
    _
  $region31: #{ocean_vae_forward.29} parent=0 // pred_check_branch
    %1381 = sbr.rel (0) target = $region33
  $region32: #{ocean_vae_forward.29} parent=0 // pred_region
    _
  $region33: #{ocean_vae_forward.29} parent=0 // pred_fallthru
    _

// kernel: tile.48
$region0: #{tile.48}
  #allocation0 [shape = 's32[1]{0}', space=sflag, size = 0x4, scoped, tag = 'scoped memory for tile.48']
  %s0 = inlined_call_operand.vmem [shape: f32[4], index: 0, kind: input, shape index: {}]
  %s1 = inlined_call_operand.vmem [shape: f32[4,4], index: 1, kind: output, shape index: {}]
  // Predicated region
  $region2: #{tile.48} parent=0 // pred_check
    _
  $region3: #{tile.48} parent=0 // pred_check_branch
    %3 = sbr.rel (0) target = $region5
  $region4: #{tile.48} parent=0 // pred_region
    _
  $region5: #{tile.48} parent=0 // pred_fallthru
    _
  %v4 = vld [vmem:[%s0] ss:$0 sm:$0xff]
  %5 = vst [vmem:[%s1] sm:$0xf] %v4

// kernel: tile.49
$region0: #{tile.49}
  %s0 = inlined_call_operand.vmem [shape: f32[4,4], index: 0, kind: input, shape index: {}]
  %s1 = inlined_call_operand.vmem [shape: f32[16], index: 1, kind: output, shape index: {}]
  $region1: #{tile.49} parent=0
    #allocation0 [shape = 'u8[4096]{0}', space=vmem, size = 0x1000, scoped, tag = 'scoped mem for output reshape']
    #allocation1 [shape = 'u8[4096]{0}', space=vmem, size = 0x1000, scoped, tag = 'scoped mem for input reshape']
    %s3 = sshllo.u32 0, 4
    %v4 = vld [vmem:[%s0] sm:%s3]
    %5 = vst [vmem:[#allocation1] sm:%s3] %v4
    %v6 = vld [vmem:[#allocation1] sm:$0x1]
    %vm7 = vcmask 31744
    %8 = vst.msk [vmem:[#allocation0] sm:$0x1] %vm7, %v6
    %s9 = scalar_lea.vmem [#allocation1], 3
    %v10 = vld [vmem:[%s9] sm:$0x1]
    %11 = vrot.lane.b32.xlu0 %v10, 12
    %v12 = vpop.permute.xlu0 %11
    %vm13 = vcmask 130144
    %14 = vst.msk [vmem:[#allocation0] sm:$0x1] %vm13, %v12
    %s15 = scalar_lea.vmem [#allocation1], 2
    %v16 = vld [vmem:[%s15] sm:$0x1]
    %17 = vrot.lane.b32.xlu0 %v16, 8
    %v18 = vpop.permute.xlu0 %17
    %vm19 = vcmask 97344
    %20 = vst.msk [vmem:[#allocation0] sm:$0x1] %vm19, %v18
    %s21 = scalar_lea.vmem [#allocation1], 1
    %v22 = vld [vmem:[%s21] sm:$0x1]
    %23 = vrot.lane.b32.xlu0 %v22, 4
    %v24 = vpop.permute.xlu0 %23
    %vm25 = vcmask 64544
    %26 = vst.msk [vmem:[#allocation0] sm:$0x1] %vm25, %v24
    %s28 = sshllo.u32 0, 1
    %v30 = vld [vmem:[#allocation0] sm:%s28]
    %s31 = sshllo.u32 0, 1
    %32 = vst [vmem:[%s1] sm:%s31] %v30

// kernel: ocean_vae_forward.31
$region0: #{ocean_vae_forward.31}
  #allocation0 [shape = 'u32[]', space=smem, size = 0x4, offset = 0x4, fixed_abs, tag = 'smem constant byte address 0x4 - core index']
  #allocation1 [shape = 'u32[144,128]{1,0:T(1,128)}', space=vmem, size = 0x12000, scoped, tag = 'internal scratch']
  %s0 = inlined_call_operand.vmem [shape: bf16[128,576], index: 0, kind: input, shape index: {}]
  %s1 = inlined_call_operand.vmem [shape: bf16[576,128], index: 1, kind: input, shape index: {}]
  %s2 = inlined_call_operand.vmem [shape: f32[1,128], index: 2, kind: input, shape index: {}]
  %s3 = inlined_call_operand.vmem [shape: f32[128,128], index: 3, kind: output, shape index: {}]
  %s4 = sld [smem:[#allocation0]]
  $region22: #{ocean_vae_forward.31} parent=0
    _
  %s6 = ssub.s32 1, %s4
  %s7 = scalar_select 0, %s6, %s4
  // Predicated region
  $region2: #{ocean_vae_forward.31} parent=0 // pred_check
    _
  $region3: #{ocean_vae_forward.31} parent=0 // pred_check_branch
    %9 = sbr.rel (0) target = $region5
  $region4: #{ocean_vae_forward.31} parent=0 // pred_region
    _
  $region5: #{ocean_vae_forward.31} parent=0 // pred_fallthru
    _
  // Predicated region
  $region6: #{ocean_vae_forward.31} parent=0 // pred_check
    _
  $region7: #{ocean_vae_forward.31} parent=0 // pred_check_branch
    %11 = sbr.rel (0) target = $region9
  $region8: #{ocean_vae_forward.31} parent=0 // pred_region
    _
  $region9: #{ocean_vae_forward.31} parent=0 // pred_fallthru
    _
  // Predicated region
  $region10: #{ocean_vae_forward.31} parent=0 // pred_check
    _
  $region11: #{ocean_vae_forward.31} parent=0 // pred_check_branch
    %13 = sbr.rel (0) target = $region13
  $region12: #{ocean_vae_forward.31} parent=0 // pred_region
    _
  $region13: #{ocean_vae_forward.31} parent=0 // pred_fallthru
    _
  %v15 = vld [vmem:[%s0] sm:$0xff]
  %v16 = vld [vmem:[%s0 + $0x8] sm:$0xff]
  %v17 = vld [vmem:[%s0 + $0x10] sm:$0xf]
  %v18 = vld [vmem:[%s0 + $0x14] sm:$0xff]
  %v19 = vld [vmem:[%s0 + $0x1c] sm:$0xff]
  %v20 = vld [vmem:[%s0 + $0x24] sm:$0xf]
  %v21 = vld [vmem:[%s0 + $0x28] sm:$0xff]
  %v22 = vld [vmem:[%s0 + $0x30] sm:$0xff]
  %v23 = vld [vmem:[%s0 + $0x38] sm:$0xf]
  %v24 = vld [vmem:[%s0 + $0x3c] sm:$0xff]
  %v25 = vld [vmem:[%s0 + $0x44] sm:$0xff]
  %v26 = vld [vmem:[%s0 + $0x4c] sm:$0xf]
  %v27 = vld [vmem:[%s0 + $0x50] sm:$0xff]
  %v28 = vld [vmem:[%s0 + $0x58] sm:$0xff]
  %v29 = vld [vmem:[%s0 + $0x60] sm:$0xf]
  %v30 = vld [vmem:[%s0 + $0x64] sm:$0xff]
  %v31 = vld [vmem:[%s0 + $0x6c] sm:$0xff]
  %v32 = vld [vmem:[%s0 + $0x74] sm:$0xf]
  %v33 = vld [vmem:[%s0 + $0x78] sm:$0xff]
  %v34 = vld [vmem:[%s0 + $0x80] sm:$0xff]
  %v35 = vld [vmem:[%s0 + $0x88] sm:$0xf]
  %v36 = vld [vmem:[%s0 + $0x8c] sm:$0xff]
  %v37 = vld [vmem:[%s0 + $0x94] sm:$0xff]
  %v38 = vld [vmem:[%s0 + $0x9c] sm:$0xf]
  %v39 = vld [vmem:[%s0 + $0xa0] sm:$0xff]
  %v40 = vld [vmem:[%s0 + $0xa8] sm:$0xff]
  %v41 = vld [vmem:[%s0 + $0xb0] sm:$0xf]
  %v42 = vld [vmem:[%s0 + $0xb4] sm:$0xff]
  %v43 = vld [vmem:[%s0 + $0xbc] sm:$0xff]
  %v44 = vld [vmem:[%s0 + $0xc4] sm:$0xf]
  %v45 = vld [vmem:[%s0 + $0xc8] sm:$0xff]
  %v46 = vld [vmem:[%s0 + $0xd0] sm:$0xff]
  %v47 = vld [vmem:[%s0 + $0xd8] sm:$0xf]
  %v48 = vld [vmem:[%s0 + $0xdc] sm:$0xff]
  %v49 = vld [vmem:[%s0 + $0xe4] sm:$0xff]
  %v50 = vld [vmem:[%s0 + $0xec] sm:$0xf]
  %v51 = vld [vmem:[%s0 + $0xf0] sm:$0xff]
  %v52 = vld [vmem:[%s0 + $0xf8] sm:$0xff]
  %v53 = vld [vmem:[%s0 + $0x100] sm:$0xf]
  %v54 = vld [vmem:[%s0 + $0x104] sm:$0xff]
  %v55 = vld [vmem:[%s0 + $0x10c] sm:$0xff]
  %v56 = vld [vmem:[%s0 + $0x114] sm:$0xf]
  %v57 = vld [vmem:[%s0 + $0x118] sm:$0xff]
  %v58 = vld [vmem:[%s0 + $0x120] sm:$0xff]
  %v59 = vld [vmem:[%s0 + $0x128] sm:$0xf]
  %v60 = vld [vmem:[%s0 + $0x12c] sm:$0xff]
  %v61 = vld [vmem:[%s0 + $0x134] sm:$0xff]
  %v62 = vld [vmem:[%s0 + $0x13c] sm:$0xf]
  %v63 = vld [vmem:[%s1] sm:$0xf]
  %v64 = vld [vmem:[%s1 + $0x4] sm:$0xf]
  %v65 = vld [vmem:[%s1 + $0x8] sm:$0xf]
  %v66 = vld [vmem:[%s1 + $0xc] sm:$0xf]
  %v67 = vld [vmem:[%s1 + $0x10] sm:$0xf]
  %v68 = vld [vmem:[%s1 + $0x14] sm:$0xf]
  %v69 = vld [vmem:[%s1 + $0x18] sm:$0xf]
  %v70 = vld [vmem:[%s1 + $0x1c] sm:$0xf]
  %v71 = vld [vmem:[%s1 + $0x20] sm:$0xf]
  %v72 = vld [vmem:[%s1 + $0x24] sm:$0xf]
  %v73 = vld [vmem:[%s1 + $0x28] sm:$0xf]
  %v74 = vld [vmem:[%s1 + $0x2c] sm:$0xf]
  %v75 = vld [vmem:[%s1 + $0x30] sm:$0xf]
  %v76 = vld [vmem:[%s1 + $0x34] sm:$0xf]
  %v77 = vld [vmem:[%s1 + $0x38] sm:$0xf]
  %v78 = vld [vmem:[%s1 + $0x3c] sm:$0xf]
  %v79 = vld [vmem:[%s1 + $0x40] sm:$0xf]
  %v80 = vld [vmem:[%s1 + $0x44] sm:$0xf]
  %v81 = vld [vmem:[%s1 + $0x48] sm:$0xf]
  %v82 = vld [vmem:[%s1 + $0x4c] sm:$0xf]
  %v83 = vld [vmem:[%s1 + $0x50] sm:$0xf]
  %v84 = vld [vmem:[%s1 + $0x54] sm:$0xf]
  %v85 = vld [vmem:[%s1 + $0x58] sm:$0xf]
  %v86 = vld [vmem:[%s1 + $0x5c] sm:$0xf]
  %v87 = vld [vmem:[%s1 + $0x60] sm:$0xf]
  %v88 = vld [vmem:[%s1 + $0x64] sm:$0xf]
  %v89 = vld [vmem:[%s1 + $0x68] sm:$0xf]
  %v90 = vld [vmem:[%s1 + $0x6c] sm:$0xf]
  %v91 = vld [vmem:[%s1 + $0x70] sm:$0xf]
  %v92 = vld [vmem:[%s1 + $0x74] sm:$0xf]
  %v93 = vld [vmem:[%s1 + $0x78] sm:$0xf]
  %v94 = vld [vmem:[%s1 + $0x7c] sm:$0xf]
  %v95 = vld [vmem:[%s1 + $0x80] sm:$0xf]
  %v96 = vld [vmem:[%s1 + $0x84] sm:$0xf]
  %v97 = vld [vmem:[%s1 + $0x88] sm:$0xf]
  %v98 = vld [vmem:[%s1 + $0x8c] sm:$0xf]
  %v99 = vld [vmem:[%s1 + $0x90] sm:$0xf]
  %v100 = vld [vmem:[%s1 + $0x94] sm:$0xf]
  %v101 = vld [vmem:[%s1 + $0x98] sm:$0xf]
  %v102 = vld [vmem:[%s1 + $0x9c] sm:$0xf]
  %v103 = vld [vmem:[%s1 + $0xa0] sm:$0xf]
  %v104 = vld [vmem:[%s1 + $0xa4] sm:$0xf]
  %v105 = vld [vmem:[%s1 + $0xa8] sm:$0xf]
  %v106 = vld [vmem:[%s1 + $0xac] sm:$0xf]
  %v107 = vld [vmem:[%s1 + $0xb0] sm:$0xf]
  %v108 = vld [vmem:[%s1 + $0xb4] sm:$0xf]
  %v109 = vld [vmem:[%s1 + $0xb8] sm:$0xf]
  %v110 = vld [vmem:[%s1 + $0xbc] sm:$0xf]
  %v111 = vld [vmem:[%s1 + $0xc0] sm:$0xf]
  %v112 = vld [vmem:[%s1 + $0xc4] sm:$0xf]
  %v113 = vld [vmem:[%s1 + $0xc8] sm:$0xf]
  %v114 = vld [vmem:[%s1 + $0xcc] sm:$0xf]
  %v115 = vld [vmem:[%s1 + $0xd0] sm:$0xf]
  %v116 = vld [vmem:[%s1 + $0xd4] sm:$0xf]
  %v117 = vld [vmem:[%s1 + $0xd8] sm:$0xf]
  %v118 = vld [vmem:[%s1 + $0xdc] sm:$0xf]
  %v119 = vld [vmem:[%s1 + $0xe0] sm:$0xf]
  %v120 = vld [vmem:[%s1 + $0xe4] sm:$0xf]
  %v121 = vld [vmem:[%s1 + $0xe8] sm:$0xf]
  %v122 = vld [vmem:[%s1 + $0xec] sm:$0xf]
  %v123 = vld [vmem:[%s1 + $0xf0] sm:$0xf]
  %v124 = vld [vmem:[%s1 + $0xf4] sm:$0xf]
  %v125 = vld [vmem:[%s1 + $0xf8] sm:$0xf]
  %v126 = vld [vmem:[%s1 + $0xfc] sm:$0xf]
  %v127 = vld [vmem:[%s1 + $0x100] sm:$0xf]
  %v128 = vld [vmem:[%s1 + $0x104] sm:$0xf]
  %v129 = vld [vmem:[%s1 + $0x108] sm:$0xf]
  %v130 = vld [vmem:[%s1 + $0x10c] sm:$0xf]
  %v131 = vld [vmem:[%s1 + $0x110] sm:$0xf]
  %v132 = vld [vmem:[%s1 + $0x114] sm:$0xf]
  %v133 = vld [vmem:[%s1 + $0x118] sm:$0xf]
  %v134 = vld [vmem:[%s1 + $0x11c] sm:$0xf]
  %v135 = vld [vmem:[%s2] sm:$0x1]
  %v137 = vlaneseq
  %v138 = vshrl.u32 %v137, 7
  %v139 = vsub.s32 0, %v138
  %v140 = vrot.slane %v135, %v139
  %v190 = vunpack.c.l.b16 %v15
  %v191 = vunpack.c.h.b16 %v15
  %v192 = vunpack.c.l.b16 %v16
  %v193 = vunpack.c.h.b16 %v16
  %v194 = vunpack.c.l.b16 %v17
  %v195 = vunpack.c.l.b16 %v18
  %v196 = vunpack.c.h.b16 %v18
  %v197 = vunpack.c.l.b16 %v19
  %v198 = vunpack.c.h.b16 %v19
  %v199 = vunpack.c.l.b16 %v20
  %v200 = vunpack.c.l.b16 %v21
  %v201 = vunpack.c.h.b16 %v21
  %v202 = vunpack.c.l.b16 %v22
  %v203 = vunpack.c.h.b16 %v22
  %v204 = vunpack.c.l.b16 %v23
  %v205 = vunpack.c.l.b16 %v24
  %v206 = vunpack.c.h.b16 %v24
  %v207 = vunpack.c.l.b16 %v25
  %v208 = vunpack.c.h.b16 %v25
  %v209 = vunpack.c.l.b16 %v26
  %v210 = vunpack.c.l.b16 %v27
  %v211 = vunpack.c.h.b16 %v27
  %v212 = vunpack.c.l.b16 %v28
  %v213 = vunpack.c.h.b16 %v28
  %v214 = vunpack.c.l.b16 %v29
  %v215 = vunpack.c.l.b16 %v30
  %v216 = vunpack.c.h.b16 %v30
  %v217 = vunpack.c.l.b16 %v31
  %v218 = vunpack.c.h.b16 %v31
  %v219 = vunpack.c.l.b16 %v32
  %v220 = vunpack.c.l.b16 %v33
  %v221 = vunpack.c.h.b16 %v33
  %v222 = vunpack.c.l.b16 %v34
  %v223 = vunpack.c.h.b16 %v34
  %v224 = vunpack.c.l.b16 %v35
  %v225 = vunpack.c.l.b16 %v36
  %v226 = vunpack.c.h.b16 %v36
  %v227 = vunpack.c.l.b16 %v37
  %v228 = vunpack.c.h.b16 %v37
  %v229 = vunpack.c.l.b16 %v38
  %v230 = vunpack.c.l.b16 %v39
  %v231 = vunpack.c.h.b16 %v39
  %v232 = vunpack.c.l.b16 %v40
  %v233 = vunpack.c.h.b16 %v40
  %v234 = vunpack.c.l.b16 %v41
  %v235 = vunpack.c.l.b16 %v42
  %v236 = vunpack.c.h.b16 %v42
  %v237 = vunpack.c.l.b16 %v43
  %v238 = vunpack.c.h.b16 %v43
  %v239 = vunpack.c.l.b16 %v44
  %v240 = vunpack.c.l.b16 %v45
  %v241 = vunpack.c.h.b16 %v45
  %v242 = vunpack.c.l.b16 %v46
  %v243 = vunpack.c.h.b16 %v46
  %v244 = vunpack.c.l.b16 %v47
  %v245 = vunpack.c.l.b16 %v48
  %v246 = vunpack.c.h.b16 %v48
  %v247 = vunpack.c.l.b16 %v49
  %v248 = vunpack.c.h.b16 %v49
  %v249 = vunpack.c.l.b16 %v50
  %v250 = vunpack.c.l.b16 %v51
  %v251 = vunpack.c.h.b16 %v51
  %v252 = vunpack.c.l.b16 %v52
  %v253 = vunpack.c.h.b16 %v52
  %v254 = vunpack.c.l.b16 %v53
  %v255 = vunpack.c.l.b16 %v54
  %v256 = vunpack.c.h.b16 %v54
  %v257 = vunpack.c.l.b16 %v55
  %v258 = vunpack.c.h.b16 %v55
  %v259 = vunpack.c.l.b16 %v56
  %v260 = vunpack.c.l.b16 %v57
  %v261 = vunpack.c.h.b16 %v57
  %v262 = vunpack.c.l.b16 %v58
  %v263 = vunpack.c.h.b16 %v58
  %v264 = vunpack.c.l.b16 %v59
  %v265 = vunpack.c.l.b16 %v60
  %v266 = vunpack.c.h.b16 %v60
  %v267 = vunpack.c.l.b16 %v61
  %v268 = vunpack.c.h.b16 %v61
  %v269 = vunpack.c.l.b16 %v62
  %v270 = vpack.c.b16 %v195, %v190
  %v271 = vpack.c.b16 %v196, %v191
  %v272 = vpack.c.b16 %v197, %v192
  %v273 = vpack.c.b16 %v198, %v193
  %v274 = vpack.c.b16 %v199, %v194
  %v275 = vpack.c.b16 %v205, %v200
  %v276 = vpack.c.b16 %v206, %v201
  %v277 = vpack.c.b16 %v207, %v202
  %v278 = vpack.c.b16 %v208, %v203
  %v279 = vpack.c.b16 %v209, %v204
  %v280 = vpack.c.b16 %v215, %v210
  %v281 = vpack.c.b16 %v216, %v211
  %v282 = vpack.c.b16 %v217, %v212
  %v283 = vpack.c.b16 %v218, %v213
  %v284 = vpack.c.b16 %v219, %v214
  %v285 = vpack.c.b16 %v225, %v220
  %v286 = vpack.c.b16 %v226, %v221
  %v287 = vpack.c.b16 %v227, %v222
  %v288 = vpack.c.b16 %v228, %v223
  %v289 = vpack.c.b16 %v229, %v224
  %v290 = vpack.c.b16 %v235, %v230
  %v291 = vpack.c.b16 %v236, %v231
  %v292 = vpack.c.b16 %v237, %v232
  %v293 = vpack.c.b16 %v238, %v233
  %v294 = vpack.c.b16 %v239, %v234
  %v295 = vpack.c.b16 %v245, %v240
  %v296 = vpack.c.b16 %v246, %v241
  %v297 = vpack.c.b16 %v247, %v242
  %v298 = vpack.c.b16 %v248, %v243
  %v299 = vpack.c.b16 %v249, %v244
  %v300 = vpack.c.b16 %v255, %v250
  %v301 = vpack.c.b16 %v256, %v251
  %v302 = vpack.c.b16 %v257, %v252
  %v303 = vpack.c.b16 %v258, %v253
  %v304 = vpack.c.b16 %v259, %v254
  %v305 = vpack.c.b16 %v265, %v260
  %v306 = vpack.c.b16 %v266, %v261
  %v307 = vpack.c.b16 %v267, %v262
  %v308 = vpack.c.b16 %v268, %v263
  %v309 = vpack.c.b16 %v269, %v264
  %v414 = vunpack.c.l.b16 %v63
  %v415 = vunpack.c.l.b16 %v64
  %v416 = vunpack.c.l.b16 %v65
  %v417 = vunpack.c.l.b16 %v66
  %v418 = vunpack.c.l.b16 %v67
  %v419 = vunpack.c.l.b16 %v68
  %v420 = vunpack.c.l.b16 %v69
  %v421 = vunpack.c.l.b16 %v70
  %v422 = vunpack.c.l.b16 %v71
  %v423 = vunpack.c.l.b16 %v72
  %v424 = vunpack.c.l.b16 %v73
  %v425 = vunpack.c.l.b16 %v74
  %v426 = vunpack.c.l.b16 %v75
  %v427 = vunpack.c.l.b16 %v76
  %v428 = vunpack.c.l.b16 %v77
  %v429 = vunpack.c.l.b16 %v78
  %v430 = vunpack.c.l.b16 %v79
  %v431 = vunpack.c.l.b16 %v80
  %v432 = vunpack.c.l.b16 %v81
  %v433 = vunpack.c.l.b16 %v82
  %v434 = vunpack.c.l.b16 %v83
  %v435 = vunpack.c.l.b16 %v84
  %v436 = vunpack.c.l.b16 %v85
  %v437 = vunpack.c.l.b16 %v86
  %v438 = vunpack.c.l.b16 %v87
  %v439 = vunpack.c.l.b16 %v88
  %v440 = vunpack.c.l.b16 %v89
  %v441 = vunpack.c.l.b16 %v90
  %v442 = vunpack.c.l.b16 %v91
  %v443 = vunpack.c.l.b16 %v92
  %v444 = vunpack.c.l.b16 %v93
  %v445 = vunpack.c.l.b16 %v94
  %v446 = vunpack.c.l.b16 %v95
  %v447 = vunpack.c.l.b16 %v96
  %v448 = vunpack.c.l.b16 %v97
  %v449 = vunpack.c.l.b16 %v98
  %v450 = vunpack.c.l.b16 %v99
  %v451 = vunpack.c.l.b16 %v100
  %v452 = vunpack.c.l.b16 %v101
  %v453 = vunpack.c.l.b16 %v102
  %v454 = vunpack.c.l.b16 %v103
  %v455 = vunpack.c.l.b16 %v104
  %v456 = vunpack.c.l.b16 %v105
  %v457 = vunpack.c.l.b16 %v106
  %v458 = vunpack.c.l.b16 %v107
  %v459 = vunpack.c.l.b16 %v108
  %v460 = vunpack.c.l.b16 %v109
  %v461 = vunpack.c.l.b16 %v110
  %v462 = vunpack.c.l.b16 %v111
  %v463 = vunpack.c.l.b16 %v112
  %v464 = vunpack.c.l.b16 %v113
  %v465 = vunpack.c.l.b16 %v114
  %v466 = vunpack.c.l.b16 %v115
  %v467 = vunpack.c.l.b16 %v116
  %v468 = vunpack.c.l.b16 %v117
  %v469 = vunpack.c.l.b16 %v118
  %v470 = vunpack.c.l.b16 %v119
  %v471 = vunpack.c.l.b16 %v120
  %v472 = vunpack.c.l.b16 %v121
  %v473 = vunpack.c.l.b16 %v122
  %v474 = vunpack.c.l.b16 %v123
  %v475 = vunpack.c.l.b16 %v124
  %v476 = vunpack.c.l.b16 %v125
  %v477 = vunpack.c.l.b16 %v126
  %v478 = vunpack.c.l.b16 %v127
  %v479 = vunpack.c.l.b16 %v128
  %v480 = vunpack.c.l.b16 %v129
  %v481 = vunpack.c.l.b16 %v130
  %v482 = vunpack.c.l.b16 %v131
  %v483 = vunpack.c.l.b16 %v132
  %v484 = vunpack.c.l.b16 %v133
  %v485 = vunpack.c.l.b16 %v134
  %v486 = vpack.c.b16 %v415, %v414
  %v487 = vpack.c.b16 %v417, %v416
  %v488 = vpack.c.b16 %v419, %v418
  %v489 = vpack.c.b16 %v421, %v420
  %v490 = vpack.c.b16 %v423, %v422
  %v491 = vpack.c.b16 %v425, %v424
  %v492 = vpack.c.b16 %v427, %v426
  %v493 = vpack.c.b16 %v429, %v428
  %v494 = vpack.c.b16 %v431, %v430
  %v495 = vpack.c.b16 %v433, %v432
  %v496 = vpack.c.b16 %v435, %v434
  %v497 = vpack.c.b16 %v437, %v436
  %v498 = vpack.c.b16 %v439, %v438
  %v499 = vpack.c.b16 %v441, %v440
  %v500 = vpack.c.b16 %v443, %v442
  %v501 = vpack.c.b16 %v445, %v444
  %v502 = vpack.c.b16 %v447, %v446
  %v503 = vpack.c.b16 %v449, %v448
  %v504 = vpack.c.b16 %v451, %v450
  %v505 = vpack.c.b16 %v453, %v452
  %v506 = vpack.c.b16 %v455, %v454
  %v507 = vpack.c.b16 %v457, %v456
  %v508 = vpack.c.b16 %v459, %v458
  %v509 = vpack.c.b16 %v461, %v460
  %v510 = vpack.c.b16 %v463, %v462
  %v511 = vpack.c.b16 %v465, %v464
  %v512 = vpack.c.b16 %v467, %v466
  %v513 = vpack.c.b16 %v469, %v468
  %v514 = vpack.c.b16 %v471, %v470
  %v515 = vpack.c.b16 %v473, %v472
  %v516 = vpack.c.b16 %v475, %v474
  %v517 = vpack.c.b16 %v477, %v476
  %v518 = vpack.c.b16 %v479, %v478
  %v519 = vpack.c.b16 %v481, %v480
  %v520 = vpack.c.b16 %v483, %v482
  %v521 = vpack.c.b16 %v485, %v484
  %vm558 = vcmask 523264
  %v560 = vsel %vm558, %v274, 0
  %v563 = vsel %vm558, %v279, 0
  %v566 = vsel %vm558, %v284, 0
  %v569 = vsel %vm558, %v289, 0
  %v572 = vsel %vm558, %v294, 0
  %v575 = vsel %vm558, %v299, 0
  %v578 = vsel %vm558, %v304, 0
  %v581 = vsel %vm558, %v309, 0
  %583 = vmatprep.subr.bf16.mxu0 0
  %584 = vmatpush1.bf16.msra.mxu0 %v486
  %585 = vmatprep.subr.bf16.mxu0 0
  %586 = vmatpush1.bf16.msra.mxu0 %v487
  %587 = vmatprep.subr.bf16.mxu0 0
  %588 = vmatpush1.bf16.msra.mxu0 %v488
  %589 = vmatprep.subr.bf16.mxu0 0
  %590 = vmatpush1.bf16.msra.mxu0 %v489
  %591 = vmatprep.subr.bf16.mxu0 0
  %592 = vmatpush1.bf16.msra.mxu0 %v490
  %593 = vmatprep.subr.bf16.mxu0 0
  %594 = vmatpush1.bf16.msra.mxu0 %v491
  %595 = vmatprep.subr.bf16.mxu0 0
  %596 = vmatpush1.bf16.msra.mxu0 %v492
  %597 = vmatprep.subr.bf16.mxu0 0
  %598 = vmatpush1.bf16.msra.mxu0 %v493
  %599 = vmatprep.subr.bf16.mxu0 0
  %600 = vmatpush1.bf16.msra.mxu0 %v494
  %601 = vmatprep.subr.bf16.mxu0 0
  %602 = vmatpush1.bf16.msra.mxu0 %v495
  %603 = vmatprep.subr.bf16.mxu0 0
  %604 = vmatpush1.bf16.msra.mxu0 %v496
  %605 = vmatprep.subr.bf16.mxu0 0
  %606 = vmatpush1.bf16.msra.mxu0 %v497
  %607 = vmatprep.subr.bf16.mxu0 0
  %608 = vmatpush1.bf16.msra.mxu0 %v498
  %609 = vmatprep.subr.bf16.mxu0 0
  %610 = vmatpush1.bf16.msra.mxu0 %v499
  %611 = vmatprep.subr.bf16.mxu0 0
  %612 = vmatpush1.bf16.msra.mxu0 %v500
  %613 = vmatprep.subr.bf16.mxu0 0
  %614 = vmatpush1.bf16.msra.mxu0 %v501
  %615 = vmatprep.mubr.bf16.mxu0 %v271
  %616 = vmatmul.mubr.bf16.gmra.mrb[0].mxu0 %v270
  %v617 = vpop.f32.mrb[0].mxu0
  %v618 = vadd.f32 %v140, %v617
  %v619 = vpop.f32.mrb[0].mxu0
  %v620 = vpop.f32.mrb[0].mxu0
  %v621 = vadd.f32 %v140, %v620
  %v622 = vpop.f32.mrb[0].mxu0
  %623 = vmatprep.mubr.bf16.mxu0 %v276
  %624 = vmatmul.mubr.bf16.gmra.mrb[0].mxu0 %v275
  %v625 = vpop.f32.mrb[0].mxu0
  %v626 = vadd.f32 %v140, %v625
  %v627 = vpop.f32.mrb[0].mxu0
  %v628 = vpop.f32.mrb[0].mxu0
  %v629 = vadd.f32 %v140, %v628
  %v630 = vpop.f32.mrb[0].mxu0
  %631 = vmatprep.mubr.bf16.mxu0 %v281
  %632 = vmatmul.mubr.bf16.gmra.mrb[0].mxu0 %v280
  %v633 = vpop.f32.mrb[0].mxu0
  %v634 = vadd.f32 %v140, %v633
  %v635 = vpop.f32.mrb[0].mxu0
  %v636 = vpop.f32.mrb[0].mxu0
  %v637 = vadd.f32 %v140, %v636
  %v638 = vpop.f32.mrb[0].mxu0
  %639 = vmatprep.mubr.bf16.mxu0 %v286
  %640 = vmatmul.mubr.bf16.gmra.mrb[0].mxu0 %v285
  %v641 = vpop.f32.mrb[0].mxu0
  %v642 = vadd.f32 %v140, %v641
  %v643 = vpop.f32.mrb[0].mxu0
  %v644 = vpop.f32.mrb[0].mxu0
  %v645 = vadd.f32 %v140, %v644
  %v646 = vpop.f32.mrb[0].mxu0
  %647 = vmatprep.mubr.bf16.mxu0 %v291
  %648 = vmatmul.mubr.bf16.gmra.mrb[0].mxu0 %v290
  %v649 = vpop.f32.mrb[0].mxu0
  %v650 = vadd.f32 %v140, %v649
  %v651 = vpop.f32.mrb[0].mxu0
  %v652 = vpop.f32.mrb[0].mxu0
  %v653 = vadd.f32 %v140, %v652
  %v654 = vpop.f32.mrb[0].mxu0
  %655 = vmatprep.mubr.bf16.mxu0 %v296
  %656 = vmatmul.mubr.bf16.gmra.mrb[0].mxu0 %v295
  %v657 = vpop.f32.mrb[0].mxu0
  %v658 = vadd.f32 %v140, %v657
  %v659 = vpop.f32.mrb[0].mxu0
  %v660 = vpop.f32.mrb[0].mxu0
  %v661 = vadd.f32 %v140, %v660
  %v662 = vpop.f32.mrb[0].mxu0
  %663 = vmatprep.mubr.bf16.mxu0 %v301
  %664 = vmatmul.mubr.bf16.gmra.mrb[0].mxu0 %v300
  %v665 = vpop.f32.mrb[0].mxu0
  %v666 = vadd.f32 %v140, %v665
  %v667 = vpop.f32.mrb[0].mxu0
  %v668 = vpop.f32.mrb[0].mxu0
  %v669 = vadd.f32 %v140, %v668
  %v670 = vpop.f32.mrb[0].mxu0
  %671 = vmatprep.mubr.bf16.mxu0 %v306
  %672 = vmatmul.mubr.bf16.gmra.mrb[0].mxu0 %v305
  %v673 = vpop.f32.mrb[0].mxu0
  %v674 = vadd.f32 %v140, %v673
  %v675 = vpop.f32.mrb[0].mxu0
  %v676 = vpop.f32.mrb[0].mxu0
  %v677 = vadd.f32 %v140, %v676
  %v678 = vpop.f32.mrb[0].mxu0
  %679 = vdwg.mxu0
  %680 = vmatprep.subr.bf16.mxu0 0
  %681 = vmatpush1.bf16.msra.mxu0 %v502
  %682 = vmatprep.subr.bf16.mxu0 0
  %683 = vmatpush1.bf16.msra.mxu0 %v503
  %684 = vmatprep.subr.bf16.mxu0 0
  %685 = vmatpush1.bf16.msra.mxu0 %v504
  %686 = vmatprep.subr.bf16.mxu0 0
  %687 = vmatpush1.bf16.msra.mxu0 %v505
  %688 = vmatprep.subr.bf16.mxu0 0
  %689 = vmatpush1.bf16.msra.mxu0 %v506
  %690 = vmatprep.subr.bf16.mxu0 0
  %691 = vmatpush1.bf16.msra.mxu0 %v507
  %692 = vmatprep.subr.bf16.mxu0 0
  %693 = vmatpush1.bf16.msra.mxu0 %v508
  %694 = vmatprep.subr.bf16.mxu0 0
  %695 = vmatpush1.bf16.msra.mxu0 %v509
  %696 = vmatprep.subr.bf16.mxu0 0
  %697 = vmatpush1.bf16.msra.mxu0 %v510
  %698 = vmatprep.subr.bf16.mxu0 0
  %699 = vmatpush1.bf16.msra.mxu0 %v511
  %700 = vmatprep.subr.bf16.mxu0 0
  %701 = vmatpush1.bf16.msra.mxu0 %v512
  %702 = vmatprep.subr.bf16.mxu0 0
  %703 = vmatpush1.bf16.msra.mxu0 %v513
  %704 = vmatprep.subr.bf16.mxu0 0
  %705 = vmatpush1.bf16.msra.mxu0 %v514
  %706 = vmatprep.subr.bf16.mxu0 0
  %707 = vmatpush1.bf16.msra.mxu0 %v515
  %708 = vmatprep.subr.bf16.mxu0 0
  %709 = vmatpush1.bf16.msra.mxu0 %v516
  %710 = vmatprep.subr.bf16.mxu0 0
  %711 = vmatpush1.bf16.msra.mxu0 %v517
  %712 = vmatprep.mubr.bf16.mxu0 %v273
  %713 = vmatmul.mubr.bf16.gmra.mrb[0].mxu0 %v272
  %v714 = vpop.f32.mrb[0].mxu0
  %v715 = vadd.f32 %v618, %v714
  %v716 = vpop.f32.mrb[0].mxu0
  %v717 = vpop.f32.mrb[0].mxu0
  %v718 = vadd.f32 %v621, %v717
  %v719 = vpop.f32.mrb[0].mxu0
  %720 = vmatprep.mubr.bf16.mxu0 %v278
  %721 = vmatmul.mubr.bf16.gmra.mrb[0].mxu0 %v277
  %v722 = vpop.f32.mrb[0].mxu0
  %v723 = vadd.f32 %v626, %v722
  %v724 = vpop.f32.mrb[0].mxu0
  %v725 = vpop.f32.mrb[0].mxu0
  %v726 = vadd.f32 %v629, %v725
  %v727 = vpop.f32.mrb[0].mxu0
  %728 = vmatprep.mubr.bf16.mxu0 %v283
  %729 = vmatmul.mubr.bf16.gmra.mrb[0].mxu0 %v282
  %v730 = vpop.f32.mrb[0].mxu0
  %v731 = vadd.f32 %v634, %v730
  %v732 = vpop.f32.mrb[0].mxu0
  %v733 = vpop.f32.mrb[0].mxu0
  %v734 = vadd.f32 %v637, %v733
  %v735 = vpop.f32.mrb[0].mxu0
  %736 = vmatprep.mubr.bf16.mxu0 %v288
  %737 = vmatmul.mubr.bf16.gmra.mrb[0].mxu0 %v287
  %v738 = vpop.f32.mrb[0].mxu0
  %v739 = vadd.f32 %v642, %v738
  %v740 = vpop.f32.mrb[0].mxu0
  %v741 = vpop.f32.mrb[0].mxu0
  %v742 = vadd.f32 %v645, %v741
  %v743 = vpop.f32.mrb[0].mxu0
  %744 = vmatprep.mubr.bf16.mxu0 %v293
  %745 = vmatmul.mubr.bf16.gmra.mrb[0].mxu0 %v292
  %v746 = vpop.f32.mrb[0].mxu0
  %v747 = vadd.f32 %v650, %v746
  %v748 = vpop.f32.mrb[0].mxu0
  %v749 = vpop.f32.mrb[0].mxu0
  %v750 = vadd.f32 %v653, %v749
  %v751 = vpop.f32.mrb[0].mxu0
  %752 = vmatprep.mubr.bf16.mxu0 %v298
  %753 = vmatmul.mubr.bf16.gmra.mrb[0].mxu0 %v297
  %v754 = vpop.f32.mrb[0].mxu0
  %v755 = vadd.f32 %v658, %v754
  %v756 = vpop.f32.mrb[0].mxu0
  %v757 = vpop.f32.mrb[0].mxu0
  %v758 = vadd.f32 %v661, %v757
  %v759 = vpop.f32.mrb[0].mxu0
  %760 = vmatprep.mubr.bf16.mxu0 %v303
  %761 = vmatmul.mubr.bf16.gmra.mrb[0].mxu0 %v302
  %v762 = vpop.f32.mrb[0].mxu0
  %v763 = vadd.f32 %v666, %v762
  %v764 = vpop.f32.mrb[0].mxu0
  %v765 = vpop.f32.mrb[0].mxu0
  %v766 = vadd.f32 %v669, %v765
  %v767 = vpop.f32.mrb[0].mxu0
  %768 = vmatprep.mubr.bf16.mxu0 %v308
  %769 = vmatmul.mubr.bf16.gmra.mrb[0].mxu0 %v307
  %v770 = vpop.f32.mrb[0].mxu0
  %v771 = vadd.f32 %v674, %v770
  %v772 = vpop.f32.mrb[0].mxu0
  %v773 = vpop.f32.mrb[0].mxu0
  %v774 = vadd.f32 %v677, %v773
  %v775 = vpop.f32.mrb[0].mxu0
  %776 = vdwg.mxu0
  %777 = vmatprep.subr.bf16.mxu0 0
  %778 = vmatpush1.bf16.msra.mxu0 %v518
  %779 = vmatprep.subr.bf16.mxu0 0
  %780 = vmatpush1.bf16.msra.mxu0 %v519
  %781 = vmatprep.subr.bf16.mxu0 0
  %782 = vmatpush1.bf16.msra.mxu0 %v520
  %783 = vmatprep.subr.bf16.mxu0 0
  %784 = vmatpush1.bf16.msra.mxu0 %v521
  %785 = vmatprep.subr.bf16.mxu0 0
  %786 = vmatpush1.bf16.msra.mxu0 0
  %787 = vmatprep.subr.bf16.mxu0 0
  %788 = vmatpush1.bf16.msra.mxu0 0
  %789 = vmatprep.subr.bf16.mxu0 0
  %790 = vmatpush1.bf16.msra.mxu0 0
  %791 = vmatprep.subr.bf16.mxu0 0
  %792 = vmatpush1.bf16.msra.mxu0 0
  %793 = vmatprep.subr.bf16.mxu0 0
  %794 = vmatpush1.bf16.msra.mxu0 0
  %795 = vmatprep.subr.bf16.mxu0 0
  %796 = vmatpush1.bf16.msra.mxu0 0
  %797 = vmatprep.subr.bf16.mxu0 0
  %798 = vmatpush1.bf16.msra.mxu0 0
  %799 = vmatprep.subr.bf16.mxu0 0
  %800 = vmatpush1.bf16.msra.mxu0 0
  %801 = vmatprep.subr.bf16.mxu0 0
  %802 = vmatpush1.bf16.msra.mxu0 0
  %803 = vmatprep.subr.bf16.mxu0 0
  %804 = vmatpush1.bf16.msra.mxu0 0
  %805 = vmatprep.subr.bf16.mxu0 0
  %806 = vmatpush1.bf16.msra.mxu0 0
  %807 = vmatprep.subr.bf16.mxu0 0
  %808 = vmatpush1.bf16.msra.mxu0 0
  %809 = vmatprep.mubr.bf16.mxu0 0
  %810 = vmatmul.mubr.bf16.gmra.mrb[0].mxu0 %v560
  %v811 = vpop.f32.mrb[0].mxu0
  %v812 = vadd.f32 %v715, %v811
  %v813 = vpop.f32.mrb[0].mxu0
  %v814 = vpop.f32.mrb[0].mxu0
  %v815 = vadd.f32 %v718, %v814
  %v816 = vpop.f32.mrb[0].mxu0
  %817 = vmatprep.mubr.bf16.mxu0 0
  %818 = vmatmul.mubr.bf16.gmra.mrb[0].mxu0 %v563
  %v819 = vpop.f32.mrb[0].mxu0
  %v820 = vadd.f32 %v723, %v819
  %v821 = vpop.f32.mrb[0].mxu0
  %v822 = vpop.f32.mrb[0].mxu0
  %v823 = vadd.f32 %v726, %v822
  %v824 = vpop.f32.mrb[0].mxu0
  %825 = vmatprep.mubr.bf16.mxu0 0
  %826 = vmatmul.mubr.bf16.gmra.mrb[0].mxu0 %v566
  %v827 = vpop.f32.mrb[0].mxu0
  %v828 = vadd.f32 %v731, %v827
  %v829 = vpop.f32.mrb[0].mxu0
  %v830 = vpop.f32.mrb[0].mxu0
  %v831 = vadd.f32 %v734, %v830
  %v832 = vpop.f32.mrb[0].mxu0
  %833 = vmatprep.mubr.bf16.mxu0 0
  %834 = vmatmul.mubr.bf16.gmra.mrb[0].mxu0 %v569
  %v835 = vpop.f32.mrb[0].mxu0
  %v836 = vadd.f32 %v739, %v835
  %v837 = vpop.f32.mrb[0].mxu0
  %v838 = vpop.f32.mrb[0].mxu0
  %v839 = vadd.f32 %v742, %v838
  %v840 = vpop.f32.mrb[0].mxu0
  %841 = vmatprep.mubr.bf16.mxu0 0
  %842 = vmatmul.mubr.bf16.gmra.mrb[0].mxu0 %v572
  %v843 = vpop.f32.mrb[0].mxu0
  %v844 = vadd.f32 %v747, %v843
  %v845 = vpop.f32.mrb[0].mxu0
  %v846 = vpop.f32.mrb[0].mxu0
  %v847 = vadd.f32 %v750, %v846
  %v848 = vpop.f32.mrb[0].mxu0
  %849 = vmatprep.mubr.bf16.mxu0 0
  %850 = vmatmul.mubr.bf16.gmra.mrb[0].mxu0 %v575
  %v851 = vpop.f32.mrb[0].mxu0
  %v852 = vadd.f32 %v755, %v851
  %v853 = vpop.f32.mrb[0].mxu0
  %v854 = vpop.f32.mrb[0].mxu0
  %v855 = vadd.f32 %v758, %v854
  %v856 = vpop.f32.mrb[0].mxu0
  %857 = vmatprep.mubr.bf16.mxu0 0
  %858 = vmatmul.mubr.bf16.gmra.mrb[0].mxu0 %v578
  %v859 = vpop.f32.mrb[0].mxu0
  %v860 = vadd.f32 %v763, %v859
  %v861 = vpop.f32.mrb[0].mxu0
  %v862 = vpop.f32.mrb[0].mxu0
  %v863 = vadd.f32 %v766, %v862
  %v864 = vpop.f32.mrb[0].mxu0
  %865 = vmatprep.mubr.bf16.mxu0 0
  %866 = vmatmul.mubr.bf16.gmra.mrb[0].mxu0 %v581
  %v867 = vpop.f32.mrb[0].mxu0
  %v868 = vadd.f32 %v771, %v867
  %v869 = vpop.f32.mrb[0].mxu0
  %v870 = vpop.f32.mrb[0].mxu0
  %v871 = vadd.f32 %v774, %v870
  %v872 = vpop.f32.mrb[0].mxu0
  %873 = vdwg.mxu0
  %v874 = vtanh.pop %v812
  %v875 = vtanh.pop %v815
  %v876 = vtanh.pop %v820
  %v877 = vtanh.pop %v823
  %v878 = vtanh.pop %v828
  %v879 = vtanh.pop %v831
  %v880 = vtanh.pop %v836
  %v881 = vtanh.pop %v839
  %v882 = vtanh.pop %v844
  %v883 = vtanh.pop %v847
  %v884 = vtanh.pop %v852
  %v885 = vtanh.pop %v855
  %v886 = vtanh.pop %v860
  %v887 = vtanh.pop %v863
  %v888 = vtanh.pop %v868
  %v889 = vtanh.pop %v871
  %890 = vst [vmem:[%s3] sm:$0xff] %v874
  %891 = vst [vmem:[%s3 + $0x8] sm:$0xff] %v875
  %892 = vst [vmem:[%s3 + $0x10] sm:$0xff] %v876
  %893 = vst [vmem:[%s3 + $0x18] sm:$0xff] %v877
  %894 = vst [vmem:[%s3 + $0x20] sm:$0xff] %v878
  %895 = vst [vmem:[%s3 + $0x28] sm:$0xff] %v879
  %896 = vst [vmem:[%s3 + $0x30] sm:$0xff] %v880
  %897 = vst [vmem:[%s3 + $0x38] sm:$0xff] %v881
  %898 = vst [vmem:[%s3 + $0x40] sm:$0xff] %v882
  %899 = vst [vmem:[%s3 + $0x48] sm:$0xff] %v883
  %900 = vst [vmem:[%s3 + $0x50] sm:$0xff] %v884
  %901 = vst [vmem:[%s3 + $0x58] sm:$0xff] %v885
  %902 = vst [vmem:[%s3 + $0x60] sm:$0xff] %v886
  %903 = vst [vmem:[%s3 + $0x68] sm:$0xff] %v887
  %904 = vst [vmem:[%s3 + $0x70] sm:$0xff] %v888
  %905 = vst [vmem:[%s3 + $0x78] sm:$0xff] %v889
  // Predicated region
  $region14: #{ocean_vae_forward.31} parent=0 // pred_check
    _
  $region15: #{ocean_vae_forward.31} parent=0 // pred_check_branch
    %907 = sbr.rel (0) target = $region17
  $region16: #{ocean_vae_forward.31} parent=0 // pred_region
    _
  $region17: #{ocean_vae_forward.31} parent=0 // pred_fallthru
    _
  // Predicated region
  $region18: #{ocean_vae_forward.31} parent=0 // pred_check
    _
  $region19: #{ocean_vae_forward.31} parent=0 // pred_check_branch
    %909 = sbr.rel (0) target = $region21
  $region20: #{ocean_vae_forward.31} parent=0 // pred_region
    _
  $region21: #{ocean_vae_forward.31} parent=0 // pred_fallthru
    _

</llo_original>
